<compile_context>
chip_gen: v7x
topology: tpu7x:2x2x1
jax: 0.10.0
libtpu: 0.0.40
codegen_flags: <defaults>
</compile_context>

<pallas_src>
import functools

import jax
import jax.numpy as jnp
from jax.experimental import pallas as pl
from jax.experimental.pallas import tpu as pltpu


_VMEM = pl.BlockSpec(memory_space=pltpu.MemorySpace.VMEM)

_H = 32                               # input spatial size implied by fc1 (16*6*6)
_PIX = _H * _H                        # pixels per image
_MAX_SHIFT_PIX = 2 * 2 * _H + 2 * 2   # largest tap offset in pixels (dilated conv2)


# ------------------------------ fused kernel --------------------------------

def _lenet_kernel(x_ref, w1_ref, b1_ref, w2_ref, b2_ref,
                  w1t_ref, fb1_ref, fw2_ref, fb2_ref, fw3_ref, fb3_ref,
                  o_ref,
                  c1_ref, p1_ref, c2_ref, m4_ref, flat_ref,
                  *, n_batch):
    f32 = jnp.float32
    N = n_batch
    L = N * _PIX                        # valid interleaved lane count
    pad = c1_ref.shape[1] - L           # lane padding of the scratch slabs

    # Zero the lane tails of the padded scratch slabs once, so shifted reads
    # past the end of the image grid see zeros (cheap: a few vector stores).
    c1_ref[:, pl.ds(L, pad)] = jnp.zeros((8, pad), f32)
    p1_ref[:, pl.ds(L, pad)] = jnp.zeros((8, pad), f32)
    c2_ref[:, pl.ds(L, pad)] = jnp.zeros((16, pad), f32)

    # ---- conv1 (1->6, 3x3, VALID) + ReLU: 9 VPU broadcast-FMA taps ----------
    # Bias-initialized accumulator (no zero-fill pass).  Output rows 6,7 are
    # zero-weight/zero-bias padding so later matmul RHS blocks are 8 rows.
    w1 = w1_ref[...]                                            # (8, 9)
    c1 = b1_ref[...] + w1[:, 0:1] * x_ref[:, pl.ds(0, L)]
    for t in range(1, 9):
        dh, dw = divmod(t, 3)
        s = (dh * _H + dw) * N
        c1 = c1 + w1[:, t:t + 1] * x_ref[:, pl.ds(s, L)]
    c1_ref[:, pl.ds(0, L)] = jnp.maximum(c1, 0.0)               # valid i,j < 30

    # ---- pool1: 2x2 stride-2 max, kept dilated on the 32x32 grid ------------
    p1 = c1_ref[:, pl.ds(0, L)]
    for s_pix in (1, _H, _H + 1):
        p1 = jnp.maximum(p1, c1_ref[:, pl.ds(s_pix * N, L)])
    p1_ref[:, pl.ds(0, L)] = p1                                 # valid at (2io, 2jo)

    # ---- conv2 (6->16, 3x3) + ReLU on the dilated grid: 9 MXU matmuls -------
    # Each tap contracts all (zero-padded to 8) input channels in one
    # (16,8) x (8,L) MXU dot; 9 accumulator updates instead of 54 VPU sweeps.
    c2 = None
    for t in range(9):
        dh, dw = divmod(t, 3)
        s = (2 * dh * _H + 2 * dw) * N
        d = jnp.dot(w2_ref[t], p1_ref[:, pl.ds(s, L)],
                    preferred_element_type=f32)
        c2 = d if c2 is None else c2 + d
    c2_ref[:, pl.ds(0, L)] = jnp.maximum(c2 + b2_ref[...], 0.0)  # valid (2i,2j), i,j<13

    # ---- pool2: 2x2 stride-2 max on the dilated grid -------------------------
    m4 = c2_ref[:, pl.ds(0, L)]
    for s_pix in (2, 2 * _H, 2 * _H + 2):
        m4 = jnp.maximum(m4, c2_ref[:, pl.ds(s_pix * N, L)])
    m4_ref[...] = m4                                            # valid at (4io, 4jo)

    # ---- flatten: gather the 36 valid pooled positions for ALL images -------
    # Images are interleaved on lanes, so each spatial position is a single
    # contiguous (16, N) slice.  Rows of `flat` are ordered r = (io*6+jo)*16+c;
    # fc1's weight was pre-permuted on the host to match.
    for io in range(6):
        for jo in range(6):
            q = (4 * io * _H + 4 * jo) * N
            flat_ref[pl.ds((io * 6 + jo) * 16, 16), :] = m4_ref[:, pl.ds(q, N)]

    # ---- fc1 / fc2 / fc3: three batched MXU matmuls, one output store -------
    flat = flat_ref[...]                                        # (576, N)
    h1 = jnp.maximum(
        jnp.dot(w1t_ref[...], flat, preferred_element_type=f32) + fb1_ref[...], 0.0)
    h2 = jnp.maximum(
        jnp.dot(fw2_ref[...], h1, preferred_element_type=f32) + fb2_ref[...], 0.0)
    o_ref[...] = jnp.dot(fw3_ref[...], h2, preferred_element_type=f32) + fb3_ref[...]


# ------------------------------ host wrappers --------------------------------

def prepare_params(params):
    """One-time (outside jit) re-layout of the PyTorch-style parameters."""
    (w1, b1, w2, b2, fw1, fb1, fw2, fb2, fw3, fb3) = params
    f32 = jnp.float32
    # conv1 weights/bias padded from 6 to 8 output channels (zero rows).
    w1k = jnp.zeros((8, 9), f32).at[:6].set(w1.reshape(6, 9).astype(f32))
    b1k = jnp.zeros((8, 1), f32).at[:6].set(b1.reshape(6, 1).astype(f32))
    # conv2 weights as (tap, co, ci) with ci padded from 6 to 8 (zero columns).
    w2t = jnp.transpose(w2.astype(f32), (2, 3, 0, 1)).reshape(9, 16, 6)
    w2k = jnp.zeros((9, 16, 8), f32).at[:, :, :6].set(w2t)
    b2k = b2.reshape(16, 1).astype(f32)
    # fc1 weight columns permuted from f = c*36 + s  to  r = s*16 + c, where
    # s = io*6 + jo indexes the 6x6 pooled map (matches the in-kernel gather).
    w1t = jnp.transpose(fw1.astype(f32).reshape(120, 16, 36),
                        (0, 2, 1)).reshape(120, 576)
    return (w1k, b1k, w2k, b2k, w1t,
            fb1.reshape(120, 1).astype(f32),
            fw2.astype(f32), fb2.reshape(84, 1).astype(f32),
            fw3.astype(f32), fb3.reshape(10, 1).astype(f32))


def net_forward(x, prepared):
    """x: (N, 1, 32, 32) float32 NCHW -> (N, 10) logits."""
    n = x.shape[0]
    assert x.shape[1:] == (1, _H, _H), x.shape
    L = n * _PIX
    # Lane padding must cover the largest (dilated) tap shift; round up to a
    # multiple of 128 lanes so the scratch slabs stay tile-aligned.
    pad = ((_MAX_SHIFT_PIX * n + 127) // 128) * 128
    assert pad >= _MAX_SHIFT_PIX * n, (pad, _MAX_SHIFT_PIX * n)
    lp = L + pad
    # Interleave images on the lane axis (lane = pixel*n + image) and pre-pad
    # with zeros on the host; shifted taps therefore never cross from one image
    # into another -- out-of-grid taps only ever read the zero pad.
    x_slab = jnp.pad(x.reshape(n, _PIX).T.reshape(1, L), ((0, 0), (0, pad)))
    # Note: at larger batch, split the grid over image groups with
    # dimension_semantics=("parallel",) so v7x's two TensorCores share the
    # work; at batch=2 a single gridless call minimizes launch overhead.
    out_t = pl.pallas_call(
        functools.partial(_lenet_kernel, n_batch=n),
        out_shape=jax.ShapeDtypeStruct((10, n), jnp.float32),
        in_specs=[_VMEM] * 11,
        out_specs=_VMEM,
        scratch_shapes=[
            pltpu.VMEM((8, lp), jnp.float32),    # conv1 output (lane-padded)
            pltpu.VMEM((8, lp), jnp.float32),    # pool1 output (lane-padded)
            pltpu.VMEM((16, lp), jnp.float32),   # conv2 output (lane-padded)
            pltpu.VMEM((16, L), jnp.float32),    # pool2 output (dilated)
            pltpu.VMEM((576, n), jnp.float32),   # flattened fc1 input
        ],
    )(x_slab, *prepared)
    return out_t.T                               # (N, 10); 80-byte relayout


# ------------------------- pure-JAX reference check --------------------------

def ref_forward(x, params):
    (w1, b1, w2, b2, fw1, fb1, fw2, fb2, fw3, fb3) = params
    hp = jax.lax.Precision.HIGHEST

    def conv(x, w, b):
        y = jax.lax.conv_general_dilated(
            x, w, (1, 1), "VALID",
            dimension_numbers=("NCHW", "OIHW", "NCHW"), precision=hp)
        return jnp.maximum(y + b[None, :, None, None], 0.0)

    def pool(x):
        return jax.lax.reduce_window(
            x, -jnp.inf, jax.lax.max, (1, 1, 2, 2), (1, 1, 2, 2), "VALID")

    x = pool(conv(x, w1, b1))
    x = pool(conv(x, w2, b2))
    x = x.reshape(x.shape[0], -1)
    x = jnp.maximum(jnp.dot(x, fw1.T, precision=hp) + fb1, 0.0)
    x = jnp.maximum(jnp.dot(x, fw2.T, precision=hp) + fb2, 0.0)
    return jnp.dot(x, fw3.T, precision=hp) + fb3


# ----------------------------------- main -------------------------------------

def init_params(key):
    ks = jax.random.split(key, 10)
    s = 0.1
    return (s * jax.random.normal(ks[0], (6, 1, 3, 3), jnp.float32),
            s * jax.random.normal(ks[1], (6,), jnp.float32),
            s * jax.random.normal(ks[2], (16, 6, 3, 3), jnp.float32),
            s * jax.random.normal(ks[3], (16,), jnp.float32),
            s * jax.random.normal(ks[4], (120, 16 * 6 * 6), jnp.float32),
            s * jax.random.normal(ks[5], (120,), jnp.float32),
            s * jax.random.normal(ks[6], (84, 120), jnp.float32),
            s * jax.random.normal(ks[7], (84,), jnp.float32),
            s * jax.random.normal(ks[8], (10, 84), jnp.float32),
            s * jax.random.normal(ks[9], (10,), jnp.float32))


if __name__ == "__main__":
    key = jax.random.PRNGKey(0)
    k_x, k_p = jax.random.split(key)
    # 32x32 input is required by fc1's 16*6*6 flatten (classic LeNet sizing).
    x = jax.random.normal(k_x, (2, 1, 32, 32), jnp.float32)
    params = init_params(k_p)
    prepared = prepare_params(params)     # weight re-layout, once, outside jit

    fwd = jax.jit(net_forward)
    out = jax.block_until_ready(fwd(x, prepared))
    assert out.shape == (2, 10), out.shape

    ref = jax.block_until_ready(ref_forward(x, params))
    err = float(jnp.max(jnp.abs(out - ref)))
    # Headroom for MXU-vs-HIGHEST precision differences; real layout/indexing
    # bugs produce errors orders of magnitude larger.
    assert err < 1e-2, err

    print("KERNEL_OK")
</pallas_src>

<mosaic_0001>
module attributes {stable_mosaic.version = 11 : i64} {
  func.func @_lenet_kernel(%arg0: memref<1x2432xf32, #tpu.memory_space<vmem>>, %arg1: memref<8x9xf32, #tpu.memory_space<vmem>>, %arg2: memref<8x1xf32, #tpu.memory_space<vmem>>, %arg3: memref<9x16x8xf32, #tpu.memory_space<vmem>>, %arg4: memref<16x1xf32, #tpu.memory_space<vmem>>, %arg5: memref<120x576xf32, #tpu.memory_space<vmem>>, %arg6: memref<120x1xf32, #tpu.memory_space<vmem>>, %arg7: memref<84x120xf32, #tpu.memory_space<vmem>>, %arg8: memref<84x1xf32, #tpu.memory_space<vmem>>, %arg9: memref<10x84xf32, #tpu.memory_space<vmem>>, %arg10: memref<10x1xf32, #tpu.memory_space<vmem>>, %arg11: memref<10x2xf32, #tpu.memory_space<vmem>>, %arg12: memref<8x2432xf32, #tpu.memory_space<vmem>>, %arg13: memref<8x2432xf32, #tpu.memory_space<vmem>>, %arg14: memref<16x2432xf32, #tpu.memory_space<vmem>>, %arg15: memref<16x2048xf32, #tpu.memory_space<vmem>>, %arg16: memref<576x2xf32, #tpu.memory_space<vmem>>) attributes {dimension_semantics = [], scalar_prefetch = 0 : i64, scratch_operands = 5 : i64, tpu.core_type = #tpu.core_type<tc>} {
    %cst = arith.constant 0.000000e+00 : f32
    %0 = vector.broadcast %cst : f32 to vector<8x384xf32>
    %c0 = arith.constant 0 : index
    %c2048 = arith.constant 2048 : index
    %1 = vector.load %arg12[%c0, %c2048] : memref<8x2432xf32, #tpu.memory_space<vmem>>, vector<8x384xf32>
    tpu.vector_store %arg12[%c0, %c2048], %0 {strides = array<i32>} : memref<8x2432xf32, #tpu.memory_space<vmem>>, vector<8x384xf32>,
    %cst_0 = arith.constant 0.000000e+00 : f32
    %2 = vector.broadcast %cst_0 : f32 to vector<8x384xf32>
    %c0_1 = arith.constant 0 : index
    %c2048_2 = arith.constant 2048 : index
    %3 = vector.load %arg13[%c0_1, %c2048_2] : memref<8x2432xf32, #tpu.memory_space<vmem>>, vector<8x384xf32>
    tpu.vector_store %arg13[%c0_1, %c2048_2], %2 {strides = array<i32>} : memref<8x2432xf32, #tpu.memory_space<vmem>>, vector<8x384xf32>,
    %cst_3 = arith.constant 0.000000e+00 : f32
    %4 = vector.broadcast %cst_3 : f32 to vector<16x384xf32>
    %c0_4 = arith.constant 0 : index
    %c2048_5 = arith.constant 2048 : index
    %5 = vector.load %arg14[%c0_4, %c2048_5] : memref<16x2432xf32, #tpu.memory_space<vmem>>, vector<16x384xf32>
    tpu.vector_store %arg14[%c0_4, %c2048_5], %4 {strides = array<i32>} : memref<16x2432xf32, #tpu.memory_space<vmem>>, vector<16x384xf32>,
    %c0_6 = arith.constant 0 : index
    %c0_7 = arith.constant 0 : index
    %6 = vector.load %arg1[%c0_6, %c0_7] : memref<8x9xf32, #tpu.memory_space<vmem>>, vector<8x9xf32>
    %c0_8 = arith.constant 0 : index
    %c0_9 = arith.constant 0 : index
    %7 = vector.load %arg2[%c0_8, %c0_9] : memref<8x1xf32, #tpu.memory_space<vmem>>, vector<8x1xf32>
    %8 = vector.extract_strided_slice %6 {offsets = [0, 0], sizes = [8, 1], strides = [1, 1]} : vector<8x9xf32> to vector<8x1xf32>
    %c0_10 = arith.constant 0 : index
    %c0_11 = arith.constant 0 : index
    %9 = vector.load %arg0[%c0_10, %c0_11] : memref<1x2432xf32, #tpu.memory_space<vmem>>, vector<1x2048xf32>
    %10 = vector.broadcast %8 : vector<8x1xf32> to vector<8x2048xf32>
    %11 = vector.broadcast %9 : vector<1x2048xf32> to vector<8x2048xf32>
    %12 = arith.mulf %10, %11 : vector<8x2048xf32>
    %13 = vector.broadcast %7 : vector<8x1xf32> to vector<8x2048xf32>
    %14 = arith.addf %13, %12 : vector<8x2048xf32>
    %15 = vector.extract_strided_slice %6 {offsets = [0, 1], sizes = [8, 1], strides = [1, 1]} : vector<8x9xf32> to vector<8x1xf32>
    %c0_12 = arith.constant 0 : index
    %c2 = arith.constant 2 : index
    %16 = vector.load %arg0[%c0_12, %c2] : memref<1x2432xf32, #tpu.memory_space<vmem>>, vector<1x2048xf32>
    %17 = vector.broadcast %15 : vector<8x1xf32> to vector<8x2048xf32>
    %18 = vector.broadcast %16 : vector<1x2048xf32> to vector<8x2048xf32>
    %19 = arith.mulf %17, %18 : vector<8x2048xf32>
    %20 = arith.addf %14, %19 : vector<8x2048xf32>
    %21 = vector.extract_strided_slice %6 {offsets = [0, 2], sizes = [8, 1], strides = [1, 1]} : vector<8x9xf32> to vector<8x1xf32>
    %c0_13 = arith.constant 0 : index
    %c4 = arith.constant 4 : index
    %22 = vector.load %arg0[%c0_13, %c4] : memref<1x2432xf32, #tpu.memory_space<vmem>>, vector<1x2048xf32>
    %23 = vector.broadcast %21 : vector<8x1xf32> to vector<8x2048xf32>
    %24 = vector.broadcast %22 : vector<1x2048xf32> to vector<8x2048xf32>
    %25 = arith.mulf %23, %24 : vector<8x2048xf32>
    %26 = arith.addf %20, %25 : vector<8x2048xf32>
    %27 = vector.extract_strided_slice %6 {offsets = [0, 3], sizes = [8, 1], strides = [1, 1]} : vector<8x9xf32> to vector<8x1xf32>
    %c0_14 = arith.constant 0 : index
    %c64 = arith.constant 64 : index
    %28 = vector.load %arg0[%c0_14, %c64] : memref<1x2432xf32, #tpu.memory_space<vmem>>, vector<1x2048xf32>
    %29 = vector.broadcast %27 : vector<8x1xf32> to vector<8x2048xf32>
    %30 = vector.broadcast %28 : vector<1x2048xf32> to vector<8x2048xf32>
    %31 = arith.mulf %29, %30 : vector<8x2048xf32>
    %32 = arith.addf %26, %31 : vector<8x2048xf32>
    %33 = vector.extract_strided_slice %6 {offsets = [0, 4], sizes = [8, 1], strides = [1, 1]} : vector<8x9xf32> to vector<8x1xf32>
    %c0_15 = arith.constant 0 : index
    %c66 = arith.constant 66 : index
    %34 = vector.load %arg0[%c0_15, %c66] : memref<1x2432xf32, #tpu.memory_space<vmem>>, vector<1x2048xf32>
    %35 = vector.broadcast %33 : vector<8x1xf32> to vector<8x2048xf32>
    %36 = vector.broadcast %34 : vector<1x2048xf32> to vector<8x2048xf32>
    %37 = arith.mulf %35, %36 : vector<8x2048xf32>
    %38 = arith.addf %32, %37 : vector<8x2048xf32>
    %39 = vector.extract_strided_slice %6 {offsets = [0, 5], sizes = [8, 1], strides = [1, 1]} : vector<8x9xf32> to vector<8x1xf32>
    %c0_16 = arith.constant 0 : index
    %c68 = arith.constant 68 : index
    %40 = vector.load %arg0[%c0_16, %c68] : memref<1x2432xf32, #tpu.memory_space<vmem>>, vector<1x2048xf32>
    %41 = vector.broadcast %39 : vector<8x1xf32> to vector<8x2048xf32>
    %42 = vector.broadcast %40 : vector<1x2048xf32> to vector<8x2048xf32>
    %43 = arith.mulf %41, %42 : vector<8x2048xf32>
    %44 = arith.addf %38, %43 : vector<8x2048xf32>
    %45 = vector.extract_strided_slice %6 {offsets = [0, 6], sizes = [8, 1], strides = [1, 1]} : vector<8x9xf32> to vector<8x1xf32>
    %c0_17 = arith.constant 0 : index
    %c128 = arith.constant 128 : index
    %46 = vector.load %arg0[%c0_17, %c128] : memref<1x2432xf32, #tpu.memory_space<vmem>>, vector<1x2048xf32>
    %47 = vector.broadcast %45 : vector<8x1xf32> to vector<8x2048xf32>
    %48 = vector.broadcast %46 : vector<1x2048xf32> to vector<8x2048xf32>
    %49 = arith.mulf %47, %48 : vector<8x2048xf32>
    %50 = arith.addf %44, %49 : vector<8x2048xf32>
    %51 = vector.extract_strided_slice %6 {offsets = [0, 7], sizes = [8, 1], strides = [1, 1]} : vector<8x9xf32> to vector<8x1xf32>
    %c0_18 = arith.constant 0 : index
    %c130 = arith.constant 130 : index
    %52 = vector.load %arg0[%c0_18, %c130] : memref<1x2432xf32, #tpu.memory_space<vmem>>, vector<1x2048xf32>
    %53 = vector.broadcast %51 : vector<8x1xf32> to vector<8x2048xf32>
    %54 = vector.broadcast %52 : vector<1x2048xf32> to vector<8x2048xf32>
    %55 = arith.mulf %53, %54 : vector<8x2048xf32>
    %56 = arith.addf %50, %55 : vector<8x2048xf32>
    %57 = vector.extract_strided_slice %6 {offsets = [0, 8], sizes = [8, 1], strides = [1, 1]} : vector<8x9xf32> to vector<8x1xf32>
    %c0_19 = arith.constant 0 : index
    %c132 = arith.constant 132 : index
    %58 = vector.load %arg0[%c0_19, %c132] : memref<1x2432xf32, #tpu.memory_space<vmem>>, vector<1x2048xf32>
    %59 = vector.broadcast %57 : vector<8x1xf32> to vector<8x2048xf32>
    %60 = vector.broadcast %58 : vector<1x2048xf32> to vector<8x2048xf32>
    %61 = arith.mulf %59, %60 : vector<8x2048xf32>
    %62 = arith.addf %56, %61 : vector<8x2048xf32>
    %cst_20 = arith.constant 0.000000e+00 : f32
    %63 = vector.broadcast %cst_20 : f32 to vector<8x2048xf32>
    %64 = arith.maximumf %62, %63 : vector<8x2048xf32>
    %c0_21 = arith.constant 0 : index
    %c0_22 = arith.constant 0 : index
    %65 = vector.load %arg12[%c0_21, %c0_22] : memref<8x2432xf32, #tpu.memory_space<vmem>>, vector<8x2048xf32>
    tpu.vector_store %arg12[%c0_21, %c0_22], %64 {strides = array<i32>} : memref<8x2432xf32, #tpu.memory_space<vmem>>, vector<8x2048xf32>,
    %c0_23 = arith.constant 0 : index
    %c0_24 = arith.constant 0 : index
    %66 = vector.load %arg12[%c0_23, %c0_24] : memref<8x2432xf32, #tpu.memory_space<vmem>>, vector<8x2048xf32>
    %c0_25 = arith.constant 0 : index
    %c2_26 = arith.constant 2 : index
    %67 = vector.load %arg12[%c0_25, %c2_26] : memref<8x2432xf32, #tpu.memory_space<vmem>>, vector<8x2048xf32>
    %68 = arith.maximumf %66, %67 : vector<8x2048xf32>
    %c0_27 = arith.constant 0 : index
    %c64_28 = arith.constant 64 : index
    %69 = vector.load %arg12[%c0_27, %c64_28] : memref<8x2432xf32, #tpu.memory_space<vmem>>, vector<8x2048xf32>
    %70 = arith.maximumf %68, %69 : vector<8x2048xf32>
    %c0_29 = arith.constant 0 : index
    %c66_30 = arith.constant 66 : index
    %71 = vector.load %arg12[%c0_29, %c66_30] : memref<8x2432xf32, #tpu.memory_space<vmem>>, vector<8x2048xf32>
    %72 = arith.maximumf %70, %71 : vector<8x2048xf32>
    %c0_31 = arith.constant 0 : index
    %c0_32 = arith.constant 0 : index
    %73 = vector.load %arg13[%c0_31, %c0_32] : memref<8x2432xf32, #tpu.memory_space<vmem>>, vector<8x2048xf32>
    tpu.vector_store %arg13[%c0_31, %c0_32], %72 {strides = array<i32>} : memref<8x2432xf32, #tpu.memory_space<vmem>>, vector<8x2048xf32>,
    %c0_33 = arith.constant 0 : index
    %c0_34 = arith.constant 0 : index
    %c0_35 = arith.constant 0 : index
    %74 = vector.load %arg3[%c0_33, %c0_34, %c0_35] : memref<9x16x8xf32, #tpu.memory_space<vmem>>, vector<1x16x8xf32>
    %75 = vector.shape_cast %74 : vector<1x16x8xf32> to vector<16x8xf32>
    %c0_36 = arith.constant 0 : index
    %c0_37 = arith.constant 0 : index
    %76 = vector.load %arg13[%c0_36, %c0_37] : memref<8x2432xf32, #tpu.memory_space<vmem>>, vector<8x2048xf32>
    %cst_38 = arith.constant dense<0.000000e+00> : vector<16x2048xf32>
    %77 = tpu.matmul %75, %76, %cst_38 {dimension_numbers = #tpu.dot_dimension_numbers<[1], [0], [0], [1], [0, 0, 1, 1], [], []>} : vector<16x8xf32>, vector<8x2048xf32>, vector<16x2048xf32> -> vector<16x2048xf32>
    %c1 = arith.constant 1 : index
    %c0_39 = arith.constant 0 : index
    %c0_40 = arith.constant 0 : index
    %78 = vector.load %arg3[%c1, %c0_39, %c0_40] : memref<9x16x8xf32, #tpu.memory_space<vmem>>, vector<1x16x8xf32>
    %79 = vector.shape_cast %78 : vector<1x16x8xf32> to vector<16x8xf32>
    %c0_41 = arith.constant 0 : index
    %c4_42 = arith.constant 4 : index
    %80 = vector.load %arg13[%c0_41, %c4_42] : memref<8x2432xf32, #tpu.memory_space<vmem>>, vector<8x2048xf32>
    %cst_43 = arith.constant dense<0.000000e+00> : vector<16x2048xf32>
    %81 = tpu.matmul %79, %80, %cst_43 {dimension_numbers = #tpu.dot_dimension_numbers<[1], [0], [0], [1], [0, 0, 1, 1], [], []>} : vector<16x8xf32>, vector<8x2048xf32>, vector<16x2048xf32> -> vector<16x2048xf32>
    %82 = arith.addf %77, %81 : vector<16x2048xf32>
    %c2_44 = arith.constant 2 : index
    %c0_45 = arith.constant 0 : index
    %c0_46 = arith.constant 0 : index
    %83 = vector.load %arg3[%c2_44, %c0_45, %c0_46] : memref<9x16x8xf32, #tpu.memory_space<vmem>>, vector<1x16x8xf32>
    %84 = vector.shape_cast %83 : vector<1x16x8xf32> to vector<16x8xf32>
    %c0_47 = arith.constant 0 : index
    %c8 = arith.constant 8 : index
    %85 = vector.load %arg13[%c0_47, %c8] : memref<8x2432xf32, #tpu.memory_space<vmem>>, vector<8x2048xf32>
    %cst_48 = arith.constant dense<0.000000e+00> : vector<16x2048xf32>
    %86 = tpu.matmul %84, %85, %cst_48 {dimension_numbers = #tpu.dot_dimension_numbers<[1], [0], [0], [1], [0, 0, 1, 1], [], []>} : vector<16x8xf32>, vector<8x2048xf32>, vector<16x2048xf32> -> vector<16x2048xf32>
    %87 = arith.addf %82, %86 : vector<16x2048xf32>
    %c3 = arith.constant 3 : index
    %c0_49 = arith.constant 0 : index
    %c0_50 = arith.constant 0 : index
    %88 = vector.load %arg3[%c3, %c0_49, %c0_50] : memref<9x16x8xf32, #tpu.memory_space<vmem>>, vector<1x16x8xf32>
    %89 = vector.shape_cast %88 : vector<1x16x8xf32> to vector<16x8xf32>
    %c0_51 = arith.constant 0 : index
    %c128_52 = arith.constant 128 : index
    %90 = vector.load %arg13[%c0_51, %c128_52] : memref<8x2432xf32, #tpu.memory_space<vmem>>, vector<8x2048xf32>
    %cst_53 = arith.constant dense<0.000000e+00> : vector<16x2048xf32>
    %91 = tpu.matmul %89, %90, %cst_53 {dimension_numbers = #tpu.dot_dimension_numbers<[1], [0], [0], [1], [0, 0, 1, 1], [], []>} : vector<16x8xf32>, vector<8x2048xf32>, vector<16x2048xf32> -> vector<16x2048xf32>
    %92 = arith.addf %87, %91 : vector<16x2048xf32>
    %c4_54 = arith.constant 4 : index
    %c0_55 = arith.constant 0 : index
    %c0_56 = arith.constant 0 : index
    %93 = vector.load %arg3[%c4_54, %c0_55, %c0_56] : memref<9x16x8xf32, #tpu.memory_space<vmem>>, vector<1x16x8xf32>
    %94 = vector.shape_cast %93 : vector<1x16x8xf32> to vector<16x8xf32>
    %c0_57 = arith.constant 0 : index
    %c132_58 = arith.constant 132 : index
    %95 = vector.load %arg13[%c0_57, %c132_58] : memref<8x2432xf32, #tpu.memory_space<vmem>>, vector<8x2048xf32>
    %cst_59 = arith.constant dense<0.000000e+00> : vector<16x2048xf32>
    %96 = tpu.matmul %94, %95, %cst_59 {dimension_numbers = #tpu.dot_dimension_numbers<[1], [0], [0], [1], [0, 0, 1, 1], [], []>} : vector<16x8xf32>, vector<8x2048xf32>, vector<16x2048xf32> -> vector<16x2048xf32>
    %97 = arith.addf %92, %96 : vector<16x2048xf32>
    %c5 = arith.constant 5 : index
    %c0_60 = arith.constant 0 : index
    %c0_61 = arith.constant 0 : index
    %98 = vector.load %arg3[%c5, %c0_60, %c0_61] : memref<9x16x8xf32, #tpu.memory_space<vmem>>, vector<1x16x8xf32>
    %99 = vector.shape_cast %98 : vector<1x16x8xf32> to vector<16x8xf32>
    %c0_62 = arith.constant 0 : index
    %c136 = arith.constant 136 : index
    %100 = vector.load %arg13[%c0_62, %c136] : memref<8x2432xf32, #tpu.memory_space<vmem>>, vector<8x2048xf32>
    %cst_63 = arith.constant dense<0.000000e+00> : vector<16x2048xf32>
    %101 = tpu.matmul %99, %100, %cst_63 {dimension_numbers = #tpu.dot_dimension_numbers<[1], [0], [0], [1], [0, 0, 1, 1], [], []>} : vector<16x8xf32>, vector<8x2048xf32>, vector<16x2048xf32> -> vector<16x2048xf32>
    %102 = arith.addf %97, %101 : vector<16x2048xf32>
    %c6 = arith.constant 6 : index
    %c0_64 = arith.constant 0 : index
    %c0_65 = arith.constant 0 : index
    %103 = vector.load %arg3[%c6, %c0_64, %c0_65] : memref<9x16x8xf32, #tpu.memory_space<vmem>>, vector<1x16x8xf32>
    %104 = vector.shape_cast %103 : vector<1x16x8xf32> to vector<16x8xf32>
    %c0_66 = arith.constant 0 : index
    %c256 = arith.constant 256 : index
    %105 = vector.load %arg13[%c0_66, %c256] : memref<8x2432xf32, #tpu.memory_space<vmem>>, vector<8x2048xf32>
    %cst_67 = arith.constant dense<0.000000e+00> : vector<16x2048xf32>
    %106 = tpu.matmul %104, %105, %cst_67 {dimension_numbers = #tpu.dot_dimension_numbers<[1], [0], [0], [1], [0, 0, 1, 1], [], []>} : vector<16x8xf32>, vector<8x2048xf32>, vector<16x2048xf32> -> vector<16x2048xf32>
    %107 = arith.addf %102, %106 : vector<16x2048xf32>
    %c7 = arith.constant 7 : index
    %c0_68 = arith.constant 0 : index
    %c0_69 = arith.constant 0 : index
    %108 = vector.load %arg3[%c7, %c0_68, %c0_69] : memref<9x16x8xf32, #tpu.memory_space<vmem>>, vector<1x16x8xf32>
    %109 = vector.shape_cast %108 : vector<1x16x8xf32> to vector<16x8xf32>
    %c0_70 = arith.constant 0 : index
    %c260 = arith.constant 260 : index
    %110 = vector.load %arg13[%c0_70, %c260] : memref<8x2432xf32, #tpu.memory_space<vmem>>, vector<8x2048xf32>
    %cst_71 = arith.constant dense<0.000000e+00> : vector<16x2048xf32>
    %111 = tpu.matmul %109, %110, %cst_71 {dimension_numbers = #tpu.dot_dimension_numbers<[1], [0], [0], [1], [0, 0, 1, 1], [], []>} : vector<16x8xf32>, vector<8x2048xf32>, vector<16x2048xf32> -> vector<16x2048xf32>
    %112 = arith.addf %107, %111 : vector<16x2048xf32>
    %c8_72 = arith.constant 8 : index
    %c0_73 = arith.constant 0 : index
    %c0_74 = arith.constant 0 : index
    %113 = vector.load %arg3[%c8_72, %c0_73, %c0_74] : memref<9x16x8xf32, #tpu.memory_space<vmem>>, vector<1x16x8xf32>
    %114 = vector.shape_cast %113 : vector<1x16x8xf32> to vector<16x8xf32>
    %c0_75 = arith.constant 0 : index
    %c264 = arith.constant 264 : index
    %115 = vector.load %arg13[%c0_75, %c264] : memref<8x2432xf32, #tpu.memory_space<vmem>>, vector<8x2048xf32>
    %cst_76 = arith.constant dense<0.000000e+00> : vector<16x2048xf32>
    %116 = tpu.matmul %114, %115, %cst_76 {dimension_numbers = #tpu.dot_dimension_numbers<[1], [0], [0], [1], [0, 0, 1, 1], [], []>} : vector<16x8xf32>, vector<8x2048xf32>, vector<16x2048xf32> -> vector<16x2048xf32>
    %117 = arith.addf %112, %116 : vector<16x2048xf32>
    %c0_77 = arith.constant 0 : index
    %c0_78 = arith.constant 0 : index
    %118 = vector.load %arg4[%c0_77, %c0_78] : memref<16x1xf32, #tpu.memory_space<vmem>>, vector<16x1xf32>
    %119 = vector.broadcast %118 : vector<16x1xf32> to vector<16x2048xf32>
    %120 = arith.addf %117, %119 : vector<16x2048xf32>
    %cst_79 = arith.constant 0.000000e+00 : f32
    %121 = vector.broadcast %cst_79 : f32 to vector<16x2048xf32>
    %122 = arith.maximumf %120, %121 : vector<16x2048xf32>
    %c0_80 = arith.constant 0 : index
    %c0_81 = arith.constant 0 : index
    %123 = vector.load %arg14[%c0_80, %c0_81] : memref<16x2432xf32, #tpu.memory_space<vmem>>, vector<16x2048xf32>
    tpu.vector_store %arg14[%c0_80, %c0_81], %122 {strides = array<i32>} : memref<16x2432xf32, #tpu.memory_space<vmem>>, vector<16x2048xf32>,
    %c0_82 = arith.constant 0 : index
    %c0_83 = arith.constant 0 : index
    %124 = vector.load %arg14[%c0_82, %c0_83] : memref<16x2432xf32, #tpu.memory_space<vmem>>, vector<16x2048xf32>
    %c0_84 = arith.constant 0 : index
    %c4_85 = arith.constant 4 : index
    %125 = vector.load %arg14[%c0_84, %c4_85] : memref<16x2432xf32, #tpu.memory_space<vmem>>, vector<16x2048xf32>
    %126 = arith.maximumf %124, %125 : vector<16x2048xf32>
    %c0_86 = arith.constant 0 : index
    %c128_87 = arith.constant 128 : index
    %127 = vector.load %arg14[%c0_86, %c128_87] : memref<16x2432xf32, #tpu.memory_space<vmem>>, vector<16x2048xf32>
    %128 = arith.maximumf %126, %127 : vector<16x2048xf32>
    %c0_88 = arith.constant 0 : index
    %c132_89 = arith.constant 132 : index
    %129 = vector.load %arg14[%c0_88, %c132_89] : memref<16x2432xf32, #tpu.memory_space<vmem>>, vector<16x2048xf32>
    %130 = arith.maximumf %128, %129 : vector<16x2048xf32>
    %c0_90 = arith.constant 0 : index
    %c0_91 = arith.constant 0 : index
    %131 = vector.load %arg15[%c0_90, %c0_91] : memref<16x2048xf32, #tpu.memory_space<vmem>>, vector<16x2048xf32>
    tpu.vector_store %arg15[%c0_90, %c0_91], %130 {strides = array<i32>} : memref<16x2048xf32, #tpu.memory_space<vmem>>, vector<16x2048xf32>,
    %c0_92 = arith.constant 0 : index
    %c0_93 = arith.constant 0 : index
    %132 = vector.load %arg15[%c0_92, %c0_93] : memref<16x2048xf32, #tpu.memory_space<vmem>>, vector<16x2xf32>
    %c0_94 = arith.constant 0 : index
    %c0_95 = arith.constant 0 : index
    %133 = vector.load %arg16[%c0_94, %c0_95] : memref<576x2xf32, #tpu.memory_space<vmem>>, vector<16x2xf32>
    tpu.vector_store %arg16[%c0_94, %c0_95], %132 {strides = array<i32>} : memref<576x2xf32, #tpu.memory_space<vmem>>, vector<16x2xf32>,
    %c0_96 = arith.constant 0 : index
    %c8_97 = arith.constant 8 : index
    %134 = vector.load %arg15[%c0_96, %c8_97] : memref<16x2048xf32, #tpu.memory_space<vmem>>, vector<16x2xf32>
    %c16 = arith.constant 16 : index
    %c0_98 = arith.constant 0 : index
    %135 = vector.load %arg16[%c16, %c0_98] : memref<576x2xf32, #tpu.memory_space<vmem>>, vector<16x2xf32>
    tpu.vector_store %arg16[%c16, %c0_98], %134 {strides = array<i32>} : memref<576x2xf32, #tpu.memory_space<vmem>>, vector<16x2xf32>,
    %c0_99 = arith.constant 0 : index
    %c16_100 = arith.constant 16 : index
    %136 = vector.load %arg15[%c0_99, %c16_100] : memref<16x2048xf32, #tpu.memory_space<vmem>>, vector<16x2xf32>
    %c32 = arith.constant 32 : index
    %c0_101 = arith.constant 0 : index
    %137 = vector.load %arg16[%c32, %c0_101] : memref<576x2xf32, #tpu.memory_space<vmem>>, vector<16x2xf32>
    tpu.vector_store %arg16[%c32, %c0_101], %136 {strides = array<i32>} : memref<576x2xf32, #tpu.memory_space<vmem>>, vector<16x2xf32>,
    %c0_102 = arith.constant 0 : index
    %c24 = arith.constant 24 : index
    %138 = vector.load %arg15[%c0_102, %c24] : memref<16x2048xf32, #tpu.memory_space<vmem>>, vector<16x2xf32>
    %c48 = arith.constant 48 : index
    %c0_103 = arith.constant 0 : index
    %139 = vector.load %arg16[%c48, %c0_103] : memref<576x2xf32, #tpu.memory_space<vmem>>, vector<16x2xf32>
    tpu.vector_store %arg16[%c48, %c0_103], %138 {strides = array<i32>} : memref<576x2xf32, #tpu.memory_space<vmem>>, vector<16x2xf32>,
    %c0_104 = arith.constant 0 : index
    %c32_105 = arith.constant 32 : index
    %140 = vector.load %arg15[%c0_104, %c32_105] : memref<16x2048xf32, #tpu.memory_space<vmem>>, vector<16x2xf32>
    %c64_106 = arith.constant 64 : index
    %c0_107 = arith.constant 0 : index
    %141 = vector.load %arg16[%c64_106, %c0_107] : memref<576x2xf32, #tpu.memory_space<vmem>>, vector<16x2xf32>
    tpu.vector_store %arg16[%c64_106, %c0_107], %140 {strides = array<i32>} : memref<576x2xf32, #tpu.memory_space<vmem>>, vector<16x2xf32>,
    %c0_108 = arith.constant 0 : index
    %c40 = arith.constant 40 : index
    %142 = vector.load %arg15[%c0_108, %c40] : memref<16x2048xf32, #tpu.memory_space<vmem>>, vector<16x2xf32>
    %c80 = arith.constant 80 : index
    %c0_109 = arith.constant 0 : index
    %143 = vector.load %arg16[%c80, %c0_109] : memref<576x2xf32, #tpu.memory_space<vmem>>, vector<16x2xf32>
    tpu.vector_store %arg16[%c80, %c0_109], %142 {strides = array<i32>} : memref<576x2xf32, #tpu.memory_space<vmem>>, vector<16x2xf32>,
    %c0_110 = arith.constant 0 : index
    %c256_111 = arith.constant 256 : index
    %144 = vector.load %arg15[%c0_110, %c256_111] : memref<16x2048xf32, #tpu.memory_space<vmem>>, vector<16x2xf32>
    %c96 = arith.constant 96 : index
    %c0_112 = arith.constant 0 : index
    %145 = vector.load %arg16[%c96, %c0_112] : memref<576x2xf32, #tpu.memory_space<vmem>>, vector<16x2xf32>
    tpu.vector_store %arg16[%c96, %c0_112], %144 {strides = array<i32>} : memref<576x2xf32, #tpu.memory_space<vmem>>, vector<16x2xf32>,
    %c0_113 = arith.constant 0 : index
    %c264_114 = arith.constant 264 : index
    %146 = vector.load %arg15[%c0_113, %c264_114] : memref<16x2048xf32, #tpu.memory_space<vmem>>, vector<16x2xf32>
    %c112 = arith.constant 112 : index
    %c0_115 = arith.constant 0 : index
    %147 = vector.load %arg16[%c112, %c0_115] : memref<576x2xf32, #tpu.memory_space<vmem>>, vector<16x2xf32>
    tpu.vector_store %arg16[%c112, %c0_115], %146 {strides = array<i32>} : memref<576x2xf32, #tpu.memory_space<vmem>>, vector<16x2xf32>,
    %c0_116 = arith.constant 0 : index
    %c272 = arith.constant 272 : index
    %148 = vector.load %arg15[%c0_116, %c272] : memref<16x2048xf32, #tpu.memory_space<vmem>>, vector<16x2xf32>
    %c128_117 = arith.constant 128 : index
    %c0_118 = arith.constant 0 : index
    %149 = vector.load %arg16[%c128_117, %c0_118] : memref<576x2xf32, #tpu.memory_space<vmem>>, vector<16x2xf32>
    tpu.vector_store %arg16[%c128_117, %c0_118], %148 {strides = array<i32>} : memref<576x2xf32, #tpu.memory_space<vmem>>, vector<16x2xf32>,
    %c0_119 = arith.constant 0 : index
    %c280 = arith.constant 280 : index
    %150 = vector.load %arg15[%c0_119, %c280] : memref<16x2048xf32, #tpu.memory_space<vmem>>, vector<16x2xf32>
    %c144 = arith.constant 144 : index
    %c0_120 = arith.constant 0 : index
    %151 = vector.load %arg16[%c144, %c0_120] : memref<576x2xf32, #tpu.memory_space<vmem>>, vector<16x2xf32>
    tpu.vector_store %arg16[%c144, %c0_120], %150 {strides = array<i32>} : memref<576x2xf32, #tpu.memory_space<vmem>>, vector<16x2xf32>,
    %c0_121 = arith.constant 0 : index
    %c288 = arith.constant 288 : index
    %152 = vector.load %arg15[%c0_121, %c288] : memref<16x2048xf32, #tpu.memory_space<vmem>>, vector<16x2xf32>
    %c160 = arith.constant 160 : index
    %c0_122 = arith.constant 0 : index
    %153 = vector.load %arg16[%c160, %c0_122] : memref<576x2xf32, #tpu.memory_space<vmem>>, vector<16x2xf32>
    tpu.vector_store %arg16[%c160, %c0_122], %152 {strides = array<i32>} : memref<576x2xf32, #tpu.memory_space<vmem>>, vector<16x2xf32>,
    %c0_123 = arith.constant 0 : index
    %c296 = arith.constant 296 : index
    %154 = vector.load %arg15[%c0_123, %c296] : memref<16x2048xf32, #tpu.memory_space<vmem>>, vector<16x2xf32>
    %c176 = arith.constant 176 : index
    %c0_124 = arith.constant 0 : index
    %155 = vector.load %arg16[%c176, %c0_124] : memref<576x2xf32, #tpu.memory_space<vmem>>, vector<16x2xf32>
    tpu.vector_store %arg16[%c176, %c0_124], %154 {strides = array<i32>} : memref<576x2xf32, #tpu.memory_space<vmem>>, vector<16x2xf32>,
    %c0_125 = arith.constant 0 : index
    %c512 = arith.constant 512 : index
    %156 = vector.load %arg15[%c0_125, %c512] : memref<16x2048xf32, #tpu.memory_space<vmem>>, vector<16x2xf32>
    %c192 = arith.constant 192 : index
    %c0_126 = arith.constant 0 : index
    %157 = vector.load %arg16[%c192, %c0_126] : memref<576x2xf32, #tpu.memory_space<vmem>>, vector<16x2xf32>
    tpu.vector_store %arg16[%c192, %c0_126], %156 {strides = array<i32>} : memref<576x2xf32, #tpu.memory_space<vmem>>, vector<16x2xf32>,
    %c0_127 = arith.constant 0 : index
    %c520 = arith.constant 520 : index
    %158 = vector.load %arg15[%c0_127, %c520] : memref<16x2048xf32, #tpu.memory_space<vmem>>, vector<16x2xf32>
    %c208 = arith.constant 208 : index
    %c0_128 = arith.constant 0 : index
    %159 = vector.load %arg16[%c208, %c0_128] : memref<576x2xf32, #tpu.memory_space<vmem>>, vector<16x2xf32>
    tpu.vector_store %arg16[%c208, %c0_128], %158 {strides = array<i32>} : memref<576x2xf32, #tpu.memory_space<vmem>>, vector<16x2xf32>,
    %c0_129 = arith.constant 0 : index
    %c528 = arith.constant 528 : index
    %160 = vector.load %arg15[%c0_129, %c528] : memref<16x2048xf32, #tpu.memory_space<vmem>>, vector<16x2xf32>
    %c224 = arith.constant 224 : index
    %c0_130 = arith.constant 0 : index
    %161 = vector.load %arg16[%c224, %c0_130] : memref<576x2xf32, #tpu.memory_space<vmem>>, vector<16x2xf32>
    tpu.vector_store %arg16[%c224, %c0_130], %160 {strides = array<i32>} : memref<576x2xf32, #tpu.memory_space<vmem>>, vector<16x2xf32>,
    %c0_131 = arith.constant 0 : index
    %c536 = arith.constant 536 : index
    %162 = vector.load %arg15[%c0_131, %c536] : memref<16x2048xf32, #tpu.memory_space<vmem>>, vector<16x2xf32>
    %c240 = arith.constant 240 : index
    %c0_132 = arith.constant 0 : index
    %163 = vector.load %arg16[%c240, %c0_132] : memref<576x2xf32, #tpu.memory_space<vmem>>, vector<16x2xf32>
    tpu.vector_store %arg16[%c240, %c0_132], %162 {strides = array<i32>} : memref<576x2xf32, #tpu.memory_space<vmem>>, vector<16x2xf32>,
    %c0_133 = arith.constant 0 : index
    %c544 = arith.constant 544 : index
    %164 = vector.load %arg15[%c0_133, %c544] : memref<16x2048xf32, #tpu.memory_space<vmem>>, vector<16x2xf32>
    %c256_134 = arith.constant 256 : index
    %c0_135 = arith.constant 0 : index
    %165 = vector.load %arg16[%c256_134, %c0_135] : memref<576x2xf32, #tpu.memory_space<vmem>>, vector<16x2xf32>
    tpu.vector_store %arg16[%c256_134, %c0_135], %164 {strides = array<i32>} : memref<576x2xf32, #tpu.memory_space<vmem>>, vector<16x2xf32>,
    %c0_136 = arith.constant 0 : index
    %c552 = arith.constant 552 : index
    %166 = vector.load %arg15[%c0_136, %c552] : memref<16x2048xf32, #tpu.memory_space<vmem>>, vector<16x2xf32>
    %c272_137 = arith.constant 272 : index
    %c0_138 = arith.constant 0 : index
    %167 = vector.load %arg16[%c272_137, %c0_138] : memref<576x2xf32, #tpu.memory_space<vmem>>, vector<16x2xf32>
    tpu.vector_store %arg16[%c272_137, %c0_138], %166 {strides = array<i32>} : memref<576x2xf32, #tpu.memory_space<vmem>>, vector<16x2xf32>,
    %c0_139 = arith.constant 0 : index
    %c768 = arith.constant 768 : index
    %168 = vector.load %arg15[%c0_139, %c768] : memref<16x2048xf32, #tpu.memory_space<vmem>>, vector<16x2xf32>
    %c288_140 = arith.constant 288 : index
    %c0_141 = arith.constant 0 : index
    %169 = vector.load %arg16[%c288_140, %c0_141] : memref<576x2xf32, #tpu.memory_space<vmem>>, vector<16x2xf32>
    tpu.vector_store %arg16[%c288_140, %c0_141], %168 {strides = array<i32>} : memref<576x2xf32, #tpu.memory_space<vmem>>, vector<16x2xf32>,
    %c0_142 = arith.constant 0 : index
    %c776 = arith.constant 776 : index
    %170 = vector.load %arg15[%c0_142, %c776] : memref<16x2048xf32, #tpu.memory_space<vmem>>, vector<16x2xf32>
    %c304 = arith.constant 304 : index
    %c0_143 = arith.constant 0 : index
    %171 = vector.load %arg16[%c304, %c0_143] : memref<576x2xf32, #tpu.memory_space<vmem>>, vector<16x2xf32>
    tpu.vector_store %arg16[%c304, %c0_143], %170 {strides = array<i32>} : memref<576x2xf32, #tpu.memory_space<vmem>>, vector<16x2xf32>,
    %c0_144 = arith.constant 0 : index
    %c784 = arith.constant 784 : index
    %172 = vector.load %arg15[%c0_144, %c784] : memref<16x2048xf32, #tpu.memory_space<vmem>>, vector<16x2xf32>
    %c320 = arith.constant 320 : index
    %c0_145 = arith.constant 0 : index
    %173 = vector.load %arg16[%c320, %c0_145] : memref<576x2xf32, #tpu.memory_space<vmem>>, vector<16x2xf32>
    tpu.vector_store %arg16[%c320, %c0_145], %172 {strides = array<i32>} : memref<576x2xf32, #tpu.memory_space<vmem>>, vector<16x2xf32>,
    %c0_146 = arith.constant 0 : index
    %c792 = arith.constant 792 : index
    %174 = vector.load %arg15[%c0_146, %c792] : memref<16x2048xf32, #tpu.memory_space<vmem>>, vector<16x2xf32>
    %c336 = arith.constant 336 : index
    %c0_147 = arith.constant 0 : index
    %175 = vector.load %arg16[%c336, %c0_147] : memref<576x2xf32, #tpu.memory_space<vmem>>, vector<16x2xf32>
    tpu.vector_store %arg16[%c336, %c0_147], %174 {strides = array<i32>} : memref<576x2xf32, #tpu.memory_space<vmem>>, vector<16x2xf32>,
    %c0_148 = arith.constant 0 : index
    %c800 = arith.constant 800 : index
    %176 = vector.load %arg15[%c0_148, %c800] : memref<16x2048xf32, #tpu.memory_space<vmem>>, vector<16x2xf32>
    %c352 = arith.constant 352 : index
    %c0_149 = arith.constant 0 : index
    %177 = vector.load %arg16[%c352, %c0_149] : memref<576x2xf32, #tpu.memory_space<vmem>>, vector<16x2xf32>
    tpu.vector_store %arg16[%c352, %c0_149], %176 {strides = array<i32>} : memref<576x2xf32, #tpu.memory_space<vmem>>, vector<16x2xf32>,
    %c0_150 = arith.constant 0 : index
    %c808 = arith.constant 808 : index
    %178 = vector.load %arg15[%c0_150, %c808] : memref<16x2048xf32, #tpu.memory_space<vmem>>, vector<16x2xf32>
    %c368 = arith.constant 368 : index
    %c0_151 = arith.constant 0 : index
    %179 = vector.load %arg16[%c368, %c0_151] : memref<576x2xf32, #tpu.memory_space<vmem>>, vector<16x2xf32>
    tpu.vector_store %arg16[%c368, %c0_151], %178 {strides = array<i32>} : memref<576x2xf32, #tpu.memory_space<vmem>>, vector<16x2xf32>,
    %c0_152 = arith.constant 0 : index
    %c1024 = arith.constant 1024 : index
    %180 = vector.load %arg15[%c0_152, %c1024] : memref<16x2048xf32, #tpu.memory_space<vmem>>, vector<16x2xf32>
    %c384 = arith.constant 384 : index
    %c0_153 = arith.constant 0 : index
    %181 = vector.load %arg16[%c384, %c0_153] : memref<576x2xf32, #tpu.memory_space<vmem>>, vector<16x2xf32>
    tpu.vector_store %arg16[%c384, %c0_153], %180 {strides = array<i32>} : memref<576x2xf32, #tpu.memory_space<vmem>>, vector<16x2xf32>,
    %c0_154 = arith.constant 0 : index
    %c1032 = arith.constant 1032 : index
    %182 = vector.load %arg15[%c0_154, %c1032] : memref<16x2048xf32, #tpu.memory_space<vmem>>, vector<16x2xf32>
    %c400 = arith.constant 400 : index
    %c0_155 = arith.constant 0 : index
    %183 = vector.load %arg16[%c400, %c0_155] : memref<576x2xf32, #tpu.memory_space<vmem>>, vector<16x2xf32>
    tpu.vector_store %arg16[%c400, %c0_155], %182 {strides = array<i32>} : memref<576x2xf32, #tpu.memory_space<vmem>>, vector<16x2xf32>,
    %c0_156 = arith.constant 0 : index
    %c1040 = arith.constant 1040 : index
    %184 = vector.load %arg15[%c0_156, %c1040] : memref<16x2048xf32, #tpu.memory_space<vmem>>, vector<16x2xf32>
    %c416 = arith.constant 416 : index
    %c0_157 = arith.constant 0 : index
    %185 = vector.load %arg16[%c416, %c0_157] : memref<576x2xf32, #tpu.memory_space<vmem>>, vector<16x2xf32>
    tpu.vector_store %arg16[%c416, %c0_157], %184 {strides = array<i32>} : memref<576x2xf32, #tpu.memory_space<vmem>>, vector<16x2xf32>,
    %c0_158 = arith.constant 0 : index
    %c1048 = arith.constant 1048 : index
    %186 = vector.load %arg15[%c0_158, %c1048] : memref<16x2048xf32, #tpu.memory_space<vmem>>, vector<16x2xf32>
    %c432 = arith.constant 432 : index
    %c0_159 = arith.constant 0 : index
    %187 = vector.load %arg16[%c432, %c0_159] : memref<576x2xf32, #tpu.memory_space<vmem>>, vector<16x2xf32>
    tpu.vector_store %arg16[%c432, %c0_159], %186 {strides = array<i32>} : memref<576x2xf32, #tpu.memory_space<vmem>>, vector<16x2xf32>,
    %c0_160 = arith.constant 0 : index
    %c1056 = arith.constant 1056 : index
    %188 = vector.load %arg15[%c0_160, %c1056] : memref<16x2048xf32, #tpu.memory_space<vmem>>, vector<16x2xf32>
    %c448 = arith.constant 448 : index
    %c0_161 = arith.constant 0 : index
    %189 = vector.load %arg16[%c448, %c0_161] : memref<576x2xf32, #tpu.memory_space<vmem>>, vector<16x2xf32>
    tpu.vector_store %arg16[%c448, %c0_161], %188 {strides = array<i32>} : memref<576x2xf32, #tpu.memory_space<vmem>>, vector<16x2xf32>,
    %c0_162 = arith.constant 0 : index
    %c1064 = arith.constant 1064 : index
    %190 = vector.load %arg15[%c0_162, %c1064] : memref<16x2048xf32, #tpu.memory_space<vmem>>, vector<16x2xf32>
    %c464 = arith.constant 464 : index
    %c0_163 = arith.constant 0 : index
    %191 = vector.load %arg16[%c464, %c0_163] : memref<576x2xf32, #tpu.memory_space<vmem>>, vector<16x2xf32>
    tpu.vector_store %arg16[%c464, %c0_163], %190 {strides = array<i32>} : memref<576x2xf32, #tpu.memory_space<vmem>>, vector<16x2xf32>,
    %c0_164 = arith.constant 0 : index
    %c1280 = arith.constant 1280 : index
    %192 = vector.load %arg15[%c0_164, %c1280] : memref<16x2048xf32, #tpu.memory_space<vmem>>, vector<16x2xf32>
    %c480 = arith.constant 480 : index
    %c0_165 = arith.constant 0 : index
    %193 = vector.load %arg16[%c480, %c0_165] : memref<576x2xf32, #tpu.memory_space<vmem>>, vector<16x2xf32>
    tpu.vector_store %arg16[%c480, %c0_165], %192 {strides = array<i32>} : memref<576x2xf32, #tpu.memory_space<vmem>>, vector<16x2xf32>,
    %c0_166 = arith.constant 0 : index
    %c1288 = arith.constant 1288 : index
    %194 = vector.load %arg15[%c0_166, %c1288] : memref<16x2048xf32, #tpu.memory_space<vmem>>, vector<16x2xf32>
    %c496 = arith.constant 496 : index
    %c0_167 = arith.constant 0 : index
    %195 = vector.load %arg16[%c496, %c0_167] : memref<576x2xf32, #tpu.memory_space<vmem>>, vector<16x2xf32>
    tpu.vector_store %arg16[%c496, %c0_167], %194 {strides = array<i32>} : memref<576x2xf32, #tpu.memory_space<vmem>>, vector<16x2xf32>,
    %c0_168 = arith.constant 0 : index
    %c1296 = arith.constant 1296 : index
    %196 = vector.load %arg15[%c0_168, %c1296] : memref<16x2048xf32, #tpu.memory_space<vmem>>, vector<16x2xf32>
    %c512_169 = arith.constant 512 : index
    %c0_170 = arith.constant 0 : index
    %197 = vector.load %arg16[%c512_169, %c0_170] : memref<576x2xf32, #tpu.memory_space<vmem>>, vector<16x2xf32>
    tpu.vector_store %arg16[%c512_169, %c0_170], %196 {strides = array<i32>} : memref<576x2xf32, #tpu.memory_space<vmem>>, vector<16x2xf32>,
    %c0_171 = arith.constant 0 : index
    %c1304 = arith.constant 1304 : index
    %198 = vector.load %arg15[%c0_171, %c1304] : memref<16x2048xf32, #tpu.memory_space<vmem>>, vector<16x2xf32>
    %c528_172 = arith.constant 528 : index
    %c0_173 = arith.constant 0 : index
    %199 = vector.load %arg16[%c528_172, %c0_173] : memref<576x2xf32, #tpu.memory_space<vmem>>, vector<16x2xf32>
    tpu.vector_store %arg16[%c528_172, %c0_173], %198 {strides = array<i32>} : memref<576x2xf32, #tpu.memory_space<vmem>>, vector<16x2xf32>,
    %c0_174 = arith.constant 0 : index
    %c1312 = arith.constant 1312 : index
    %200 = vector.load %arg15[%c0_174, %c1312] : memref<16x2048xf32, #tpu.memory_space<vmem>>, vector<16x2xf32>
    %c544_175 = arith.constant 544 : index
    %c0_176 = arith.constant 0 : index
    %201 = vector.load %arg16[%c544_175, %c0_176] : memref<576x2xf32, #tpu.memory_space<vmem>>, vector<16x2xf32>
    tpu.vector_store %arg16[%c544_175, %c0_176], %200 {strides = array<i32>} : memref<576x2xf32, #tpu.memory_space<vmem>>, vector<16x2xf32>,
    %c0_177 = arith.constant 0 : index
    %c1320 = arith.constant 1320 : index
    %202 = vector.load %arg15[%c0_177, %c1320] : memref<16x2048xf32, #tpu.memory_space<vmem>>, vector<16x2xf32>
    %c560 = arith.constant 560 : index
    %c0_178 = arith.constant 0 : index
    %203 = vector.load %arg16[%c560, %c0_178] : memref<576x2xf32, #tpu.memory_space<vmem>>, vector<16x2xf32>
    tpu.vector_store %arg16[%c560, %c0_178], %202 {strides = array<i32>} : memref<576x2xf32, #tpu.memory_space<vmem>>, vector<16x2xf32>,
    %c0_179 = arith.constant 0 : index
    %c0_180 = arith.constant 0 : index
    %204 = vector.load %arg16[%c0_179, %c0_180] : memref<576x2xf32, #tpu.memory_space<vmem>>, vector<576x2xf32>
    %c0_181 = arith.constant 0 : index
    %c0_182 = arith.constant 0 : index
    %205 = vector.load %arg5[%c0_181, %c0_182] : memref<120x576xf32, #tpu.memory_space<vmem>>, vector<120x576xf32>
    %cst_183 = arith.constant dense<0.000000e+00> : vector<120x2xf32>
    %206 = tpu.matmul %205, %204, %cst_183 {dimension_numbers = #tpu.dot_dimension_numbers<[1], [0], [0], [1], [0, 0, 1, 1], [], []>} : vector<120x576xf32>, vector<576x2xf32>, vector<120x2xf32> -> vector<120x2xf32>
    %c0_184 = arith.constant 0 : index
    %c0_185 = arith.constant 0 : index
    %207 = vector.load %arg6[%c0_184, %c0_185] : memref<120x1xf32, #tpu.memory_space<vmem>>, vector<120x1xf32>
    %208 = vector.broadcast %207 : vector<120x1xf32> to vector<120x2xf32>
    %209 = arith.addf %206, %208 : vector<120x2xf32>
    %cst_186 = arith.constant 0.000000e+00 : f32
    %210 = vector.broadcast %cst_186 : f32 to vector<120x2xf32>
    %211 = arith.maximumf %209, %210 : vector<120x2xf32>
    %c0_187 = arith.constant 0 : index
    %c0_188 = arith.constant 0 : index
    %212 = vector.load %arg7[%c0_187, %c0_188] : memref<84x120xf32, #tpu.memory_space<vmem>>, vector<84x120xf32>
    %cst_189 = arith.constant dense<0.000000e+00> : vector<84x2xf32>
    %213 = tpu.matmul %212, %211, %cst_189 {dimension_numbers = #tpu.dot_dimension_numbers<[1], [0], [0], [1], [0, 0, 1, 1], [], []>} : vector<84x120xf32>, vector<120x2xf32>, vector<84x2xf32> -> vector<84x2xf32>
    %c0_190 = arith.constant 0 : index
    %c0_191 = arith.constant 0 : index
    %214 = vector.load %arg8[%c0_190, %c0_191] : memref<84x1xf32, #tpu.memory_space<vmem>>, vector<84x1xf32>
    %215 = vector.broadcast %214 : vector<84x1xf32> to vector<84x2xf32>
    %216 = arith.addf %213, %215 : vector<84x2xf32>
    %cst_192 = arith.constant 0.000000e+00 : f32
    %217 = vector.broadcast %cst_192 : f32 to vector<84x2xf32>
    %218 = arith.maximumf %216, %217 : vector<84x2xf32>
    %c0_193 = arith.constant 0 : index
    %c0_194 = arith.constant 0 : index
    %219 = vector.load %arg9[%c0_193, %c0_194] : memref<10x84xf32, #tpu.memory_space<vmem>>, vector<10x84xf32>
    %cst_195 = arith.constant dense<0.000000e+00> : vector<10x2xf32>
    %220 = tpu.matmul %219, %218, %cst_195 {dimension_numbers = #tpu.dot_dimension_numbers<[1], [0], [0], [1], [0, 0, 1, 1], [], []>} : vector<10x84xf32>, vector<84x2xf32>, vector<10x2xf32> -> vector<10x2xf32>
    %c0_196 = arith.constant 0 : index
    %c0_197 = arith.constant 0 : index
    %221 = vector.load %arg10[%c0_196, %c0_197] : memref<10x1xf32, #tpu.memory_space<vmem>>, vector<10x1xf32>
    %222 = vector.broadcast %221 : vector<10x1xf32> to vector<10x2xf32>
    %223 = arith.addf %220, %222 : vector<10x2xf32>
    %c0_198 = arith.constant 0 : index
    %c0_199 = arith.constant 0 : index
    %224 = vector.load %arg11[%c0_198, %c0_199] : memref<10x2xf32, #tpu.memory_space<vmem>>, vector<10x2xf32>
    tpu.vector_store %arg11[%c0_198, %c0_199], %223 {strides = array<i32>} : memref<10x2xf32, #tpu.memory_space<vmem>>, vector<10x2xf32>,
    return
  }
}

</mosaic_0001>

<llo_original>
// kernel: net_forward.1
$region0: #{net_forward.1}
  #allocation0 [shape = 'u32[]', space=smem, size = 0x4, offset = 0x4, fixed_abs, tag = 'smem constant byte address 0x4 - core index']
  #allocation1 [shape = 'u32[144,128]{1,0:T(1,128)}', space=vmem, size = 0x12000, scoped, tag = 'internal scratch']
  #allocation2 [shape = 'f32[8,2432]{1,0:T(8,128)}', space=vmem, size = 0x13000, scoped, tag = 'scratch operand']
  #allocation3 [shape = 'f32[8,2432]{1,0:T(8,128)}', space=vmem, size = 0x13000, scoped, tag = 'scratch operand']
  #allocation4 [shape = 'f32[16,2432]{1,0:T(8,128)}', space=vmem, size = 0x26000, scoped, tag = 'scratch operand']
  #allocation5 [shape = 'f32[16,2048]{1,0:T(8,128)}', space=vmem, size = 0x20000, scoped, tag = 'scratch operand']
  #allocation6 [shape = 'f32[576,2]{1,0:T(8,128)}', space=vmem, size = 0x48000, scoped, tag = 'scratch operand']
  %s0 = inlined_call_operand.vmem [shape: f32[1,2432], index: 0, kind: input, shape index: {}]
  %s1 = inlined_call_operand.vmem [shape: f32[8,9], index: 1, kind: input, shape index: {}]
  %s2 = inlined_call_operand.vmem [shape: f32[8,1], index: 2, kind: input, shape index: {}]
  %s3 = inlined_call_operand.vmem [shape: f32[9,16,8], index: 3, kind: input, shape index: {}]
  %s4 = inlined_call_operand.vmem [shape: f32[16,1], index: 4, kind: input, shape index: {}]
  %s5 = inlined_call_operand.vmem [shape: f32[120,576], index: 5, kind: input, shape index: {}]
  %s6 = inlined_call_operand.vmem [shape: f32[120,1], index: 6, kind: input, shape index: {}]
  %s7 = inlined_call_operand.vmem [shape: f32[84,120], index: 7, kind: input, shape index: {}]
  %s8 = inlined_call_operand.vmem [shape: f32[84,1], index: 8, kind: input, shape index: {}]
  %s9 = inlined_call_operand.vmem [shape: f32[10,84], index: 9, kind: input, shape index: {}]
  %s10 = inlined_call_operand.vmem [shape: f32[10,1], index: 10, kind: input, shape index: {}]
  %s11 = inlined_call_operand.vmem [shape: f32[10,2], index: 11, kind: output, shape index: {}]
  %s12 = sld [smem:[#allocation0]]
  $region54: #{net_forward.1} parent=0
    _
  %s14 = ssub.s32 1, %s12
  %s15 = scalar_select 0, %s14, %s12
  // Predicated region
  $region2: #{net_forward.1} parent=0 // pred_check
    _
  $region3: #{net_forward.1} parent=0 // pred_check_branch
    %17 = sbr.rel (0) target = $region5
  $region4: #{net_forward.1} parent=0 // pred_region
    _
  $region5: #{net_forward.1} parent=0 // pred_fallthru
    _
  // Predicated region
  $region6: #{net_forward.1} parent=0 // pred_check
    _
  $region7: #{net_forward.1} parent=0 // pred_check_branch
    %19 = sbr.rel (0) target = $region9
  $region8: #{net_forward.1} parent=0 // pred_region
    _
  $region9: #{net_forward.1} parent=0 // pred_fallthru
    _
  // Predicated region
  $region10: #{net_forward.1} parent=0 // pred_check
    _
  $region11: #{net_forward.1} parent=0 // pred_check_branch
    %21 = sbr.rel (0) target = $region13
  $region12: #{net_forward.1} parent=0 // pred_region
    _
  $region13: #{net_forward.1} parent=0 // pred_fallthru
    _
  // Predicated region
  $region14: #{net_forward.1} parent=0 // pred_check
    _
  $region15: #{net_forward.1} parent=0 // pred_check_branch
    %23 = sbr.rel (0) target = $region17
  $region16: #{net_forward.1} parent=0 // pred_region
    _
  $region17: #{net_forward.1} parent=0 // pred_fallthru
    _
  // Predicated region
  $region18: #{net_forward.1} parent=0 // pred_check
    _
  $region19: #{net_forward.1} parent=0 // pred_check_branch
    %25 = sbr.rel (0) target = $region21
  $region20: #{net_forward.1} parent=0 // pred_region
    _
  $region21: #{net_forward.1} parent=0 // pred_fallthru
    _
  // Predicated region
  $region22: #{net_forward.1} parent=0 // pred_check
    _
  $region23: #{net_forward.1} parent=0 // pred_check_branch
    %27 = sbr.rel (0) target = $region25
  $region24: #{net_forward.1} parent=0 // pred_region
    _
  $region25: #{net_forward.1} parent=0 // pred_fallthru
    _
  // Predicated region
  $region26: #{net_forward.1} parent=0 // pred_check
    _
  $region27: #{net_forward.1} parent=0 // pred_check_branch
    %29 = sbr.rel (0) target = $region29
  $region28: #{net_forward.1} parent=0 // pred_region
    _
  $region29: #{net_forward.1} parent=0 // pred_fallthru
    _
  // Predicated region
  $region30: #{net_forward.1} parent=0 // pred_check
    _
  $region31: #{net_forward.1} parent=0 // pred_check_branch
    %31 = sbr.rel (0) target = $region33
  $region32: #{net_forward.1} parent=0 // pred_region
    _
  $region33: #{net_forward.1} parent=0 // pred_fallthru
    _
  // Predicated region
  $region34: #{net_forward.1} parent=0 // pred_check
    _
  $region35: #{net_forward.1} parent=0 // pred_check_branch
    %33 = sbr.rel (0) target = $region37
  $region36: #{net_forward.1} parent=0 // pred_region
    _
  $region37: #{net_forward.1} parent=0 // pred_fallthru
    _
  // Predicated region
  $region38: #{net_forward.1} parent=0 // pred_check
    _
  $region39: #{net_forward.1} parent=0 // pred_check_branch
    %35 = sbr.rel (0) target = $region41
  $region40: #{net_forward.1} parent=0 // pred_region
    _
  $region41: #{net_forward.1} parent=0 // pred_fallthru
    _
  // Predicated region
  $region42: #{net_forward.1} parent=0 // pred_check
    _
  $region43: #{net_forward.1} parent=0 // pred_check_branch
    %37 = sbr.rel (0) target = $region45
  $region44: #{net_forward.1} parent=0 // pred_region
    _
  $region45: #{net_forward.1} parent=0 // pred_fallthru
    _
  %38 = vst [vmem:[#allocation2 + $0x80] sm:$0xff] 0.0
  %39 = vst [vmem:[#allocation2 + $0x88] sm:$0xff] 0.0
  %40 = vst [vmem:[#allocation2 + $0x90] sm:$0xff] 0.0
  %41 = vst [vmem:[#allocation3 + $0x80] sm:$0xff] 0.0
  %42 = vst [vmem:[#allocation3 + $0x88] sm:$0xff] 0.0
  %43 = vst [vmem:[#allocation3 + $0x90] sm:$0xff] 0.0
  %44 = vst [vmem:[#allocation4 + $0x80] sm:$0xff] 0.0
  %45 = vst [vmem:[#allocation4 + $0x88] sm:$0xff] 0.0
  %46 = vst [vmem:[#allocation4 + $0x90] sm:$0xff] 0.0
  %47 = vst [vmem:[#allocation4 + $0x118] sm:$0xff] 0.0
  %48 = vst [vmem:[#allocation4 + $0x120] sm:$0xff] 0.0
  %49 = vst [vmem:[#allocation4 + $0x128] sm:$0xff] 0.0
  %v50 = vld [vmem:[%s1] sm:$0xff]
  %v51 = vld [vmem:[%s2] sm:$0xff]
  %v52 = vld [vmem:[%s0] sm:$0xff]
  %v53 = vld [vmem:[%s0 + $0x8] sm:$0xff]
  %55 = vset.pattern.permute.xlu0 0
  %56 = vperm.xlu0 %55, %v50
  %v57 = vpop.permute.xlu0 %56
  %v61 = vlaneseq
  %v62 = vshrl.u32 %v61, 7
  %v63 = vsub.s32 0, %v62
  %v64 = vrot.slane %v52, %v63
  %v65 = vlaneseq
  %v66 = vshrl.u32 %v65, 7
  %v67 = vsub.s32 1, %v66
  %v68 = vrot.slane %v52, %v67
  %v69 = vlaneseq
  %v70 = vshrl.u32 %v69, 7
  %v71 = vsub.s32 2, %v70
  %v72 = vrot.slane %v52, %v71
  %v73 = vlaneseq
  %v74 = vshrl.u32 %v73, 7
  %v75 = vsub.s32 3, %v74
  %v76 = vrot.slane %v52, %v75
  %v77 = vlaneseq
  %v78 = vshrl.u32 %v77, 7
  %v79 = vsub.s32 4, %v78
  %v80 = vrot.slane %v52, %v79
  %v81 = vlaneseq
  %v82 = vshrl.u32 %v81, 7
  %v83 = vsub.s32 5, %v82
  %v84 = vrot.slane %v52, %v83
  %v85 = vlaneseq
  %v86 = vshrl.u32 %v85, 7
  %v87 = vsub.s32 6, %v86
  %v88 = vrot.slane %v52, %v87
  %v89 = vlaneseq
  %v90 = vshrl.u32 %v89, 7
  %v91 = vsub.s32 7, %v90
  %v92 = vrot.slane %v52, %v91
  %v93 = vlaneseq
  %v94 = vshrl.u32 %v93, 7
  %v95 = vsub.s32 0, %v94
  %v96 = vrot.slane %v53, %v95
  %v97 = vlaneseq
  %v98 = vshrl.u32 %v97, 7
  %v99 = vsub.s32 1, %v98
  %v100 = vrot.slane %v53, %v99
  %v101 = vlaneseq
  %v102 = vshrl.u32 %v101, 7
  %v103 = vsub.s32 2, %v102
  %v104 = vrot.slane %v53, %v103
  %v105 = vlaneseq
  %v106 = vshrl.u32 %v105, 7
  %v107 = vsub.s32 3, %v106
  %v108 = vrot.slane %v53, %v107
  %v109 = vlaneseq
  %v110 = vshrl.u32 %v109, 7
  %v111 = vsub.s32 4, %v110
  %v112 = vrot.slane %v53, %v111
  %v113 = vlaneseq
  %v114 = vshrl.u32 %v113, 7
  %v115 = vsub.s32 5, %v114
  %v116 = vrot.slane %v53, %v115
  %v117 = vlaneseq
  %v118 = vshrl.u32 %v117, 7
  %v119 = vsub.s32 6, %v118
  %v120 = vrot.slane %v53, %v119
  %v121 = vlaneseq
  %v122 = vshrl.u32 %v121, 7
  %v123 = vsub.s32 7, %v122
  %v124 = vrot.slane %v53, %v123
  %v141 = vmul.f32 %v57, %v64
  %v142 = vmul.f32 %v57, %v68
  %v143 = vmul.f32 %v57, %v72
  %v144 = vmul.f32 %v57, %v76
  %v145 = vmul.f32 %v57, %v80
  %v146 = vmul.f32 %v57, %v84
  %v147 = vmul.f32 %v57, %v88
  %v148 = vmul.f32 %v57, %v92
  %v149 = vmul.f32 %v57, %v96
  %v150 = vmul.f32 %v57, %v100
  %v151 = vmul.f32 %v57, %v104
  %v152 = vmul.f32 %v57, %v108
  %v153 = vmul.f32 %v57, %v112
  %v154 = vmul.f32 %v57, %v116
  %v155 = vmul.f32 %v57, %v120
  %v156 = vmul.f32 %v57, %v124
  %158 = vset.pattern.permute.xlu0 0
  %159 = vperm.xlu0 %158, %v51
  %v160 = vpop.permute.xlu0 %159
  %v162 = vadd.f32 %v160, %v141
  %v163 = vadd.f32 %v160, %v142
  %v164 = vadd.f32 %v160, %v143
  %v165 = vadd.f32 %v160, %v144
  %v166 = vadd.f32 %v160, %v145
  %v167 = vadd.f32 %v160, %v146
  %v168 = vadd.f32 %v160, %v147
  %v169 = vadd.f32 %v160, %v148
  %v170 = vadd.f32 %v160, %v149
  %v171 = vadd.f32 %v160, %v150
  %v172 = vadd.f32 %v160, %v151
  %v173 = vadd.f32 %v160, %v152
  %v174 = vadd.f32 %v160, %v153
  %v175 = vadd.f32 %v160, %v154
  %v176 = vadd.f32 %v160, %v155
  %v177 = vadd.f32 %v160, %v156
  %v178 = vld [vmem:[%s0] sm:$0xff]
  %v179 = vld [vmem:[%s0 + $0x8] sm:$0xff]
  %v180 = vld [vmem:[%s0 + $0x10] sm:$0x1]
  %181 = vset.pattern.permute.xlu0 1
  %182 = vperm.xlu0 %181, %v50
  %v183 = vpop.permute.xlu0 %182
  %v188 = vlaneseq
  %v189 = vshrl.u32 %v188, 7
  %v190 = vsub.s32 0, %v189
  %v191 = vrot.slane %v178, %v190
  %v192 = vlaneseq
  %v193 = vshrl.u32 %v192, 7
  %v194 = vsub.s32 1, %v193
  %v195 = vrot.slane %v178, %v194
  %v196 = vlaneseq
  %v197 = vshrl.u32 %v196, 7
  %v198 = vsub.s32 2, %v197
  %v199 = vrot.slane %v178, %v198
  %v200 = vlaneseq
  %v201 = vshrl.u32 %v200, 7
  %v202 = vsub.s32 3, %v201
  %v203 = vrot.slane %v178, %v202
  %v204 = vlaneseq
  %v205 = vshrl.u32 %v204, 7
  %v206 = vsub.s32 4, %v205
  %v207 = vrot.slane %v178, %v206
  %v208 = vlaneseq
  %v209 = vshrl.u32 %v208, 7
  %v210 = vsub.s32 5, %v209
  %v211 = vrot.slane %v178, %v210
  %v212 = vlaneseq
  %v213 = vshrl.u32 %v212, 7
  %v214 = vsub.s32 6, %v213
  %v215 = vrot.slane %v178, %v214
  %v216 = vlaneseq
  %v217 = vshrl.u32 %v216, 7
  %v218 = vsub.s32 7, %v217
  %v219 = vrot.slane %v178, %v218
  %v220 = vlaneseq
  %v221 = vshrl.u32 %v220, 7
  %v222 = vsub.s32 0, %v221
  %v223 = vrot.slane %v179, %v222
  %v224 = vlaneseq
  %v225 = vshrl.u32 %v224, 7
  %v226 = vsub.s32 1, %v225
  %v227 = vrot.slane %v179, %v226
  %v228 = vlaneseq
  %v229 = vshrl.u32 %v228, 7
  %v230 = vsub.s32 2, %v229
  %v231 = vrot.slane %v179, %v230
  %v232 = vlaneseq
  %v233 = vshrl.u32 %v232, 7
  %v234 = vsub.s32 3, %v233
  %v235 = vrot.slane %v179, %v234
  %v236 = vlaneseq
  %v237 = vshrl.u32 %v236, 7
  %v238 = vsub.s32 4, %v237
  %v239 = vrot.slane %v179, %v238
  %v240 = vlaneseq
  %v241 = vshrl.u32 %v240, 7
  %v242 = vsub.s32 5, %v241
  %v243 = vrot.slane %v179, %v242
  %v244 = vlaneseq
  %v245 = vshrl.u32 %v244, 7
  %v246 = vsub.s32 6, %v245
  %v247 = vrot.slane %v179, %v246
  %v248 = vlaneseq
  %v249 = vshrl.u32 %v248, 7
  %v250 = vsub.s32 7, %v249
  %v251 = vrot.slane %v179, %v250
  %v252 = vlaneseq
  %v253 = vshrl.u32 %v252, 7
  %v254 = vsub.s32 0, %v253
  %v255 = vrot.slane %v180, %v254
  %v273 = vmul.f32 %v183, %v191
  %v274 = vmul.f32 %v183, %v195
  %v275 = vmul.f32 %v183, %v199
  %v276 = vmul.f32 %v183, %v203
  %v277 = vmul.f32 %v183, %v207
  %v278 = vmul.f32 %v183, %v211
  %v279 = vmul.f32 %v183, %v215
  %v280 = vmul.f32 %v183, %v219
  %v281 = vmul.f32 %v183, %v223
  %v282 = vmul.f32 %v183, %v227
  %v283 = vmul.f32 %v183, %v231
  %v284 = vmul.f32 %v183, %v235
  %v285 = vmul.f32 %v183, %v239
  %v286 = vmul.f32 %v183, %v243
  %v287 = vmul.f32 %v183, %v247
  %v288 = vmul.f32 %v183, %v251
  %v289 = vmul.f32 %v183, %v255
  %307 = vrot.lane.b32.xlu0 %v273, 126
  %v308 = vpop.permute.xlu0 %307
  %309 = vrot.lane.b32.xlu0 %v274, 126
  %v310 = vpop.permute.xlu0 %309
  %311 = vrot.lane.b32.xlu0 %v275, 126
  %v312 = vpop.permute.xlu0 %311
  %313 = vrot.lane.b32.xlu0 %v276, 126
  %v314 = vpop.permute.xlu0 %313
  %315 = vrot.lane.b32.xlu0 %v277, 126
  %v316 = vpop.permute.xlu0 %315
  %317 = vrot.lane.b32.xlu0 %v278, 126
  %v318 = vpop.permute.xlu0 %317
  %319 = vrot.lane.b32.xlu0 %v279, 126
  %v320 = vpop.permute.xlu0 %319
  %321 = vrot.lane.b32.xlu0 %v280, 126
  %v322 = vpop.permute.xlu0 %321
  %323 = vrot.lane.b32.xlu0 %v281, 126
  %v324 = vpop.permute.xlu0 %323
  %325 = vrot.lane.b32.xlu0 %v282, 126
  %v326 = vpop.permute.xlu0 %325
  %327 = vrot.lane.b32.xlu0 %v283, 126
  %v328 = vpop.permute.xlu0 %327
  %329 = vrot.lane.b32.xlu0 %v284, 126
  %v330 = vpop.permute.xlu0 %329
  %331 = vrot.lane.b32.xlu0 %v285, 126
  %v332 = vpop.permute.xlu0 %331
  %333 = vrot.lane.b32.xlu0 %v286, 126
  %v334 = vpop.permute.xlu0 %333
  %335 = vrot.lane.b32.xlu0 %v287, 126
  %v336 = vpop.permute.xlu0 %335
  %337 = vrot.lane.b32.xlu0 %v288, 126
  %v338 = vpop.permute.xlu0 %337
  %339 = vrot.lane.b32.xlu0 %v289, 126
  %v340 = vpop.permute.xlu0 %339
  %vm341 = vcmask 1031168
  %v342 = vsel %vm341, %v308, %v310
  %v343 = vsel %vm341, %v310, %v312
  %v344 = vsel %vm341, %v312, %v314
  %v345 = vsel %vm341, %v314, %v316
  %v346 = vsel %vm341, %v316, %v318
  %v347 = vsel %vm341, %v318, %v320
  %v348 = vsel %vm341, %v320, %v322
  %v349 = vsel %vm341, %v322, %v324
  %v350 = vsel %vm341, %v324, %v326
  %v351 = vsel %vm341, %v326, %v328
  %v352 = vsel %vm341, %v328, %v330
  %v353 = vsel %vm341, %v330, %v332
  %v354 = vsel %vm341, %v332, %v334
  %v355 = vsel %vm341, %v334, %v336
  %v356 = vsel %vm341, %v336, %v338
  %v357 = vsel %vm341, %v338, %v340
  %v374 = vadd.f32 %v162, %v342
  %v375 = vadd.f32 %v163, %v343
  %v376 = vadd.f32 %v164, %v344
  %v377 = vadd.f32 %v165, %v345
  %v378 = vadd.f32 %v166, %v346
  %v379 = vadd.f32 %v167, %v347
  %v380 = vadd.f32 %v168, %v348
  %v381 = vadd.f32 %v169, %v349
  %v382 = vadd.f32 %v170, %v350
  %v383 = vadd.f32 %v171, %v351
  %v384 = vadd.f32 %v172, %v352
  %v385 = vadd.f32 %v173, %v353
  %v386 = vadd.f32 %v174, %v354
  %v387 = vadd.f32 %v175, %v355
  %v388 = vadd.f32 %v176, %v356
  %v389 = vadd.f32 %v177, %v357
  %390 = vset.pattern.permute.xlu0 2
  %391 = vperm.xlu0 %390, %v50
  %v392 = vpop.permute.xlu0 %391
  %v394 = vmul.f32 %v392, %v191
  %v395 = vmul.f32 %v392, %v195
  %v396 = vmul.f32 %v392, %v199
  %v397 = vmul.f32 %v392, %v203
  %v398 = vmul.f32 %v392, %v207
  %v399 = vmul.f32 %v392, %v211
  %v400 = vmul.f32 %v392, %v215
  %v401 = vmul.f32 %v392, %v219
  %v402 = vmul.f32 %v392, %v223
  %v403 = vmul.f32 %v392, %v227
  %v404 = vmul.f32 %v392, %v231
  %v405 = vmul.f32 %v392, %v235
  %v406 = vmul.f32 %v392, %v239
  %v407 = vmul.f32 %v392, %v243
  %v408 = vmul.f32 %v392, %v247
  %v409 = vmul.f32 %v392, %v251
  %v410 = vmul.f32 %v392, %v255
  %428 = vrot.lane.b32.xlu0 %v394, 124
  %v429 = vpop.permute.xlu0 %428
  %430 = vrot.lane.b32.xlu0 %v395, 124
  %v431 = vpop.permute.xlu0 %430
  %432 = vrot.lane.b32.xlu0 %v396, 124
  %v433 = vpop.permute.xlu0 %432
  %434 = vrot.lane.b32.xlu0 %v397, 124
  %v435 = vpop.permute.xlu0 %434
  %436 = vrot.lane.b32.xlu0 %v398, 124
  %v437 = vpop.permute.xlu0 %436
  %438 = vrot.lane.b32.xlu0 %v399, 124
  %v439 = vpop.permute.xlu0 %438
  %440 = vrot.lane.b32.xlu0 %v400, 124
  %v441 = vpop.permute.xlu0 %440
  %442 = vrot.lane.b32.xlu0 %v401, 124
  %v443 = vpop.permute.xlu0 %442
  %444 = vrot.lane.b32.xlu0 %v402, 124
  %v445 = vpop.permute.xlu0 %444
  %446 = vrot.lane.b32.xlu0 %v403, 124
  %v447 = vpop.permute.xlu0 %446
  %448 = vrot.lane.b32.xlu0 %v404, 124
  %v449 = vpop.permute.xlu0 %448
  %450 = vrot.lane.b32.xlu0 %v405, 124
  %v451 = vpop.permute.xlu0 %450
  %452 = vrot.lane.b32.xlu0 %v406, 124
  %v453 = vpop.permute.xlu0 %452
  %454 = vrot.lane.b32.xlu0 %v407, 124
  %v455 = vpop.permute.xlu0 %454
  %456 = vrot.lane.b32.xlu0 %v408, 124
  %v457 = vpop.permute.xlu0 %456
  %458 = vrot.lane.b32.xlu0 %v409, 124
  %v459 = vpop.permute.xlu0 %458
  %460 = vrot.lane.b32.xlu0 %v410, 124
  %v461 = vpop.permute.xlu0 %460
  %vm462 = vcmask 1014784
  %v463 = vsel %vm462, %v429, %v431
  %v464 = vsel %vm462, %v431, %v433
  %v465 = vsel %vm462, %v433, %v435
  %v466 = vsel %vm462, %v435, %v437
  %v467 = vsel %vm462, %v437, %v439
  %v468 = vsel %vm462, %v439, %v441
  %v469 = vsel %vm462, %v441, %v443
  %v470 = vsel %vm462, %v443, %v445
  %v471 = vsel %vm462, %v445, %v447
  %v472 = vsel %vm462, %v447, %v449
  %v473 = vsel %vm462, %v449, %v451
  %v474 = vsel %vm462, %v451, %v453
  %v475 = vsel %vm462, %v453, %v455
  %v476 = vsel %vm462, %v455, %v457
  %v477 = vsel %vm462, %v457, %v459
  %v478 = vsel %vm462, %v459, %v461
  %v495 = vadd.f32 %v374, %v463
  %v496 = vadd.f32 %v375, %v464
  %v497 = vadd.f32 %v376, %v465
  %v498 = vadd.f32 %v377, %v466
  %v499 = vadd.f32 %v378, %v467
  %v500 = vadd.f32 %v379, %v468
  %v501 = vadd.f32 %v380, %v469
  %v502 = vadd.f32 %v381, %v470
  %v503 = vadd.f32 %v382, %v471
  %v504 = vadd.f32 %v383, %v472
  %v505 = vadd.f32 %v384, %v473
  %v506 = vadd.f32 %v385, %v474
  %v507 = vadd.f32 %v386, %v475
  %v508 = vadd.f32 %v387, %v476
  %v509 = vadd.f32 %v388, %v477
  %v510 = vadd.f32 %v389, %v478
  %511 = vset.pattern.permute.xlu0 3
  %512 = vperm.xlu0 %511, %v50
  %v513 = vpop.permute.xlu0 %512
  %v515 = vmul.f32 %v513, %v191
  %v516 = vmul.f32 %v513, %v195
  %v517 = vmul.f32 %v513, %v199
  %v518 = vmul.f32 %v513, %v203
  %v519 = vmul.f32 %v513, %v207
  %v520 = vmul.f32 %v513, %v211
  %v521 = vmul.f32 %v513, %v215
  %v522 = vmul.f32 %v513, %v219
  %v523 = vmul.f32 %v513, %v223
  %v524 = vmul.f32 %v513, %v227
  %v525 = vmul.f32 %v513, %v231
  %v526 = vmul.f32 %v513, %v235
  %v527 = vmul.f32 %v513, %v239
  %v528 = vmul.f32 %v513, %v243
  %v529 = vmul.f32 %v513, %v247
  %v530 = vmul.f32 %v513, %v251
  %v531 = vmul.f32 %v513, %v255
  %549 = vrot.lane.b32.xlu0 %v515, 64
  %v550 = vpop.permute.xlu0 %549
  %551 = vrot.lane.b32.xlu0 %v516, 64
  %v552 = vpop.permute.xlu0 %551
  %553 = vrot.lane.b32.xlu0 %v517, 64
  %v554 = vpop.permute.xlu0 %553
  %555 = vrot.lane.b32.xlu0 %v518, 64
  %v556 = vpop.permute.xlu0 %555
  %557 = vrot.lane.b32.xlu0 %v519, 64
  %v558 = vpop.permute.xlu0 %557
  %559 = vrot.lane.b32.xlu0 %v520, 64
  %v560 = vpop.permute.xlu0 %559
  %561 = vrot.lane.b32.xlu0 %v521, 64
  %v562 = vpop.permute.xlu0 %561
  %563 = vrot.lane.b32.xlu0 %v522, 64
  %v564 = vpop.permute.xlu0 %563
  %565 = vrot.lane.b32.xlu0 %v523, 64
  %v566 = vpop.permute.xlu0 %565
  %567 = vrot.lane.b32.xlu0 %v524, 64
  %v568 = vpop.permute.xlu0 %567
  %569 = vrot.lane.b32.xlu0 %v525, 64
  %v570 = vpop.permute.xlu0 %569
  %571 = vrot.lane.b32.xlu0 %v526, 64
  %v572 = vpop.permute.xlu0 %571
  %573 = vrot.lane.b32.xlu0 %v527, 64
  %v574 = vpop.permute.xlu0 %573
  %575 = vrot.lane.b32.xlu0 %v528, 64
  %v576 = vpop.permute.xlu0 %575
  %577 = vrot.lane.b32.xlu0 %v529, 64
  %v578 = vpop.permute.xlu0 %577
  %579 = vrot.lane.b32.xlu0 %v530, 64
  %v580 = vpop.permute.xlu0 %579
  %581 = vrot.lane.b32.xlu0 %v531, 64
  %v582 = vpop.permute.xlu0 %581
  %vm583 = vcmask 523264
  %v584 = vsel %vm583, %v550, %v552
  %v585 = vsel %vm583, %v552, %v554
  %v586 = vsel %vm583, %v554, %v556
  %v587 = vsel %vm583, %v556, %v558
  %v588 = vsel %vm583, %v558, %v560
  %v589 = vsel %vm583, %v560, %v562
  %v590 = vsel %vm583, %v562, %v564
  %v591 = vsel %vm583, %v564, %v566
  %v592 = vsel %vm583, %v566, %v568
  %v593 = vsel %vm583, %v568, %v570
  %v594 = vsel %vm583, %v570, %v572
  %v595 = vsel %vm583, %v572, %v574
  %v596 = vsel %vm583, %v574, %v576
  %v597 = vsel %vm583, %v576, %v578
  %v598 = vsel %vm583, %v578, %v580
  %v599 = vsel %vm583, %v580, %v582
  %v616 = vadd.f32 %v495, %v584
  %v617 = vadd.f32 %v496, %v585
  %v618 = vadd.f32 %v497, %v586
  %v619 = vadd.f32 %v498, %v587
  %v620 = vadd.f32 %v499, %v588
  %v621 = vadd.f32 %v500, %v589
  %v622 = vadd.f32 %v501, %v590
  %v623 = vadd.f32 %v502, %v591
  %v624 = vadd.f32 %v503, %v592
  %v625 = vadd.f32 %v504, %v593
  %v626 = vadd.f32 %v505, %v594
  %v627 = vadd.f32 %v506, %v595
  %v628 = vadd.f32 %v507, %v596
  %v629 = vadd.f32 %v508, %v597
  %v630 = vadd.f32 %v509, %v598
  %v631 = vadd.f32 %v510, %v599
  %632 = vset.pattern.permute.xlu0 4
  %633 = vperm.xlu0 %632, %v50
  %v634 = vpop.permute.xlu0 %633
  %v636 = vmul.f32 %v634, %v191
  %v637 = vmul.f32 %v634, %v195
  %v638 = vmul.f32 %v634, %v199
  %v639 = vmul.f32 %v634, %v203
  %v640 = vmul.f32 %v634, %v207
  %v641 = vmul.f32 %v634, %v211
  %v642 = vmul.f32 %v634, %v215
  %v643 = vmul.f32 %v634, %v219
  %v644 = vmul.f32 %v634, %v223
  %v645 = vmul.f32 %v634, %v227
  %v646 = vmul.f32 %v634, %v231
  %v647 = vmul.f32 %v634, %v235
  %v648 = vmul.f32 %v634, %v239
  %v649 = vmul.f32 %v634, %v243
  %v650 = vmul.f32 %v634, %v247
  %v651 = vmul.f32 %v634, %v251
  %v652 = vmul.f32 %v634, %v255
  %670 = vrot.lane.b32.xlu0 %v636, 62
  %v671 = vpop.permute.xlu0 %670
  %672 = vrot.lane.b32.xlu0 %v637, 62
  %v673 = vpop.permute.xlu0 %672
  %674 = vrot.lane.b32.xlu0 %v638, 62
  %v675 = vpop.permute.xlu0 %674
  %676 = vrot.lane.b32.xlu0 %v639, 62
  %v677 = vpop.permute.xlu0 %676
  %678 = vrot.lane.b32.xlu0 %v640, 62
  %v679 = vpop.permute.xlu0 %678
  %680 = vrot.lane.b32.xlu0 %v641, 62
  %v681 = vpop.permute.xlu0 %680
  %682 = vrot.lane.b32.xlu0 %v642, 62
  %v683 = vpop.permute.xlu0 %682
  %684 = vrot.lane.b32.xlu0 %v643, 62
  %v685 = vpop.permute.xlu0 %684
  %686 = vrot.lane.b32.xlu0 %v644, 62
  %v687 = vpop.permute.xlu0 %686
  %688 = vrot.lane.b32.xlu0 %v645, 62
  %v689 = vpop.permute.xlu0 %688
  %690 = vrot.lane.b32.xlu0 %v646, 62
  %v691 = vpop.permute.xlu0 %690
  %692 = vrot.lane.b32.xlu0 %v647, 62
  %v693 = vpop.permute.xlu0 %692
  %694 = vrot.lane.b32.xlu0 %v648, 62
  %v695 = vpop.permute.xlu0 %694
  %696 = vrot.lane.b32.xlu0 %v649, 62
  %v697 = vpop.permute.xlu0 %696
  %698 = vrot.lane.b32.xlu0 %v650, 62
  %v699 = vpop.permute.xlu0 %698
  %700 = vrot.lane.b32.xlu0 %v651, 62
  %v701 = vpop.permute.xlu0 %700
  %702 = vrot.lane.b32.xlu0 %v652, 62
  %v703 = vpop.permute.xlu0 %702
  %vm704 = vcmask 506880
  %v705 = vsel %vm704, %v671, %v673
  %v706 = vsel %vm704, %v673, %v675
  %v707 = vsel %vm704, %v675, %v677
  %v708 = vsel %vm704, %v677, %v679
  %v709 = vsel %vm704, %v679, %v681
  %v710 = vsel %vm704, %v681, %v683
  %v711 = vsel %vm704, %v683, %v685
  %v712 = vsel %vm704, %v685, %v687
  %v713 = vsel %vm704, %v687, %v689
  %v714 = vsel %vm704, %v689, %v691
  %v715 = vsel %vm704, %v691, %v693
  %v716 = vsel %vm704, %v693, %v695
  %v717 = vsel %vm704, %v695, %v697
  %v718 = vsel %vm704, %v697, %v699
  %v719 = vsel %vm704, %v699, %v701
  %v720 = vsel %vm704, %v701, %v703
  %v737 = vadd.f32 %v616, %v705
  %v738 = vadd.f32 %v617, %v706
  %v739 = vadd.f32 %v618, %v707
  %v740 = vadd.f32 %v619, %v708
  %v741 = vadd.f32 %v620, %v709
  %v742 = vadd.f32 %v621, %v710
  %v743 = vadd.f32 %v622, %v711
  %v744 = vadd.f32 %v623, %v712
  %v745 = vadd.f32 %v624, %v713
  %v746 = vadd.f32 %v625, %v714
  %v747 = vadd.f32 %v626, %v715
  %v748 = vadd.f32 %v627, %v716
  %v749 = vadd.f32 %v628, %v717
  %v750 = vadd.f32 %v629, %v718
  %v751 = vadd.f32 %v630, %v719
  %v752 = vadd.f32 %v631, %v720
  %753 = vset.pattern.permute.xlu0 5
  %754 = vperm.xlu0 %753, %v50
  %v755 = vpop.permute.xlu0 %754
  %v757 = vmul.f32 %v755, %v191
  %v758 = vmul.f32 %v755, %v195
  %v759 = vmul.f32 %v755, %v199
  %v760 = vmul.f32 %v755, %v203
  %v761 = vmul.f32 %v755, %v207
  %v762 = vmul.f32 %v755, %v211
  %v763 = vmul.f32 %v755, %v215
  %v764 = vmul.f32 %v755, %v219
  %v765 = vmul.f32 %v755, %v223
  %v766 = vmul.f32 %v755, %v227
  %v767 = vmul.f32 %v755, %v231
  %v768 = vmul.f32 %v755, %v235
  %v769 = vmul.f32 %v755, %v239
  %v770 = vmul.f32 %v755, %v243
  %v771 = vmul.f32 %v755, %v247
  %v772 = vmul.f32 %v755, %v251
  %v773 = vmul.f32 %v755, %v255
  %791 = vrot.lane.b32.xlu0 %v757, 60
  %v792 = vpop.permute.xlu0 %791
  %793 = vrot.lane.b32.xlu0 %v758, 60
  %v794 = vpop.permute.xlu0 %793
  %795 = vrot.lane.b32.xlu0 %v759, 60
  %v796 = vpop.permute.xlu0 %795
  %797 = vrot.lane.b32.xlu0 %v760, 60
  %v798 = vpop.permute.xlu0 %797
  %799 = vrot.lane.b32.xlu0 %v761, 60
  %v800 = vpop.permute.xlu0 %799
  %801 = vrot.lane.b32.xlu0 %v762, 60
  %v802 = vpop.permute.xlu0 %801
  %803 = vrot.lane.b32.xlu0 %v763, 60
  %v804 = vpop.permute.xlu0 %803
  %805 = vrot.lane.b32.xlu0 %v764, 60
  %v806 = vpop.permute.xlu0 %805
  %807 = vrot.lane.b32.xlu0 %v765, 60
  %v808 = vpop.permute.xlu0 %807
  %809 = vrot.lane.b32.xlu0 %v766, 60
  %v810 = vpop.permute.xlu0 %809
  %811 = vrot.lane.b32.xlu0 %v767, 60
  %v812 = vpop.permute.xlu0 %811
  %813 = vrot.lane.b32.xlu0 %v768, 60
  %v814 = vpop.permute.xlu0 %813
  %815 = vrot.lane.b32.xlu0 %v769, 60
  %v816 = vpop.permute.xlu0 %815
  %817 = vrot.lane.b32.xlu0 %v770, 60
  %v818 = vpop.permute.xlu0 %817
  %819 = vrot.lane.b32.xlu0 %v771, 60
  %v820 = vpop.permute.xlu0 %819
  %821 = vrot.lane.b32.xlu0 %v772, 60
  %v822 = vpop.permute.xlu0 %821
  %823 = vrot.lane.b32.xlu0 %v773, 60
  %v824 = vpop.permute.xlu0 %823
  %vm825 = vcmask 490496
  %v826 = vsel %vm825, %v792, %v794
  %v827 = vsel %vm825, %v794, %v796
  %v828 = vsel %vm825, %v796, %v798
  %v829 = vsel %vm825, %v798, %v800
  %v830 = vsel %vm825, %v800, %v802
  %v831 = vsel %vm825, %v802, %v804
  %v832 = vsel %vm825, %v804, %v806
  %v833 = vsel %vm825, %v806, %v808
  %v834 = vsel %vm825, %v808, %v810
  %v835 = vsel %vm825, %v810, %v812
  %v836 = vsel %vm825, %v812, %v814
  %v837 = vsel %vm825, %v814, %v816
  %v838 = vsel %vm825, %v816, %v818
  %v839 = vsel %vm825, %v818, %v820
  %v840 = vsel %vm825, %v820, %v822
  %v841 = vsel %vm825, %v822, %v824
  %v858 = vadd.f32 %v737, %v826
  %v859 = vadd.f32 %v738, %v827
  %v860 = vadd.f32 %v739, %v828
  %v861 = vadd.f32 %v740, %v829
  %v862 = vadd.f32 %v741, %v830
  %v863 = vadd.f32 %v742, %v831
  %v864 = vadd.f32 %v743, %v832
  %v865 = vadd.f32 %v744, %v833
  %v866 = vadd.f32 %v745, %v834
  %v867 = vadd.f32 %v746, %v835
  %v868 = vadd.f32 %v747, %v836
  %v869 = vadd.f32 %v748, %v837
  %v870 = vadd.f32 %v749, %v838
  %v871 = vadd.f32 %v750, %v839
  %v872 = vadd.f32 %v751, %v840
  %v873 = vadd.f32 %v752, %v841
  %v874 = vld [vmem:[%s0 + $0x1] sm:$0xff]
  %v875 = vld [vmem:[%s0 + $0x9] sm:$0xff]
  %876 = vset.pattern.permute.xlu0 6
  %877 = vperm.xlu0 %876, %v50
  %v878 = vpop.permute.xlu0 %877
  %v882 = vlaneseq
  %v883 = vshrl.u32 %v882, 7
  %v884 = vsub.s32 0, %v883
  %v885 = vrot.slane %v874, %v884
  %v886 = vlaneseq
  %v887 = vshrl.u32 %v886, 7
  %v888 = vsub.s32 1, %v887
  %v889 = vrot.slane %v874, %v888
  %v890 = vlaneseq
  %v891 = vshrl.u32 %v890, 7
  %v892 = vsub.s32 2, %v891
  %v893 = vrot.slane %v874, %v892
  %v894 = vlaneseq
  %v895 = vshrl.u32 %v894, 7
  %v896 = vsub.s32 3, %v895
  %v897 = vrot.slane %v874, %v896
  %v898 = vlaneseq
  %v899 = vshrl.u32 %v898, 7
  %v900 = vsub.s32 4, %v899
  %v901 = vrot.slane %v874, %v900
  %v902 = vlaneseq
  %v903 = vshrl.u32 %v902, 7
  %v904 = vsub.s32 5, %v903
  %v905 = vrot.slane %v874, %v904
  %v906 = vlaneseq
  %v907 = vshrl.u32 %v906, 7
  %v908 = vsub.s32 6, %v907
  %v909 = vrot.slane %v874, %v908
  %v910 = vlaneseq
  %v911 = vshrl.u32 %v910, 7
  %v912 = vsub.s32 7, %v911
  %v913 = vrot.slane %v874, %v912
  %v914 = vlaneseq
  %v915 = vshrl.u32 %v914, 7
  %v916 = vsub.s32 0, %v915
  %v917 = vrot.slane %v875, %v916
  %v918 = vlaneseq
  %v919 = vshrl.u32 %v918, 7
  %v920 = vsub.s32 1, %v919
  %v921 = vrot.slane %v875, %v920
  %v922 = vlaneseq
  %v923 = vshrl.u32 %v922, 7
  %v924 = vsub.s32 2, %v923
  %v925 = vrot.slane %v875, %v924
  %v926 = vlaneseq
  %v927 = vshrl.u32 %v926, 7
  %v928 = vsub.s32 3, %v927
  %v929 = vrot.slane %v875, %v928
  %v930 = vlaneseq
  %v931 = vshrl.u32 %v930, 7
  %v932 = vsub.s32 4, %v931
  %v933 = vrot.slane %v875, %v932
  %v934 = vlaneseq
  %v935 = vshrl.u32 %v934, 7
  %v936 = vsub.s32 5, %v935
  %v937 = vrot.slane %v875, %v936
  %v938 = vlaneseq
  %v939 = vshrl.u32 %v938, 7
  %v940 = vsub.s32 6, %v939
  %v941 = vrot.slane %v875, %v940
  %v942 = vlaneseq
  %v943 = vshrl.u32 %v942, 7
  %v944 = vsub.s32 7, %v943
  %v945 = vrot.slane %v875, %v944
  %v962 = vmul.f32 %v878, %v885
  %v963 = vmul.f32 %v878, %v889
  %v964 = vmul.f32 %v878, %v893
  %v965 = vmul.f32 %v878, %v897
  %v966 = vmul.f32 %v878, %v901
  %v967 = vmul.f32 %v878, %v905
  %v968 = vmul.f32 %v878, %v909
  %v969 = vmul.f32 %v878, %v913
  %v970 = vmul.f32 %v878, %v917
  %v971 = vmul.f32 %v878, %v921
  %v972 = vmul.f32 %v878, %v925
  %v973 = vmul.f32 %v878, %v929
  %v974 = vmul.f32 %v878, %v933
  %v975 = vmul.f32 %v878, %v937
  %v976 = vmul.f32 %v878, %v941
  %v977 = vmul.f32 %v878, %v945
  %v978 = vadd.f32 %v858, %v962
  %v979 = vadd.f32 %v859, %v963
  %v980 = vadd.f32 %v860, %v964
  %v981 = vadd.f32 %v861, %v965
  %v982 = vadd.f32 %v862, %v966
  %v983 = vadd.f32 %v863, %v967
  %v984 = vadd.f32 %v864, %v968
  %v985 = vadd.f32 %v865, %v969
  %v986 = vadd.f32 %v866, %v970
  %v987 = vadd.f32 %v867, %v971
  %v988 = vadd.f32 %v868, %v972
  %v989 = vadd.f32 %v869, %v973
  %v990 = vadd.f32 %v870, %v974
  %v991 = vadd.f32 %v871, %v975
  %v992 = vadd.f32 %v872, %v976
  %v993 = vadd.f32 %v873, %v977
  %v994 = vld [vmem:[%s0 + $0x1] sm:$0xff]
  %v995 = vld [vmem:[%s0 + $0x9] sm:$0xff]
  %v996 = vld [vmem:[%s0 + $0x11] sm:$0x1]
  %997 = vset.pattern.permute.xlu0 7
  %998 = vperm.xlu0 %997, %v50
  %v999 = vpop.permute.xlu0 %998
  %v1004 = vlaneseq
  %v1005 = vshrl.u32 %v1004, 7
  %v1006 = vsub.s32 0, %v1005
  %v1007 = vrot.slane %v994, %v1006
  %v1008 = vlaneseq
  %v1009 = vshrl.u32 %v1008, 7
  %v1010 = vsub.s32 1, %v1009
  %v1011 = vrot.slane %v994, %v1010
  %v1012 = vlaneseq
  %v1013 = vshrl.u32 %v1012, 7
  %v1014 = vsub.s32 2, %v1013
  %v1015 = vrot.slane %v994, %v1014
  %v1016 = vlaneseq
  %v1017 = vshrl.u32 %v1016, 7
  %v1018 = vsub.s32 3, %v1017
  %v1019 = vrot.slane %v994, %v1018
  %v1020 = vlaneseq
  %v1021 = vshrl.u32 %v1020, 7
  %v1022 = vsub.s32 4, %v1021
  %v1023 = vrot.slane %v994, %v1022
  %v1024 = vlaneseq
  %v1025 = vshrl.u32 %v1024, 7
  %v1026 = vsub.s32 5, %v1025
  %v1027 = vrot.slane %v994, %v1026
  %v1028 = vlaneseq
  %v1029 = vshrl.u32 %v1028, 7
  %v1030 = vsub.s32 6, %v1029
  %v1031 = vrot.slane %v994, %v1030
  %v1032 = vlaneseq
  %v1033 = vshrl.u32 %v1032, 7
  %v1034 = vsub.s32 7, %v1033
  %v1035 = vrot.slane %v994, %v1034
  %v1036 = vlaneseq
  %v1037 = vshrl.u32 %v1036, 7
  %v1038 = vsub.s32 0, %v1037
  %v1039 = vrot.slane %v995, %v1038
  %v1040 = vlaneseq
  %v1041 = vshrl.u32 %v1040, 7
  %v1042 = vsub.s32 1, %v1041
  %v1043 = vrot.slane %v995, %v1042
  %v1044 = vlaneseq
  %v1045 = vshrl.u32 %v1044, 7
  %v1046 = vsub.s32 2, %v1045
  %v1047 = vrot.slane %v995, %v1046
  %v1048 = vlaneseq
  %v1049 = vshrl.u32 %v1048, 7
  %v1050 = vsub.s32 3, %v1049
  %v1051 = vrot.slane %v995, %v1050
  %v1052 = vlaneseq
  %v1053 = vshrl.u32 %v1052, 7
  %v1054 = vsub.s32 4, %v1053
  %v1055 = vrot.slane %v995, %v1054
  %v1056 = vlaneseq
  %v1057 = vshrl.u32 %v1056, 7
  %v1058 = vsub.s32 5, %v1057
  %v1059 = vrot.slane %v995, %v1058
  %v1060 = vlaneseq
  %v1061 = vshrl.u32 %v1060, 7
  %v1062 = vsub.s32 6, %v1061
  %v1063 = vrot.slane %v995, %v1062
  %v1064 = vlaneseq
  %v1065 = vshrl.u32 %v1064, 7
  %v1066 = vsub.s32 7, %v1065
  %v1067 = vrot.slane %v995, %v1066
  %v1068 = vlaneseq
  %v1069 = vshrl.u32 %v1068, 7
  %v1070 = vsub.s32 0, %v1069
  %v1071 = vrot.slane %v996, %v1070
  %v1089 = vmul.f32 %v999, %v1007
  %v1090 = vmul.f32 %v999, %v1011
  %v1091 = vmul.f32 %v999, %v1015
  %v1092 = vmul.f32 %v999, %v1019
  %v1093 = vmul.f32 %v999, %v1023
  %v1094 = vmul.f32 %v999, %v1027
  %v1095 = vmul.f32 %v999, %v1031
  %v1096 = vmul.f32 %v999, %v1035
  %v1097 = vmul.f32 %v999, %v1039
  %v1098 = vmul.f32 %v999, %v1043
  %v1099 = vmul.f32 %v999, %v1047
  %v1100 = vmul.f32 %v999, %v1051
  %v1101 = vmul.f32 %v999, %v1055
  %v1102 = vmul.f32 %v999, %v1059
  %v1103 = vmul.f32 %v999, %v1063
  %v1104 = vmul.f32 %v999, %v1067
  %v1105 = vmul.f32 %v999, %v1071
  %1123 = vrot.lane.b32.xlu0 %v1089, 126
  %v1124 = vpop.permute.xlu0 %1123
  %1125 = vrot.lane.b32.xlu0 %v1090, 126
  %v1126 = vpop.permute.xlu0 %1125
  %1127 = vrot.lane.b32.xlu0 %v1091, 126
  %v1128 = vpop.permute.xlu0 %1127
  %1129 = vrot.lane.b32.xlu0 %v1092, 126
  %v1130 = vpop.permute.xlu0 %1129
  %1131 = vrot.lane.b32.xlu0 %v1093, 126
  %v1132 = vpop.permute.xlu0 %1131
  %1133 = vrot.lane.b32.xlu0 %v1094, 126
  %v1134 = vpop.permute.xlu0 %1133
  %1135 = vrot.lane.b32.xlu0 %v1095, 126
  %v1136 = vpop.permute.xlu0 %1135
  %1137 = vrot.lane.b32.xlu0 %v1096, 126
  %v1138 = vpop.permute.xlu0 %1137
  %1139 = vrot.lane.b32.xlu0 %v1097, 126
  %v1140 = vpop.permute.xlu0 %1139
  %1141 = vrot.lane.b32.xlu0 %v1098, 126
  %v1142 = vpop.permute.xlu0 %1141
  %1143 = vrot.lane.b32.xlu0 %v1099, 126
  %v1144 = vpop.permute.xlu0 %1143
  %1145 = vrot.lane.b32.xlu0 %v1100, 126
  %v1146 = vpop.permute.xlu0 %1145
  %1147 = vrot.lane.b32.xlu0 %v1101, 126
  %v1148 = vpop.permute.xlu0 %1147
  %1149 = vrot.lane.b32.xlu0 %v1102, 126
  %v1150 = vpop.permute.xlu0 %1149
  %1151 = vrot.lane.b32.xlu0 %v1103, 126
  %v1152 = vpop.permute.xlu0 %1151
  %1153 = vrot.lane.b32.xlu0 %v1104, 126
  %v1154 = vpop.permute.xlu0 %1153
  %1155 = vrot.lane.b32.xlu0 %v1105, 126
  %v1156 = vpop.permute.xlu0 %1155
  %v1157 = vsel %vm341, %v1124, %v1126
  %v1158 = vsel %vm341, %v1126, %v1128
  %v1159 = vsel %vm341, %v1128, %v1130
  %v1160 = vsel %vm341, %v1130, %v1132
  %v1161 = vsel %vm341, %v1132, %v1134
  %v1162 = vsel %vm341, %v1134, %v1136
  %v1163 = vsel %vm341, %v1136, %v1138
  %v1164 = vsel %vm341, %v1138, %v1140
  %v1165 = vsel %vm341, %v1140, %v1142
  %v1166 = vsel %vm341, %v1142, %v1144
  %v1167 = vsel %vm341, %v1144, %v1146
  %v1168 = vsel %vm341, %v1146, %v1148
  %v1169 = vsel %vm341, %v1148, %v1150
  %v1170 = vsel %vm341, %v1150, %v1152
  %v1171 = vsel %vm341, %v1152, %v1154
  %v1172 = vsel %vm341, %v1154, %v1156
  %v1189 = vadd.f32 %v978, %v1157
  %v1190 = vadd.f32 %v979, %v1158
  %v1191 = vadd.f32 %v980, %v1159
  %v1192 = vadd.f32 %v981, %v1160
  %v1193 = vadd.f32 %v982, %v1161
  %v1194 = vadd.f32 %v983, %v1162
  %v1195 = vadd.f32 %v984, %v1163
  %v1196 = vadd.f32 %v985, %v1164
  %v1197 = vadd.f32 %v986, %v1165
  %v1198 = vadd.f32 %v987, %v1166
  %v1199 = vadd.f32 %v988, %v1167
  %v1200 = vadd.f32 %v989, %v1168
  %v1201 = vadd.f32 %v990, %v1169
  %v1202 = vadd.f32 %v991, %v1170
  %v1203 = vadd.f32 %v992, %v1171
  %v1204 = vadd.f32 %v993, %v1172
  %1205 = vset.pattern.permute.xlu0 8
  %1206 = vperm.xlu0 %1205, %v50
  %v1207 = vpop.permute.xlu0 %1206
  %v1209 = vmul.f32 %v1207, %v1007
  %v1210 = vmul.f32 %v1207, %v1011
  %v1211 = vmul.f32 %v1207, %v1015
  %v1212 = vmul.f32 %v1207, %v1019
  %v1213 = vmul.f32 %v1207, %v1023
  %v1214 = vmul.f32 %v1207, %v1027
  %v1215 = vmul.f32 %v1207, %v1031
  %v1216 = vmul.f32 %v1207, %v1035
  %v1217 = vmul.f32 %v1207, %v1039
  %v1218 = vmul.f32 %v1207, %v1043
  %v1219 = vmul.f32 %v1207, %v1047
  %v1220 = vmul.f32 %v1207, %v1051
  %v1221 = vmul.f32 %v1207, %v1055
  %v1222 = vmul.f32 %v1207, %v1059
  %v1223 = vmul.f32 %v1207, %v1063
  %v1224 = vmul.f32 %v1207, %v1067
  %v1225 = vmul.f32 %v1207, %v1071
  %1243 = vrot.lane.b32.xlu0 %v1209, 124
  %v1244 = vpop.permute.xlu0 %1243
  %1245 = vrot.lane.b32.xlu0 %v1210, 124
  %v1246 = vpop.permute.xlu0 %1245
  %1247 = vrot.lane.b32.xlu0 %v1211, 124
  %v1248 = vpop.permute.xlu0 %1247
  %1249 = vrot.lane.b32.xlu0 %v1212, 124
  %v1250 = vpop.permute.xlu0 %1249
  %1251 = vrot.lane.b32.xlu0 %v1213, 124
  %v1252 = vpop.permute.xlu0 %1251
  %1253 = vrot.lane.b32.xlu0 %v1214, 124
  %v1254 = vpop.permute.xlu0 %1253
  %1255 = vrot.lane.b32.xlu0 %v1215, 124
  %v1256 = vpop.permute.xlu0 %1255
  %1257 = vrot.lane.b32.xlu0 %v1216, 124
  %v1258 = vpop.permute.xlu0 %1257
  %1259 = vrot.lane.b32.xlu0 %v1217, 124
  %v1260 = vpop.permute.xlu0 %1259
  %1261 = vrot.lane.b32.xlu0 %v1218, 124
  %v1262 = vpop.permute.xlu0 %1261
  %1263 = vrot.lane.b32.xlu0 %v1219, 124
  %v1264 = vpop.permute.xlu0 %1263
  %1265 = vrot.lane.b32.xlu0 %v1220, 124
  %v1266 = vpop.permute.xlu0 %1265
  %1267 = vrot.lane.b32.xlu0 %v1221, 124
  %v1268 = vpop.permute.xlu0 %1267
  %1269 = vrot.lane.b32.xlu0 %v1222, 124
  %v1270 = vpop.permute.xlu0 %1269
  %1271 = vrot.lane.b32.xlu0 %v1223, 124
  %v1272 = vpop.permute.xlu0 %1271
  %1273 = vrot.lane.b32.xlu0 %v1224, 124
  %v1274 = vpop.permute.xlu0 %1273
  %1275 = vrot.lane.b32.xlu0 %v1225, 124
  %v1276 = vpop.permute.xlu0 %1275
  %v1277 = vsel %vm462, %v1244, %v1246
  %v1278 = vsel %vm462, %v1246, %v1248
  %v1279 = vsel %vm462, %v1248, %v1250
  %v1280 = vsel %vm462, %v1250, %v1252
  %v1281 = vsel %vm462, %v1252, %v1254
  %v1282 = vsel %vm462, %v1254, %v1256
  %v1283 = vsel %vm462, %v1256, %v1258
  %v1284 = vsel %vm462, %v1258, %v1260
  %v1285 = vsel %vm462, %v1260, %v1262
  %v1286 = vsel %vm462, %v1262, %v1264
  %v1287 = vsel %vm462, %v1264, %v1266
  %v1288 = vsel %vm462, %v1266, %v1268
  %v1289 = vsel %vm462, %v1268, %v1270
  %v1290 = vsel %vm462, %v1270, %v1272
  %v1291 = vsel %vm462, %v1272, %v1274
  %v1292 = vsel %vm462, %v1274, %v1276
  %v1309 = vadd.f32 %v1189, %v1277
  %v1310 = vadd.f32 %v1190, %v1278
  %v1311 = vadd.f32 %v1191, %v1279
  %v1312 = vadd.f32 %v1192, %v1280
  %v1313 = vadd.f32 %v1193, %v1281
  %v1314 = vadd.f32 %v1194, %v1282
  %v1315 = vadd.f32 %v1195, %v1283
  %v1316 = vadd.f32 %v1196, %v1284
  %v1317 = vadd.f32 %v1197, %v1285
  %v1318 = vadd.f32 %v1198, %v1286
  %v1319 = vadd.f32 %v1199, %v1287
  %v1320 = vadd.f32 %v1200, %v1288
  %v1321 = vadd.f32 %v1201, %v1289
  %v1322 = vadd.f32 %v1202, %v1290
  %v1323 = vadd.f32 %v1203, %v1291
  %v1324 = vadd.f32 %v1204, %v1292
  %v1325 = vmax.f32 %v1309, 0.0
  %v1326 = vmax.f32 %v1310, 0.0
  %v1327 = vmax.f32 %v1311, 0.0
  %v1328 = vmax.f32 %v1312, 0.0
  %v1329 = vmax.f32 %v1313, 0.0
  %v1330 = vmax.f32 %v1314, 0.0
  %v1331 = vmax.f32 %v1315, 0.0
  %v1332 = vmax.f32 %v1316, 0.0
  %v1333 = vmax.f32 %v1317, 0.0
  %v1334 = vmax.f32 %v1318, 0.0
  %v1335 = vmax.f32 %v1319, 0.0
  %v1336 = vmax.f32 %v1320, 0.0
  %v1337 = vmax.f32 %v1321, 0.0
  %v1338 = vmax.f32 %v1322, 0.0
  %v1339 = vmax.f32 %v1323, 0.0
  %v1340 = vmax.f32 %v1324, 0.0
  %1341 = vst [vmem:[#allocation2] sm:$0xff] %v1325
  %1342 = vst [vmem:[#allocation2 + $0x8] sm:$0xff] %v1326
  %1343 = vst [vmem:[#allocation2 + $0x10] sm:$0xff] %v1327
  %1344 = vst [vmem:[#allocation2 + $0x18] sm:$0xff] %v1328
  %1345 = vst [vmem:[#allocation2 + $0x20] sm:$0xff] %v1329
  %1346 = vst [vmem:[#allocation2 + $0x28] sm:$0xff] %v1330
  %1347 = vst [vmem:[#allocation2 + $0x30] sm:$0xff] %v1331
  %1348 = vst [vmem:[#allocation2 + $0x38] sm:$0xff] %v1332
  %1349 = vst [vmem:[#allocation2 + $0x40] sm:$0xff] %v1333
  %1350 = vst [vmem:[#allocation2 + $0x48] sm:$0xff] %v1334
  %1351 = vst [vmem:[#allocation2 + $0x50] sm:$0xff] %v1335
  %1352 = vst [vmem:[#allocation2 + $0x58] sm:$0xff] %v1336
  %1353 = vst [vmem:[#allocation2 + $0x60] sm:$0xff] %v1337
  %1354 = vst [vmem:[#allocation2 + $0x68] sm:$0xff] %v1338
  %1355 = vst [vmem:[#allocation2 + $0x70] sm:$0xff] %v1339
  %1356 = vst [vmem:[#allocation2 + $0x78] sm:$0xff] %v1340
  %v1357 = vld [vmem:[#allocation2] sm:$0xff]
  %v1358 = vld [vmem:[#allocation2 + $0x8] sm:$0xff]
  %v1359 = vld [vmem:[#allocation2 + $0x10] sm:$0xff]
  %v1360 = vld [vmem:[#allocation2 + $0x18] sm:$0xff]
  %v1361 = vld [vmem:[#allocation2 + $0x20] sm:$0xff]
  %v1362 = vld [vmem:[#allocation2 + $0x28] sm:$0xff]
  %v1363 = vld [vmem:[#allocation2 + $0x30] sm:$0xff]
  %v1364 = vld [vmem:[#allocation2 + $0x38] sm:$0xff]
  %v1365 = vld [vmem:[#allocation2 + $0x40] sm:$0xff]
  %v1366 = vld [vmem:[#allocation2 + $0x48] sm:$0xff]
  %v1367 = vld [vmem:[#allocation2 + $0x50] sm:$0xff]
  %v1368 = vld [vmem:[#allocation2 + $0x58] sm:$0xff]
  %v1369 = vld [vmem:[#allocation2 + $0x60] sm:$0xff]
  %v1370 = vld [vmem:[#allocation2 + $0x68] sm:$0xff]
  %v1371 = vld [vmem:[#allocation2 + $0x70] sm:$0xff]
  %v1372 = vld [vmem:[#allocation2 + $0x78] sm:$0xff]
  %v1373 = vld [vmem:[#allocation2 + $0x80] sm:$0xff]
  %1391 = vrot.lane.b32.xlu0 %v1357, 126
  %v1392 = vpop.permute.xlu0 %1391
  %1393 = vrot.lane.b32.xlu0 %v1358, 126
  %v1394 = vpop.permute.xlu0 %1393
  %1395 = vrot.lane.b32.xlu0 %v1359, 126
  %v1396 = vpop.permute.xlu0 %1395
  %1397 = vrot.lane.b32.xlu0 %v1360, 126
  %v1398 = vpop.permute.xlu0 %1397
  %1399 = vrot.lane.b32.xlu0 %v1361, 126
  %v1400 = vpop.permute.xlu0 %1399
  %1401 = vrot.lane.b32.xlu0 %v1362, 126
  %v1402 = vpop.permute.xlu0 %1401
  %1403 = vrot.lane.b32.xlu0 %v1363, 126
  %v1404 = vpop.permute.xlu0 %1403
  %1405 = vrot.lane.b32.xlu0 %v1364, 126
  %v1406 = vpop.permute.xlu0 %1405
  %1407 = vrot.lane.b32.xlu0 %v1365, 126
  %v1408 = vpop.permute.xlu0 %1407
  %1409 = vrot.lane.b32.xlu0 %v1366, 126
  %v1410 = vpop.permute.xlu0 %1409
  %1411 = vrot.lane.b32.xlu0 %v1367, 126
  %v1412 = vpop.permute.xlu0 %1411
  %1413 = vrot.lane.b32.xlu0 %v1368, 126
  %v1414 = vpop.permute.xlu0 %1413
  %1415 = vrot.lane.b32.xlu0 %v1369, 126
  %v1416 = vpop.permute.xlu0 %1415
  %1417 = vrot.lane.b32.xlu0 %v1370, 126
  %v1418 = vpop.permute.xlu0 %1417
  %1419 = vrot.lane.b32.xlu0 %v1371, 126
  %v1420 = vpop.permute.xlu0 %1419
  %1421 = vrot.lane.b32.xlu0 %v1372, 126
  %v1422 = vpop.permute.xlu0 %1421
  %1423 = vrot.lane.b32.xlu0 %v1373, 126
  %v1424 = vpop.permute.xlu0 %1423
  %v1425 = vsel %vm341, %v1392, %v1394
  %v1426 = vsel %vm341, %v1394, %v1396
  %v1427 = vsel %vm341, %v1396, %v1398
  %v1428 = vsel %vm341, %v1398, %v1400
  %v1429 = vsel %vm341, %v1400, %v1402
  %v1430 = vsel %vm341, %v1402, %v1404
  %v1431 = vsel %vm341, %v1404, %v1406
  %v1432 = vsel %vm341, %v1406, %v1408
  %v1433 = vsel %vm341, %v1408, %v1410
  %v1434 = vsel %vm341, %v1410, %v1412
  %v1435 = vsel %vm341, %v1412, %v1414
  %v1436 = vsel %vm341, %v1414, %v1416
  %v1437 = vsel %vm341, %v1416, %v1418
  %v1438 = vsel %vm341, %v1418, %v1420
  %v1439 = vsel %vm341, %v1420, %v1422
  %v1440 = vsel %vm341, %v1422, %v1424
  %v1457 = vmax.f32 %v1357, %v1425
  %v1458 = vmax.f32 %v1358, %v1426
  %v1459 = vmax.f32 %v1359, %v1427
  %v1460 = vmax.f32 %v1360, %v1428
  %v1461 = vmax.f32 %v1361, %v1429
  %v1462 = vmax.f32 %v1362, %v1430
  %v1463 = vmax.f32 %v1363, %v1431
  %v1464 = vmax.f32 %v1364, %v1432
  %v1465 = vmax.f32 %v1365, %v1433
  %v1466 = vmax.f32 %v1366, %v1434
  %v1467 = vmax.f32 %v1367, %v1435
  %v1468 = vmax.f32 %v1368, %v1436
  %v1469 = vmax.f32 %v1369, %v1437
  %v1470 = vmax.f32 %v1370, %v1438
  %v1471 = vmax.f32 %v1371, %v1439
  %v1472 = vmax.f32 %v1372, %v1440
  %1473 = vrot.lane.b32.xlu0 %v1357, 64
  %v1474 = vpop.permute.xlu0 %1473
  %1475 = vrot.lane.b32.xlu0 %v1358, 64
  %v1476 = vpop.permute.xlu0 %1475
  %1477 = vrot.lane.b32.xlu0 %v1359, 64
  %v1478 = vpop.permute.xlu0 %1477
  %1479 = vrot.lane.b32.xlu0 %v1360, 64
  %v1480 = vpop.permute.xlu0 %1479
  %1481 = vrot.lane.b32.xlu0 %v1361, 64
  %v1482 = vpop.permute.xlu0 %1481
  %1483 = vrot.lane.b32.xlu0 %v1362, 64
  %v1484 = vpop.permute.xlu0 %1483
  %1485 = vrot.lane.b32.xlu0 %v1363, 64
  %v1486 = vpop.permute.xlu0 %1485
  %1487 = vrot.lane.b32.xlu0 %v1364, 64
  %v1488 = vpop.permute.xlu0 %1487
  %1489 = vrot.lane.b32.xlu0 %v1365, 64
  %v1490 = vpop.permute.xlu0 %1489
  %1491 = vrot.lane.b32.xlu0 %v1366, 64
  %v1492 = vpop.permute.xlu0 %1491
  %1493 = vrot.lane.b32.xlu0 %v1367, 64
  %v1494 = vpop.permute.xlu0 %1493
  %1495 = vrot.lane.b32.xlu0 %v1368, 64
  %v1496 = vpop.permute.xlu0 %1495
  %1497 = vrot.lane.b32.xlu0 %v1369, 64
  %v1498 = vpop.permute.xlu0 %1497
  %1499 = vrot.lane.b32.xlu0 %v1370, 64
  %v1500 = vpop.permute.xlu0 %1499
  %1501 = vrot.lane.b32.xlu0 %v1371, 64
  %v1502 = vpop.permute.xlu0 %1501
  %1503 = vrot.lane.b32.xlu0 %v1372, 64
  %v1504 = vpop.permute.xlu0 %1503
  %1505 = vrot.lane.b32.xlu0 %v1373, 64
  %v1506 = vpop.permute.xlu0 %1505
  %v1507 = vsel %vm583, %v1474, %v1476
  %v1508 = vsel %vm583, %v1476, %v1478
  %v1509 = vsel %vm583, %v1478, %v1480
  %v1510 = vsel %vm583, %v1480, %v1482
  %v1511 = vsel %vm583, %v1482, %v1484
  %v1512 = vsel %vm583, %v1484, %v1486
  %v1513 = vsel %vm583, %v1486, %v1488
  %v1514 = vsel %vm583, %v1488, %v1490
  %v1515 = vsel %vm583, %v1490, %v1492
  %v1516 = vsel %vm583, %v1492, %v1494
  %v1517 = vsel %vm583, %v1494, %v1496
  %v1518 = vsel %vm583, %v1496, %v1498
  %v1519 = vsel %vm583, %v1498, %v1500
  %v1520 = vsel %vm583, %v1500, %v1502
  %v1521 = vsel %vm583, %v1502, %v1504
  %v1522 = vsel %vm583, %v1504, %v1506
  %v1539 = vmax.f32 %v1457, %v1507
  %v1540 = vmax.f32 %v1458, %v1508
  %v1541 = vmax.f32 %v1459, %v1509
  %v1542 = vmax.f32 %v1460, %v1510
  %v1543 = vmax.f32 %v1461, %v1511
  %v1544 = vmax.f32 %v1462, %v1512
  %v1545 = vmax.f32 %v1463, %v1513
  %v1546 = vmax.f32 %v1464, %v1514
  %v1547 = vmax.f32 %v1465, %v1515
  %v1548 = vmax.f32 %v1466, %v1516
  %v1549 = vmax.f32 %v1467, %v1517
  %v1550 = vmax.f32 %v1468, %v1518
  %v1551 = vmax.f32 %v1469, %v1519
  %v1552 = vmax.f32 %v1470, %v1520
  %v1553 = vmax.f32 %v1471, %v1521
  %v1554 = vmax.f32 %v1472, %v1522
  %1555 = vrot.lane.b32.xlu0 %v1357, 62
  %v1556 = vpop.permute.xlu0 %1555
  %1557 = vrot.lane.b32.xlu0 %v1358, 62
  %v1558 = vpop.permute.xlu0 %1557
  %1559 = vrot.lane.b32.xlu0 %v1359, 62
  %v1560 = vpop.permute.xlu0 %1559
  %1561 = vrot.lane.b32.xlu0 %v1360, 62
  %v1562 = vpop.permute.xlu0 %1561
  %1563 = vrot.lane.b32.xlu0 %v1361, 62
  %v1564 = vpop.permute.xlu0 %1563
  %1565 = vrot.lane.b32.xlu0 %v1362, 62
  %v1566 = vpop.permute.xlu0 %1565
  %1567 = vrot.lane.b32.xlu0 %v1363, 62
  %v1568 = vpop.permute.xlu0 %1567
  %1569 = vrot.lane.b32.xlu0 %v1364, 62
  %v1570 = vpop.permute.xlu0 %1569
  %1571 = vrot.lane.b32.xlu0 %v1365, 62
  %v1572 = vpop.permute.xlu0 %1571
  %1573 = vrot.lane.b32.xlu0 %v1366, 62
  %v1574 = vpop.permute.xlu0 %1573
  %1575 = vrot.lane.b32.xlu0 %v1367, 62
  %v1576 = vpop.permute.xlu0 %1575
  %1577 = vrot.lane.b32.xlu0 %v1368, 62
  %v1578 = vpop.permute.xlu0 %1577
  %1579 = vrot.lane.b32.xlu0 %v1369, 62
  %v1580 = vpop.permute.xlu0 %1579
  %1581 = vrot.lane.b32.xlu0 %v1370, 62
  %v1582 = vpop.permute.xlu0 %1581
  %1583 = vrot.lane.b32.xlu0 %v1371, 62
  %v1584 = vpop.permute.xlu0 %1583
  %1585 = vrot.lane.b32.xlu0 %v1372, 62
  %v1586 = vpop.permute.xlu0 %1585
  %1587 = vrot.lane.b32.xlu0 %v1373, 62
  %v1588 = vpop.permute.xlu0 %1587
  %v1589 = vsel %vm704, %v1556, %v1558
  %v1590 = vsel %vm704, %v1558, %v1560
  %v1591 = vsel %vm704, %v1560, %v1562
  %v1592 = vsel %vm704, %v1562, %v1564
  %v1593 = vsel %vm704, %v1564, %v1566
  %v1594 = vsel %vm704, %v1566, %v1568
  %v1595 = vsel %vm704, %v1568, %v1570
  %v1596 = vsel %vm704, %v1570, %v1572
  %v1597 = vsel %vm704, %v1572, %v1574
  %v1598 = vsel %vm704, %v1574, %v1576
  %v1599 = vsel %vm704, %v1576, %v1578
  %v1600 = vsel %vm704, %v1578, %v1580
  %v1601 = vsel %vm704, %v1580, %v1582
  %v1602 = vsel %vm704, %v1582, %v1584
  %v1603 = vsel %vm704, %v1584, %v1586
  %v1604 = vsel %vm704, %v1586, %v1588
  %v1621 = vmax.f32 %v1539, %v1589
  %v1622 = vmax.f32 %v1540, %v1590
  %v1623 = vmax.f32 %v1541, %v1591
  %v1624 = vmax.f32 %v1542, %v1592
  %v1625 = vmax.f32 %v1543, %v1593
  %v1626 = vmax.f32 %v1544, %v1594
  %v1627 = vmax.f32 %v1545, %v1595
  %v1628 = vmax.f32 %v1546, %v1596
  %v1629 = vmax.f32 %v1547, %v1597
  %v1630 = vmax.f32 %v1548, %v1598
  %v1631 = vmax.f32 %v1549, %v1599
  %v1632 = vmax.f32 %v1550, %v1600
  %v1633 = vmax.f32 %v1551, %v1601
  %v1634 = vmax.f32 %v1552, %v1602
  %v1635 = vmax.f32 %v1553, %v1603
  %v1636 = vmax.f32 %v1554, %v1604
  %1637 = vst [vmem:[#allocation3] sm:$0xff] %v1621
  %1638 = vst [vmem:[#allocation3 + $0x8] sm:$0xff] %v1622
  %1639 = vst [vmem:[#allocation3 + $0x10] sm:$0xff] %v1623
  %1640 = vst [vmem:[#allocation3 + $0x18] sm:$0xff] %v1624
  %1641 = vst [vmem:[#allocation3 + $0x20] sm:$0xff] %v1625
  %1642 = vst [vmem:[#allocation3 + $0x28] sm:$0xff] %v1626
  %1643 = vst [vmem:[#allocation3 + $0x30] sm:$0xff] %v1627
  %1644 = vst [vmem:[#allocation3 + $0x38] sm:$0xff] %v1628
  %1645 = vst [vmem:[#allocation3 + $0x40] sm:$0xff] %v1629
  %1646 = vst [vmem:[#allocation3 + $0x48] sm:$0xff] %v1630
  %1647 = vst [vmem:[#allocation3 + $0x50] sm:$0xff] %v1631
  %1648 = vst [vmem:[#allocation3 + $0x58] sm:$0xff] %v1632
  %1649 = vst [vmem:[#allocation3 + $0x60] sm:$0xff] %v1633
  %1650 = vst [vmem:[#allocation3 + $0x68] sm:$0xff] %v1634
  %1651 = vst [vmem:[#allocation3 + $0x70] sm:$0xff] %v1635
  %1652 = vst [vmem:[#allocation3 + $0x78] sm:$0xff] %v1636
  %v1653 = vld [vmem:[%s3] sm:$0xff]
  %v1654 = vld [vmem:[%s3 + $0x8] sm:$0xff]
  %v1655 = vld [vmem:[#allocation3] sm:$0xff]
  %v1656 = vld [vmem:[#allocation3 + $0x8] sm:$0xff]
  %v1657 = vld [vmem:[#allocation3 + $0x10] sm:$0xff]
  %v1658 = vld [vmem:[#allocation3 + $0x18] sm:$0xff]
  %v1659 = vld [vmem:[#allocation3 + $0x20] sm:$0xff]
  %v1660 = vld [vmem:[#allocation3 + $0x28] sm:$0xff]
  %v1661 = vld [vmem:[#allocation3 + $0x30] sm:$0xff]
  %v1662 = vld [vmem:[#allocation3 + $0x38] sm:$0xff]
  %v1663 = vld [vmem:[#allocation3 + $0x40] sm:$0xff]
  %v1664 = vld [vmem:[#allocation3 + $0x48] sm:$0xff]
  %v1665 = vld [vmem:[#allocation3 + $0x50] sm:$0xff]
  %v1666 = vld [vmem:[#allocation3 + $0x58] sm:$0xff]
  %v1667 = vld [vmem:[#allocation3 + $0x60] sm:$0xff]
  %v1668 = vld [vmem:[#allocation3 + $0x68] sm:$0xff]
  %v1669 = vld [vmem:[#allocation3 + $0x70] sm:$0xff]
  %v1670 = vld [vmem:[#allocation3 + $0x78] sm:$0xff]
  %s1671 = scalar_lea.vmem %s3, 16
  %v1672 = vld [vmem:[%s1671] sm:$0xff]
  %v1673 = vld [vmem:[%s1671 + $0x8] sm:$0xff]
  %v1674 = vld [vmem:[#allocation3 + $0x80] sm:$0xff]
  %1692 = vrot.lane.b32.xlu0 %v1655, 124
  %v1693 = vpop.permute.xlu0 %1692
  %1694 = vrot.lane.b32.xlu0 %v1656, 124
  %v1695 = vpop.permute.xlu0 %1694
  %1696 = vrot.lane.b32.xlu0 %v1657, 124
  %v1697 = vpop.permute.xlu0 %1696
  %1698 = vrot.lane.b32.xlu0 %v1658, 124
  %v1699 = vpop.permute.xlu0 %1698
  %1700 = vrot.lane.b32.xlu0 %v1659, 124
  %v1701 = vpop.permute.xlu0 %1700
  %1702 = vrot.lane.b32.xlu0 %v1660, 124
  %v1703 = vpop.permute.xlu0 %1702
  %1704 = vrot.lane.b32.xlu0 %v1661, 124
  %v1705 = vpop.permute.xlu0 %1704
  %1706 = vrot.lane.b32.xlu0 %v1662, 124
  %v1707 = vpop.permute.xlu0 %1706
  %1708 = vrot.lane.b32.xlu0 %v1663, 124
  %v1709 = vpop.permute.xlu0 %1708
  %1710 = vrot.lane.b32.xlu0 %v1664, 124
  %v1711 = vpop.permute.xlu0 %1710
  %1712 = vrot.lane.b32.xlu0 %v1665, 124
  %v1713 = vpop.permute.xlu0 %1712
  %1714 = vrot.lane.b32.xlu0 %v1666, 124
  %v1715 = vpop.permute.xlu0 %1714
  %1716 = vrot.lane.b32.xlu0 %v1667, 124
  %v1717 = vpop.permute.xlu0 %1716
  %1718 = vrot.lane.b32.xlu0 %v1668, 124
  %v1719 = vpop.permute.xlu0 %1718
  %1720 = vrot.lane.b32.xlu0 %v1669, 124
  %v1721 = vpop.permute.xlu0 %1720
  %1722 = vrot.lane.b32.xlu0 %v1670, 124
  %v1723 = vpop.permute.xlu0 %1722
  %1724 = vrot.lane.b32.xlu0 %v1674, 124
  %v1725 = vpop.permute.xlu0 %1724
  %v1726 = vsel %vm462, %v1693, %v1695
  %v1727 = vsel %vm462, %v1695, %v1697
  %v1728 = vsel %vm462, %v1697, %v1699
  %v1729 = vsel %vm462, %v1699, %v1701
  %v1730 = vsel %vm462, %v1701, %v1703
  %v1731 = vsel %vm462, %v1703, %v1705
  %v1732 = vsel %vm462, %v1705, %v1707
  %v1733 = vsel %vm462, %v1707, %v1709
  %v1734 = vsel %vm462, %v1709, %v1711
  %v1735 = vsel %vm462, %v1711, %v1713
  %v1736 = vsel %vm462, %v1713, %v1715
  %v1737 = vsel %vm462, %v1715, %v1717
  %v1738 = vsel %vm462, %v1717, %v1719
  %v1739 = vsel %vm462, %v1719, %v1721
  %v1740 = vsel %vm462, %v1721, %v1723
  %v1741 = vsel %vm462, %v1723, %v1725
  %vm1758 = vcmask 64512
  %v1760 = vsel %vm1758, %v1672, 0
  %v1763 = vsel %vm1758, %v1673, 0
  %1765 = vmatprep.subr.mxu0 %v1727
  %1766 = vmatpush1.msra.mxu0 %v1726
  %1767 = vmatprep.subr.mxu0 0.0
  %1768 = vmatpush1.msra.mxu0 0.0
  %1769 = vmatprep.subr.mxu0 0.0
  %1770 = vmatpush1.msra.mxu0 0.0
  %1771 = vmatprep.subr.mxu0 0.0
  %1772 = vmatpush1.msra.mxu0 0.0
  %1773 = vmatprep.subr.mxu0 0.0
  %1774 = vmatpush1.msra.mxu0 0.0
  %1775 = vmatprep.subr.mxu0 0.0
  %1776 = vmatpush1.msra.mxu0 0.0
  %1777 = vmatprep.subr.mxu0 0.0
  %1778 = vmatpush1.msra.mxu0 0.0
  %1779 = vmatprep.subr.mxu0 0.0
  %1780 = vmatpush1.msra.mxu0 0.0
  %1781 = vmatprep.subr.mxu0 0.0
  %1782 = vmatpush1.msra.mxu0 0.0
  %1783 = vmatprep.subr.mxu0 0.0
  %1784 = vmatpush1.msra.mxu0 0.0
  %1785 = vmatprep.subr.mxu0 0.0
  %1786 = vmatpush1.msra.mxu0 0.0
  %1787 = vmatprep.subr.mxu0 0.0
  %1788 = vmatpush1.msra.mxu0 0.0
  %1789 = vmatprep.subr.mxu0 0.0
  %1790 = vmatpush1.msra.mxu0 0.0
  %1791 = vmatprep.subr.mxu0 0.0
  %1792 = vmatpush1.msra.mxu0 0.0
  %1793 = vmatprep.subr.mxu0 0.0
  %1794 = vmatpush1.msra.mxu0 0.0
  %1795 = vmatprep.subr.mxu0 0.0
  %1796 = vmatpush1.msra.mxu0 0.0
  %1797 = vmatprep.subr.mxu0 0.0
  %1798 = vmatpush1.msra.mxu0 0.0
  %1799 = vmatprep.subr.mxu0 0.0
  %1800 = vmatpush1.msra.mxu0 0.0
  %1801 = vmatprep.subr.mxu0 0.0
  %1802 = vmatpush1.msra.mxu0 0.0
  %1803 = vmatprep.subr.mxu0 0.0
  %1804 = vmatpush1.msra.mxu0 0.0
  %1805 = vmatprep.subr.mxu0 0.0
  %1806 = vmatpush1.msra.mxu0 0.0
  %1807 = vmatprep.subr.mxu0 0.0
  %1808 = vmatpush1.msra.mxu0 0.0
  %1809 = vmatprep.subr.mxu0 0.0
  %1810 = vmatpush1.msra.mxu0 0.0
  %1811 = vmatprep.subr.mxu0 0.0
  %1812 = vmatpush1.msra.mxu0 0.0
  %1813 = vmatprep.subr.mxu0 0.0
  %1814 = vmatpush1.msra.mxu0 0.0
  %1815 = vmatprep.subr.mxu0 0.0
  %1816 = vmatpush1.msra.mxu0 0.0
  %1817 = vmatprep.subr.mxu0 0.0
  %1818 = vmatpush1.msra.mxu0 0.0
  %1819 = vmatprep.subr.mxu0 0.0
  %1820 = vmatpush1.msra.mxu0 0.0
  %1821 = vmatprep.subr.mxu0 0.0
  %1822 = vmatpush1.msra.mxu0 0.0
  %1823 = vmatprep.subr.mxu0 0.0
  %1824 = vmatpush1.msra.mxu0 0.0
  %1825 = vmatprep.subr.mxu0 0.0
  %1826 = vmatpush1.msra.mxu0 0.0
  %1827 = vmatprep.subr.mxu0 0.0
  %1828 = vmatpush1.msra.mxu0 0.0
  %1829 = vmatprep.mubr.f32.mxu0 0.0
  %1830 = vmatmul.mubr.f32.gmra.mrb[0].mxu0 %v1760
  %v1831 = vpop.f32.mrb[0].mxu0
  %v1832 = vadd.f32 0.0, %v1831
  %v1833 = vpop.f32.mrb[0].mxu0
  %v1834 = vadd.f32 0.0, %v1833
  %1835 = vmatprep.mubr.f32.mxu0 0.0
  %1836 = vmatmul.mubr.f32.gmra.mrb[0].mxu0 %v1763
  %v1837 = vpop.f32.mrb[0].mxu0
  %v1838 = vadd.f32 0.0, %v1837
  %v1839 = vpop.f32.mrb[0].mxu0
  %v1840 = vadd.f32 0.0, %v1839
  %1841 = vdwg.mxu0
  %1842 = vmatprep.subr.mxu0 %v1729
  %1843 = vmatpush1.msra.mxu0 %v1728
  %1844 = vmatprep.subr.mxu0 0.0
  %1845 = vmatpush1.msra.mxu0 0.0
  %1846 = vmatprep.subr.mxu0 0.0
  %1847 = vmatpush1.msra.mxu0 0.0
  %1848 = vmatprep.subr.mxu0 0.0
  %1849 = vmatpush1.msra.mxu0 0.0
  %1850 = vmatprep.subr.mxu0 0.0
  %1851 = vmatpush1.msra.mxu0 0.0
  %1852 = vmatprep.subr.mxu0 0.0
  %1853 = vmatpush1.msra.mxu0 0.0
  %1854 = vmatprep.subr.mxu0 0.0
  %1855 = vmatpush1.msra.mxu0 0.0
  %1856 = vmatprep.subr.mxu0 0.0
  %1857 = vmatpush1.msra.mxu0 0.0
  %1858 = vmatprep.subr.mxu0 0.0
  %1859 = vmatpush1.msra.mxu0 0.0
  %1860 = vmatprep.subr.mxu0 0.0
  %1861 = vmatpush1.msra.mxu0 0.0
  %1862 = vmatprep.subr.mxu0 0.0
  %1863 = vmatpush1.msra.mxu0 0.0
  %1864 = vmatprep.subr.mxu0 0.0
  %1865 = vmatpush1.msra.mxu0 0.0
  %1866 = vmatprep.subr.mxu0 0.0
  %1867 = vmatpush1.msra.mxu0 0.0
  %1868 = vmatprep.subr.mxu0 0.0
  %1869 = vmatpush1.msra.mxu0 0.0
  %1870 = vmatprep.subr.mxu0 0.0
  %1871 = vmatpush1.msra.mxu0 0.0
  %1872 = vmatprep.subr.mxu0 0.0
  %1873 = vmatpush1.msra.mxu0 0.0
  %1874 = vmatprep.subr.mxu0 0.0
  %1875 = vmatpush1.msra.mxu0 0.0
  %1876 = vmatprep.subr.mxu0 0.0
  %1877 = vmatpush1.msra.mxu0 0.0
  %1878 = vmatprep.subr.mxu0 0.0
  %1879 = vmatpush1.msra.mxu0 0.0
  %1880 = vmatprep.subr.mxu0 0.0
  %1881 = vmatpush1.msra.mxu0 0.0
  %1882 = vmatprep.subr.mxu0 0.0
  %1883 = vmatpush1.msra.mxu0 0.0
  %1884 = vmatprep.subr.mxu0 0.0
  %1885 = vmatpush1.msra.mxu0 0.0
  %1886 = vmatprep.subr.mxu0 0.0
  %1887 = vmatpush1.msra.mxu0 0.0
  %1888 = vmatprep.subr.mxu0 0.0
  %1889 = vmatpush1.msra.mxu0 0.0
  %1890 = vmatprep.subr.mxu0 0.0
  %1891 = vmatpush1.msra.mxu0 0.0
  %1892 = vmatprep.subr.mxu0 0.0
  %1893 = vmatpush1.msra.mxu0 0.0
  %1894 = vmatprep.subr.mxu0 0.0
  %1895 = vmatpush1.msra.mxu0 0.0
  %1896 = vmatprep.subr.mxu0 0.0
  %1897 = vmatpush1.msra.mxu0 0.0
  %1898 = vmatprep.subr.mxu0 0.0
  %1899 = vmatpush1.msra.mxu0 0.0
  %1900 = vmatprep.subr.mxu0 0.0
  %1901 = vmatpush1.msra.mxu0 0.0
  %1902 = vmatprep.subr.mxu0 0.0
  %1903 = vmatpush1.msra.mxu0 0.0
  %1904 = vmatprep.subr.mxu0 0.0
  %1905 = vmatpush1.msra.mxu0 0.0
  %1906 = vmatprep.mubr.f32.mxu0 0.0
  %1907 = vmatmul.mubr.f32.gmra.mrb[0].mxu0 %v1760
  %v1908 = vpop.f32.mrb[0].mxu0
  %v1909 = vadd.f32 0.0, %v1908
  %v1910 = vpop.f32.mrb[0].mxu0
  %v1911 = vadd.f32 0.0, %v1910
  %1912 = vmatprep.mubr.f32.mxu0 0.0
  %1913 = vmatmul.mubr.f32.gmra.mrb[0].mxu0 %v1763
  %v1914 = vpop.f32.mrb[0].mxu0
  %v1915 = vadd.f32 0.0, %v1914
  %v1916 = vpop.f32.mrb[0].mxu0
  %v1917 = vadd.f32 0.0, %v1916
  %1918 = vdwg.mxu0
  %1919 = vmatprep.subr.mxu0 %v1731
  %1920 = vmatpush1.msra.mxu0 %v1730
  %1921 = vmatprep.subr.mxu0 0.0
  %1922 = vmatpush1.msra.mxu0 0.0
  %1923 = vmatprep.subr.mxu0 0.0
  %1924 = vmatpush1.msra.mxu0 0.0
  %1925 = vmatprep.subr.mxu0 0.0
  %1926 = vmatpush1.msra.mxu0 0.0
  %1927 = vmatprep.subr.mxu0 0.0
  %1928 = vmatpush1.msra.mxu0 0.0
  %1929 = vmatprep.subr.mxu0 0.0
  %1930 = vmatpush1.msra.mxu0 0.0
  %1931 = vmatprep.subr.mxu0 0.0
  %1932 = vmatpush1.msra.mxu0 0.0
  %1933 = vmatprep.subr.mxu0 0.0
  %1934 = vmatpush1.msra.mxu0 0.0
  %1935 = vmatprep.subr.mxu0 0.0
  %1936 = vmatpush1.msra.mxu0 0.0
  %1937 = vmatprep.subr.mxu0 0.0
  %1938 = vmatpush1.msra.mxu0 0.0
  %1939 = vmatprep.subr.mxu0 0.0
  %1940 = vmatpush1.msra.mxu0 0.0
  %1941 = vmatprep.subr.mxu0 0.0
  %1942 = vmatpush1.msra.mxu0 0.0
  %1943 = vmatprep.subr.mxu0 0.0
  %1944 = vmatpush1.msra.mxu0 0.0
  %1945 = vmatprep.subr.mxu0 0.0
  %1946 = vmatpush1.msra.mxu0 0.0
  %1947 = vmatprep.subr.mxu0 0.0
  %1948 = vmatpush1.msra.mxu0 0.0
  %1949 = vmatprep.subr.mxu0 0.0
  %1950 = vmatpush1.msra.mxu0 0.0
  %1951 = vmatprep.subr.mxu0 0.0
  %1952 = vmatpush1.msra.mxu0 0.0
  %1953 = vmatprep.subr.mxu0 0.0
  %1954 = vmatpush1.msra.mxu0 0.0
  %1955 = vmatprep.subr.mxu0 0.0
  %1956 = vmatpush1.msra.mxu0 0.0
  %1957 = vmatprep.subr.mxu0 0.0
  %1958 = vmatpush1.msra.mxu0 0.0
  %1959 = vmatprep.subr.mxu0 0.0
  %1960 = vmatpush1.msra.mxu0 0.0
  %1961 = vmatprep.subr.mxu0 0.0
  %1962 = vmatpush1.msra.mxu0 0.0
  %1963 = vmatprep.subr.mxu0 0.0
  %1964 = vmatpush1.msra.mxu0 0.0
  %1965 = vmatprep.subr.mxu0 0.0
  %1966 = vmatpush1.msra.mxu0 0.0
  %1967 = vmatprep.subr.mxu0 0.0
  %1968 = vmatpush1.msra.mxu0 0.0
  %1969 = vmatprep.subr.mxu0 0.0
  %1970 = vmatpush1.msra.mxu0 0.0
  %1971 = vmatprep.subr.mxu0 0.0
  %1972 = vmatpush1.msra.mxu0 0.0
  %1973 = vmatprep.subr.mxu0 0.0
  %1974 = vmatpush1.msra.mxu0 0.0
  %1975 = vmatprep.subr.mxu0 0.0
  %1976 = vmatpush1.msra.mxu0 0.0
  %1977 = vmatprep.subr.mxu0 0.0
  %1978 = vmatpush1.msra.mxu0 0.0
  %1979 = vmatprep.subr.mxu0 0.0
  %1980 = vmatpush1.msra.mxu0 0.0
  %1981 = vmatprep.subr.mxu0 0.0
  %1982 = vmatpush1.msra.mxu0 0.0
  %1983 = vmatprep.mubr.f32.mxu0 0.0
  %1984 = vmatmul.mubr.f32.gmra.mrb[0].mxu0 %v1760
  %v1985 = vpop.f32.mrb[0].mxu0
  %v1986 = vadd.f32 0.0, %v1985
  %v1987 = vpop.f32.mrb[0].mxu0
  %v1988 = vadd.f32 0.0, %v1987
  %1989 = vmatprep.mubr.f32.mxu0 0.0
  %1990 = vmatmul.mubr.f32.gmra.mrb[0].mxu0 %v1763
  %v1991 = vpop.f32.mrb[0].mxu0
  %v1992 = vadd.f32 0.0, %v1991
  %v1993 = vpop.f32.mrb[0].mxu0
  %v1994 = vadd.f32 0.0, %v1993
  %1995 = vdwg.mxu0
  %1996 = vmatprep.subr.mxu0 %v1733
  %1997 = vmatpush1.msra.mxu0 %v1732
  %1998 = vmatprep.subr.mxu0 0.0
  %1999 = vmatpush1.msra.mxu0 0.0
  %2000 = vmatprep.subr.mxu0 0.0
  %2001 = vmatpush1.msra.mxu0 0.0
  %2002 = vmatprep.subr.mxu0 0.0
  %2003 = vmatpush1.msra.mxu0 0.0
  %2004 = vmatprep.subr.mxu0 0.0
  %2005 = vmatpush1.msra.mxu0 0.0
  %2006 = vmatprep.subr.mxu0 0.0
  %2007 = vmatpush1.msra.mxu0 0.0
  %2008 = vmatprep.subr.mxu0 0.0
  %2009 = vmatpush1.msra.mxu0 0.0
  %2010 = vmatprep.subr.mxu0 0.0
  %2011 = vmatpush1.msra.mxu0 0.0
  %2012 = vmatprep.subr.mxu0 0.0
  %2013 = vmatpush1.msra.mxu0 0.0
  %2014 = vmatprep.subr.mxu0 0.0
  %2015 = vmatpush1.msra.mxu0 0.0
  %2016 = vmatprep.subr.mxu0 0.0
  %2017 = vmatpush1.msra.mxu0 0.0
  %2018 = vmatprep.subr.mxu0 0.0
  %2019 = vmatpush1.msra.mxu0 0.0
  %2020 = vmatprep.subr.mxu0 0.0
  %2021 = vmatpush1.msra.mxu0 0.0
  %2022 = vmatprep.subr.mxu0 0.0
  %2023 = vmatpush1.msra.mxu0 0.0
  %2024 = vmatprep.subr.mxu0 0.0
  %2025 = vmatpush1.msra.mxu0 0.0
  %2026 = vmatprep.subr.mxu0 0.0
  %2027 = vmatpush1.msra.mxu0 0.0
  %2028 = vmatprep.subr.mxu0 0.0
  %2029 = vmatpush1.msra.mxu0 0.0
  %2030 = vmatprep.subr.mxu0 0.0
  %2031 = vmatpush1.msra.mxu0 0.0
  %2032 = vmatprep.subr.mxu0 0.0
  %2033 = vmatpush1.msra.mxu0 0.0
  %2034 = vmatprep.subr.mxu0 0.0
  %2035 = vmatpush1.msra.mxu0 0.0
  %2036 = vmatprep.subr.mxu0 0.0
  %2037 = vmatpush1.msra.mxu0 0.0
  %2038 = vmatprep.subr.mxu0 0.0
  %2039 = vmatpush1.msra.mxu0 0.0
  %2040 = vmatprep.subr.mxu0 0.0
  %2041 = vmatpush1.msra.mxu0 0.0
  %2042 = vmatprep.subr.mxu0 0.0
  %2043 = vmatpush1.msra.mxu0 0.0
  %2044 = vmatprep.subr.mxu0 0.0
  %2045 = vmatpush1.msra.mxu0 0.0
  %2046 = vmatprep.subr.mxu0 0.0
  %2047 = vmatpush1.msra.mxu0 0.0
  %2048 = vmatprep.subr.mxu0 0.0
  %2049 = vmatpush1.msra.mxu0 0.0
  %2050 = vmatprep.subr.mxu0 0.0
  %2051 = vmatpush1.msra.mxu0 0.0
  %2052 = vmatprep.subr.mxu0 0.0
  %2053 = vmatpush1.msra.mxu0 0.0
  %2054 = vmatprep.subr.mxu0 0.0
  %2055 = vmatpush1.msra.mxu0 0.0
  %2056 = vmatprep.subr.mxu0 0.0
  %2057 = vmatpush1.msra.mxu0 0.0
  %2058 = vmatprep.subr.mxu0 0.0
  %2059 = vmatpush1.msra.mxu0 0.0
  %2060 = vmatprep.mubr.f32.mxu0 0.0
  %2061 = vmatmul.mubr.f32.gmra.mrb[0].mxu0 %v1760
  %v2062 = vpop.f32.mrb[0].mxu0
  %v2063 = vadd.f32 0.0, %v2062
  %v2064 = vpop.f32.mrb[0].mxu0
  %v2065 = vadd.f32 0.0, %v2064
  %2066 = vmatprep.mubr.f32.mxu0 0.0
  %2067 = vmatmul.mubr.f32.gmra.mrb[0].mxu0 %v1763
  %v2068 = vpop.f32.mrb[0].mxu0
  %v2069 = vadd.f32 0.0, %v2068
  %v2070 = vpop.f32.mrb[0].mxu0
  %v2071 = vadd.f32 0.0, %v2070
  %2072 = vdwg.mxu0
  %2073 = vmatprep.subr.mxu0 %v1735
  %2074 = vmatpush1.msra.mxu0 %v1734
  %2075 = vmatprep.subr.mxu0 0.0
  %2076 = vmatpush1.msra.mxu0 0.0
  %2077 = vmatprep.subr.mxu0 0.0
  %2078 = vmatpush1.msra.mxu0 0.0
  %2079 = vmatprep.subr.mxu0 0.0
  %2080 = vmatpush1.msra.mxu0 0.0
  %2081 = vmatprep.subr.mxu0 0.0
  %2082 = vmatpush1.msra.mxu0 0.0
  %2083 = vmatprep.subr.mxu0 0.0
  %2084 = vmatpush1.msra.mxu0 0.0
  %2085 = vmatprep.subr.mxu0 0.0
  %2086 = vmatpush1.msra.mxu0 0.0
  %2087 = vmatprep.subr.mxu0 0.0
  %2088 = vmatpush1.msra.mxu0 0.0
  %2089 = vmatprep.subr.mxu0 0.0
  %2090 = vmatpush1.msra.mxu0 0.0
  %2091 = vmatprep.subr.mxu0 0.0
  %2092 = vmatpush1.msra.mxu0 0.0
  %2093 = vmatprep.subr.mxu0 0.0
  %2094 = vmatpush1.msra.mxu0 0.0
  %2095 = vmatprep.subr.mxu0 0.0
  %2096 = vmatpush1.msra.mxu0 0.0
  %2097 = vmatprep.subr.mxu0 0.0
  %2098 = vmatpush1.msra.mxu0 0.0
  %2099 = vmatprep.subr.mxu0 0.0
  %2100 = vmatpush1.msra.mxu0 0.0
  %2101 = vmatprep.subr.mxu0 0.0
  %2102 = vmatpush1.msra.mxu0 0.0
  %2103 = vmatprep.subr.mxu0 0.0
  %2104 = vmatpush1.msra.mxu0 0.0
  %2105 = vmatprep.subr.mxu0 0.0
  %2106 = vmatpush1.msra.mxu0 0.0
  %2107 = vmatprep.subr.mxu0 0.0
  %2108 = vmatpush1.msra.mxu0 0.0
  %2109 = vmatprep.subr.mxu0 0.0
  %2110 = vmatpush1.msra.mxu0 0.0
  %2111 = vmatprep.subr.mxu0 0.0
  %2112 = vmatpush1.msra.mxu0 0.0
  %2113 = vmatprep.subr.mxu0 0.0
  %2114 = vmatpush1.msra.mxu0 0.0
  %2115 = vmatprep.subr.mxu0 0.0
  %2116 = vmatpush1.msra.mxu0 0.0
  %2117 = vmatprep.subr.mxu0 0.0
  %2118 = vmatpush1.msra.mxu0 0.0
  %2119 = vmatprep.subr.mxu0 0.0
  %2120 = vmatpush1.msra.mxu0 0.0
  %2121 = vmatprep.subr.mxu0 0.0
  %2122 = vmatpush1.msra.mxu0 0.0
  %2123 = vmatprep.subr.mxu0 0.0
  %2124 = vmatpush1.msra.mxu0 0.0
  %2125 = vmatprep.subr.mxu0 0.0
  %2126 = vmatpush1.msra.mxu0 0.0
  %2127 = vmatprep.subr.mxu0 0.0
  %2128 = vmatpush1.msra.mxu0 0.0
  %2129 = vmatprep.subr.mxu0 0.0
  %2130 = vmatpush1.msra.mxu0 0.0
  %2131 = vmatprep.subr.mxu0 0.0
  %2132 = vmatpush1.msra.mxu0 0.0
  %2133 = vmatprep.subr.mxu0 0.0
  %2134 = vmatpush1.msra.mxu0 0.0
  %2135 = vmatprep.subr.mxu0 0.0
  %2136 = vmatpush1.msra.mxu0 0.0
  %2137 = vmatprep.mubr.f32.mxu0 0.0
  %2138 = vmatmul.mubr.f32.gmra.mrb[0].mxu0 %v1760
  %v2139 = vpop.f32.mrb[0].mxu0
  %v2140 = vadd.f32 0.0, %v2139
  %v2141 = vpop.f32.mrb[0].mxu0
  %v2142 = vadd.f32 0.0, %v2141
  %2143 = vmatprep.mubr.f32.mxu0 0.0
  %2144 = vmatmul.mubr.f32.gmra.mrb[0].mxu0 %v1763
  %v2145 = vpop.f32.mrb[0].mxu0
  %v2146 = vadd.f32 0.0, %v2145
  %v2147 = vpop.f32.mrb[0].mxu0
  %v2148 = vadd.f32 0.0, %v2147
  %2149 = vdwg.mxu0
  %2150 = vmatprep.subr.mxu0 %v1737
  %2151 = vmatpush1.msra.mxu0 %v1736
  %2152 = vmatprep.subr.mxu0 0.0
  %2153 = vmatpush1.msra.mxu0 0.0
  %2154 = vmatprep.subr.mxu0 0.0
  %2155 = vmatpush1.msra.mxu0 0.0
  %2156 = vmatprep.subr.mxu0 0.0
  %2157 = vmatpush1.msra.mxu0 0.0
  %2158 = vmatprep.subr.mxu0 0.0
  %2159 = vmatpush1.msra.mxu0 0.0
  %2160 = vmatprep.subr.mxu0 0.0
  %2161 = vmatpush1.msra.mxu0 0.0
  %2162 = vmatprep.subr.mxu0 0.0
  %2163 = vmatpush1.msra.mxu0 0.0
  %2164 = vmatprep.subr.mxu0 0.0
  %2165 = vmatpush1.msra.mxu0 0.0
  %2166 = vmatprep.subr.mxu0 0.0
  %2167 = vmatpush1.msra.mxu0 0.0
  %2168 = vmatprep.subr.mxu0 0.0
  %2169 = vmatpush1.msra.mxu0 0.0
  %2170 = vmatprep.subr.mxu0 0.0
  %2171 = vmatpush1.msra.mxu0 0.0
  %2172 = vmatprep.subr.mxu0 0.0
  %2173 = vmatpush1.msra.mxu0 0.0
  %2174 = vmatprep.subr.mxu0 0.0
  %2175 = vmatpush1.msra.mxu0 0.0
  %2176 = vmatprep.subr.mxu0 0.0
  %2177 = vmatpush1.msra.mxu0 0.0
  %2178 = vmatprep.subr.mxu0 0.0
  %2179 = vmatpush1.msra.mxu0 0.0
  %2180 = vmatprep.subr.mxu0 0.0
  %2181 = vmatpush1.msra.mxu0 0.0
  %2182 = vmatprep.subr.mxu0 0.0
  %2183 = vmatpush1.msra.mxu0 0.0
  %2184 = vmatprep.subr.mxu0 0.0
  %2185 = vmatpush1.msra.mxu0 0.0
  %2186 = vmatprep.subr.mxu0 0.0
  %2187 = vmatpush1.msra.mxu0 0.0
  %2188 = vmatprep.subr.mxu0 0.0
  %2189 = vmatpush1.msra.mxu0 0.0
  %2190 = vmatprep.subr.mxu0 0.0
  %2191 = vmatpush1.msra.mxu0 0.0
  %2192 = vmatprep.subr.mxu0 0.0
  %2193 = vmatpush1.msra.mxu0 0.0
  %2194 = vmatprep.subr.mxu0 0.0
  %2195 = vmatpush1.msra.mxu0 0.0
  %2196 = vmatprep.subr.mxu0 0.0
  %2197 = vmatpush1.msra.mxu0 0.0
  %2198 = vmatprep.subr.mxu0 0.0
  %2199 = vmatpush1.msra.mxu0 0.0
  %2200 = vmatprep.subr.mxu0 0.0
  %2201 = vmatpush1.msra.mxu0 0.0
  %2202 = vmatprep.subr.mxu0 0.0
  %2203 = vmatpush1.msra.mxu0 0.0
  %2204 = vmatprep.subr.mxu0 0.0
  %2205 = vmatpush1.msra.mxu0 0.0
  %2206 = vmatprep.subr.mxu0 0.0
  %2207 = vmatpush1.msra.mxu0 0.0
  %2208 = vmatprep.subr.mxu0 0.0
  %2209 = vmatpush1.msra.mxu0 0.0
  %2210 = vmatprep.subr.mxu0 0.0
  %2211 = vmatpush1.msra.mxu0 0.0
  %2212 = vmatprep.subr.mxu0 0.0
  %2213 = vmatpush1.msra.mxu0 0.0
  %2214 = vmatprep.mubr.f32.mxu0 0.0
  %2215 = vmatmul.mubr.f32.gmra.mrb[0].mxu0 %v1760
  %v2216 = vpop.f32.mrb[0].mxu0
  %v2217 = vadd.f32 0.0, %v2216
  %v2218 = vpop.f32.mrb[0].mxu0
  %v2219 = vadd.f32 0.0, %v2218
  %2220 = vmatprep.mubr.f32.mxu0 0.0
  %2221 = vmatmul.mubr.f32.gmra.mrb[0].mxu0 %v1763
  %v2222 = vpop.f32.mrb[0].mxu0
  %v2223 = vadd.f32 0.0, %v2222
  %v2224 = vpop.f32.mrb[0].mxu0
  %v2225 = vadd.f32 0.0, %v2224
  %2226 = vdwg.mxu0
  %2227 = vmatprep.subr.mxu0 %v1739
  %2228 = vmatpush1.msra.mxu0 %v1738
  %2229 = vmatprep.subr.mxu0 0.0
  %2230 = vmatpush1.msra.mxu0 0.0
  %2231 = vmatprep.subr.mxu0 0.0
  %2232 = vmatpush1.msra.mxu0 0.0
  %2233 = vmatprep.subr.mxu0 0.0
  %2234 = vmatpush1.msra.mxu0 0.0
  %2235 = vmatprep.subr.mxu0 0.0
  %2236 = vmatpush1.msra.mxu0 0.0
  %2237 = vmatprep.subr.mxu0 0.0
  %2238 = vmatpush1.msra.mxu0 0.0
  %2239 = vmatprep.subr.mxu0 0.0
  %2240 = vmatpush1.msra.mxu0 0.0
  %2241 = vmatprep.subr.mxu0 0.0
  %2242 = vmatpush1.msra.mxu0 0.0
  %2243 = vmatprep.subr.mxu0 0.0
  %2244 = vmatpush1.msra.mxu0 0.0
  %2245 = vmatprep.subr.mxu0 0.0
  %2246 = vmatpush1.msra.mxu0 0.0
  %2247 = vmatprep.subr.mxu0 0.0
  %2248 = vmatpush1.msra.mxu0 0.0
  %2249 = vmatprep.subr.mxu0 0.0
  %2250 = vmatpush1.msra.mxu0 0.0
  %2251 = vmatprep.subr.mxu0 0.0
  %2252 = vmatpush1.msra.mxu0 0.0
  %2253 = vmatprep.subr.mxu0 0.0
  %2254 = vmatpush1.msra.mxu0 0.0
  %2255 = vmatprep.subr.mxu0 0.0
  %2256 = vmatpush1.msra.mxu0 0.0
  %2257 = vmatprep.subr.mxu0 0.0
  %2258 = vmatpush1.msra.mxu0 0.0
  %2259 = vmatprep.subr.mxu0 0.0
  %2260 = vmatpush1.msra.mxu0 0.0
  %2261 = vmatprep.subr.mxu0 0.0
  %2262 = vmatpush1.msra.mxu0 0.0
  %2263 = vmatprep.subr.mxu0 0.0
  %2264 = vmatpush1.msra.mxu0 0.0
  %2265 = vmatprep.subr.mxu0 0.0
  %2266 = vmatpush1.msra.mxu0 0.0
  %2267 = vmatprep.subr.mxu0 0.0
  %2268 = vmatpush1.msra.mxu0 0.0
  %2269 = vmatprep.subr.mxu0 0.0
  %2270 = vmatpush1.msra.mxu0 0.0
  %2271 = vmatprep.subr.mxu0 0.0
  %2272 = vmatpush1.msra.mxu0 0.0
  %2273 = vmatprep.subr.mxu0 0.0
  %2274 = vmatpush1.msra.mxu0 0.0
  %2275 = vmatprep.subr.mxu0 0.0
  %2276 = vmatpush1.msra.mxu0 0.0
  %2277 = vmatprep.subr.mxu0 0.0
  %2278 = vmatpush1.msra.mxu0 0.0
  %2279 = vmatprep.subr.mxu0 0.0
  %2280 = vmatpush1.msra.mxu0 0.0
  %2281 = vmatprep.subr.mxu0 0.0
  %2282 = vmatpush1.msra.mxu0 0.0
  %2283 = vmatprep.subr.mxu0 0.0
  %2284 = vmatpush1.msra.mxu0 0.0
  %2285 = vmatprep.subr.mxu0 0.0
  %2286 = vmatpush1.msra.mxu0 0.0
  %2287 = vmatprep.subr.mxu0 0.0
  %2288 = vmatpush1.msra.mxu0 0.0
  %2289 = vmatprep.subr.mxu0 0.0
  %2290 = vmatpush1.msra.mxu0 0.0
  %2291 = vmatprep.mubr.f32.mxu0 0.0
  %2292 = vmatmul.mubr.f32.gmra.mrb[0].mxu0 %v1760
  %v2293 = vpop.f32.mrb[0].mxu0
  %v2294 = vadd.f32 0.0, %v2293
  %v2295 = vpop.f32.mrb[0].mxu0
  %v2296 = vadd.f32 0.0, %v2295
  %2297 = vmatprep.mubr.f32.mxu0 0.0
  %2298 = vmatmul.mubr.f32.gmra.mrb[0].mxu0 %v1763
  %v2299 = vpop.f32.mrb[0].mxu0
  %v2300 = vadd.f32 0.0, %v2299
  %v2301 = vpop.f32.mrb[0].mxu0
  %v2302 = vadd.f32 0.0, %v2301
  %2303 = vdwg.mxu0
  %2304 = vmatprep.subr.mxu0 %v1741
  %2305 = vmatpush1.msra.mxu0 %v1740
  %2306 = vmatprep.subr.mxu0 0.0
  %2307 = vmatpush1.msra.mxu0 0.0
  %2308 = vmatprep.subr.mxu0 0.0
  %2309 = vmatpush1.msra.mxu0 0.0
  %2310 = vmatprep.subr.mxu0 0.0
  %2311 = vmatpush1.msra.mxu0 0.0
  %2312 = vmatprep.subr.mxu0 0.0
  %2313 = vmatpush1.msra.mxu0 0.0
  %2314 = vmatprep.subr.mxu0 0.0
  %2315 = vmatpush1.msra.mxu0 0.0
  %2316 = vmatprep.subr.mxu0 0.0
  %2317 = vmatpush1.msra.mxu0 0.0
  %2318 = vmatprep.subr.mxu0 0.0
  %2319 = vmatpush1.msra.mxu0 0.0
  %2320 = vmatprep.subr.mxu0 0.0
  %2321 = vmatpush1.msra.mxu0 0.0
  %2322 = vmatprep.subr.mxu0 0.0
  %2323 = vmatpush1.msra.mxu0 0.0
  %2324 = vmatprep.subr.mxu0 0.0
  %2325 = vmatpush1.msra.mxu0 0.0
  %2326 = vmatprep.subr.mxu0 0.0
  %2327 = vmatpush1.msra.mxu0 0.0
  %2328 = vmatprep.subr.mxu0 0.0
  %2329 = vmatpush1.msra.mxu0 0.0
  %2330 = vmatprep.subr.mxu0 0.0
  %2331 = vmatpush1.msra.mxu0 0.0
  %2332 = vmatprep.subr.mxu0 0.0
  %2333 = vmatpush1.msra.mxu0 0.0
  %2334 = vmatprep.subr.mxu0 0.0
  %2335 = vmatpush1.msra.mxu0 0.0
  %2336 = vmatprep.subr.mxu0 0.0
  %2337 = vmatpush1.msra.mxu0 0.0
  %2338 = vmatprep.subr.mxu0 0.0
  %2339 = vmatpush1.msra.mxu0 0.0
  %2340 = vmatprep.subr.mxu0 0.0
  %2341 = vmatpush1.msra.mxu0 0.0
  %2342 = vmatprep.subr.mxu0 0.0
  %2343 = vmatpush1.msra.mxu0 0.0
  %2344 = vmatprep.subr.mxu0 0.0
  %2345 = vmatpush1.msra.mxu0 0.0
  %2346 = vmatprep.subr.mxu0 0.0
  %2347 = vmatpush1.msra.mxu0 0.0
  %2348 = vmatprep.subr.mxu0 0.0
  %2349 = vmatpush1.msra.mxu0 0.0
  %2350 = vmatprep.subr.mxu0 0.0
  %2351 = vmatpush1.msra.mxu0 0.0
  %2352 = vmatprep.subr.mxu0 0.0
  %2353 = vmatpush1.msra.mxu0 0.0
  %2354 = vmatprep.subr.mxu0 0.0
  %2355 = vmatpush1.msra.mxu0 0.0
  %2356 = vmatprep.subr.mxu0 0.0
  %2357 = vmatpush1.msra.mxu0 0.0
  %2358 = vmatprep.subr.mxu0 0.0
  %2359 = vmatpush1.msra.mxu0 0.0
  %2360 = vmatprep.subr.mxu0 0.0
  %2361 = vmatpush1.msra.mxu0 0.0
  %2362 = vmatprep.subr.mxu0 0.0
  %2363 = vmatpush1.msra.mxu0 0.0
  %2364 = vmatprep.subr.mxu0 0.0
  %2365 = vmatpush1.msra.mxu0 0.0
  %2366 = vmatprep.subr.mxu0 0.0
  %2367 = vmatpush1.msra.mxu0 0.0
  %2368 = vmatprep.mubr.f32.mxu0 0.0
  %2369 = vmatmul.mubr.f32.gmra.mrb[0].mxu0 %v1760
  %v2370 = vpop.f32.mrb[0].mxu0
  %v2371 = vadd.f32 0.0, %v2370
  %v2372 = vpop.f32.mrb[0].mxu0
  %v2373 = vadd.f32 0.0, %v2372
  %2374 = vmatprep.mubr.f32.mxu0 0.0
  %2375 = vmatmul.mubr.f32.gmra.mrb[0].mxu0 %v1763
  %v2376 = vpop.f32.mrb[0].mxu0
  %v2377 = vadd.f32 0.0, %v2376
  %v2378 = vpop.f32.mrb[0].mxu0
  %v2379 = vadd.f32 0.0, %v2378
  %2380 = vdwg.mxu0
  %v2382 = vsel %vm1758, %v1653, 0
  %v2385 = vsel %vm1758, %v1654, 0
  %2387 = vmatprep.subr.mxu0 %v1656
  %2388 = vmatpush1.msra.mxu0 %v1655
  %2389 = vmatprep.subr.mxu0 0.0
  %2390 = vmatpush1.msra.mxu0 0.0
  %2391 = vmatprep.subr.mxu0 0.0
  %2392 = vmatpush1.msra.mxu0 0.0
  %2393 = vmatprep.subr.mxu0 0.0
  %2394 = vmatpush1.msra.mxu0 0.0
  %2395 = vmatprep.subr.mxu0 0.0
  %2396 = vmatpush1.msra.mxu0 0.0
  %2397 = vmatprep.subr.mxu0 0.0
  %2398 = vmatpush1.msra.mxu0 0.0
  %2399 = vmatprep.subr.mxu0 0.0
  %2400 = vmatpush1.msra.mxu0 0.0
  %2401 = vmatprep.subr.mxu0 0.0
  %2402 = vmatpush1.msra.mxu0 0.0
  %2403 = vmatprep.subr.mxu0 0.0
  %2404 = vmatpush1.msra.mxu0 0.0
  %2405 = vmatprep.subr.mxu0 0.0
  %2406 = vmatpush1.msra.mxu0 0.0
  %2407 = vmatprep.subr.mxu0 0.0
  %2408 = vmatpush1.msra.mxu0 0.0
  %2409 = vmatprep.subr.mxu0 0.0
  %2410 = vmatpush1.msra.mxu0 0.0
  %2411 = vmatprep.subr.mxu0 0.0
  %2412 = vmatpush1.msra.mxu0 0.0
  %2413 = vmatprep.subr.mxu0 0.0
  %2414 = vmatpush1.msra.mxu0 0.0
  %2415 = vmatprep.subr.mxu0 0.0
  %2416 = vmatpush1.msra.mxu0 0.0
  %2417 = vmatprep.subr.mxu0 0.0
  %2418 = vmatpush1.msra.mxu0 0.0
  %2419 = vmatprep.subr.mxu0 0.0
  %2420 = vmatpush1.msra.mxu0 0.0
  %2421 = vmatprep.subr.mxu0 0.0
  %2422 = vmatpush1.msra.mxu0 0.0
  %2423 = vmatprep.subr.mxu0 0.0
  %2424 = vmatpush1.msra.mxu0 0.0
  %2425 = vmatprep.subr.mxu0 0.0
  %2426 = vmatpush1.msra.mxu0 0.0
  %2427 = vmatprep.subr.mxu0 0.0
  %2428 = vmatpush1.msra.mxu0 0.0
  %2429 = vmatprep.subr.mxu0 0.0
  %2430 = vmatpush1.msra.mxu0 0.0
  %2431 = vmatprep.subr.mxu0 0.0
  %2432 = vmatpush1.msra.mxu0 0.0
  %2433 = vmatprep.subr.mxu0 0.0
  %2434 = vmatpush1.msra.mxu0 0.0
  %2435 = vmatprep.subr.mxu0 0.0
  %2436 = vmatpush1.msra.mxu0 0.0
  %2437 = vmatprep.subr.mxu0 0.0
  %2438 = vmatpush1.msra.mxu0 0.0
  %2439 = vmatprep.subr.mxu0 0.0
  %2440 = vmatpush1.msra.mxu0 0.0
  %2441 = vmatprep.subr.mxu0 0.0
  %2442 = vmatpush1.msra.mxu0 0.0
  %2443 = vmatprep.subr.mxu0 0.0
  %2444 = vmatpush1.msra.mxu0 0.0
  %2445 = vmatprep.subr.mxu0 0.0
  %2446 = vmatpush1.msra.mxu0 0.0
  %2447 = vmatprep.subr.mxu0 0.0
  %2448 = vmatpush1.msra.mxu0 0.0
  %2449 = vmatprep.subr.mxu0 0.0
  %2450 = vmatpush1.msra.mxu0 0.0
  %2451 = vmatprep.mubr.f32.mxu0 0.0
  %2452 = vmatmul.mubr.f32.gmra.mrb[0].mxu0 %v2382
  %v2453 = vpop.f32.mrb[0].mxu0
  %v2454 = vadd.f32 %v1832, %v2453
  %v2455 = vpop.f32.mrb[0].mxu0
  %v2456 = vadd.f32 %v1834, %v2455
  %2457 = vmatprep.mubr.f32.mxu0 0.0
  %2458 = vmatmul.mubr.f32.gmra.mrb[0].mxu0 %v2385
  %v2459 = vpop.f32.mrb[0].mxu0
  %v2460 = vadd.f32 %v1838, %v2459
  %v2461 = vpop.f32.mrb[0].mxu0
  %v2462 = vadd.f32 %v1840, %v2461
  %2463 = vdwg.mxu0
  %2464 = vmatprep.subr.mxu0 %v1658
  %2465 = vmatpush1.msra.mxu0 %v1657
  %2466 = vmatprep.subr.mxu0 0.0
  %2467 = vmatpush1.msra.mxu0 0.0
  %2468 = vmatprep.subr.mxu0 0.0
  %2469 = vmatpush1.msra.mxu0 0.0
  %2470 = vmatprep.subr.mxu0 0.0
  %2471 = vmatpush1.msra.mxu0 0.0
  %2472 = vmatprep.subr.mxu0 0.0
  %2473 = vmatpush1.msra.mxu0 0.0
  %2474 = vmatprep.subr.mxu0 0.0
  %2475 = vmatpush1.msra.mxu0 0.0
  %2476 = vmatprep.subr.mxu0 0.0
  %2477 = vmatpush1.msra.mxu0 0.0
  %2478 = vmatprep.subr.mxu0 0.0
  %2479 = vmatpush1.msra.mxu0 0.0
  %2480 = vmatprep.subr.mxu0 0.0
  %2481 = vmatpush1.msra.mxu0 0.0
  %2482 = vmatprep.subr.mxu0 0.0
  %2483 = vmatpush1.msra.mxu0 0.0
  %2484 = vmatprep.subr.mxu0 0.0
  %2485 = vmatpush1.msra.mxu0 0.0
  %2486 = vmatprep.subr.mxu0 0.0
  %2487 = vmatpush1.msra.mxu0 0.0
  %2488 = vmatprep.subr.mxu0 0.0
  %2489 = vmatpush1.msra.mxu0 0.0
  %2490 = vmatprep.subr.mxu0 0.0
  %2491 = vmatpush1.msra.mxu0 0.0
  %2492 = vmatprep.subr.mxu0 0.0
  %2493 = vmatpush1.msra.mxu0 0.0
  %2494 = vmatprep.subr.mxu0 0.0
  %2495 = vmatpush1.msra.mxu0 0.0
  %2496 = vmatprep.subr.mxu0 0.0
  %2497 = vmatpush1.msra.mxu0 0.0
  %2498 = vmatprep.subr.mxu0 0.0
  %2499 = vmatpush1.msra.mxu0 0.0
  %2500 = vmatprep.subr.mxu0 0.0
  %2501 = vmatpush1.msra.mxu0 0.0
  %2502 = vmatprep.subr.mxu0 0.0
  %2503 = vmatpush1.msra.mxu0 0.0
  %2504 = vmatprep.subr.mxu0 0.0
  %2505 = vmatpush1.msra.mxu0 0.0
  %2506 = vmatprep.subr.mxu0 0.0
  %2507 = vmatpush1.msra.mxu0 0.0
  %2508 = vmatprep.subr.mxu0 0.0
  %2509 = vmatpush1.msra.mxu0 0.0
  %2510 = vmatprep.subr.mxu0 0.0
  %2511 = vmatpush1.msra.mxu0 0.0
  %2512 = vmatprep.subr.mxu0 0.0
  %2513 = vmatpush1.msra.mxu0 0.0
  %2514 = vmatprep.subr.mxu0 0.0
  %2515 = vmatpush1.msra.mxu0 0.0
  %2516 = vmatprep.subr.mxu0 0.0
  %2517 = vmatpush1.msra.mxu0 0.0
  %2518 = vmatprep.subr.mxu0 0.0
  %2519 = vmatpush1.msra.mxu0 0.0
  %2520 = vmatprep.subr.mxu0 0.0
  %2521 = vmatpush1.msra.mxu0 0.0
  %2522 = vmatprep.subr.mxu0 0.0
  %2523 = vmatpush1.msra.mxu0 0.0
  %2524 = vmatprep.subr.mxu0 0.0
  %2525 = vmatpush1.msra.mxu0 0.0
  %2526 = vmatprep.subr.mxu0 0.0
  %2527 = vmatpush1.msra.mxu0 0.0
  %2528 = vmatprep.mubr.f32.mxu0 0.0
  %2529 = vmatmul.mubr.f32.gmra.mrb[0].mxu0 %v2382
  %v2530 = vpop.f32.mrb[0].mxu0
  %v2531 = vadd.f32 %v1909, %v2530
  %v2532 = vpop.f32.mrb[0].mxu0
  %v2533 = vadd.f32 %v1911, %v2532
  %2534 = vmatprep.mubr.f32.mxu0 0.0
  %2535 = vmatmul.mubr.f32.gmra.mrb[0].mxu0 %v2385
  %v2536 = vpop.f32.mrb[0].mxu0
  %v2537 = vadd.f32 %v1915, %v2536
  %v2538 = vpop.f32.mrb[0].mxu0
  %v2539 = vadd.f32 %v1917, %v2538
  %2540 = vdwg.mxu0
  %2541 = vmatprep.subr.mxu0 %v1660
  %2542 = vmatpush1.msra.mxu0 %v1659
  %2543 = vmatprep.subr.mxu0 0.0
  %2544 = vmatpush1.msra.mxu0 0.0
  %2545 = vmatprep.subr.mxu0 0.0
  %2546 = vmatpush1.msra.mxu0 0.0
  %2547 = vmatprep.subr.mxu0 0.0
  %2548 = vmatpush1.msra.mxu0 0.0
  %2549 = vmatprep.subr.mxu0 0.0
  %2550 = vmatpush1.msra.mxu0 0.0
  %2551 = vmatprep.subr.mxu0 0.0
  %2552 = vmatpush1.msra.mxu0 0.0
  %2553 = vmatprep.subr.mxu0 0.0
  %2554 = vmatpush1.msra.mxu0 0.0
  %2555 = vmatprep.subr.mxu0 0.0
  %2556 = vmatpush1.msra.mxu0 0.0
  %2557 = vmatprep.subr.mxu0 0.0
  %2558 = vmatpush1.msra.mxu0 0.0
  %2559 = vmatprep.subr.mxu0 0.0
  %2560 = vmatpush1.msra.mxu0 0.0
  %2561 = vmatprep.subr.mxu0 0.0
  %2562 = vmatpush1.msra.mxu0 0.0
  %2563 = vmatprep.subr.mxu0 0.0
  %2564 = vmatpush1.msra.mxu0 0.0
  %2565 = vmatprep.subr.mxu0 0.0
  %2566 = vmatpush1.msra.mxu0 0.0
  %2567 = vmatprep.subr.mxu0 0.0
  %2568 = vmatpush1.msra.mxu0 0.0
  %2569 = vmatprep.subr.mxu0 0.0
  %2570 = vmatpush1.msra.mxu0 0.0
  %2571 = vmatprep.subr.mxu0 0.0
  %2572 = vmatpush1.msra.mxu0 0.0
  %2573 = vmatprep.subr.mxu0 0.0
  %2574 = vmatpush1.msra.mxu0 0.0
  %2575 = vmatprep.subr.mxu0 0.0
  %2576 = vmatpush1.msra.mxu0 0.0
  %2577 = vmatprep.subr.mxu0 0.0
  %2578 = vmatpush1.msra.mxu0 0.0
  %2579 = vmatprep.subr.mxu0 0.0
  %2580 = vmatpush1.msra.mxu0 0.0
  %2581 = vmatprep.subr.mxu0 0.0
  %2582 = vmatpush1.msra.mxu0 0.0
  %2583 = vmatprep.subr.mxu0 0.0
  %2584 = vmatpush1.msra.mxu0 0.0
  %2585 = vmatprep.subr.mxu0 0.0
  %2586 = vmatpush1.msra.mxu0 0.0
  %2587 = vmatprep.subr.mxu0 0.0
  %2588 = vmatpush1.msra.mxu0 0.0
  %2589 = vmatprep.subr.mxu0 0.0
  %2590 = vmatpush1.msra.mxu0 0.0
  %2591 = vmatprep.subr.mxu0 0.0
  %2592 = vmatpush1.msra.mxu0 0.0
  %2593 = vmatprep.subr.mxu0 0.0
  %2594 = vmatpush1.msra.mxu0 0.0
  %2595 = vmatprep.subr.mxu0 0.0
  %2596 = vmatpush1.msra.mxu0 0.0
  %2597 = vmatprep.subr.mxu0 0.0
  %2598 = vmatpush1.msra.mxu0 0.0
  %2599 = vmatprep.subr.mxu0 0.0
  %2600 = vmatpush1.msra.mxu0 0.0
  %2601 = vmatprep.subr.mxu0 0.0
  %2602 = vmatpush1.msra.mxu0 0.0
  %2603 = vmatprep.subr.mxu0 0.0
  %2604 = vmatpush1.msra.mxu0 0.0
  %2605 = vmatprep.mubr.f32.mxu0 0.0
  %2606 = vmatmul.mubr.f32.gmra.mrb[0].mxu0 %v2382
  %v2607 = vpop.f32.mrb[0].mxu0
  %v2608 = vadd.f32 %v1986, %v2607
  %v2609 = vpop.f32.mrb[0].mxu0
  %v2610 = vadd.f32 %v1988, %v2609
  %2611 = vmatprep.mubr.f32.mxu0 0.0
  %2612 = vmatmul.mubr.f32.gmra.mrb[0].mxu0 %v2385
  %v2613 = vpop.f32.mrb[0].mxu0
  %v2614 = vadd.f32 %v1992, %v2613
  %v2615 = vpop.f32.mrb[0].mxu0
  %v2616 = vadd.f32 %v1994, %v2615
  %2617 = vdwg.mxu0
  %2618 = vmatprep.subr.mxu0 %v1662
  %2619 = vmatpush1.msra.mxu0 %v1661
  %2620 = vmatprep.subr.mxu0 0.0
  %2621 = vmatpush1.msra.mxu0 0.0
  %2622 = vmatprep.subr.mxu0 0.0
  %2623 = vmatpush1.msra.mxu0 0.0
  %2624 = vmatprep.subr.mxu0 0.0
  %2625 = vmatpush1.msra.mxu0 0.0
  %2626 = vmatprep.subr.mxu0 0.0
  %2627 = vmatpush1.msra.mxu0 0.0
  %2628 = vmatprep.subr.mxu0 0.0
  %2629 = vmatpush1.msra.mxu0 0.0
  %2630 = vmatprep.subr.mxu0 0.0
  %2631 = vmatpush1.msra.mxu0 0.0
  %2632 = vmatprep.subr.mxu0 0.0
  %2633 = vmatpush1.msra.mxu0 0.0
  %2634 = vmatprep.subr.mxu0 0.0
  %2635 = vmatpush1.msra.mxu0 0.0
  %2636 = vmatprep.subr.mxu0 0.0
  %2637 = vmatpush1.msra.mxu0 0.0
  %2638 = vmatprep.subr.mxu0 0.0
  %2639 = vmatpush1.msra.mxu0 0.0
  %2640 = vmatprep.subr.mxu0 0.0
  %2641 = vmatpush1.msra.mxu0 0.0
  %2642 = vmatprep.subr.mxu0 0.0
  %2643 = vmatpush1.msra.mxu0 0.0
  %2644 = vmatprep.subr.mxu0 0.0
  %2645 = vmatpush1.msra.mxu0 0.0
  %2646 = vmatprep.subr.mxu0 0.0
  %2647 = vmatpush1.msra.mxu0 0.0
  %2648 = vmatprep.subr.mxu0 0.0
  %2649 = vmatpush1.msra.mxu0 0.0
  %2650 = vmatprep.subr.mxu0 0.0
  %2651 = vmatpush1.msra.mxu0 0.0
  %2652 = vmatprep.subr.mxu0 0.0
  %2653 = vmatpush1.msra.mxu0 0.0
  %2654 = vmatprep.subr.mxu0 0.0
  %2655 = vmatpush1.msra.mxu0 0.0
  %2656 = vmatprep.subr.mxu0 0.0
  %2657 = vmatpush1.msra.mxu0 0.0
  %2658 = vmatprep.subr.mxu0 0.0
  %2659 = vmatpush1.msra.mxu0 0.0
  %2660 = vmatprep.subr.mxu0 0.0
  %2661 = vmatpush1.msra.mxu0 0.0
  %2662 = vmatprep.subr.mxu0 0.0
  %2663 = vmatpush1.msra.mxu0 0.0
  %2664 = vmatprep.subr.mxu0 0.0
  %2665 = vmatpush1.msra.mxu0 0.0
  %2666 = vmatprep.subr.mxu0 0.0
  %2667 = vmatpush1.msra.mxu0 0.0
  %2668 = vmatprep.subr.mxu0 0.0
  %2669 = vmatpush1.msra.mxu0 0.0
  %2670 = vmatprep.subr.mxu0 0.0
  %2671 = vmatpush1.msra.mxu0 0.0
  %2672 = vmatprep.subr.mxu0 0.0
  %2673 = vmatpush1.msra.mxu0 0.0
  %2674 = vmatprep.subr.mxu0 0.0
  %2675 = vmatpush1.msra.mxu0 0.0
  %2676 = vmatprep.subr.mxu0 0.0
  %2677 = vmatpush1.msra.mxu0 0.0
  %2678 = vmatprep.subr.mxu0 0.0
  %2679 = vmatpush1.msra.mxu0 0.0
  %2680 = vmatprep.subr.mxu0 0.0
  %2681 = vmatpush1.msra.mxu0 0.0
  %2682 = vmatprep.mubr.f32.mxu0 0.0
  %2683 = vmatmul.mubr.f32.gmra.mrb[0].mxu0 %v2382
  %v2684 = vpop.f32.mrb[0].mxu0
  %v2685 = vadd.f32 %v2063, %v2684
  %v2686 = vpop.f32.mrb[0].mxu0
  %v2687 = vadd.f32 %v2065, %v2686
  %2688 = vmatprep.mubr.f32.mxu0 0.0
  %2689 = vmatmul.mubr.f32.gmra.mrb[0].mxu0 %v2385
  %v2690 = vpop.f32.mrb[0].mxu0
  %v2691 = vadd.f32 %v2069, %v2690
  %v2692 = vpop.f32.mrb[0].mxu0
  %v2693 = vadd.f32 %v2071, %v2692
  %2694 = vdwg.mxu0
  %2695 = vmatprep.subr.mxu0 %v1664
  %2696 = vmatpush1.msra.mxu0 %v1663
  %2697 = vmatprep.subr.mxu0 0.0
  %2698 = vmatpush1.msra.mxu0 0.0
  %2699 = vmatprep.subr.mxu0 0.0
  %2700 = vmatpush1.msra.mxu0 0.0
  %2701 = vmatprep.subr.mxu0 0.0
  %2702 = vmatpush1.msra.mxu0 0.0
  %2703 = vmatprep.subr.mxu0 0.0
  %2704 = vmatpush1.msra.mxu0 0.0
  %2705 = vmatprep.subr.mxu0 0.0
  %2706 = vmatpush1.msra.mxu0 0.0
  %2707 = vmatprep.subr.mxu0 0.0
  %2708 = vmatpush1.msra.mxu0 0.0
  %2709 = vmatprep.subr.mxu0 0.0
  %2710 = vmatpush1.msra.mxu0 0.0
  %2711 = vmatprep.subr.mxu0 0.0
  %2712 = vmatpush1.msra.mxu0 0.0
  %2713 = vmatprep.subr.mxu0 0.0
  %2714 = vmatpush1.msra.mxu0 0.0
  %2715 = vmatprep.subr.mxu0 0.0
  %2716 = vmatpush1.msra.mxu0 0.0
  %2717 = vmatprep.subr.mxu0 0.0
  %2718 = vmatpush1.msra.mxu0 0.0
  %2719 = vmatprep.subr.mxu0 0.0
  %2720 = vmatpush1.msra.mxu0 0.0
  %2721 = vmatprep.subr.mxu0 0.0
  %2722 = vmatpush1.msra.mxu0 0.0
  %2723 = vmatprep.subr.mxu0 0.0
  %2724 = vmatpush1.msra.mxu0 0.0
  %2725 = vmatprep.subr.mxu0 0.0
  %2726 = vmatpush1.msra.mxu0 0.0
  %2727 = vmatprep.subr.mxu0 0.0
  %2728 = vmatpush1.msra.mxu0 0.0
  %2729 = vmatprep.subr.mxu0 0.0
  %2730 = vmatpush1.msra.mxu0 0.0
  %2731 = vmatprep.subr.mxu0 0.0
  %2732 = vmatpush1.msra.mxu0 0.0
  %2733 = vmatprep.subr.mxu0 0.0
  %2734 = vmatpush1.msra.mxu0 0.0
  %2735 = vmatprep.subr.mxu0 0.0
  %2736 = vmatpush1.msra.mxu0 0.0
  %2737 = vmatprep.subr.mxu0 0.0
  %2738 = vmatpush1.msra.mxu0 0.0
  %2739 = vmatprep.subr.mxu0 0.0
  %2740 = vmatpush1.msra.mxu0 0.0
  %2741 = vmatprep.subr.mxu0 0.0
  %2742 = vmatpush1.msra.mxu0 0.0
  %2743 = vmatprep.subr.mxu0 0.0
  %2744 = vmatpush1.msra.mxu0 0.0
  %2745 = vmatprep.subr.mxu0 0.0
  %2746 = vmatpush1.msra.mxu0 0.0
  %2747 = vmatprep.subr.mxu0 0.0
  %2748 = vmatpush1.msra.mxu0 0.0
  %2749 = vmatprep.subr.mxu0 0.0
  %2750 = vmatpush1.msra.mxu0 0.0
  %2751 = vmatprep.subr.mxu0 0.0
  %2752 = vmatpush1.msra.mxu0 0.0
  %2753 = vmatprep.subr.mxu0 0.0
  %2754 = vmatpush1.msra.mxu0 0.0
  %2755 = vmatprep.subr.mxu0 0.0
  %2756 = vmatpush1.msra.mxu0 0.0
  %2757 = vmatprep.subr.mxu0 0.0
  %2758 = vmatpush1.msra.mxu0 0.0
  %2759 = vmatprep.mubr.f32.mxu0 0.0
  %2760 = vmatmul.mubr.f32.gmra.mrb[0].mxu0 %v2382
  %v2761 = vpop.f32.mrb[0].mxu0
  %v2762 = vadd.f32 %v2140, %v2761
  %v2763 = vpop.f32.mrb[0].mxu0
  %v2764 = vadd.f32 %v2142, %v2763
  %2765 = vmatprep.mubr.f32.mxu0 0.0
  %2766 = vmatmul.mubr.f32.gmra.mrb[0].mxu0 %v2385
  %v2767 = vpop.f32.mrb[0].mxu0
  %v2768 = vadd.f32 %v2146, %v2767
  %v2769 = vpop.f32.mrb[0].mxu0
  %v2770 = vadd.f32 %v2148, %v2769
  %2771 = vdwg.mxu0
  %2772 = vmatprep.subr.mxu0 %v1666
  %2773 = vmatpush1.msra.mxu0 %v1665
  %2774 = vmatprep.subr.mxu0 0.0
  %2775 = vmatpush1.msra.mxu0 0.0
  %2776 = vmatprep.subr.mxu0 0.0
  %2777 = vmatpush1.msra.mxu0 0.0
  %2778 = vmatprep.subr.mxu0 0.0
  %2779 = vmatpush1.msra.mxu0 0.0
  %2780 = vmatprep.subr.mxu0 0.0
  %2781 = vmatpush1.msra.mxu0 0.0
  %2782 = vmatprep.subr.mxu0 0.0
  %2783 = vmatpush1.msra.mxu0 0.0
  %2784 = vmatprep.subr.mxu0 0.0
  %2785 = vmatpush1.msra.mxu0 0.0
  %2786 = vmatprep.subr.mxu0 0.0
  %2787 = vmatpush1.msra.mxu0 0.0
  %2788 = vmatprep.subr.mxu0 0.0
  %2789 = vmatpush1.msra.mxu0 0.0
  %2790 = vmatprep.subr.mxu0 0.0
  %2791 = vmatpush1.msra.mxu0 0.0
  %2792 = vmatprep.subr.mxu0 0.0
  %2793 = vmatpush1.msra.mxu0 0.0
  %2794 = vmatprep.subr.mxu0 0.0
  %2795 = vmatpush1.msra.mxu0 0.0
  %2796 = vmatprep.subr.mxu0 0.0
  %2797 = vmatpush1.msra.mxu0 0.0
  %2798 = vmatprep.subr.mxu0 0.0
  %2799 = vmatpush1.msra.mxu0 0.0
  %2800 = vmatprep.subr.mxu0 0.0
  %2801 = vmatpush1.msra.mxu0 0.0
  %2802 = vmatprep.subr.mxu0 0.0
  %2803 = vmatpush1.msra.mxu0 0.0
  %2804 = vmatprep.subr.mxu0 0.0
  %2805 = vmatpush1.msra.mxu0 0.0
  %2806 = vmatprep.subr.mxu0 0.0
  %2807 = vmatpush1.msra.mxu0 0.0
  %2808 = vmatprep.subr.mxu0 0.0
  %2809 = vmatpush1.msra.mxu0 0.0
  %2810 = vmatprep.subr.mxu0 0.0
  %2811 = vmatpush1.msra.mxu0 0.0
  %2812 = vmatprep.subr.mxu0 0.0
  %2813 = vmatpush1.msra.mxu0 0.0
  %2814 = vmatprep.subr.mxu0 0.0
  %2815 = vmatpush1.msra.mxu0 0.0
  %2816 = vmatprep.subr.mxu0 0.0
  %2817 = vmatpush1.msra.mxu0 0.0
  %2818 = vmatprep.subr.mxu0 0.0
  %2819 = vmatpush1.msra.mxu0 0.0
  %2820 = vmatprep.subr.mxu0 0.0
  %2821 = vmatpush1.msra.mxu0 0.0
  %2822 = vmatprep.subr.mxu0 0.0
  %2823 = vmatpush1.msra.mxu0 0.0
  %2824 = vmatprep.subr.mxu0 0.0
  %2825 = vmatpush1.msra.mxu0 0.0
  %2826 = vmatprep.subr.mxu0 0.0
  %2827 = vmatpush1.msra.mxu0 0.0
  %2828 = vmatprep.subr.mxu0 0.0
  %2829 = vmatpush1.msra.mxu0 0.0
  %2830 = vmatprep.subr.mxu0 0.0
  %2831 = vmatpush1.msra.mxu0 0.0
  %2832 = vmatprep.subr.mxu0 0.0
  %2833 = vmatpush1.msra.mxu0 0.0
  %2834 = vmatprep.subr.mxu0 0.0
  %2835 = vmatpush1.msra.mxu0 0.0
  %2836 = vmatprep.mubr.f32.mxu0 0.0
  %2837 = vmatmul.mubr.f32.gmra.mrb[0].mxu0 %v2382
  %v2838 = vpop.f32.mrb[0].mxu0
  %v2839 = vadd.f32 %v2217, %v2838
  %v2840 = vpop.f32.mrb[0].mxu0
  %v2841 = vadd.f32 %v2219, %v2840
  %2842 = vmatprep.mubr.f32.mxu0 0.0
  %2843 = vmatmul.mubr.f32.gmra.mrb[0].mxu0 %v2385
  %v2844 = vpop.f32.mrb[0].mxu0
  %v2845 = vadd.f32 %v2223, %v2844
  %v2846 = vpop.f32.mrb[0].mxu0
  %v2847 = vadd.f32 %v2225, %v2846
  %2848 = vdwg.mxu0
  %2849 = vmatprep.subr.mxu0 %v1668
  %2850 = vmatpush1.msra.mxu0 %v1667
  %2851 = vmatprep.subr.mxu0 0.0
  %2852 = vmatpush1.msra.mxu0 0.0
  %2853 = vmatprep.subr.mxu0 0.0
  %2854 = vmatpush1.msra.mxu0 0.0
  %2855 = vmatprep.subr.mxu0 0.0
  %2856 = vmatpush1.msra.mxu0 0.0
  %2857 = vmatprep.subr.mxu0 0.0
  %2858 = vmatpush1.msra.mxu0 0.0
  %2859 = vmatprep.subr.mxu0 0.0
  %2860 = vmatpush1.msra.mxu0 0.0
  %2861 = vmatprep.subr.mxu0 0.0
  %2862 = vmatpush1.msra.mxu0 0.0
  %2863 = vmatprep.subr.mxu0 0.0
  %2864 = vmatpush1.msra.mxu0 0.0
  %2865 = vmatprep.subr.mxu0 0.0
  %2866 = vmatpush1.msra.mxu0 0.0
  %2867 = vmatprep.subr.mxu0 0.0
  %2868 = vmatpush1.msra.mxu0 0.0
  %2869 = vmatprep.subr.mxu0 0.0
  %2870 = vmatpush1.msra.mxu0 0.0
  %2871 = vmatprep.subr.mxu0 0.0
  %2872 = vmatpush1.msra.mxu0 0.0
  %2873 = vmatprep.subr.mxu0 0.0
  %2874 = vmatpush1.msra.mxu0 0.0
  %2875 = vmatprep.subr.mxu0 0.0
  %2876 = vmatpush1.msra.mxu0 0.0
  %2877 = vmatprep.subr.mxu0 0.0
  %2878 = vmatpush1.msra.mxu0 0.0
  %2879 = vmatprep.subr.mxu0 0.0
  %2880 = vmatpush1.msra.mxu0 0.0
  %2881 = vmatprep.subr.mxu0 0.0
  %2882 = vmatpush1.msra.mxu0 0.0
  %2883 = vmatprep.subr.mxu0 0.0
  %2884 = vmatpush1.msra.mxu0 0.0
  %2885 = vmatprep.subr.mxu0 0.0
  %2886 = vmatpush1.msra.mxu0 0.0
  %2887 = vmatprep.subr.mxu0 0.0
  %2888 = vmatpush1.msra.mxu0 0.0
  %2889 = vmatprep.subr.mxu0 0.0
  %2890 = vmatpush1.msra.mxu0 0.0
  %2891 = vmatprep.subr.mxu0 0.0
  %2892 = vmatpush1.msra.mxu0 0.0
  %2893 = vmatprep.subr.mxu0 0.0
  %2894 = vmatpush1.msra.mxu0 0.0
  %2895 = vmatprep.subr.mxu0 0.0
  %2896 = vmatpush1.msra.mxu0 0.0
  %2897 = vmatprep.subr.mxu0 0.0
  %2898 = vmatpush1.msra.mxu0 0.0
  %2899 = vmatprep.subr.mxu0 0.0
  %2900 = vmatpush1.msra.mxu0 0.0
  %2901 = vmatprep.subr.mxu0 0.0
  %2902 = vmatpush1.msra.mxu0 0.0
  %2903 = vmatprep.subr.mxu0 0.0
  %2904 = vmatpush1.msra.mxu0 0.0
  %2905 = vmatprep.subr.mxu0 0.0
  %2906 = vmatpush1.msra.mxu0 0.0
  %2907 = vmatprep.subr.mxu0 0.0
  %2908 = vmatpush1.msra.mxu0 0.0
  %2909 = vmatprep.subr.mxu0 0.0
  %2910 = vmatpush1.msra.mxu0 0.0
  %2911 = vmatprep.subr.mxu0 0.0
  %2912 = vmatpush1.msra.mxu0 0.0
  %2913 = vmatprep.mubr.f32.mxu0 0.0
  %2914 = vmatmul.mubr.f32.gmra.mrb[0].mxu0 %v2382
  %v2915 = vpop.f32.mrb[0].mxu0
  %v2916 = vadd.f32 %v2294, %v2915
  %v2917 = vpop.f32.mrb[0].mxu0
  %v2918 = vadd.f32 %v2296, %v2917
  %2919 = vmatprep.mubr.f32.mxu0 0.0
  %2920 = vmatmul.mubr.f32.gmra.mrb[0].mxu0 %v2385
  %v2921 = vpop.f32.mrb[0].mxu0
  %v2922 = vadd.f32 %v2300, %v2921
  %v2923 = vpop.f32.mrb[0].mxu0
  %v2924 = vadd.f32 %v2302, %v2923
  %2925 = vdwg.mxu0
  %2926 = vmatprep.subr.mxu0 %v1670
  %2927 = vmatpush1.msra.mxu0 %v1669
  %2928 = vmatprep.subr.mxu0 0.0
  %2929 = vmatpush1.msra.mxu0 0.0
  %2930 = vmatprep.subr.mxu0 0.0
  %2931 = vmatpush1.msra.mxu0 0.0
  %2932 = vmatprep.subr.mxu0 0.0
  %2933 = vmatpush1.msra.mxu0 0.0
  %2934 = vmatprep.subr.mxu0 0.0
  %2935 = vmatpush1.msra.mxu0 0.0
  %2936 = vmatprep.subr.mxu0 0.0
  %2937 = vmatpush1.msra.mxu0 0.0
  %2938 = vmatprep.subr.mxu0 0.0
  %2939 = vmatpush1.msra.mxu0 0.0
  %2940 = vmatprep.subr.mxu0 0.0
  %2941 = vmatpush1.msra.mxu0 0.0
  %2942 = vmatprep.subr.mxu0 0.0
  %2943 = vmatpush1.msra.mxu0 0.0
  %2944 = vmatprep.subr.mxu0 0.0
  %2945 = vmatpush1.msra.mxu0 0.0
  %2946 = vmatprep.subr.mxu0 0.0
  %2947 = vmatpush1.msra.mxu0 0.0
  %2948 = vmatprep.subr.mxu0 0.0
  %2949 = vmatpush1.msra.mxu0 0.0
  %2950 = vmatprep.subr.mxu0 0.0
  %2951 = vmatpush1.msra.mxu0 0.0
  %2952 = vmatprep.subr.mxu0 0.0
  %2953 = vmatpush1.msra.mxu0 0.0
  %2954 = vmatprep.subr.mxu0 0.0
  %2955 = vmatpush1.msra.mxu0 0.0
  %2956 = vmatprep.subr.mxu0 0.0
  %2957 = vmatpush1.msra.mxu0 0.0
  %2958 = vmatprep.subr.mxu0 0.0
  %2959 = vmatpush1.msra.mxu0 0.0
  %2960 = vmatprep.subr.mxu0 0.0
  %2961 = vmatpush1.msra.mxu0 0.0
  %2962 = vmatprep.subr.mxu0 0.0
  %2963 = vmatpush1.msra.mxu0 0.0
  %2964 = vmatprep.subr.mxu0 0.0
  %2965 = vmatpush1.msra.mxu0 0.0
  %2966 = vmatprep.subr.mxu0 0.0
  %2967 = vmatpush1.msra.mxu0 0.0
  %2968 = vmatprep.subr.mxu0 0.0
  %2969 = vmatpush1.msra.mxu0 0.0
  %2970 = vmatprep.subr.mxu0 0.0
  %2971 = vmatpush1.msra.mxu0 0.0
  %2972 = vmatprep.subr.mxu0 0.0
  %2973 = vmatpush1.msra.mxu0 0.0
  %2974 = vmatprep.subr.mxu0 0.0
  %2975 = vmatpush1.msra.mxu0 0.0
  %2976 = vmatprep.subr.mxu0 0.0
  %2977 = vmatpush1.msra.mxu0 0.0
  %2978 = vmatprep.subr.mxu0 0.0
  %2979 = vmatpush1.msra.mxu0 0.0
  %2980 = vmatprep.subr.mxu0 0.0
  %2981 = vmatpush1.msra.mxu0 0.0
  %2982 = vmatprep.subr.mxu0 0.0
  %2983 = vmatpush1.msra.mxu0 0.0
  %2984 = vmatprep.subr.mxu0 0.0
  %2985 = vmatpush1.msra.mxu0 0.0
  %2986 = vmatprep.subr.mxu0 0.0
  %2987 = vmatpush1.msra.mxu0 0.0
  %2988 = vmatprep.subr.mxu0 0.0
  %2989 = vmatpush1.msra.mxu0 0.0
  %2990 = vmatprep.mubr.f32.mxu0 0.0
  %2991 = vmatmul.mubr.f32.gmra.mrb[0].mxu0 %v2382
  %v2992 = vpop.f32.mrb[0].mxu0
  %v2993 = vadd.f32 %v2371, %v2992
  %v2994 = vpop.f32.mrb[0].mxu0
  %v2995 = vadd.f32 %v2373, %v2994
  %2996 = vmatprep.mubr.f32.mxu0 0.0
  %2997 = vmatmul.mubr.f32.gmra.mrb[0].mxu0 %v2385
  %v2998 = vpop.f32.mrb[0].mxu0
  %v2999 = vadd.f32 %v2377, %v2998
  %v3000 = vpop.f32.mrb[0].mxu0
  %v3001 = vadd.f32 %v2379, %v3000
  %3002 = vdwg.mxu0
  %s3003 = scalar_lea.vmem %s3, 32
  %v3004 = vld [vmem:[%s3003] sm:$0xff]
  %v3005 = vld [vmem:[%s3003 + $0x8] sm:$0xff]
  %3006 = vrot.lane.b32.xlu0 %v1655, 120
  %v3007 = vpop.permute.xlu0 %3006
  %3008 = vrot.lane.b32.xlu0 %v1656, 120
  %v3009 = vpop.permute.xlu0 %3008
  %3010 = vrot.lane.b32.xlu0 %v1657, 120
  %v3011 = vpop.permute.xlu0 %3010
  %3012 = vrot.lane.b32.xlu0 %v1658, 120
  %v3013 = vpop.permute.xlu0 %3012
  %3014 = vrot.lane.b32.xlu0 %v1659, 120
  %v3015 = vpop.permute.xlu0 %3014
  %3016 = vrot.lane.b32.xlu0 %v1660, 120
  %v3017 = vpop.permute.xlu0 %3016
  %3018 = vrot.lane.b32.xlu0 %v1661, 120
  %v3019 = vpop.permute.xlu0 %3018
  %3020 = vrot.lane.b32.xlu0 %v1662, 120
  %v3021 = vpop.permute.xlu0 %3020
  %3022 = vrot.lane.b32.xlu0 %v1663, 120
  %v3023 = vpop.permute.xlu0 %3022
  %3024 = vrot.lane.b32.xlu0 %v1664, 120
  %v3025 = vpop.permute.xlu0 %3024
  %3026 = vrot.lane.b32.xlu0 %v1665, 120
  %v3027 = vpop.permute.xlu0 %3026
  %3028 = vrot.lane.b32.xlu0 %v1666, 120
  %v3029 = vpop.permute.xlu0 %3028
  %3030 = vrot.lane.b32.xlu0 %v1667, 120
  %v3031 = vpop.permute.xlu0 %3030
  %3032 = vrot.lane.b32.xlu0 %v1668, 120
  %v3033 = vpop.permute.xlu0 %3032
  %3034 = vrot.lane.b32.xlu0 %v1669, 120
  %v3035 = vpop.permute.xlu0 %3034
  %3036 = vrot.lane.b32.xlu0 %v1670, 120
  %v3037 = vpop.permute.xlu0 %3036
  %3038 = vrot.lane.b32.xlu0 %v1674, 120
  %v3039 = vpop.permute.xlu0 %3038
  %vm3040 = vcmask 982016
  %v3041 = vsel %vm3040, %v3007, %v3009
  %v3042 = vsel %vm3040, %v3009, %v3011
  %v3043 = vsel %vm3040, %v3011, %v3013
  %v3044 = vsel %vm3040, %v3013, %v3015
  %v3045 = vsel %vm3040, %v3015, %v3017
  %v3046 = vsel %vm3040, %v3017, %v3019
  %v3047 = vsel %vm3040, %v3019, %v3021
  %v3048 = vsel %vm3040, %v3021, %v3023
  %v3049 = vsel %vm3040, %v3023, %v3025
  %v3050 = vsel %vm3040, %v3025, %v3027
  %v3051 = vsel %vm3040, %v3027, %v3029
  %v3052 = vsel %vm3040, %v3029, %v3031
  %v3053 = vsel %vm3040, %v3031, %v3033
  %v3054 = vsel %vm3040, %v3033, %v3035
  %v3055 = vsel %vm3040, %v3035, %v3037
  %v3056 = vsel %vm3040, %v3037, %v3039
  %v3074 = vsel %vm1758, %v3004, 0
  %v3077 = vsel %vm1758, %v3005, 0
  %3079 = vmatprep.subr.mxu0 %v3042
  %3080 = vmatpush1.msra.mxu0 %v3041
  %3081 = vmatprep.subr.mxu0 0.0
  %3082 = vmatpush1.msra.mxu0 0.0
  %3083 = vmatprep.subr.mxu0 0.0
  %3084 = vmatpush1.msra.mxu0 0.0
  %3085 = vmatprep.subr.mxu0 0.0
  %3086 = vmatpush1.msra.mxu0 0.0
  %3087 = vmatprep.subr.mxu0 0.0
  %3088 = vmatpush1.msra.mxu0 0.0
  %3089 = vmatprep.subr.mxu0 0.0
  %3090 = vmatpush1.msra.mxu0 0.0
  %3091 = vmatprep.subr.mxu0 0.0
  %3092 = vmatpush1.msra.mxu0 0.0
  %3093 = vmatprep.subr.mxu0 0.0
  %3094 = vmatpush1.msra.mxu0 0.0
  %3095 = vmatprep.subr.mxu0 0.0
  %3096 = vmatpush1.msra.mxu0 0.0
  %3097 = vmatprep.subr.mxu0 0.0
  %3098 = vmatpush1.msra.mxu0 0.0
  %3099 = vmatprep.subr.mxu0 0.0
  %3100 = vmatpush1.msra.mxu0 0.0
  %3101 = vmatprep.subr.mxu0 0.0
  %3102 = vmatpush1.msra.mxu0 0.0
  %3103 = vmatprep.subr.mxu0 0.0
  %3104 = vmatpush1.msra.mxu0 0.0
  %3105 = vmatprep.subr.mxu0 0.0
  %3106 = vmatpush1.msra.mxu0 0.0
  %3107 = vmatprep.subr.mxu0 0.0
  %3108 = vmatpush1.msra.mxu0 0.0
  %3109 = vmatprep.subr.mxu0 0.0
  %3110 = vmatpush1.msra.mxu0 0.0
  %3111 = vmatprep.subr.mxu0 0.0
  %3112 = vmatpush1.msra.mxu0 0.0
  %3113 = vmatprep.subr.mxu0 0.0
  %3114 = vmatpush1.msra.mxu0 0.0
  %3115 = vmatprep.subr.mxu0 0.0
  %3116 = vmatpush1.msra.mxu0 0.0
  %3117 = vmatprep.subr.mxu0 0.0
  %3118 = vmatpush1.msra.mxu0 0.0
  %3119 = vmatprep.subr.mxu0 0.0
  %3120 = vmatpush1.msra.mxu0 0.0
  %3121 = vmatprep.subr.mxu0 0.0
  %3122 = vmatpush1.msra.mxu0 0.0
  %3123 = vmatprep.subr.mxu0 0.0
  %3124 = vmatpush1.msra.mxu0 0.0
  %3125 = vmatprep.subr.mxu0 0.0
  %3126 = vmatpush1.msra.mxu0 0.0
  %3127 = vmatprep.subr.mxu0 0.0
  %3128 = vmatpush1.msra.mxu0 0.0
  %3129 = vmatprep.subr.mxu0 0.0
  %3130 = vmatpush1.msra.mxu0 0.0
  %3131 = vmatprep.subr.mxu0 0.0
  %3132 = vmatpush1.msra.mxu0 0.0
  %3133 = vmatprep.subr.mxu0 0.0
  %3134 = vmatpush1.msra.mxu0 0.0
  %3135 = vmatprep.subr.mxu0 0.0
  %3136 = vmatpush1.msra.mxu0 0.0
  %3137 = vmatprep.subr.mxu0 0.0
  %3138 = vmatpush1.msra.mxu0 0.0
  %3139 = vmatprep.subr.mxu0 0.0
  %3140 = vmatpush1.msra.mxu0 0.0
  %3141 = vmatprep.subr.mxu0 0.0
  %3142 = vmatpush1.msra.mxu0 0.0
  %3143 = vmatprep.mubr.f32.mxu0 0.0
  %3144 = vmatmul.mubr.f32.gmra.mrb[0].mxu0 %v3074
  %v3145 = vpop.f32.mrb[0].mxu0
  %v3146 = vadd.f32 0.0, %v3145
  %v3147 = vpop.f32.mrb[0].mxu0
  %v3148 = vadd.f32 0.0, %v3147
  %3149 = vmatprep.mubr.f32.mxu0 0.0
  %3150 = vmatmul.mubr.f32.gmra.mrb[0].mxu0 %v3077
  %v3151 = vpop.f32.mrb[0].mxu0
  %v3152 = vadd.f32 0.0, %v3151
  %v3153 = vpop.f32.mrb[0].mxu0
  %v3154 = vadd.f32 0.0, %v3153
  %3155 = vdwg.mxu0
  %3156 = vmatprep.subr.mxu0 %v3044
  %3157 = vmatpush1.msra.mxu0 %v3043
  %3158 = vmatprep.subr.mxu0 0.0
  %3159 = vmatpush1.msra.mxu0 0.0
  %3160 = vmatprep.subr.mxu0 0.0
  %3161 = vmatpush1.msra.mxu0 0.0
  %3162 = vmatprep.subr.mxu0 0.0
  %3163 = vmatpush1.msra.mxu0 0.0
  %3164 = vmatprep.subr.mxu0 0.0
  %3165 = vmatpush1.msra.mxu0 0.0
  %3166 = vmatprep.subr.mxu0 0.0
  %3167 = vmatpush1.msra.mxu0 0.0
  %3168 = vmatprep.subr.mxu0 0.0
  %3169 = vmatpush1.msra.mxu0 0.0
  %3170 = vmatprep.subr.mxu0 0.0
  %3171 = vmatpush1.msra.mxu0 0.0
  %3172 = vmatprep.subr.mxu0 0.0
  %3173 = vmatpush1.msra.mxu0 0.0
  %3174 = vmatprep.subr.mxu0 0.0
  %3175 = vmatpush1.msra.mxu0 0.0
  %3176 = vmatprep.subr.mxu0 0.0
  %3177 = vmatpush1.msra.mxu0 0.0
  %3178 = vmatprep.subr.mxu0 0.0
  %3179 = vmatpush1.msra.mxu0 0.0
  %3180 = vmatprep.subr.mxu0 0.0
  %3181 = vmatpush1.msra.mxu0 0.0
  %3182 = vmatprep.subr.mxu0 0.0
  %3183 = vmatpush1.msra.mxu0 0.0
  %3184 = vmatprep.subr.mxu0 0.0
  %3185 = vmatpush1.msra.mxu0 0.0
  %3186 = vmatprep.subr.mxu0 0.0
  %3187 = vmatpush1.msra.mxu0 0.0
  %3188 = vmatprep.subr.mxu0 0.0
  %3189 = vmatpush1.msra.mxu0 0.0
  %3190 = vmatprep.subr.mxu0 0.0
  %3191 = vmatpush1.msra.mxu0 0.0
  %3192 = vmatprep.subr.mxu0 0.0
  %3193 = vmatpush1.msra.mxu0 0.0
  %3194 = vmatprep.subr.mxu0 0.0
  %3195 = vmatpush1.msra.mxu0 0.0
  %3196 = vmatprep.subr.mxu0 0.0
  %3197 = vmatpush1.msra.mxu0 0.0
  %3198 = vmatprep.subr.mxu0 0.0
  %3199 = vmatpush1.msra.mxu0 0.0
  %3200 = vmatprep.subr.mxu0 0.0
  %3201 = vmatpush1.msra.mxu0 0.0
  %3202 = vmatprep.subr.mxu0 0.0
  %3203 = vmatpush1.msra.mxu0 0.0
  %3204 = vmatprep.subr.mxu0 0.0
  %3205 = vmatpush1.msra.mxu0 0.0
  %3206 = vmatprep.subr.mxu0 0.0
  %3207 = vmatpush1.msra.mxu0 0.0
  %3208 = vmatprep.subr.mxu0 0.0
  %3209 = vmatpush1.msra.mxu0 0.0
  %3210 = vmatprep.subr.mxu0 0.0
  %3211 = vmatpush1.msra.mxu0 0.0
  %3212 = vmatprep.subr.mxu0 0.0
  %3213 = vmatpush1.msra.mxu0 0.0
  %3214 = vmatprep.subr.mxu0 0.0
  %3215 = vmatpush1.msra.mxu0 0.0
  %3216 = vmatprep.subr.mxu0 0.0
  %3217 = vmatpush1.msra.mxu0 0.0
  %3218 = vmatprep.subr.mxu0 0.0
  %3219 = vmatpush1.msra.mxu0 0.0
  %3220 = vmatprep.mubr.f32.mxu0 0.0
  %3221 = vmatmul.mubr.f32.gmra.mrb[0].mxu0 %v3074
  %v3222 = vpop.f32.mrb[0].mxu0
  %v3223 = vadd.f32 0.0, %v3222
  %v3224 = vpop.f32.mrb[0].mxu0
  %v3225 = vadd.f32 0.0, %v3224
  %3226 = vmatprep.mubr.f32.mxu0 0.0
  %3227 = vmatmul.mubr.f32.gmra.mrb[0].mxu0 %v3077
  %v3228 = vpop.f32.mrb[0].mxu0
  %v3229 = vadd.f32 0.0, %v3228
  %v3230 = vpop.f32.mrb[0].mxu0
  %v3231 = vadd.f32 0.0, %v3230
  %3232 = vdwg.mxu0
  %3233 = vmatprep.subr.mxu0 %v3046
  %3234 = vmatpush1.msra.mxu0 %v3045
  %3235 = vmatprep.subr.mxu0 0.0
  %3236 = vmatpush1.msra.mxu0 0.0
  %3237 = vmatprep.subr.mxu0 0.0
  %3238 = vmatpush1.msra.mxu0 0.0
  %3239 = vmatprep.subr.mxu0 0.0
  %3240 = vmatpush1.msra.mxu0 0.0
  %3241 = vmatprep.subr.mxu0 0.0
  %3242 = vmatpush1.msra.mxu0 0.0
  %3243 = vmatprep.subr.mxu0 0.0
  %3244 = vmatpush1.msra.mxu0 0.0
  %3245 = vmatprep.subr.mxu0 0.0
  %3246 = vmatpush1.msra.mxu0 0.0
  %3247 = vmatprep.subr.mxu0 0.0
  %3248 = vmatpush1.msra.mxu0 0.0
  %3249 = vmatprep.subr.mxu0 0.0
  %3250 = vmatpush1.msra.mxu0 0.0
  %3251 = vmatprep.subr.mxu0 0.0
  %3252 = vmatpush1.msra.mxu0 0.0
  %3253 = vmatprep.subr.mxu0 0.0
  %3254 = vmatpush1.msra.mxu0 0.0
  %3255 = vmatprep.subr.mxu0 0.0
  %3256 = vmatpush1.msra.mxu0 0.0
  %3257 = vmatprep.subr.mxu0 0.0
  %3258 = vmatpush1.msra.mxu0 0.0
  %3259 = vmatprep.subr.mxu0 0.0
  %3260 = vmatpush1.msra.mxu0 0.0
  %3261 = vmatprep.subr.mxu0 0.0
  %3262 = vmatpush1.msra.mxu0 0.0
  %3263 = vmatprep.subr.mxu0 0.0
  %3264 = vmatpush1.msra.mxu0 0.0
  %3265 = vmatprep.subr.mxu0 0.0
  %3266 = vmatpush1.msra.mxu0 0.0
  %3267 = vmatprep.subr.mxu0 0.0
  %3268 = vmatpush1.msra.mxu0 0.0
  %3269 = vmatprep.subr.mxu0 0.0
  %3270 = vmatpush1.msra.mxu0 0.0
  %3271 = vmatprep.subr.mxu0 0.0
  %3272 = vmatpush1.msra.mxu0 0.0
  %3273 = vmatprep.subr.mxu0 0.0
  %3274 = vmatpush1.msra.mxu0 0.0
  %3275 = vmatprep.subr.mxu0 0.0
  %3276 = vmatpush1.msra.mxu0 0.0
  %3277 = vmatprep.subr.mxu0 0.0
  %3278 = vmatpush1.msra.mxu0 0.0
  %3279 = vmatprep.subr.mxu0 0.0
  %3280 = vmatpush1.msra.mxu0 0.0
  %3281 = vmatprep.subr.mxu0 0.0
  %3282 = vmatpush1.msra.mxu0 0.0
  %3283 = vmatprep.subr.mxu0 0.0
  %3284 = vmatpush1.msra.mxu0 0.0
  %3285 = vmatprep.subr.mxu0 0.0
  %3286 = vmatpush1.msra.mxu0 0.0
  %3287 = vmatprep.subr.mxu0 0.0
  %3288 = vmatpush1.msra.mxu0 0.0
  %3289 = vmatprep.subr.mxu0 0.0
  %3290 = vmatpush1.msra.mxu0 0.0
  %3291 = vmatprep.subr.mxu0 0.0
  %3292 = vmatpush1.msra.mxu0 0.0
  %3293 = vmatprep.subr.mxu0 0.0
  %3294 = vmatpush1.msra.mxu0 0.0
  %3295 = vmatprep.subr.mxu0 0.0
  %3296 = vmatpush1.msra.mxu0 0.0
  %3297 = vmatprep.mubr.f32.mxu0 0.0
  %3298 = vmatmul.mubr.f32.gmra.mrb[0].mxu0 %v3074
  %v3299 = vpop.f32.mrb[0].mxu0
  %v3300 = vadd.f32 0.0, %v3299
  %v3301 = vpop.f32.mrb[0].mxu0
  %v3302 = vadd.f32 0.0, %v3301
  %3303 = vmatprep.mubr.f32.mxu0 0.0
  %3304 = vmatmul.mubr.f32.gmra.mrb[0].mxu0 %v3077
  %v3305 = vpop.f32.mrb[0].mxu0
  %v3306 = vadd.f32 0.0, %v3305
  %v3307 = vpop.f32.mrb[0].mxu0
  %v3308 = vadd.f32 0.0, %v3307
  %3309 = vdwg.mxu0
  %3310 = vmatprep.subr.mxu0 %v3048
  %3311 = vmatpush1.msra.mxu0 %v3047
  %3312 = vmatprep.subr.mxu0 0.0
  %3313 = vmatpush1.msra.mxu0 0.0
  %3314 = vmatprep.subr.mxu0 0.0
  %3315 = vmatpush1.msra.mxu0 0.0
  %3316 = vmatprep.subr.mxu0 0.0
  %3317 = vmatpush1.msra.mxu0 0.0
  %3318 = vmatprep.subr.mxu0 0.0
  %3319 = vmatpush1.msra.mxu0 0.0
  %3320 = vmatprep.subr.mxu0 0.0
  %3321 = vmatpush1.msra.mxu0 0.0
  %3322 = vmatprep.subr.mxu0 0.0
  %3323 = vmatpush1.msra.mxu0 0.0
  %3324 = vmatprep.subr.mxu0 0.0
  %3325 = vmatpush1.msra.mxu0 0.0
  %3326 = vmatprep.subr.mxu0 0.0
  %3327 = vmatpush1.msra.mxu0 0.0
  %3328 = vmatprep.subr.mxu0 0.0
  %3329 = vmatpush1.msra.mxu0 0.0
  %3330 = vmatprep.subr.mxu0 0.0
  %3331 = vmatpush1.msra.mxu0 0.0
  %3332 = vmatprep.subr.mxu0 0.0
  %3333 = vmatpush1.msra.mxu0 0.0
  %3334 = vmatprep.subr.mxu0 0.0
  %3335 = vmatpush1.msra.mxu0 0.0
  %3336 = vmatprep.subr.mxu0 0.0
  %3337 = vmatpush1.msra.mxu0 0.0
  %3338 = vmatprep.subr.mxu0 0.0
  %3339 = vmatpush1.msra.mxu0 0.0
  %3340 = vmatprep.subr.mxu0 0.0
  %3341 = vmatpush1.msra.mxu0 0.0
  %3342 = vmatprep.subr.mxu0 0.0
  %3343 = vmatpush1.msra.mxu0 0.0
  %3344 = vmatprep.subr.mxu0 0.0
  %3345 = vmatpush1.msra.mxu0 0.0
  %3346 = vmatprep.subr.mxu0 0.0
  %3347 = vmatpush1.msra.mxu0 0.0
  %3348 = vmatprep.subr.mxu0 0.0
  %3349 = vmatpush1.msra.mxu0 0.0
  %3350 = vmatprep.subr.mxu0 0.0
  %3351 = vmatpush1.msra.mxu0 0.0
  %3352 = vmatprep.subr.mxu0 0.0
  %3353 = vmatpush1.msra.mxu0 0.0
  %3354 = vmatprep.subr.mxu0 0.0
  %3355 = vmatpush1.msra.mxu0 0.0
  %3356 = vmatprep.subr.mxu0 0.0
  %3357 = vmatpush1.msra.mxu0 0.0
  %3358 = vmatprep.subr.mxu0 0.0
  %3359 = vmatpush1.msra.mxu0 0.0
  %3360 = vmatprep.subr.mxu0 0.0
  %3361 = vmatpush1.msra.mxu0 0.0
  %3362 = vmatprep.subr.mxu0 0.0
  %3363 = vmatpush1.msra.mxu0 0.0
  %3364 = vmatprep.subr.mxu0 0.0
  %3365 = vmatpush1.msra.mxu0 0.0
  %3366 = vmatprep.subr.mxu0 0.0
  %3367 = vmatpush1.msra.mxu0 0.0
  %3368 = vmatprep.subr.mxu0 0.0
  %3369 = vmatpush1.msra.mxu0 0.0
  %3370 = vmatprep.subr.mxu0 0.0
  %3371 = vmatpush1.msra.mxu0 0.0
  %3372 = vmatprep.subr.mxu0 0.0
  %3373 = vmatpush1.msra.mxu0 0.0
  %3374 = vmatprep.mubr.f32.mxu0 0.0
  %3375 = vmatmul.mubr.f32.gmra.mrb[0].mxu0 %v3074
  %v3376 = vpop.f32.mrb[0].mxu0
  %v3377 = vadd.f32 0.0, %v3376
  %v3378 = vpop.f32.mrb[0].mxu0
  %v3379 = vadd.f32 0.0, %v3378
  %3380 = vmatprep.mubr.f32.mxu0 0.0
  %3381 = vmatmul.mubr.f32.gmra.mrb[0].mxu0 %v3077
  %v3382 = vpop.f32.mrb[0].mxu0
  %v3383 = vadd.f32 0.0, %v3382
  %v3384 = vpop.f32.mrb[0].mxu0
  %v3385 = vadd.f32 0.0, %v3384
  %3386 = vdwg.mxu0
  %3387 = vmatprep.subr.mxu0 %v3050
  %3388 = vmatpush1.msra.mxu0 %v3049
  %3389 = vmatprep.subr.mxu0 0.0
  %3390 = vmatpush1.msra.mxu0 0.0
  %3391 = vmatprep.subr.mxu0 0.0
  %3392 = vmatpush1.msra.mxu0 0.0
  %3393 = vmatprep.subr.mxu0 0.0
  %3394 = vmatpush1.msra.mxu0 0.0
  %3395 = vmatprep.subr.mxu0 0.0
  %3396 = vmatpush1.msra.mxu0 0.0
  %3397 = vmatprep.subr.mxu0 0.0
  %3398 = vmatpush1.msra.mxu0 0.0
  %3399 = vmatprep.subr.mxu0 0.0
  %3400 = vmatpush1.msra.mxu0 0.0
  %3401 = vmatprep.subr.mxu0 0.0
  %3402 = vmatpush1.msra.mxu0 0.0
  %3403 = vmatprep.subr.mxu0 0.0
  %3404 = vmatpush1.msra.mxu0 0.0
  %3405 = vmatprep.subr.mxu0 0.0
  %3406 = vmatpush1.msra.mxu0 0.0
  %3407 = vmatprep.subr.mxu0 0.0
  %3408 = vmatpush1.msra.mxu0 0.0
  %3409 = vmatprep.subr.mxu0 0.0
  %3410 = vmatpush1.msra.mxu0 0.0
  %3411 = vmatprep.subr.mxu0 0.0
  %3412 = vmatpush1.msra.mxu0 0.0
  %3413 = vmatprep.subr.mxu0 0.0
  %3414 = vmatpush1.msra.mxu0 0.0
  %3415 = vmatprep.subr.mxu0 0.0
  %3416 = vmatpush1.msra.mxu0 0.0
  %3417 = vmatprep.subr.mxu0 0.0
  %3418 = vmatpush1.msra.mxu0 0.0
  %3419 = vmatprep.subr.mxu0 0.0
  %3420 = vmatpush1.msra.mxu0 0.0
  %3421 = vmatprep.subr.mxu0 0.0
  %3422 = vmatpush1.msra.mxu0 0.0
  %3423 = vmatprep.subr.mxu0 0.0
  %3424 = vmatpush1.msra.mxu0 0.0
  %3425 = vmatprep.subr.mxu0 0.0
  %3426 = vmatpush1.msra.mxu0 0.0
  %3427 = vmatprep.subr.mxu0 0.0
  %3428 = vmatpush1.msra.mxu0 0.0
  %3429 = vmatprep.subr.mxu0 0.0
  %3430 = vmatpush1.msra.mxu0 0.0
  %3431 = vmatprep.subr.mxu0 0.0
  %3432 = vmatpush1.msra.mxu0 0.0
  %3433 = vmatprep.subr.mxu0 0.0
  %3434 = vmatpush1.msra.mxu0 0.0
  %3435 = vmatprep.subr.mxu0 0.0
  %3436 = vmatpush1.msra.mxu0 0.0
  %3437 = vmatprep.subr.mxu0 0.0
  %3438 = vmatpush1.msra.mxu0 0.0
  %3439 = vmatprep.subr.mxu0 0.0
  %3440 = vmatpush1.msra.mxu0 0.0
  %3441 = vmatprep.subr.mxu0 0.0
  %3442 = vmatpush1.msra.mxu0 0.0
  %3443 = vmatprep.subr.mxu0 0.0
  %3444 = vmatpush1.msra.mxu0 0.0
  %3445 = vmatprep.subr.mxu0 0.0
  %3446 = vmatpush1.msra.mxu0 0.0
  %3447 = vmatprep.subr.mxu0 0.0
  %3448 = vmatpush1.msra.mxu0 0.0
  %3449 = vmatprep.subr.mxu0 0.0
  %3450 = vmatpush1.msra.mxu0 0.0
  %3451 = vmatprep.mubr.f32.mxu0 0.0
  %3452 = vmatmul.mubr.f32.gmra.mrb[0].mxu0 %v3074
  %v3453 = vpop.f32.mrb[0].mxu0
  %v3454 = vadd.f32 0.0, %v3453
  %v3455 = vpop.f32.mrb[0].mxu0
  %v3456 = vadd.f32 0.0, %v3455
  %3457 = vmatprep.mubr.f32.mxu0 0.0
  %3458 = vmatmul.mubr.f32.gmra.mrb[0].mxu0 %v3077
  %v3459 = vpop.f32.mrb[0].mxu0
  %v3460 = vadd.f32 0.0, %v3459
  %v3461 = vpop.f32.mrb[0].mxu0
  %v3462 = vadd.f32 0.0, %v3461
  %3463 = vdwg.mxu0
  %3464 = vmatprep.subr.mxu0 %v3052
  %3465 = vmatpush1.msra.mxu0 %v3051
  %3466 = vmatprep.subr.mxu0 0.0
  %3467 = vmatpush1.msra.mxu0 0.0
  %3468 = vmatprep.subr.mxu0 0.0
  %3469 = vmatpush1.msra.mxu0 0.0
  %3470 = vmatprep.subr.mxu0 0.0
  %3471 = vmatpush1.msra.mxu0 0.0
  %3472 = vmatprep.subr.mxu0 0.0
  %3473 = vmatpush1.msra.mxu0 0.0
  %3474 = vmatprep.subr.mxu0 0.0
  %3475 = vmatpush1.msra.mxu0 0.0
  %3476 = vmatprep.subr.mxu0 0.0
  %3477 = vmatpush1.msra.mxu0 0.0
  %3478 = vmatprep.subr.mxu0 0.0
  %3479 = vmatpush1.msra.mxu0 0.0
  %3480 = vmatprep.subr.mxu0 0.0
  %3481 = vmatpush1.msra.mxu0 0.0
  %3482 = vmatprep.subr.mxu0 0.0
  %3483 = vmatpush1.msra.mxu0 0.0
  %3484 = vmatprep.subr.mxu0 0.0
  %3485 = vmatpush1.msra.mxu0 0.0
  %3486 = vmatprep.subr.mxu0 0.0
  %3487 = vmatpush1.msra.mxu0 0.0
  %3488 = vmatprep.subr.mxu0 0.0
  %3489 = vmatpush1.msra.mxu0 0.0
  %3490 = vmatprep.subr.mxu0 0.0
  %3491 = vmatpush1.msra.mxu0 0.0
  %3492 = vmatprep.subr.mxu0 0.0
  %3493 = vmatpush1.msra.mxu0 0.0
  %3494 = vmatprep.subr.mxu0 0.0
  %3495 = vmatpush1.msra.mxu0 0.0
  %3496 = vmatprep.subr.mxu0 0.0
  %3497 = vmatpush1.msra.mxu0 0.0
  %3498 = vmatprep.subr.mxu0 0.0
  %3499 = vmatpush1.msra.mxu0 0.0
  %3500 = vmatprep.subr.mxu0 0.0
  %3501 = vmatpush1.msra.mxu0 0.0
  %3502 = vmatprep.subr.mxu0 0.0
  %3503 = vmatpush1.msra.mxu0 0.0
  %3504 = vmatprep.subr.mxu0 0.0
  %3505 = vmatpush1.msra.mxu0 0.0
  %3506 = vmatprep.subr.mxu0 0.0
  %3507 = vmatpush1.msra.mxu0 0.0
  %3508 = vmatprep.subr.mxu0 0.0
  %3509 = vmatpush1.msra.mxu0 0.0
  %3510 = vmatprep.subr.mxu0 0.0
  %3511 = vmatpush1.msra.mxu0 0.0
  %3512 = vmatprep.subr.mxu0 0.0
  %3513 = vmatpush1.msra.mxu0 0.0
  %3514 = vmatprep.subr.mxu0 0.0
  %3515 = vmatpush1.msra.mxu0 0.0
  %3516 = vmatprep.subr.mxu0 0.0
  %3517 = vmatpush1.msra.mxu0 0.0
  %3518 = vmatprep.subr.mxu0 0.0
  %3519 = vmatpush1.msra.mxu0 0.0
  %3520 = vmatprep.subr.mxu0 0.0
  %3521 = vmatpush1.msra.mxu0 0.0
  %3522 = vmatprep.subr.mxu0 0.0
  %3523 = vmatpush1.msra.mxu0 0.0
  %3524 = vmatprep.subr.mxu0 0.0
  %3525 = vmatpush1.msra.mxu0 0.0
  %3526 = vmatprep.subr.mxu0 0.0
  %3527 = vmatpush1.msra.mxu0 0.0
  %3528 = vmatprep.mubr.f32.mxu0 0.0
  %3529 = vmatmul.mubr.f32.gmra.mrb[0].mxu0 %v3074
  %v3530 = vpop.f32.mrb[0].mxu0
  %v3531 = vadd.f32 0.0, %v3530
  %v3532 = vpop.f32.mrb[0].mxu0
  %v3533 = vadd.f32 0.0, %v3532
  %3534 = vmatprep.mubr.f32.mxu0 0.0
  %3535 = vmatmul.mubr.f32.gmra.mrb[0].mxu0 %v3077
  %v3536 = vpop.f32.mrb[0].mxu0
  %v3537 = vadd.f32 0.0, %v3536
  %v3538 = vpop.f32.mrb[0].mxu0
  %v3539 = vadd.f32 0.0, %v3538
  %3540 = vdwg.mxu0
  %3541 = vmatprep.subr.mxu0 %v3054
  %3542 = vmatpush1.msra.mxu0 %v3053
  %3543 = vmatprep.subr.mxu0 0.0
  %3544 = vmatpush1.msra.mxu0 0.0
  %3545 = vmatprep.subr.mxu0 0.0
  %3546 = vmatpush1.msra.mxu0 0.0
  %3547 = vmatprep.subr.mxu0 0.0
  %3548 = vmatpush1.msra.mxu0 0.0
  %3549 = vmatprep.subr.mxu0 0.0
  %3550 = vmatpush1.msra.mxu0 0.0
  %3551 = vmatprep.subr.mxu0 0.0
  %3552 = vmatpush1.msra.mxu0 0.0
  %3553 = vmatprep.subr.mxu0 0.0
  %3554 = vmatpush1.msra.mxu0 0.0
  %3555 = vmatprep.subr.mxu0 0.0
  %3556 = vmatpush1.msra.mxu0 0.0
  %3557 = vmatprep.subr.mxu0 0.0
  %3558 = vmatpush1.msra.mxu0 0.0
  %3559 = vmatprep.subr.mxu0 0.0
  %3560 = vmatpush1.msra.mxu0 0.0
  %3561 = vmatprep.subr.mxu0 0.0
  %3562 = vmatpush1.msra.mxu0 0.0
  %3563 = vmatprep.subr.mxu0 0.0
  %3564 = vmatpush1.msra.mxu0 0.0
  %3565 = vmatprep.subr.mxu0 0.0
  %3566 = vmatpush1.msra.mxu0 0.0
  %3567 = vmatprep.subr.mxu0 0.0
  %3568 = vmatpush1.msra.mxu0 0.0
  %3569 = vmatprep.subr.mxu0 0.0
  %3570 = vmatpush1.msra.mxu0 0.0
  %3571 = vmatprep.subr.mxu0 0.0
  %3572 = vmatpush1.msra.mxu0 0.0
  %3573 = vmatprep.subr.mxu0 0.0
  %3574 = vmatpush1.msra.mxu0 0.0
  %3575 = vmatprep.subr.mxu0 0.0
  %3576 = vmatpush1.msra.mxu0 0.0
  %3577 = vmatprep.subr.mxu0 0.0
  %3578 = vmatpush1.msra.mxu0 0.0
  %3579 = vmatprep.subr.mxu0 0.0
  %3580 = vmatpush1.msra.mxu0 0.0
  %3581 = vmatprep.subr.mxu0 0.0
  %3582 = vmatpush1.msra.mxu0 0.0
  %3583 = vmatprep.subr.mxu0 0.0
  %3584 = vmatpush1.msra.mxu0 0.0
  %3585 = vmatprep.subr.mxu0 0.0
  %3586 = vmatpush1.msra.mxu0 0.0
  %3587 = vmatprep.subr.mxu0 0.0
  %3588 = vmatpush1.msra.mxu0 0.0
  %3589 = vmatprep.subr.mxu0 0.0
  %3590 = vmatpush1.msra.mxu0 0.0
  %3591 = vmatprep.subr.mxu0 0.0
  %3592 = vmatpush1.msra.mxu0 0.0
  %3593 = vmatprep.subr.mxu0 0.0
  %3594 = vmatpush1.msra.mxu0 0.0
  %3595 = vmatprep.subr.mxu0 0.0
  %3596 = vmatpush1.msra.mxu0 0.0
  %3597 = vmatprep.subr.mxu0 0.0
  %3598 = vmatpush1.msra.mxu0 0.0
  %3599 = vmatprep.subr.mxu0 0.0
  %3600 = vmatpush1.msra.mxu0 0.0
  %3601 = vmatprep.subr.mxu0 0.0
  %3602 = vmatpush1.msra.mxu0 0.0
  %3603 = vmatprep.subr.mxu0 0.0
  %3604 = vmatpush1.msra.mxu0 0.0
  %3605 = vmatprep.mubr.f32.mxu0 0.0
  %3606 = vmatmul.mubr.f32.gmra.mrb[0].mxu0 %v3074
  %v3607 = vpop.f32.mrb[0].mxu0
  %v3608 = vadd.f32 0.0, %v3607
  %v3609 = vpop.f32.mrb[0].mxu0
  %v3610 = vadd.f32 0.0, %v3609
  %3611 = vmatprep.mubr.f32.mxu0 0.0
  %3612 = vmatmul.mubr.f32.gmra.mrb[0].mxu0 %v3077
  %v3613 = vpop.f32.mrb[0].mxu0
  %v3614 = vadd.f32 0.0, %v3613
  %v3615 = vpop.f32.mrb[0].mxu0
  %v3616 = vadd.f32 0.0, %v3615
  %3617 = vdwg.mxu0
  %3618 = vmatprep.subr.mxu0 %v3056
  %3619 = vmatpush1.msra.mxu0 %v3055
  %3620 = vmatprep.subr.mxu0 0.0
  %3621 = vmatpush1.msra.mxu0 0.0
  %3622 = vmatprep.subr.mxu0 0.0
  %3623 = vmatpush1.msra.mxu0 0.0
  %3624 = vmatprep.subr.mxu0 0.0
  %3625 = vmatpush1.msra.mxu0 0.0
  %3626 = vmatprep.subr.mxu0 0.0
  %3627 = vmatpush1.msra.mxu0 0.0
  %3628 = vmatprep.subr.mxu0 0.0
  %3629 = vmatpush1.msra.mxu0 0.0
  %3630 = vmatprep.subr.mxu0 0.0
  %3631 = vmatpush1.msra.mxu0 0.0
  %3632 = vmatprep.subr.mxu0 0.0
  %3633 = vmatpush1.msra.mxu0 0.0
  %3634 = vmatprep.subr.mxu0 0.0
  %3635 = vmatpush1.msra.mxu0 0.0
  %3636 = vmatprep.subr.mxu0 0.0
  %3637 = vmatpush1.msra.mxu0 0.0
  %3638 = vmatprep.subr.mxu0 0.0
  %3639 = vmatpush1.msra.mxu0 0.0
  %3640 = vmatprep.subr.mxu0 0.0
  %3641 = vmatpush1.msra.mxu0 0.0
  %3642 = vmatprep.subr.mxu0 0.0
  %3643 = vmatpush1.msra.mxu0 0.0
  %3644 = vmatprep.subr.mxu0 0.0
  %3645 = vmatpush1.msra.mxu0 0.0
  %3646 = vmatprep.subr.mxu0 0.0
  %3647 = vmatpush1.msra.mxu0 0.0
  %3648 = vmatprep.subr.mxu0 0.0
  %3649 = vmatpush1.msra.mxu0 0.0
  %3650 = vmatprep.subr.mxu0 0.0
  %3651 = vmatpush1.msra.mxu0 0.0
  %3652 = vmatprep.subr.mxu0 0.0
  %3653 = vmatpush1.msra.mxu0 0.0
  %3654 = vmatprep.subr.mxu0 0.0
  %3655 = vmatpush1.msra.mxu0 0.0
  %3656 = vmatprep.subr.mxu0 0.0
  %3657 = vmatpush1.msra.mxu0 0.0
  %3658 = vmatprep.subr.mxu0 0.0
  %3659 = vmatpush1.msra.mxu0 0.0
  %3660 = vmatprep.subr.mxu0 0.0
  %3661 = vmatpush1.msra.mxu0 0.0
  %3662 = vmatprep.subr.mxu0 0.0
  %3663 = vmatpush1.msra.mxu0 0.0
  %3664 = vmatprep.subr.mxu0 0.0
  %3665 = vmatpush1.msra.mxu0 0.0
  %3666 = vmatprep.subr.mxu0 0.0
  %3667 = vmatpush1.msra.mxu0 0.0
  %3668 = vmatprep.subr.mxu0 0.0
  %3669 = vmatpush1.msra.mxu0 0.0
  %3670 = vmatprep.subr.mxu0 0.0
  %3671 = vmatpush1.msra.mxu0 0.0
  %3672 = vmatprep.subr.mxu0 0.0
  %3673 = vmatpush1.msra.mxu0 0.0
  %3674 = vmatprep.subr.mxu0 0.0
  %3675 = vmatpush1.msra.mxu0 0.0
  %3676 = vmatprep.subr.mxu0 0.0
  %3677 = vmatpush1.msra.mxu0 0.0
  %3678 = vmatprep.subr.mxu0 0.0
  %3679 = vmatpush1.msra.mxu0 0.0
  %3680 = vmatprep.subr.mxu0 0.0
  %3681 = vmatpush1.msra.mxu0 0.0
  %3682 = vmatprep.mubr.f32.mxu0 0.0
  %3683 = vmatmul.mubr.f32.gmra.mrb[0].mxu0 %v3074
  %v3684 = vpop.f32.mrb[0].mxu0
  %v3685 = vadd.f32 0.0, %v3684
  %v3686 = vpop.f32.mrb[0].mxu0
  %v3687 = vadd.f32 0.0, %v3686
  %3688 = vmatprep.mubr.f32.mxu0 0.0
  %3689 = vmatmul.mubr.f32.gmra.mrb[0].mxu0 %v3077
  %v3690 = vpop.f32.mrb[0].mxu0
  %v3691 = vadd.f32 0.0, %v3690
  %v3692 = vpop.f32.mrb[0].mxu0
  %v3693 = vadd.f32 0.0, %v3692
  %3694 = vdwg.mxu0
  %v3695 = vadd.f32 %v2454, %v3146
  %v3696 = vadd.f32 %v2456, %v3148
  %v3697 = vadd.f32 %v2531, %v3223
  %v3698 = vadd.f32 %v2533, %v3225
  %v3699 = vadd.f32 %v2608, %v3300
  %v3700 = vadd.f32 %v2610, %v3302
  %v3701 = vadd.f32 %v2685, %v3377
  %v3702 = vadd.f32 %v2687, %v3379
  %v3703 = vadd.f32 %v2762, %v3454
  %v3704 = vadd.f32 %v2764, %v3456
  %v3705 = vadd.f32 %v2839, %v3531
  %v3706 = vadd.f32 %v2841, %v3533
  %v3707 = vadd.f32 %v2916, %v3608
  %v3708 = vadd.f32 %v2918, %v3610
  %v3709 = vadd.f32 %v2993, %v3685
  %v3710 = vadd.f32 %v2995, %v3687
  %v3711 = vadd.f32 %v2460, %v3152
  %v3712 = vadd.f32 %v2462, %v3154
  %v3713 = vadd.f32 %v2537, %v3229
  %v3714 = vadd.f32 %v2539, %v3231
  %v3715 = vadd.f32 %v2614, %v3306
  %v3716 = vadd.f32 %v2616, %v3308
  %v3717 = vadd.f32 %v2691, %v3383
  %v3718 = vadd.f32 %v2693, %v3385
  %v3719 = vadd.f32 %v2768, %v3460
  %v3720 = vadd.f32 %v2770, %v3462
  %v3721 = vadd.f32 %v2845, %v3537
  %v3722 = vadd.f32 %v2847, %v3539
  %v3723 = vadd.f32 %v2922, %v3614
  %v3724 = vadd.f32 %v2924, %v3616
  %v3725 = vadd.f32 %v2999, %v3691
  %v3726 = vadd.f32 %v3001, %v3693
  %s3727 = scalar_lea.vmem %s3, 48
  %v3728 = vld [vmem:[%s3727] sm:$0xff]
  %v3729 = vld [vmem:[%s3727 + $0x8] sm:$0xff]
  %v3731 = vsel %vm1758, %v3728, 0
  %v3734 = vsel %vm1758, %v3729, 0
  %3736 = vmatprep.subr.mxu0 %v1657
  %3737 = vmatpush1.msra.mxu0 %v1656
  %3738 = vmatprep.subr.mxu0 0.0
  %3739 = vmatpush1.msra.mxu0 0.0
  %3740 = vmatprep.subr.mxu0 0.0
  %3741 = vmatpush1.msra.mxu0 0.0
  %3742 = vmatprep.subr.mxu0 0.0
  %3743 = vmatpush1.msra.mxu0 0.0
  %3744 = vmatprep.subr.mxu0 0.0
  %3745 = vmatpush1.msra.mxu0 0.0
  %3746 = vmatprep.subr.mxu0 0.0
  %3747 = vmatpush1.msra.mxu0 0.0
  %3748 = vmatprep.subr.mxu0 0.0
  %3749 = vmatpush1.msra.mxu0 0.0
  %3750 = vmatprep.subr.mxu0 0.0
  %3751 = vmatpush1.msra.mxu0 0.0
  %3752 = vmatprep.subr.mxu0 0.0
  %3753 = vmatpush1.msra.mxu0 0.0
  %3754 = vmatprep.subr.mxu0 0.0
  %3755 = vmatpush1.msra.mxu0 0.0
  %3756 = vmatprep.subr.mxu0 0.0
  %3757 = vmatpush1.msra.mxu0 0.0
  %3758 = vmatprep.subr.mxu0 0.0
  %3759 = vmatpush1.msra.mxu0 0.0
  %3760 = vmatprep.subr.mxu0 0.0
  %3761 = vmatpush1.msra.mxu0 0.0
  %3762 = vmatprep.subr.mxu0 0.0
  %3763 = vmatpush1.msra.mxu0 0.0
  %3764 = vmatprep.subr.mxu0 0.0
  %3765 = vmatpush1.msra.mxu0 0.0
  %3766 = vmatprep.subr.mxu0 0.0
  %3767 = vmatpush1.msra.mxu0 0.0
  %3768 = vmatprep.subr.mxu0 0.0
  %3769 = vmatpush1.msra.mxu0 0.0
  %3770 = vmatprep.subr.mxu0 0.0
  %3771 = vmatpush1.msra.mxu0 0.0
  %3772 = vmatprep.subr.mxu0 0.0
  %3773 = vmatpush1.msra.mxu0 0.0
  %3774 = vmatprep.subr.mxu0 0.0
  %3775 = vmatpush1.msra.mxu0 0.0
  %3776 = vmatprep.subr.mxu0 0.0
  %3777 = vmatpush1.msra.mxu0 0.0
  %3778 = vmatprep.subr.mxu0 0.0
  %3779 = vmatpush1.msra.mxu0 0.0
  %3780 = vmatprep.subr.mxu0 0.0
  %3781 = vmatpush1.msra.mxu0 0.0
  %3782 = vmatprep.subr.mxu0 0.0
  %3783 = vmatpush1.msra.mxu0 0.0
  %3784 = vmatprep.subr.mxu0 0.0
  %3785 = vmatpush1.msra.mxu0 0.0
  %3786 = vmatprep.subr.mxu0 0.0
  %3787 = vmatpush1.msra.mxu0 0.0
  %3788 = vmatprep.subr.mxu0 0.0
  %3789 = vmatpush1.msra.mxu0 0.0
  %3790 = vmatprep.subr.mxu0 0.0
  %3791 = vmatpush1.msra.mxu0 0.0
  %3792 = vmatprep.subr.mxu0 0.0
  %3793 = vmatpush1.msra.mxu0 0.0
  %3794 = vmatprep.subr.mxu0 0.0
  %3795 = vmatpush1.msra.mxu0 0.0
  %3796 = vmatprep.subr.mxu0 0.0
  %3797 = vmatpush1.msra.mxu0 0.0
  %3798 = vmatprep.subr.mxu0 0.0
  %3799 = vmatpush1.msra.mxu0 0.0
  %3800 = vmatprep.mubr.f32.mxu0 0.0
  %3801 = vmatmul.mubr.f32.gmra.mrb[0].mxu0 %v3731
  %v3802 = vpop.f32.mrb[0].mxu0
  %v3803 = vadd.f32 0.0, %v3802
  %v3804 = vpop.f32.mrb[0].mxu0
  %v3805 = vadd.f32 0.0, %v3804
  %3806 = vmatprep.mubr.f32.mxu0 0.0
  %3807 = vmatmul.mubr.f32.gmra.mrb[0].mxu0 %v3734
  %v3808 = vpop.f32.mrb[0].mxu0
  %v3809 = vadd.f32 0.0, %v3808
  %v3810 = vpop.f32.mrb[0].mxu0
  %v3811 = vadd.f32 0.0, %v3810
  %3812 = vdwg.mxu0
  %3813 = vmatprep.subr.mxu0 %v1659
  %3814 = vmatpush1.msra.mxu0 %v1658
  %3815 = vmatprep.subr.mxu0 0.0
  %3816 = vmatpush1.msra.mxu0 0.0
  %3817 = vmatprep.subr.mxu0 0.0
  %3818 = vmatpush1.msra.mxu0 0.0
  %3819 = vmatprep.subr.mxu0 0.0
  %3820 = vmatpush1.msra.mxu0 0.0
  %3821 = vmatprep.subr.mxu0 0.0
  %3822 = vmatpush1.msra.mxu0 0.0
  %3823 = vmatprep.subr.mxu0 0.0
  %3824 = vmatpush1.msra.mxu0 0.0
  %3825 = vmatprep.subr.mxu0 0.0
  %3826 = vmatpush1.msra.mxu0 0.0
  %3827 = vmatprep.subr.mxu0 0.0
  %3828 = vmatpush1.msra.mxu0 0.0
  %3829 = vmatprep.subr.mxu0 0.0
  %3830 = vmatpush1.msra.mxu0 0.0
  %3831 = vmatprep.subr.mxu0 0.0
  %3832 = vmatpush1.msra.mxu0 0.0
  %3833 = vmatprep.subr.mxu0 0.0
  %3834 = vmatpush1.msra.mxu0 0.0
  %3835 = vmatprep.subr.mxu0 0.0
  %3836 = vmatpush1.msra.mxu0 0.0
  %3837 = vmatprep.subr.mxu0 0.0
  %3838 = vmatpush1.msra.mxu0 0.0
  %3839 = vmatprep.subr.mxu0 0.0
  %3840 = vmatpush1.msra.mxu0 0.0
  %3841 = vmatprep.subr.mxu0 0.0
  %3842 = vmatpush1.msra.mxu0 0.0
  %3843 = vmatprep.subr.mxu0 0.0
  %3844 = vmatpush1.msra.mxu0 0.0
  %3845 = vmatprep.subr.mxu0 0.0
  %3846 = vmatpush1.msra.mxu0 0.0
  %3847 = vmatprep.subr.mxu0 0.0
  %3848 = vmatpush1.msra.mxu0 0.0
  %3849 = vmatprep.subr.mxu0 0.0
  %3850 = vmatpush1.msra.mxu0 0.0
  %3851 = vmatprep.subr.mxu0 0.0
  %3852 = vmatpush1.msra.mxu0 0.0
  %3853 = vmatprep.subr.mxu0 0.0
  %3854 = vmatpush1.msra.mxu0 0.0
  %3855 = vmatprep.subr.mxu0 0.0
  %3856 = vmatpush1.msra.mxu0 0.0
  %3857 = vmatprep.subr.mxu0 0.0
  %3858 = vmatpush1.msra.mxu0 0.0
  %3859 = vmatprep.subr.mxu0 0.0
  %3860 = vmatpush1.msra.mxu0 0.0
  %3861 = vmatprep.subr.mxu0 0.0
  %3862 = vmatpush1.msra.mxu0 0.0
  %3863 = vmatprep.subr.mxu0 0.0
  %3864 = vmatpush1.msra.mxu0 0.0
  %3865 = vmatprep.subr.mxu0 0.0
  %3866 = vmatpush1.msra.mxu0 0.0
  %3867 = vmatprep.subr.mxu0 0.0
  %3868 = vmatpush1.msra.mxu0 0.0
  %3869 = vmatprep.subr.mxu0 0.0
  %3870 = vmatpush1.msra.mxu0 0.0
  %3871 = vmatprep.subr.mxu0 0.0
  %3872 = vmatpush1.msra.mxu0 0.0
  %3873 = vmatprep.subr.mxu0 0.0
  %3874 = vmatpush1.msra.mxu0 0.0
  %3875 = vmatprep.subr.mxu0 0.0
  %3876 = vmatpush1.msra.mxu0 0.0
  %3877 = vmatprep.mubr.f32.mxu0 0.0
  %3878 = vmatmul.mubr.f32.gmra.mrb[0].mxu0 %v3731
  %v3879 = vpop.f32.mrb[0].mxu0
  %v3880 = vadd.f32 0.0, %v3879
  %v3881 = vpop.f32.mrb[0].mxu0
  %v3882 = vadd.f32 0.0, %v3881
  %3883 = vmatprep.mubr.f32.mxu0 0.0
  %3884 = vmatmul.mubr.f32.gmra.mrb[0].mxu0 %v3734
  %v3885 = vpop.f32.mrb[0].mxu0
  %v3886 = vadd.f32 0.0, %v3885
  %v3887 = vpop.f32.mrb[0].mxu0
  %v3888 = vadd.f32 0.0, %v3887
  %3889 = vdwg.mxu0
  %3890 = vmatprep.subr.mxu0 %v1661
  %3891 = vmatpush1.msra.mxu0 %v1660
  %3892 = vmatprep.subr.mxu0 0.0
  %3893 = vmatpush1.msra.mxu0 0.0
  %3894 = vmatprep.subr.mxu0 0.0
  %3895 = vmatpush1.msra.mxu0 0.0
  %3896 = vmatprep.subr.mxu0 0.0
  %3897 = vmatpush1.msra.mxu0 0.0
  %3898 = vmatprep.subr.mxu0 0.0
  %3899 = vmatpush1.msra.mxu0 0.0
  %3900 = vmatprep.subr.mxu0 0.0
  %3901 = vmatpush1.msra.mxu0 0.0
  %3902 = vmatprep.subr.mxu0 0.0
  %3903 = vmatpush1.msra.mxu0 0.0
  %3904 = vmatprep.subr.mxu0 0.0
  %3905 = vmatpush1.msra.mxu0 0.0
  %3906 = vmatprep.subr.mxu0 0.0
  %3907 = vmatpush1.msra.mxu0 0.0
  %3908 = vmatprep.subr.mxu0 0.0
  %3909 = vmatpush1.msra.mxu0 0.0
  %3910 = vmatprep.subr.mxu0 0.0
  %3911 = vmatpush1.msra.mxu0 0.0
  %3912 = vmatprep.subr.mxu0 0.0
  %3913 = vmatpush1.msra.mxu0 0.0
  %3914 = vmatprep.subr.mxu0 0.0
  %3915 = vmatpush1.msra.mxu0 0.0
  %3916 = vmatprep.subr.mxu0 0.0
  %3917 = vmatpush1.msra.mxu0 0.0
  %3918 = vmatprep.subr.mxu0 0.0
  %3919 = vmatpush1.msra.mxu0 0.0
  %3920 = vmatprep.subr.mxu0 0.0
  %3921 = vmatpush1.msra.mxu0 0.0
  %3922 = vmatprep.subr.mxu0 0.0
  %3923 = vmatpush1.msra.mxu0 0.0
  %3924 = vmatprep.subr.mxu0 0.0
  %3925 = vmatpush1.msra.mxu0 0.0
  %3926 = vmatprep.subr.mxu0 0.0
  %3927 = vmatpush1.msra.mxu0 0.0
  %3928 = vmatprep.subr.mxu0 0.0
  %3929 = vmatpush1.msra.mxu0 0.0
  %3930 = vmatprep.subr.mxu0 0.0
  %3931 = vmatpush1.msra.mxu0 0.0
  %3932 = vmatprep.subr.mxu0 0.0
  %3933 = vmatpush1.msra.mxu0 0.0
  %3934 = vmatprep.subr.mxu0 0.0
  %3935 = vmatpush1.msra.mxu0 0.0
  %3936 = vmatprep.subr.mxu0 0.0
  %3937 = vmatpush1.msra.mxu0 0.0
  %3938 = vmatprep.subr.mxu0 0.0
  %3939 = vmatpush1.msra.mxu0 0.0
  %3940 = vmatprep.subr.mxu0 0.0
  %3941 = vmatpush1.msra.mxu0 0.0
  %3942 = vmatprep.subr.mxu0 0.0
  %3943 = vmatpush1.msra.mxu0 0.0
  %3944 = vmatprep.subr.mxu0 0.0
  %3945 = vmatpush1.msra.mxu0 0.0
  %3946 = vmatprep.subr.mxu0 0.0
  %3947 = vmatpush1.msra.mxu0 0.0
  %3948 = vmatprep.subr.mxu0 0.0
  %3949 = vmatpush1.msra.mxu0 0.0
  %3950 = vmatprep.subr.mxu0 0.0
  %3951 = vmatpush1.msra.mxu0 0.0
  %3952 = vmatprep.subr.mxu0 0.0
  %3953 = vmatpush1.msra.mxu0 0.0
  %3954 = vmatprep.mubr.f32.mxu0 0.0
  %3955 = vmatmul.mubr.f32.gmra.mrb[0].mxu0 %v3731
  %v3956 = vpop.f32.mrb[0].mxu0
  %v3957 = vadd.f32 0.0, %v3956
  %v3958 = vpop.f32.mrb[0].mxu0
  %v3959 = vadd.f32 0.0, %v3958
  %3960 = vmatprep.mubr.f32.mxu0 0.0
  %3961 = vmatmul.mubr.f32.gmra.mrb[0].mxu0 %v3734
  %v3962 = vpop.f32.mrb[0].mxu0
  %v3963 = vadd.f32 0.0, %v3962
  %v3964 = vpop.f32.mrb[0].mxu0
  %v3965 = vadd.f32 0.0, %v3964
  %3966 = vdwg.mxu0
  %3967 = vmatprep.subr.mxu0 %v1663
  %3968 = vmatpush1.msra.mxu0 %v1662
  %3969 = vmatprep.subr.mxu0 0.0
  %3970 = vmatpush1.msra.mxu0 0.0
  %3971 = vmatprep.subr.mxu0 0.0
  %3972 = vmatpush1.msra.mxu0 0.0
  %3973 = vmatprep.subr.mxu0 0.0
  %3974 = vmatpush1.msra.mxu0 0.0
  %3975 = vmatprep.subr.mxu0 0.0
  %3976 = vmatpush1.msra.mxu0 0.0
  %3977 = vmatprep.subr.mxu0 0.0
  %3978 = vmatpush1.msra.mxu0 0.0
  %3979 = vmatprep.subr.mxu0 0.0
  %3980 = vmatpush1.msra.mxu0 0.0
  %3981 = vmatprep.subr.mxu0 0.0
  %3982 = vmatpush1.msra.mxu0 0.0
  %3983 = vmatprep.subr.mxu0 0.0
  %3984 = vmatpush1.msra.mxu0 0.0
  %3985 = vmatprep.subr.mxu0 0.0
  %3986 = vmatpush1.msra.mxu0 0.0
  %3987 = vmatprep.subr.mxu0 0.0
  %3988 = vmatpush1.msra.mxu0 0.0
  %3989 = vmatprep.subr.mxu0 0.0
  %3990 = vmatpush1.msra.mxu0 0.0
  %3991 = vmatprep.subr.mxu0 0.0
  %3992 = vmatpush1.msra.mxu0 0.0
  %3993 = vmatprep.subr.mxu0 0.0
  %3994 = vmatpush1.msra.mxu0 0.0
  %3995 = vmatprep.subr.mxu0 0.0
  %3996 = vmatpush1.msra.mxu0 0.0
  %3997 = vmatprep.subr.mxu0 0.0
  %3998 = vmatpush1.msra.mxu0 0.0
  %3999 = vmatprep.subr.mxu0 0.0
  %4000 = vmatpush1.msra.mxu0 0.0
  %4001 = vmatprep.subr.mxu0 0.0
  %4002 = vmatpush1.msra.mxu0 0.0
  %4003 = vmatprep.subr.mxu0 0.0
  %4004 = vmatpush1.msra.mxu0 0.0
  %4005 = vmatprep.subr.mxu0 0.0
  %4006 = vmatpush1.msra.mxu0 0.0
  %4007 = vmatprep.subr.mxu0 0.0
  %4008 = vmatpush1.msra.mxu0 0.0
  %4009 = vmatprep.subr.mxu0 0.0
  %4010 = vmatpush1.msra.mxu0 0.0
  %4011 = vmatprep.subr.mxu0 0.0
  %4012 = vmatpush1.msra.mxu0 0.0
  %4013 = vmatprep.subr.mxu0 0.0
  %4014 = vmatpush1.msra.mxu0 0.0
  %4015 = vmatprep.subr.mxu0 0.0
  %4016 = vmatpush1.msra.mxu0 0.0
  %4017 = vmatprep.subr.mxu0 0.0
  %4018 = vmatpush1.msra.mxu0 0.0
  %4019 = vmatprep.subr.mxu0 0.0
  %4020 = vmatpush1.msra.mxu0 0.0
  %4021 = vmatprep.subr.mxu0 0.0
  %4022 = vmatpush1.msra.mxu0 0.0
  %4023 = vmatprep.subr.mxu0 0.0
  %4024 = vmatpush1.msra.mxu0 0.0
  %4025 = vmatprep.subr.mxu0 0.0
  %4026 = vmatpush1.msra.mxu0 0.0
  %4027 = vmatprep.subr.mxu0 0.0
  %4028 = vmatpush1.msra.mxu0 0.0
  %4029 = vmatprep.subr.mxu0 0.0
  %4030 = vmatpush1.msra.mxu0 0.0
  %4031 = vmatprep.mubr.f32.mxu0 0.0
  %4032 = vmatmul.mubr.f32.gmra.mrb[0].mxu0 %v3731
  %v4033 = vpop.f32.mrb[0].mxu0
  %v4034 = vadd.f32 0.0, %v4033
  %v4035 = vpop.f32.mrb[0].mxu0
  %v4036 = vadd.f32 0.0, %v4035
  %4037 = vmatprep.mubr.f32.mxu0 0.0
  %4038 = vmatmul.mubr.f32.gmra.mrb[0].mxu0 %v3734
  %v4039 = vpop.f32.mrb[0].mxu0
  %v4040 = vadd.f32 0.0, %v4039
  %v4041 = vpop.f32.mrb[0].mxu0
  %v4042 = vadd.f32 0.0, %v4041
  %4043 = vdwg.mxu0
  %4044 = vmatprep.subr.mxu0 %v1665
  %4045 = vmatpush1.msra.mxu0 %v1664
  %4046 = vmatprep.subr.mxu0 0.0
  %4047 = vmatpush1.msra.mxu0 0.0
  %4048 = vmatprep.subr.mxu0 0.0
  %4049 = vmatpush1.msra.mxu0 0.0
  %4050 = vmatprep.subr.mxu0 0.0
  %4051 = vmatpush1.msra.mxu0 0.0
  %4052 = vmatprep.subr.mxu0 0.0
  %4053 = vmatpush1.msra.mxu0 0.0
  %4054 = vmatprep.subr.mxu0 0.0
  %4055 = vmatpush1.msra.mxu0 0.0
  %4056 = vmatprep.subr.mxu0 0.0
  %4057 = vmatpush1.msra.mxu0 0.0
  %4058 = vmatprep.subr.mxu0 0.0
  %4059 = vmatpush1.msra.mxu0 0.0
  %4060 = vmatprep.subr.mxu0 0.0
  %4061 = vmatpush1.msra.mxu0 0.0
  %4062 = vmatprep.subr.mxu0 0.0
  %4063 = vmatpush1.msra.mxu0 0.0
  %4064 = vmatprep.subr.mxu0 0.0
  %4065 = vmatpush1.msra.mxu0 0.0
  %4066 = vmatprep.subr.mxu0 0.0
  %4067 = vmatpush1.msra.mxu0 0.0
  %4068 = vmatprep.subr.mxu0 0.0
  %4069 = vmatpush1.msra.mxu0 0.0
  %4070 = vmatprep.subr.mxu0 0.0
  %4071 = vmatpush1.msra.mxu0 0.0
  %4072 = vmatprep.subr.mxu0 0.0
  %4073 = vmatpush1.msra.mxu0 0.0
  %4074 = vmatprep.subr.mxu0 0.0
  %4075 = vmatpush1.msra.mxu0 0.0
  %4076 = vmatprep.subr.mxu0 0.0
  %4077 = vmatpush1.msra.mxu0 0.0
  %4078 = vmatprep.subr.mxu0 0.0
  %4079 = vmatpush1.msra.mxu0 0.0
  %4080 = vmatprep.subr.mxu0 0.0
  %4081 = vmatpush1.msra.mxu0 0.0
  %4082 = vmatprep.subr.mxu0 0.0
  %4083 = vmatpush1.msra.mxu0 0.0
  %4084 = vmatprep.subr.mxu0 0.0
  %4085 = vmatpush1.msra.mxu0 0.0
  %4086 = vmatprep.subr.mxu0 0.0
  %4087 = vmatpush1.msra.mxu0 0.0
  %4088 = vmatprep.subr.mxu0 0.0
  %4089 = vmatpush1.msra.mxu0 0.0
  %4090 = vmatprep.subr.mxu0 0.0
  %4091 = vmatpush1.msra.mxu0 0.0
  %4092 = vmatprep.subr.mxu0 0.0
  %4093 = vmatpush1.msra.mxu0 0.0
  %4094 = vmatprep.subr.mxu0 0.0
  %4095 = vmatpush1.msra.mxu0 0.0
  %4096 = vmatprep.subr.mxu0 0.0
  %4097 = vmatpush1.msra.mxu0 0.0
  %4098 = vmatprep.subr.mxu0 0.0
  %4099 = vmatpush1.msra.mxu0 0.0
  %4100 = vmatprep.subr.mxu0 0.0
  %4101 = vmatpush1.msra.mxu0 0.0
  %4102 = vmatprep.subr.mxu0 0.0
  %4103 = vmatpush1.msra.mxu0 0.0
  %4104 = vmatprep.subr.mxu0 0.0
  %4105 = vmatpush1.msra.mxu0 0.0
  %4106 = vmatprep.subr.mxu0 0.0
  %4107 = vmatpush1.msra.mxu0 0.0
  %4108 = vmatprep.mubr.f32.mxu0 0.0
  %4109 = vmatmul.mubr.f32.gmra.mrb[0].mxu0 %v3731
  %v4110 = vpop.f32.mrb[0].mxu0
  %v4111 = vadd.f32 0.0, %v4110
  %v4112 = vpop.f32.mrb[0].mxu0
  %v4113 = vadd.f32 0.0, %v4112
  %4114 = vmatprep.mubr.f32.mxu0 0.0
  %4115 = vmatmul.mubr.f32.gmra.mrb[0].mxu0 %v3734
  %v4116 = vpop.f32.mrb[0].mxu0
  %v4117 = vadd.f32 0.0, %v4116
  %v4118 = vpop.f32.mrb[0].mxu0
  %v4119 = vadd.f32 0.0, %v4118
  %4120 = vdwg.mxu0
  %4121 = vmatprep.subr.mxu0 %v1667
  %4122 = vmatpush1.msra.mxu0 %v1666
  %4123 = vmatprep.subr.mxu0 0.0
  %4124 = vmatpush1.msra.mxu0 0.0
  %4125 = vmatprep.subr.mxu0 0.0
  %4126 = vmatpush1.msra.mxu0 0.0
  %4127 = vmatprep.subr.mxu0 0.0
  %4128 = vmatpush1.msra.mxu0 0.0
  %4129 = vmatprep.subr.mxu0 0.0
  %4130 = vmatpush1.msra.mxu0 0.0
  %4131 = vmatprep.subr.mxu0 0.0
  %4132 = vmatpush1.msra.mxu0 0.0
  %4133 = vmatprep.subr.mxu0 0.0
  %4134 = vmatpush1.msra.mxu0 0.0
  %4135 = vmatprep.subr.mxu0 0.0
  %4136 = vmatpush1.msra.mxu0 0.0
  %4137 = vmatprep.subr.mxu0 0.0
  %4138 = vmatpush1.msra.mxu0 0.0
  %4139 = vmatprep.subr.mxu0 0.0
  %4140 = vmatpush1.msra.mxu0 0.0
  %4141 = vmatprep.subr.mxu0 0.0
  %4142 = vmatpush1.msra.mxu0 0.0
  %4143 = vmatprep.subr.mxu0 0.0
  %4144 = vmatpush1.msra.mxu0 0.0
  %4145 = vmatprep.subr.mxu0 0.0
  %4146 = vmatpush1.msra.mxu0 0.0
  %4147 = vmatprep.subr.mxu0 0.0
  %4148 = vmatpush1.msra.mxu0 0.0
  %4149 = vmatprep.subr.mxu0 0.0
  %4150 = vmatpush1.msra.mxu0 0.0
  %4151 = vmatprep.subr.mxu0 0.0
  %4152 = vmatpush1.msra.mxu0 0.0
  %4153 = vmatprep.subr.mxu0 0.0
  %4154 = vmatpush1.msra.mxu0 0.0
  %4155 = vmatprep.subr.mxu0 0.0
  %4156 = vmatpush1.msra.mxu0 0.0
  %4157 = vmatprep.subr.mxu0 0.0
  %4158 = vmatpush1.msra.mxu0 0.0
  %4159 = vmatprep.subr.mxu0 0.0
  %4160 = vmatpush1.msra.mxu0 0.0
  %4161 = vmatprep.subr.mxu0 0.0
  %4162 = vmatpush1.msra.mxu0 0.0
  %4163 = vmatprep.subr.mxu0 0.0
  %4164 = vmatpush1.msra.mxu0 0.0
  %4165 = vmatprep.subr.mxu0 0.0
  %4166 = vmatpush1.msra.mxu0 0.0
  %4167 = vmatprep.subr.mxu0 0.0
  %4168 = vmatpush1.msra.mxu0 0.0
  %4169 = vmatprep.subr.mxu0 0.0
  %4170 = vmatpush1.msra.mxu0 0.0
  %4171 = vmatprep.subr.mxu0 0.0
  %4172 = vmatpush1.msra.mxu0 0.0
  %4173 = vmatprep.subr.mxu0 0.0
  %4174 = vmatpush1.msra.mxu0 0.0
  %4175 = vmatprep.subr.mxu0 0.0
  %4176 = vmatpush1.msra.mxu0 0.0
  %4177 = vmatprep.subr.mxu0 0.0
  %4178 = vmatpush1.msra.mxu0 0.0
  %4179 = vmatprep.subr.mxu0 0.0
  %4180 = vmatpush1.msra.mxu0 0.0
  %4181 = vmatprep.subr.mxu0 0.0
  %4182 = vmatpush1.msra.mxu0 0.0
  %4183 = vmatprep.subr.mxu0 0.0
  %4184 = vmatpush1.msra.mxu0 0.0
  %4185 = vmatprep.mubr.f32.mxu0 0.0
  %4186 = vmatmul.mubr.f32.gmra.mrb[0].mxu0 %v3731
  %v4187 = vpop.f32.mrb[0].mxu0
  %v4188 = vadd.f32 0.0, %v4187
  %v4189 = vpop.f32.mrb[0].mxu0
  %v4190 = vadd.f32 0.0, %v4189
  %4191 = vmatprep.mubr.f32.mxu0 0.0
  %4192 = vmatmul.mubr.f32.gmra.mrb[0].mxu0 %v3734
  %v4193 = vpop.f32.mrb[0].mxu0
  %v4194 = vadd.f32 0.0, %v4193
  %v4195 = vpop.f32.mrb[0].mxu0
  %v4196 = vadd.f32 0.0, %v4195
  %4197 = vdwg.mxu0
  %4198 = vmatprep.subr.mxu0 %v1669
  %4199 = vmatpush1.msra.mxu0 %v1668
  %4200 = vmatprep.subr.mxu0 0.0
  %4201 = vmatpush1.msra.mxu0 0.0
  %4202 = vmatprep.subr.mxu0 0.0
  %4203 = vmatpush1.msra.mxu0 0.0
  %4204 = vmatprep.subr.mxu0 0.0
  %4205 = vmatpush1.msra.mxu0 0.0
  %4206 = vmatprep.subr.mxu0 0.0
  %4207 = vmatpush1.msra.mxu0 0.0
  %4208 = vmatprep.subr.mxu0 0.0
  %4209 = vmatpush1.msra.mxu0 0.0
  %4210 = vmatprep.subr.mxu0 0.0
  %4211 = vmatpush1.msra.mxu0 0.0
  %4212 = vmatprep.subr.mxu0 0.0
  %4213 = vmatpush1.msra.mxu0 0.0
  %4214 = vmatprep.subr.mxu0 0.0
  %4215 = vmatpush1.msra.mxu0 0.0
  %4216 = vmatprep.subr.mxu0 0.0
  %4217 = vmatpush1.msra.mxu0 0.0
  %4218 = vmatprep.subr.mxu0 0.0
  %4219 = vmatpush1.msra.mxu0 0.0
  %4220 = vmatprep.subr.mxu0 0.0
  %4221 = vmatpush1.msra.mxu0 0.0
  %4222 = vmatprep.subr.mxu0 0.0
  %4223 = vmatpush1.msra.mxu0 0.0
  %4224 = vmatprep.subr.mxu0 0.0
  %4225 = vmatpush1.msra.mxu0 0.0
  %4226 = vmatprep.subr.mxu0 0.0
  %4227 = vmatpush1.msra.mxu0 0.0
  %4228 = vmatprep.subr.mxu0 0.0
  %4229 = vmatpush1.msra.mxu0 0.0
  %4230 = vmatprep.subr.mxu0 0.0
  %4231 = vmatpush1.msra.mxu0 0.0
  %4232 = vmatprep.subr.mxu0 0.0
  %4233 = vmatpush1.msra.mxu0 0.0
  %4234 = vmatprep.subr.mxu0 0.0
  %4235 = vmatpush1.msra.mxu0 0.0
  %4236 = vmatprep.subr.mxu0 0.0
  %4237 = vmatpush1.msra.mxu0 0.0
  %4238 = vmatprep.subr.mxu0 0.0
  %4239 = vmatpush1.msra.mxu0 0.0
  %4240 = vmatprep.subr.mxu0 0.0
  %4241 = vmatpush1.msra.mxu0 0.0
  %4242 = vmatprep.subr.mxu0 0.0
  %4243 = vmatpush1.msra.mxu0 0.0
  %4244 = vmatprep.subr.mxu0 0.0
  %4245 = vmatpush1.msra.mxu0 0.0
  %4246 = vmatprep.subr.mxu0 0.0
  %4247 = vmatpush1.msra.mxu0 0.0
  %4248 = vmatprep.subr.mxu0 0.0
  %4249 = vmatpush1.msra.mxu0 0.0
  %4250 = vmatprep.subr.mxu0 0.0
  %4251 = vmatpush1.msra.mxu0 0.0
  %4252 = vmatprep.subr.mxu0 0.0
  %4253 = vmatpush1.msra.mxu0 0.0
  %4254 = vmatprep.subr.mxu0 0.0
  %4255 = vmatpush1.msra.mxu0 0.0
  %4256 = vmatprep.subr.mxu0 0.0
  %4257 = vmatpush1.msra.mxu0 0.0
  %4258 = vmatprep.subr.mxu0 0.0
  %4259 = vmatpush1.msra.mxu0 0.0
  %4260 = vmatprep.subr.mxu0 0.0
  %4261 = vmatpush1.msra.mxu0 0.0
  %4262 = vmatprep.mubr.f32.mxu0 0.0
  %4263 = vmatmul.mubr.f32.gmra.mrb[0].mxu0 %v3731
  %v4264 = vpop.f32.mrb[0].mxu0
  %v4265 = vadd.f32 0.0, %v4264
  %v4266 = vpop.f32.mrb[0].mxu0
  %v4267 = vadd.f32 0.0, %v4266
  %4268 = vmatprep.mubr.f32.mxu0 0.0
  %4269 = vmatmul.mubr.f32.gmra.mrb[0].mxu0 %v3734
  %v4270 = vpop.f32.mrb[0].mxu0
  %v4271 = vadd.f32 0.0, %v4270
  %v4272 = vpop.f32.mrb[0].mxu0
  %v4273 = vadd.f32 0.0, %v4272
  %4274 = vdwg.mxu0
  %4275 = vmatprep.subr.mxu0 %v1674
  %4276 = vmatpush1.msra.mxu0 %v1670
  %4277 = vmatprep.subr.mxu0 0.0
  %4278 = vmatpush1.msra.mxu0 0.0
  %4279 = vmatprep.subr.mxu0 0.0
  %4280 = vmatpush1.msra.mxu0 0.0
  %4281 = vmatprep.subr.mxu0 0.0
  %4282 = vmatpush1.msra.mxu0 0.0
  %4283 = vmatprep.subr.mxu0 0.0
  %4284 = vmatpush1.msra.mxu0 0.0
  %4285 = vmatprep.subr.mxu0 0.0
  %4286 = vmatpush1.msra.mxu0 0.0
  %4287 = vmatprep.subr.mxu0 0.0
  %4288 = vmatpush1.msra.mxu0 0.0
  %4289 = vmatprep.subr.mxu0 0.0
  %4290 = vmatpush1.msra.mxu0 0.0
  %4291 = vmatprep.subr.mxu0 0.0
  %4292 = vmatpush1.msra.mxu0 0.0
  %4293 = vmatprep.subr.mxu0 0.0
  %4294 = vmatpush1.msra.mxu0 0.0
  %4295 = vmatprep.subr.mxu0 0.0
  %4296 = vmatpush1.msra.mxu0 0.0
  %4297 = vmatprep.subr.mxu0 0.0
  %4298 = vmatpush1.msra.mxu0 0.0
  %4299 = vmatprep.subr.mxu0 0.0
  %4300 = vmatpush1.msra.mxu0 0.0
  %4301 = vmatprep.subr.mxu0 0.0
  %4302 = vmatpush1.msra.mxu0 0.0
  %4303 = vmatprep.subr.mxu0 0.0
  %4304 = vmatpush1.msra.mxu0 0.0
  %4305 = vmatprep.subr.mxu0 0.0
  %4306 = vmatpush1.msra.mxu0 0.0
  %4307 = vmatprep.subr.mxu0 0.0
  %4308 = vmatpush1.msra.mxu0 0.0
  %4309 = vmatprep.subr.mxu0 0.0
  %4310 = vmatpush1.msra.mxu0 0.0
  %4311 = vmatprep.subr.mxu0 0.0
  %4312 = vmatpush1.msra.mxu0 0.0
  %4313 = vmatprep.subr.mxu0 0.0
  %4314 = vmatpush1.msra.mxu0 0.0
  %4315 = vmatprep.subr.mxu0 0.0
  %4316 = vmatpush1.msra.mxu0 0.0
  %4317 = vmatprep.subr.mxu0 0.0
  %4318 = vmatpush1.msra.mxu0 0.0
  %4319 = vmatprep.subr.mxu0 0.0
  %4320 = vmatpush1.msra.mxu0 0.0
  %4321 = vmatprep.subr.mxu0 0.0
  %4322 = vmatpush1.msra.mxu0 0.0
  %4323 = vmatprep.subr.mxu0 0.0
  %4324 = vmatpush1.msra.mxu0 0.0
  %4325 = vmatprep.subr.mxu0 0.0
  %4326 = vmatpush1.msra.mxu0 0.0
  %4327 = vmatprep.subr.mxu0 0.0
  %4328 = vmatpush1.msra.mxu0 0.0
  %4329 = vmatprep.subr.mxu0 0.0
  %4330 = vmatpush1.msra.mxu0 0.0
  %4331 = vmatprep.subr.mxu0 0.0
  %4332 = vmatpush1.msra.mxu0 0.0
  %4333 = vmatprep.subr.mxu0 0.0
  %4334 = vmatpush1.msra.mxu0 0.0
  %4335 = vmatprep.subr.mxu0 0.0
  %4336 = vmatpush1.msra.mxu0 0.0
  %4337 = vmatprep.subr.mxu0 0.0
  %4338 = vmatpush1.msra.mxu0 0.0
  %4339 = vmatprep.mubr.f32.mxu0 0.0
  %4340 = vmatmul.mubr.f32.gmra.mrb[0].mxu0 %v3731
  %v4341 = vpop.f32.mrb[0].mxu0
  %v4342 = vadd.f32 0.0, %v4341
  %v4343 = vpop.f32.mrb[0].mxu0
  %v4344 = vadd.f32 0.0, %v4343
  %4345 = vmatprep.mubr.f32.mxu0 0.0
  %4346 = vmatmul.mubr.f32.gmra.mrb[0].mxu0 %v3734
  %v4347 = vpop.f32.mrb[0].mxu0
  %v4348 = vadd.f32 0.0, %v4347
  %v4349 = vpop.f32.mrb[0].mxu0
  %v4350 = vadd.f32 0.0, %v4349
  %4351 = vdwg.mxu0
  %v4352 = vadd.f32 %v3695, %v3803
  %v4353 = vadd.f32 %v3696, %v3805
  %v4354 = vadd.f32 %v3697, %v3880
  %v4355 = vadd.f32 %v3698, %v3882
  %v4356 = vadd.f32 %v3699, %v3957
  %v4357 = vadd.f32 %v3700, %v3959
  %v4358 = vadd.f32 %v3701, %v4034
  %v4359 = vadd.f32 %v3702, %v4036
  %v4360 = vadd.f32 %v3703, %v4111
  %v4361 = vadd.f32 %v3704, %v4113
  %v4362 = vadd.f32 %v3705, %v4188
  %v4363 = vadd.f32 %v3706, %v4190
  %v4364 = vadd.f32 %v3707, %v4265
  %v4365 = vadd.f32 %v3708, %v4267
  %v4366 = vadd.f32 %v3709, %v4342
  %v4367 = vadd.f32 %v3710, %v4344
  %v4368 = vadd.f32 %v3711, %v3809
  %v4369 = vadd.f32 %v3712, %v3811
  %v4370 = vadd.f32 %v3713, %v3886
  %v4371 = vadd.f32 %v3714, %v3888
  %v4372 = vadd.f32 %v3715, %v3963
  %v4373 = vadd.f32 %v3716, %v3965
  %v4374 = vadd.f32 %v3717, %v4040
  %v4375 = vadd.f32 %v3718, %v4042
  %v4376 = vadd.f32 %v3719, %v4117
  %v4377 = vadd.f32 %v3720, %v4119
  %v4378 = vadd.f32 %v3721, %v4194
  %v4379 = vadd.f32 %v3722, %v4196
  %v4380 = vadd.f32 %v3723, %v4271
  %v4381 = vadd.f32 %v3724, %v4273
  %v4382 = vadd.f32 %v3725, %v4348
  %v4383 = vadd.f32 %v3726, %v4350
  %s4384 = scalar_lea.vmem %s3, 64
  %v4385 = vld [vmem:[%s4384] sm:$0xff]
  %v4386 = vld [vmem:[%s4384 + $0x8] sm:$0xff]
  %v4387 = vld [vmem:[#allocation3 + $0x8] sm:$0xff]
  %v4388 = vld [vmem:[#allocation3 + $0x10] sm:$0xff]
  %v4389 = vld [vmem:[#allocation3 + $0x18] sm:$0xff]
  %v4390 = vld [vmem:[#allocation3 + $0x20] sm:$0xff]
  %v4391 = vld [vmem:[#allocation3 + $0x28] sm:$0xff]
  %v4392 = vld [vmem:[#allocation3 + $0x30] sm:$0xff]
  %v4393 = vld [vmem:[#allocation3 + $0x38] sm:$0xff]
  %v4394 = vld [vmem:[#allocation3 + $0x40] sm:$0xff]
  %v4395 = vld [vmem:[#allocation3 + $0x48] sm:$0xff]
  %v4396 = vld [vmem:[#allocation3 + $0x50] sm:$0xff]
  %v4397 = vld [vmem:[#allocation3 + $0x58] sm:$0xff]
  %v4398 = vld [vmem:[#allocation3 + $0x60] sm:$0xff]
  %v4399 = vld [vmem:[#allocation3 + $0x68] sm:$0xff]
  %v4400 = vld [vmem:[#allocation3 + $0x70] sm:$0xff]
  %v4401 = vld [vmem:[#allocation3 + $0x78] sm:$0xff]
  %v4402 = vld [vmem:[#allocation3 + $0x80] sm:$0xff]
  %v4403 = vld [vmem:[#allocation3 + $0x88] sm:$0xff]
  %4421 = vrot.lane.b32.xlu0 %v4387, 124
  %v4422 = vpop.permute.xlu0 %4421
  %4423 = vrot.lane.b32.xlu0 %v4388, 124
  %v4424 = vpop.permute.xlu0 %4423
  %4425 = vrot.lane.b32.xlu0 %v4389, 124
  %v4426 = vpop.permute.xlu0 %4425
  %4427 = vrot.lane.b32.xlu0 %v4390, 124
  %v4428 = vpop.permute.xlu0 %4427
  %4429 = vrot.lane.b32.xlu0 %v4391, 124
  %v4430 = vpop.permute.xlu0 %4429
  %4431 = vrot.lane.b32.xlu0 %v4392, 124
  %v4432 = vpop.permute.xlu0 %4431
  %4433 = vrot.lane.b32.xlu0 %v4393, 124
  %v4434 = vpop.permute.xlu0 %4433
  %4435 = vrot.lane.b32.xlu0 %v4394, 124
  %v4436 = vpop.permute.xlu0 %4435
  %4437 = vrot.lane.b32.xlu0 %v4395, 124
  %v4438 = vpop.permute.xlu0 %4437
  %4439 = vrot.lane.b32.xlu0 %v4396, 124
  %v4440 = vpop.permute.xlu0 %4439
  %4441 = vrot.lane.b32.xlu0 %v4397, 124
  %v4442 = vpop.permute.xlu0 %4441
  %4443 = vrot.lane.b32.xlu0 %v4398, 124
  %v4444 = vpop.permute.xlu0 %4443
  %4445 = vrot.lane.b32.xlu0 %v4399, 124
  %v4446 = vpop.permute.xlu0 %4445
  %4447 = vrot.lane.b32.xlu0 %v4400, 124
  %v4448 = vpop.permute.xlu0 %4447
  %4449 = vrot.lane.b32.xlu0 %v4401, 124
  %v4450 = vpop.permute.xlu0 %4449
  %4451 = vrot.lane.b32.xlu0 %v4402, 124
  %v4452 = vpop.permute.xlu0 %4451
  %4453 = vrot.lane.b32.xlu0 %v4403, 124
  %v4454 = vpop.permute.xlu0 %4453
  %v4455 = vsel %vm462, %v4422, %v4424
  %v4456 = vsel %vm462, %v4424, %v4426
  %v4457 = vsel %vm462, %v4426, %v4428
  %v4458 = vsel %vm462, %v4428, %v4430
  %v4459 = vsel %vm462, %v4430, %v4432
  %v4460 = vsel %vm462, %v4432, %v4434
  %v4461 = vsel %vm462, %v4434, %v4436
  %v4462 = vsel %vm462, %v4436, %v4438
  %v4463 = vsel %vm462, %v4438, %v4440
  %v4464 = vsel %vm462, %v4440, %v4442
  %v4465 = vsel %vm462, %v4442, %v4444
  %v4466 = vsel %vm462, %v4444, %v4446
  %v4467 = vsel %vm462, %v4446, %v4448
  %v4468 = vsel %vm462, %v4448, %v4450
  %v4469 = vsel %vm462, %v4450, %v4452
  %v4470 = vsel %vm462, %v4452, %v4454
  %v4488 = vsel %vm1758, %v4385, 0
  %v4491 = vsel %vm1758, %v4386, 0
  %4493 = vmatprep.subr.mxu0 %v4456
  %4494 = vmatpush1.msra.mxu0 %v4455
  %4495 = vmatprep.subr.mxu0 0.0
  %4496 = vmatpush1.msra.mxu0 0.0
  %4497 = vmatprep.subr.mxu0 0.0
  %4498 = vmatpush1.msra.mxu0 0.0
  %4499 = vmatprep.subr.mxu0 0.0
  %4500 = vmatpush1.msra.mxu0 0.0
  %4501 = vmatprep.subr.mxu0 0.0
  %4502 = vmatpush1.msra.mxu0 0.0
  %4503 = vmatprep.subr.mxu0 0.0
  %4504 = vmatpush1.msra.mxu0 0.0
  %4505 = vmatprep.subr.mxu0 0.0
  %4506 = vmatpush1.msra.mxu0 0.0
  %4507 = vmatprep.subr.mxu0 0.0
  %4508 = vmatpush1.msra.mxu0 0.0
  %4509 = vmatprep.subr.mxu0 0.0
  %4510 = vmatpush1.msra.mxu0 0.0
  %4511 = vmatprep.subr.mxu0 0.0
  %4512 = vmatpush1.msra.mxu0 0.0
  %4513 = vmatprep.subr.mxu0 0.0
  %4514 = vmatpush1.msra.mxu0 0.0
  %4515 = vmatprep.subr.mxu0 0.0
  %4516 = vmatpush1.msra.mxu0 0.0
  %4517 = vmatprep.subr.mxu0 0.0
  %4518 = vmatpush1.msra.mxu0 0.0
  %4519 = vmatprep.subr.mxu0 0.0
  %4520 = vmatpush1.msra.mxu0 0.0
  %4521 = vmatprep.subr.mxu0 0.0
  %4522 = vmatpush1.msra.mxu0 0.0
  %4523 = vmatprep.subr.mxu0 0.0
  %4524 = vmatpush1.msra.mxu0 0.0
  %4525 = vmatprep.subr.mxu0 0.0
  %4526 = vmatpush1.msra.mxu0 0.0
  %4527 = vmatprep.subr.mxu0 0.0
  %4528 = vmatpush1.msra.mxu0 0.0
  %4529 = vmatprep.subr.mxu0 0.0
  %4530 = vmatpush1.msra.mxu0 0.0
  %4531 = vmatprep.subr.mxu0 0.0
  %4532 = vmatpush1.msra.mxu0 0.0
  %4533 = vmatprep.subr.mxu0 0.0
  %4534 = vmatpush1.msra.mxu0 0.0
  %4535 = vmatprep.subr.mxu0 0.0
  %4536 = vmatpush1.msra.mxu0 0.0
  %4537 = vmatprep.subr.mxu0 0.0
  %4538 = vmatpush1.msra.mxu0 0.0
  %4539 = vmatprep.subr.mxu0 0.0
  %4540 = vmatpush1.msra.mxu0 0.0
  %4541 = vmatprep.subr.mxu0 0.0
  %4542 = vmatpush1.msra.mxu0 0.0
  %4543 = vmatprep.subr.mxu0 0.0
  %4544 = vmatpush1.msra.mxu0 0.0
  %4545 = vmatprep.subr.mxu0 0.0
  %4546 = vmatpush1.msra.mxu0 0.0
  %4547 = vmatprep.subr.mxu0 0.0
  %4548 = vmatpush1.msra.mxu0 0.0
  %4549 = vmatprep.subr.mxu0 0.0
  %4550 = vmatpush1.msra.mxu0 0.0
  %4551 = vmatprep.subr.mxu0 0.0
  %4552 = vmatpush1.msra.mxu0 0.0
  %4553 = vmatprep.subr.mxu0 0.0
  %4554 = vmatpush1.msra.mxu0 0.0
  %4555 = vmatprep.subr.mxu0 0.0
  %4556 = vmatpush1.msra.mxu0 0.0
  %4557 = vmatprep.mubr.f32.mxu0 0.0
  %4558 = vmatmul.mubr.f32.gmra.mrb[0].mxu0 %v4488
  %v4559 = vpop.f32.mrb[0].mxu0
  %v4560 = vadd.f32 0.0, %v4559
  %v4561 = vpop.f32.mrb[0].mxu0
  %v4562 = vadd.f32 0.0, %v4561
  %4563 = vmatprep.mubr.f32.mxu0 0.0
  %4564 = vmatmul.mubr.f32.gmra.mrb[0].mxu0 %v4491
  %v4565 = vpop.f32.mrb[0].mxu0
  %v4566 = vadd.f32 0.0, %v4565
  %v4567 = vpop.f32.mrb[0].mxu0
  %v4568 = vadd.f32 0.0, %v4567
  %4569 = vdwg.mxu0
  %4570 = vmatprep.subr.mxu0 %v4458
  %4571 = vmatpush1.msra.mxu0 %v4457
  %4572 = vmatprep.subr.mxu0 0.0
  %4573 = vmatpush1.msra.mxu0 0.0
  %4574 = vmatprep.subr.mxu0 0.0
  %4575 = vmatpush1.msra.mxu0 0.0
  %4576 = vmatprep.subr.mxu0 0.0
  %4577 = vmatpush1.msra.mxu0 0.0
  %4578 = vmatprep.subr.mxu0 0.0
  %4579 = vmatpush1.msra.mxu0 0.0
  %4580 = vmatprep.subr.mxu0 0.0
  %4581 = vmatpush1.msra.mxu0 0.0
  %4582 = vmatprep.subr.mxu0 0.0
  %4583 = vmatpush1.msra.mxu0 0.0
  %4584 = vmatprep.subr.mxu0 0.0
  %4585 = vmatpush1.msra.mxu0 0.0
  %4586 = vmatprep.subr.mxu0 0.0
  %4587 = vmatpush1.msra.mxu0 0.0
  %4588 = vmatprep.subr.mxu0 0.0
  %4589 = vmatpush1.msra.mxu0 0.0
  %4590 = vmatprep.subr.mxu0 0.0
  %4591 = vmatpush1.msra.mxu0 0.0
  %4592 = vmatprep.subr.mxu0 0.0
  %4593 = vmatpush1.msra.mxu0 0.0
  %4594 = vmatprep.subr.mxu0 0.0
  %4595 = vmatpush1.msra.mxu0 0.0
  %4596 = vmatprep.subr.mxu0 0.0
  %4597 = vmatpush1.msra.mxu0 0.0
  %4598 = vmatprep.subr.mxu0 0.0
  %4599 = vmatpush1.msra.mxu0 0.0
  %4600 = vmatprep.subr.mxu0 0.0
  %4601 = vmatpush1.msra.mxu0 0.0
  %4602 = vmatprep.subr.mxu0 0.0
  %4603 = vmatpush1.msra.mxu0 0.0
  %4604 = vmatprep.subr.mxu0 0.0
  %4605 = vmatpush1.msra.mxu0 0.0
  %4606 = vmatprep.subr.mxu0 0.0
  %4607 = vmatpush1.msra.mxu0 0.0
  %4608 = vmatprep.subr.mxu0 0.0
  %4609 = vmatpush1.msra.mxu0 0.0
  %4610 = vmatprep.subr.mxu0 0.0
  %4611 = vmatpush1.msra.mxu0 0.0
  %4612 = vmatprep.subr.mxu0 0.0
  %4613 = vmatpush1.msra.mxu0 0.0
  %4614 = vmatprep.subr.mxu0 0.0
  %4615 = vmatpush1.msra.mxu0 0.0
  %4616 = vmatprep.subr.mxu0 0.0
  %4617 = vmatpush1.msra.mxu0 0.0
  %4618 = vmatprep.subr.mxu0 0.0
  %4619 = vmatpush1.msra.mxu0 0.0
  %4620 = vmatprep.subr.mxu0 0.0
  %4621 = vmatpush1.msra.mxu0 0.0
  %4622 = vmatprep.subr.mxu0 0.0
  %4623 = vmatpush1.msra.mxu0 0.0
  %4624 = vmatprep.subr.mxu0 0.0
  %4625 = vmatpush1.msra.mxu0 0.0
  %4626 = vmatprep.subr.mxu0 0.0
  %4627 = vmatpush1.msra.mxu0 0.0
  %4628 = vmatprep.subr.mxu0 0.0
  %4629 = vmatpush1.msra.mxu0 0.0
  %4630 = vmatprep.subr.mxu0 0.0
  %4631 = vmatpush1.msra.mxu0 0.0
  %4632 = vmatprep.subr.mxu0 0.0
  %4633 = vmatpush1.msra.mxu0 0.0
  %4634 = vmatprep.mubr.f32.mxu0 0.0
  %4635 = vmatmul.mubr.f32.gmra.mrb[0].mxu0 %v4488
  %v4636 = vpop.f32.mrb[0].mxu0
  %v4637 = vadd.f32 0.0, %v4636
  %v4638 = vpop.f32.mrb[0].mxu0
  %v4639 = vadd.f32 0.0, %v4638
  %4640 = vmatprep.mubr.f32.mxu0 0.0
  %4641 = vmatmul.mubr.f32.gmra.mrb[0].mxu0 %v4491
  %v4642 = vpop.f32.mrb[0].mxu0
  %v4643 = vadd.f32 0.0, %v4642
  %v4644 = vpop.f32.mrb[0].mxu0
  %v4645 = vadd.f32 0.0, %v4644
  %4646 = vdwg.mxu0
  %4647 = vmatprep.subr.mxu0 %v4460
  %4648 = vmatpush1.msra.mxu0 %v4459
  %4649 = vmatprep.subr.mxu0 0.0
  %4650 = vmatpush1.msra.mxu0 0.0
  %4651 = vmatprep.subr.mxu0 0.0
  %4652 = vmatpush1.msra.mxu0 0.0
  %4653 = vmatprep.subr.mxu0 0.0
  %4654 = vmatpush1.msra.mxu0 0.0
  %4655 = vmatprep.subr.mxu0 0.0
  %4656 = vmatpush1.msra.mxu0 0.0
  %4657 = vmatprep.subr.mxu0 0.0
  %4658 = vmatpush1.msra.mxu0 0.0
  %4659 = vmatprep.subr.mxu0 0.0
  %4660 = vmatpush1.msra.mxu0 0.0
  %4661 = vmatprep.subr.mxu0 0.0
  %4662 = vmatpush1.msra.mxu0 0.0
  %4663 = vmatprep.subr.mxu0 0.0
  %4664 = vmatpush1.msra.mxu0 0.0
  %4665 = vmatprep.subr.mxu0 0.0
  %4666 = vmatpush1.msra.mxu0 0.0
  %4667 = vmatprep.subr.mxu0 0.0
  %4668 = vmatpush1.msra.mxu0 0.0
  %4669 = vmatprep.subr.mxu0 0.0
  %4670 = vmatpush1.msra.mxu0 0.0
  %4671 = vmatprep.subr.mxu0 0.0
  %4672 = vmatpush1.msra.mxu0 0.0
  %4673 = vmatprep.subr.mxu0 0.0
  %4674 = vmatpush1.msra.mxu0 0.0
  %4675 = vmatprep.subr.mxu0 0.0
  %4676 = vmatpush1.msra.mxu0 0.0
  %4677 = vmatprep.subr.mxu0 0.0
  %4678 = vmatpush1.msra.mxu0 0.0
  %4679 = vmatprep.subr.mxu0 0.0
  %4680 = vmatpush1.msra.mxu0 0.0
  %4681 = vmatprep.subr.mxu0 0.0
  %4682 = vmatpush1.msra.mxu0 0.0
  %4683 = vmatprep.subr.mxu0 0.0
  %4684 = vmatpush1.msra.mxu0 0.0
  %4685 = vmatprep.subr.mxu0 0.0
  %4686 = vmatpush1.msra.mxu0 0.0
  %4687 = vmatprep.subr.mxu0 0.0
  %4688 = vmatpush1.msra.mxu0 0.0
  %4689 = vmatprep.subr.mxu0 0.0
  %4690 = vmatpush1.msra.mxu0 0.0
  %4691 = vmatprep.subr.mxu0 0.0
  %4692 = vmatpush1.msra.mxu0 0.0
  %4693 = vmatprep.subr.mxu0 0.0
  %4694 = vmatpush1.msra.mxu0 0.0
  %4695 = vmatprep.subr.mxu0 0.0
  %4696 = vmatpush1.msra.mxu0 0.0
  %4697 = vmatprep.subr.mxu0 0.0
  %4698 = vmatpush1.msra.mxu0 0.0
  %4699 = vmatprep.subr.mxu0 0.0
  %4700 = vmatpush1.msra.mxu0 0.0
  %4701 = vmatprep.subr.mxu0 0.0
  %4702 = vmatpush1.msra.mxu0 0.0
  %4703 = vmatprep.subr.mxu0 0.0
  %4704 = vmatpush1.msra.mxu0 0.0
  %4705 = vmatprep.subr.mxu0 0.0
  %4706 = vmatpush1.msra.mxu0 0.0
  %4707 = vmatprep.subr.mxu0 0.0
  %4708 = vmatpush1.msra.mxu0 0.0
  %4709 = vmatprep.subr.mxu0 0.0
  %4710 = vmatpush1.msra.mxu0 0.0
  %4711 = vmatprep.mubr.f32.mxu0 0.0
  %4712 = vmatmul.mubr.f32.gmra.mrb[0].mxu0 %v4488
  %v4713 = vpop.f32.mrb[0].mxu0
  %v4714 = vadd.f32 0.0, %v4713
  %v4715 = vpop.f32.mrb[0].mxu0
  %v4716 = vadd.f32 0.0, %v4715
  %4717 = vmatprep.mubr.f32.mxu0 0.0
  %4718 = vmatmul.mubr.f32.gmra.mrb[0].mxu0 %v4491
  %v4719 = vpop.f32.mrb[0].mxu0
  %v4720 = vadd.f32 0.0, %v4719
  %v4721 = vpop.f32.mrb[0].mxu0
  %v4722 = vadd.f32 0.0, %v4721
  %4723 = vdwg.mxu0
  %4724 = vmatprep.subr.mxu0 %v4462
  %4725 = vmatpush1.msra.mxu0 %v4461
  %4726 = vmatprep.subr.mxu0 0.0
  %4727 = vmatpush1.msra.mxu0 0.0
  %4728 = vmatprep.subr.mxu0 0.0
  %4729 = vmatpush1.msra.mxu0 0.0
  %4730 = vmatprep.subr.mxu0 0.0
  %4731 = vmatpush1.msra.mxu0 0.0
  %4732 = vmatprep.subr.mxu0 0.0
  %4733 = vmatpush1.msra.mxu0 0.0
  %4734 = vmatprep.subr.mxu0 0.0
  %4735 = vmatpush1.msra.mxu0 0.0
  %4736 = vmatprep.subr.mxu0 0.0
  %4737 = vmatpush1.msra.mxu0 0.0
  %4738 = vmatprep.subr.mxu0 0.0
  %4739 = vmatpush1.msra.mxu0 0.0
  %4740 = vmatprep.subr.mxu0 0.0
  %4741 = vmatpush1.msra.mxu0 0.0
  %4742 = vmatprep.subr.mxu0 0.0
  %4743 = vmatpush1.msra.mxu0 0.0
  %4744 = vmatprep.subr.mxu0 0.0
  %4745 = vmatpush1.msra.mxu0 0.0
  %4746 = vmatprep.subr.mxu0 0.0
  %4747 = vmatpush1.msra.mxu0 0.0
  %4748 = vmatprep.subr.mxu0 0.0
  %4749 = vmatpush1.msra.mxu0 0.0
  %4750 = vmatprep.subr.mxu0 0.0
  %4751 = vmatpush1.msra.mxu0 0.0
  %4752 = vmatprep.subr.mxu0 0.0
  %4753 = vmatpush1.msra.mxu0 0.0
  %4754 = vmatprep.subr.mxu0 0.0
  %4755 = vmatpush1.msra.mxu0 0.0
  %4756 = vmatprep.subr.mxu0 0.0
  %4757 = vmatpush1.msra.mxu0 0.0
  %4758 = vmatprep.subr.mxu0 0.0
  %4759 = vmatpush1.msra.mxu0 0.0
  %4760 = vmatprep.subr.mxu0 0.0
  %4761 = vmatpush1.msra.mxu0 0.0
  %4762 = vmatprep.subr.mxu0 0.0
  %4763 = vmatpush1.msra.mxu0 0.0
  %4764 = vmatprep.subr.mxu0 0.0
  %4765 = vmatpush1.msra.mxu0 0.0
  %4766 = vmatprep.subr.mxu0 0.0
  %4767 = vmatpush1.msra.mxu0 0.0
  %4768 = vmatprep.subr.mxu0 0.0
  %4769 = vmatpush1.msra.mxu0 0.0
  %4770 = vmatprep.subr.mxu0 0.0
  %4771 = vmatpush1.msra.mxu0 0.0
  %4772 = vmatprep.subr.mxu0 0.0
  %4773 = vmatpush1.msra.mxu0 0.0
  %4774 = vmatprep.subr.mxu0 0.0
  %4775 = vmatpush1.msra.mxu0 0.0
  %4776 = vmatprep.subr.mxu0 0.0
  %4777 = vmatpush1.msra.mxu0 0.0
  %4778 = vmatprep.subr.mxu0 0.0
  %4779 = vmatpush1.msra.mxu0 0.0
  %4780 = vmatprep.subr.mxu0 0.0
  %4781 = vmatpush1.msra.mxu0 0.0
  %4782 = vmatprep.subr.mxu0 0.0
  %4783 = vmatpush1.msra.mxu0 0.0
  %4784 = vmatprep.subr.mxu0 0.0
  %4785 = vmatpush1.msra.mxu0 0.0
  %4786 = vmatprep.subr.mxu0 0.0
  %4787 = vmatpush1.msra.mxu0 0.0
  %4788 = vmatprep.mubr.f32.mxu0 0.0
  %4789 = vmatmul.mubr.f32.gmra.mrb[0].mxu0 %v4488
  %v4790 = vpop.f32.mrb[0].mxu0
  %v4791 = vadd.f32 0.0, %v4790
  %v4792 = vpop.f32.mrb[0].mxu0
  %v4793 = vadd.f32 0.0, %v4792
  %4794 = vmatprep.mubr.f32.mxu0 0.0
  %4795 = vmatmul.mubr.f32.gmra.mrb[0].mxu0 %v4491
  %v4796 = vpop.f32.mrb[0].mxu0
  %v4797 = vadd.f32 0.0, %v4796
  %v4798 = vpop.f32.mrb[0].mxu0
  %v4799 = vadd.f32 0.0, %v4798
  %4800 = vdwg.mxu0
  %4801 = vmatprep.subr.mxu0 %v4464
  %4802 = vmatpush1.msra.mxu0 %v4463
  %4803 = vmatprep.subr.mxu0 0.0
  %4804 = vmatpush1.msra.mxu0 0.0
  %4805 = vmatprep.subr.mxu0 0.0
  %4806 = vmatpush1.msra.mxu0 0.0
  %4807 = vmatprep.subr.mxu0 0.0
  %4808 = vmatpush1.msra.mxu0 0.0
  %4809 = vmatprep.subr.mxu0 0.0
  %4810 = vmatpush1.msra.mxu0 0.0
  %4811 = vmatprep.subr.mxu0 0.0
  %4812 = vmatpush1.msra.mxu0 0.0
  %4813 = vmatprep.subr.mxu0 0.0
  %4814 = vmatpush1.msra.mxu0 0.0
  %4815 = vmatprep.subr.mxu0 0.0
  %4816 = vmatpush1.msra.mxu0 0.0
  %4817 = vmatprep.subr.mxu0 0.0
  %4818 = vmatpush1.msra.mxu0 0.0
  %4819 = vmatprep.subr.mxu0 0.0
  %4820 = vmatpush1.msra.mxu0 0.0
  %4821 = vmatprep.subr.mxu0 0.0
  %4822 = vmatpush1.msra.mxu0 0.0
  %4823 = vmatprep.subr.mxu0 0.0
  %4824 = vmatpush1.msra.mxu0 0.0
  %4825 = vmatprep.subr.mxu0 0.0
  %4826 = vmatpush1.msra.mxu0 0.0
  %4827 = vmatprep.subr.mxu0 0.0
  %4828 = vmatpush1.msra.mxu0 0.0
  %4829 = vmatprep.subr.mxu0 0.0
  %4830 = vmatpush1.msra.mxu0 0.0
  %4831 = vmatprep.subr.mxu0 0.0
  %4832 = vmatpush1.msra.mxu0 0.0
  %4833 = vmatprep.subr.mxu0 0.0
  %4834 = vmatpush1.msra.mxu0 0.0
  %4835 = vmatprep.subr.mxu0 0.0
  %4836 = vmatpush1.msra.mxu0 0.0
  %4837 = vmatprep.subr.mxu0 0.0
  %4838 = vmatpush1.msra.mxu0 0.0
  %4839 = vmatprep.subr.mxu0 0.0
  %4840 = vmatpush1.msra.mxu0 0.0
  %4841 = vmatprep.subr.mxu0 0.0
  %4842 = vmatpush1.msra.mxu0 0.0
  %4843 = vmatprep.subr.mxu0 0.0
  %4844 = vmatpush1.msra.mxu0 0.0
  %4845 = vmatprep.subr.mxu0 0.0
  %4846 = vmatpush1.msra.mxu0 0.0
  %4847 = vmatprep.subr.mxu0 0.0
  %4848 = vmatpush1.msra.mxu0 0.0
  %4849 = vmatprep.subr.mxu0 0.0
  %4850 = vmatpush1.msra.mxu0 0.0
  %4851 = vmatprep.subr.mxu0 0.0
  %4852 = vmatpush1.msra.mxu0 0.0
  %4853 = vmatprep.subr.mxu0 0.0
  %4854 = vmatpush1.msra.mxu0 0.0
  %4855 = vmatprep.subr.mxu0 0.0
  %4856 = vmatpush1.msra.mxu0 0.0
  %4857 = vmatprep.subr.mxu0 0.0
  %4858 = vmatpush1.msra.mxu0 0.0
  %4859 = vmatprep.subr.mxu0 0.0
  %4860 = vmatpush1.msra.mxu0 0.0
  %4861 = vmatprep.subr.mxu0 0.0
  %4862 = vmatpush1.msra.mxu0 0.0
  %4863 = vmatprep.subr.mxu0 0.0
  %4864 = vmatpush1.msra.mxu0 0.0
  %4865 = vmatprep.mubr.f32.mxu0 0.0
  %4866 = vmatmul.mubr.f32.gmra.mrb[0].mxu0 %v4488
  %v4867 = vpop.f32.mrb[0].mxu0
  %v4868 = vadd.f32 0.0, %v4867
  %v4869 = vpop.f32.mrb[0].mxu0
  %v4870 = vadd.f32 0.0, %v4869
  %4871 = vmatprep.mubr.f32.mxu0 0.0
  %4872 = vmatmul.mubr.f32.gmra.mrb[0].mxu0 %v4491
  %v4873 = vpop.f32.mrb[0].mxu0
  %v4874 = vadd.f32 0.0, %v4873
  %v4875 = vpop.f32.mrb[0].mxu0
  %v4876 = vadd.f32 0.0, %v4875
  %4877 = vdwg.mxu0
  %4878 = vmatprep.subr.mxu0 %v4466
  %4879 = vmatpush1.msra.mxu0 %v4465
  %4880 = vmatprep.subr.mxu0 0.0
  %4881 = vmatpush1.msra.mxu0 0.0
  %4882 = vmatprep.subr.mxu0 0.0
  %4883 = vmatpush1.msra.mxu0 0.0
  %4884 = vmatprep.subr.mxu0 0.0
  %4885 = vmatpush1.msra.mxu0 0.0
  %4886 = vmatprep.subr.mxu0 0.0
  %4887 = vmatpush1.msra.mxu0 0.0
  %4888 = vmatprep.subr.mxu0 0.0
  %4889 = vmatpush1.msra.mxu0 0.0
  %4890 = vmatprep.subr.mxu0 0.0
  %4891 = vmatpush1.msra.mxu0 0.0
  %4892 = vmatprep.subr.mxu0 0.0
  %4893 = vmatpush1.msra.mxu0 0.0
  %4894 = vmatprep.subr.mxu0 0.0
  %4895 = vmatpush1.msra.mxu0 0.0
  %4896 = vmatprep.subr.mxu0 0.0
  %4897 = vmatpush1.msra.mxu0 0.0
  %4898 = vmatprep.subr.mxu0 0.0
  %4899 = vmatpush1.msra.mxu0 0.0
  %4900 = vmatprep.subr.mxu0 0.0
  %4901 = vmatpush1.msra.mxu0 0.0
  %4902 = vmatprep.subr.mxu0 0.0
  %4903 = vmatpush1.msra.mxu0 0.0
  %4904 = vmatprep.subr.mxu0 0.0
  %4905 = vmatpush1.msra.mxu0 0.0
  %4906 = vmatprep.subr.mxu0 0.0
  %4907 = vmatpush1.msra.mxu0 0.0
  %4908 = vmatprep.subr.mxu0 0.0
  %4909 = vmatpush1.msra.mxu0 0.0
  %4910 = vmatprep.subr.mxu0 0.0
  %4911 = vmatpush1.msra.mxu0 0.0
  %4912 = vmatprep.subr.mxu0 0.0
  %4913 = vmatpush1.msra.mxu0 0.0
  %4914 = vmatprep.subr.mxu0 0.0
  %4915 = vmatpush1.msra.mxu0 0.0
  %4916 = vmatprep.subr.mxu0 0.0
  %4917 = vmatpush1.msra.mxu0 0.0
  %4918 = vmatprep.subr.mxu0 0.0
  %4919 = vmatpush1.msra.mxu0 0.0
  %4920 = vmatprep.subr.mxu0 0.0
  %4921 = vmatpush1.msra.mxu0 0.0
  %4922 = vmatprep.subr.mxu0 0.0
  %4923 = vmatpush1.msra.mxu0 0.0
  %4924 = vmatprep.subr.mxu0 0.0
  %4925 = vmatpush1.msra.mxu0 0.0
  %4926 = vmatprep.subr.mxu0 0.0
  %4927 = vmatpush1.msra.mxu0 0.0
  %4928 = vmatprep.subr.mxu0 0.0
  %4929 = vmatpush1.msra.mxu0 0.0
  %4930 = vmatprep.subr.mxu0 0.0
  %4931 = vmatpush1.msra.mxu0 0.0
  %4932 = vmatprep.subr.mxu0 0.0
  %4933 = vmatpush1.msra.mxu0 0.0
  %4934 = vmatprep.subr.mxu0 0.0
  %4935 = vmatpush1.msra.mxu0 0.0
  %4936 = vmatprep.subr.mxu0 0.0
  %4937 = vmatpush1.msra.mxu0 0.0
  %4938 = vmatprep.subr.mxu0 0.0
  %4939 = vmatpush1.msra.mxu0 0.0
  %4940 = vmatprep.subr.mxu0 0.0
  %4941 = vmatpush1.msra.mxu0 0.0
  %4942 = vmatprep.mubr.f32.mxu0 0.0
  %4943 = vmatmul.mubr.f32.gmra.mrb[0].mxu0 %v4488
  %v4944 = vpop.f32.mrb[0].mxu0
  %v4945 = vadd.f32 0.0, %v4944
  %v4946 = vpop.f32.mrb[0].mxu0
  %v4947 = vadd.f32 0.0, %v4946
  %4948 = vmatprep.mubr.f32.mxu0 0.0
  %4949 = vmatmul.mubr.f32.gmra.mrb[0].mxu0 %v4491
  %v4950 = vpop.f32.mrb[0].mxu0
  %v4951 = vadd.f32 0.0, %v4950
  %v4952 = vpop.f32.mrb[0].mxu0
  %v4953 = vadd.f32 0.0, %v4952
  %4954 = vdwg.mxu0
  %4955 = vmatprep.subr.mxu0 %v4468
  %4956 = vmatpush1.msra.mxu0 %v4467
  %4957 = vmatprep.subr.mxu0 0.0
  %4958 = vmatpush1.msra.mxu0 0.0
  %4959 = vmatprep.subr.mxu0 0.0
  %4960 = vmatpush1.msra.mxu0 0.0
  %4961 = vmatprep.subr.mxu0 0.0
  %4962 = vmatpush1.msra.mxu0 0.0
  %4963 = vmatprep.subr.mxu0 0.0
  %4964 = vmatpush1.msra.mxu0 0.0
  %4965 = vmatprep.subr.mxu0 0.0
  %4966 = vmatpush1.msra.mxu0 0.0
  %4967 = vmatprep.subr.mxu0 0.0
  %4968 = vmatpush1.msra.mxu0 0.0
  %4969 = vmatprep.subr.mxu0 0.0
  %4970 = vmatpush1.msra.mxu0 0.0
  %4971 = vmatprep.subr.mxu0 0.0
  %4972 = vmatpush1.msra.mxu0 0.0
  %4973 = vmatprep.subr.mxu0 0.0
  %4974 = vmatpush1.msra.mxu0 0.0
  %4975 = vmatprep.subr.mxu0 0.0
  %4976 = vmatpush1.msra.mxu0 0.0
  %4977 = vmatprep.subr.mxu0 0.0
  %4978 = vmatpush1.msra.mxu0 0.0
  %4979 = vmatprep.subr.mxu0 0.0
  %4980 = vmatpush1.msra.mxu0 0.0
  %4981 = vmatprep.subr.mxu0 0.0
  %4982 = vmatpush1.msra.mxu0 0.0
  %4983 = vmatprep.subr.mxu0 0.0
  %4984 = vmatpush1.msra.mxu0 0.0
  %4985 = vmatprep.subr.mxu0 0.0
  %4986 = vmatpush1.msra.mxu0 0.0
  %4987 = vmatprep.subr.mxu0 0.0
  %4988 = vmatpush1.msra.mxu0 0.0
  %4989 = vmatprep.subr.mxu0 0.0
  %4990 = vmatpush1.msra.mxu0 0.0
  %4991 = vmatprep.subr.mxu0 0.0
  %4992 = vmatpush1.msra.mxu0 0.0
  %4993 = vmatprep.subr.mxu0 0.0
  %4994 = vmatpush1.msra.mxu0 0.0
  %4995 = vmatprep.subr.mxu0 0.0
  %4996 = vmatpush1.msra.mxu0 0.0
  %4997 = vmatprep.subr.mxu0 0.0
  %4998 = vmatpush1.msra.mxu0 0.0
  %4999 = vmatprep.subr.mxu0 0.0
  %5000 = vmatpush1.msra.mxu0 0.0
  %5001 = vmatprep.subr.mxu0 0.0
  %5002 = vmatpush1.msra.mxu0 0.0
  %5003 = vmatprep.subr.mxu0 0.0
  %5004 = vmatpush1.msra.mxu0 0.0
  %5005 = vmatprep.subr.mxu0 0.0
  %5006 = vmatpush1.msra.mxu0 0.0
  %5007 = vmatprep.subr.mxu0 0.0
  %5008 = vmatpush1.msra.mxu0 0.0
  %5009 = vmatprep.subr.mxu0 0.0
  %5010 = vmatpush1.msra.mxu0 0.0
  %5011 = vmatprep.subr.mxu0 0.0
  %5012 = vmatpush1.msra.mxu0 0.0
  %5013 = vmatprep.subr.mxu0 0.0
  %5014 = vmatpush1.msra.mxu0 0.0
  %5015 = vmatprep.subr.mxu0 0.0
  %5016 = vmatpush1.msra.mxu0 0.0
  %5017 = vmatprep.subr.mxu0 0.0
  %5018 = vmatpush1.msra.mxu0 0.0
  %5019 = vmatprep.mubr.f32.mxu0 0.0
  %5020 = vmatmul.mubr.f32.gmra.mrb[0].mxu0 %v4488
  %v5021 = vpop.f32.mrb[0].mxu0
  %v5022 = vadd.f32 0.0, %v5021
  %v5023 = vpop.f32.mrb[0].mxu0
  %v5024 = vadd.f32 0.0, %v5023
  %5025 = vmatprep.mubr.f32.mxu0 0.0
  %5026 = vmatmul.mubr.f32.gmra.mrb[0].mxu0 %v4491
  %v5027 = vpop.f32.mrb[0].mxu0
  %v5028 = vadd.f32 0.0, %v5027
  %v5029 = vpop.f32.mrb[0].mxu0
  %v5030 = vadd.f32 0.0, %v5029
  %5031 = vdwg.mxu0
  %5032 = vmatprep.subr.mxu0 %v4470
  %5033 = vmatpush1.msra.mxu0 %v4469
  %5034 = vmatprep.subr.mxu0 0.0
  %5035 = vmatpush1.msra.mxu0 0.0
  %5036 = vmatprep.subr.mxu0 0.0
  %5037 = vmatpush1.msra.mxu0 0.0
  %5038 = vmatprep.subr.mxu0 0.0
  %5039 = vmatpush1.msra.mxu0 0.0
  %5040 = vmatprep.subr.mxu0 0.0
  %5041 = vmatpush1.msra.mxu0 0.0
  %5042 = vmatprep.subr.mxu0 0.0
  %5043 = vmatpush1.msra.mxu0 0.0
  %5044 = vmatprep.subr.mxu0 0.0
  %5045 = vmatpush1.msra.mxu0 0.0
  %5046 = vmatprep.subr.mxu0 0.0
  %5047 = vmatpush1.msra.mxu0 0.0
  %5048 = vmatprep.subr.mxu0 0.0
  %5049 = vmatpush1.msra.mxu0 0.0
  %5050 = vmatprep.subr.mxu0 0.0
  %5051 = vmatpush1.msra.mxu0 0.0
  %5052 = vmatprep.subr.mxu0 0.0
  %5053 = vmatpush1.msra.mxu0 0.0
  %5054 = vmatprep.subr.mxu0 0.0
  %5055 = vmatpush1.msra.mxu0 0.0
  %5056 = vmatprep.subr.mxu0 0.0
  %5057 = vmatpush1.msra.mxu0 0.0
  %5058 = vmatprep.subr.mxu0 0.0
  %5059 = vmatpush1.msra.mxu0 0.0
  %5060 = vmatprep.subr.mxu0 0.0
  %5061 = vmatpush1.msra.mxu0 0.0
  %5062 = vmatprep.subr.mxu0 0.0
  %5063 = vmatpush1.msra.mxu0 0.0
  %5064 = vmatprep.subr.mxu0 0.0
  %5065 = vmatpush1.msra.mxu0 0.0
  %5066 = vmatprep.subr.mxu0 0.0
  %5067 = vmatpush1.msra.mxu0 0.0
  %5068 = vmatprep.subr.mxu0 0.0
  %5069 = vmatpush1.msra.mxu0 0.0
  %5070 = vmatprep.subr.mxu0 0.0
  %5071 = vmatpush1.msra.mxu0 0.0
  %5072 = vmatprep.subr.mxu0 0.0
  %5073 = vmatpush1.msra.mxu0 0.0
  %5074 = vmatprep.subr.mxu0 0.0
  %5075 = vmatpush1.msra.mxu0 0.0
  %5076 = vmatprep.subr.mxu0 0.0
  %5077 = vmatpush1.msra.mxu0 0.0
  %5078 = vmatprep.subr.mxu0 0.0
  %5079 = vmatpush1.msra.mxu0 0.0
  %5080 = vmatprep.subr.mxu0 0.0
  %5081 = vmatpush1.msra.mxu0 0.0
  %5082 = vmatprep.subr.mxu0 0.0
  %5083 = vmatpush1.msra.mxu0 0.0
  %5084 = vmatprep.subr.mxu0 0.0
  %5085 = vmatpush1.msra.mxu0 0.0
  %5086 = vmatprep.subr.mxu0 0.0
  %5087 = vmatpush1.msra.mxu0 0.0
  %5088 = vmatprep.subr.mxu0 0.0
  %5089 = vmatpush1.msra.mxu0 0.0
  %5090 = vmatprep.subr.mxu0 0.0
  %5091 = vmatpush1.msra.mxu0 0.0
  %5092 = vmatprep.subr.mxu0 0.0
  %5093 = vmatpush1.msra.mxu0 0.0
  %5094 = vmatprep.subr.mxu0 0.0
  %5095 = vmatpush1.msra.mxu0 0.0
  %5096 = vmatprep.mubr.f32.mxu0 0.0
  %5097 = vmatmul.mubr.f32.gmra.mrb[0].mxu0 %v4488
  %v5098 = vpop.f32.mrb[0].mxu0
  %v5099 = vadd.f32 0.0, %v5098
  %v5100 = vpop.f32.mrb[0].mxu0
  %v5101 = vadd.f32 0.0, %v5100
  %5102 = vmatprep.mubr.f32.mxu0 0.0
  %5103 = vmatmul.mubr.f32.gmra.mrb[0].mxu0 %v4491
  %v5104 = vpop.f32.mrb[0].mxu0
  %v5105 = vadd.f32 0.0, %v5104
  %v5106 = vpop.f32.mrb[0].mxu0
  %v5107 = vadd.f32 0.0, %v5106
  %5108 = vdwg.mxu0
  %v5109 = vadd.f32 %v4352, %v4560
  %v5110 = vadd.f32 %v4353, %v4562
  %v5111 = vadd.f32 %v4354, %v4637
  %v5112 = vadd.f32 %v4355, %v4639
  %v5113 = vadd.f32 %v4356, %v4714
  %v5114 = vadd.f32 %v4357, %v4716
  %v5115 = vadd.f32 %v4358, %v4791
  %v5116 = vadd.f32 %v4359, %v4793
  %v5117 = vadd.f32 %v4360, %v4868
  %v5118 = vadd.f32 %v4361, %v4870
  %v5119 = vadd.f32 %v4362, %v4945
  %v5120 = vadd.f32 %v4363, %v4947
  %v5121 = vadd.f32 %v4364, %v5022
  %v5122 = vadd.f32 %v4365, %v5024
  %v5123 = vadd.f32 %v4366, %v5099
  %v5124 = vadd.f32 %v4367, %v5101
  %v5125 = vadd.f32 %v4368, %v4566
  %v5126 = vadd.f32 %v4369, %v4568
  %v5127 = vadd.f32 %v4370, %v4643
  %v5128 = vadd.f32 %v4371, %v4645
  %v5129 = vadd.f32 %v4372, %v4720
  %v5130 = vadd.f32 %v4373, %v4722
  %v5131 = vadd.f32 %v4374, %v4797
  %v5132 = vadd.f32 %v4375, %v4799
  %v5133 = vadd.f32 %v4376, %v4874
  %v5134 = vadd.f32 %v4377, %v4876
  %v5135 = vadd.f32 %v4378, %v4951
  %v5136 = vadd.f32 %v4379, %v4953
  %v5137 = vadd.f32 %v4380, %v5028
  %v5138 = vadd.f32 %v4381, %v5030
  %v5139 = vadd.f32 %v4382, %v5105
  %v5140 = vadd.f32 %v4383, %v5107
  %s5141 = scalar_lea.vmem %s3, 80
  %v5142 = vld [vmem:[%s5141] sm:$0xff]
  %v5143 = vld [vmem:[%s5141 + $0x8] sm:$0xff]
  %5144 = vrot.lane.b32.xlu0 %v4387, 120
  %v5145 = vpop.permute.xlu0 %5144
  %5146 = vrot.lane.b32.xlu0 %v4388, 120
  %v5147 = vpop.permute.xlu0 %5146
  %5148 = vrot.lane.b32.xlu0 %v4389, 120
  %v5149 = vpop.permute.xlu0 %5148
  %5150 = vrot.lane.b32.xlu0 %v4390, 120
  %v5151 = vpop.permute.xlu0 %5150
  %5152 = vrot.lane.b32.xlu0 %v4391, 120
  %v5153 = vpop.permute.xlu0 %5152
  %5154 = vrot.lane.b32.xlu0 %v4392, 120
  %v5155 = vpop.permute.xlu0 %5154
  %5156 = vrot.lane.b32.xlu0 %v4393, 120
  %v5157 = vpop.permute.xlu0 %5156
  %5158 = vrot.lane.b32.xlu0 %v4394, 120
  %v5159 = vpop.permute.xlu0 %5158
  %5160 = vrot.lane.b32.xlu0 %v4395, 120
  %v5161 = vpop.permute.xlu0 %5160
  %5162 = vrot.lane.b32.xlu0 %v4396, 120
  %v5163 = vpop.permute.xlu0 %5162
  %5164 = vrot.lane.b32.xlu0 %v4397, 120
  %v5165 = vpop.permute.xlu0 %5164
  %5166 = vrot.lane.b32.xlu0 %v4398, 120
  %v5167 = vpop.permute.xlu0 %5166
  %5168 = vrot.lane.b32.xlu0 %v4399, 120
  %v5169 = vpop.permute.xlu0 %5168
  %5170 = vrot.lane.b32.xlu0 %v4400, 120
  %v5171 = vpop.permute.xlu0 %5170
  %5172 = vrot.lane.b32.xlu0 %v4401, 120
  %v5173 = vpop.permute.xlu0 %5172
  %5174 = vrot.lane.b32.xlu0 %v4402, 120
  %v5175 = vpop.permute.xlu0 %5174
  %5176 = vrot.lane.b32.xlu0 %v4403, 120
  %v5177 = vpop.permute.xlu0 %5176
  %v5178 = vsel %vm3040, %v5145, %v5147
  %v5179 = vsel %vm3040, %v5147, %v5149
  %v5180 = vsel %vm3040, %v5149, %v5151
  %v5181 = vsel %vm3040, %v5151, %v5153
  %v5182 = vsel %vm3040, %v5153, %v5155
  %v5183 = vsel %vm3040, %v5155, %v5157
  %v5184 = vsel %vm3040, %v5157, %v5159
  %v5185 = vsel %vm3040, %v5159, %v5161
  %v5186 = vsel %vm3040, %v5161, %v5163
  %v5187 = vsel %vm3040, %v5163, %v5165
  %v5188 = vsel %vm3040, %v5165, %v5167
  %v5189 = vsel %vm3040, %v5167, %v5169
  %v5190 = vsel %vm3040, %v5169, %v5171
  %v5191 = vsel %vm3040, %v5171, %v5173
  %v5192 = vsel %vm3040, %v5173, %v5175
  %v5193 = vsel %vm3040, %v5175, %v5177
  %v5211 = vsel %vm1758, %v5142, 0
  %v5214 = vsel %vm1758, %v5143, 0
  %5216 = vmatprep.subr.mxu0 %v5179
  %5217 = vmatpush1.msra.mxu0 %v5178
  %5218 = vmatprep.subr.mxu0 0.0
  %5219 = vmatpush1.msra.mxu0 0.0
  %5220 = vmatprep.subr.mxu0 0.0
  %5221 = vmatpush1.msra.mxu0 0.0
  %5222 = vmatprep.subr.mxu0 0.0
  %5223 = vmatpush1.msra.mxu0 0.0
  %5224 = vmatprep.subr.mxu0 0.0
  %5225 = vmatpush1.msra.mxu0 0.0
  %5226 = vmatprep.subr.mxu0 0.0
  %5227 = vmatpush1.msra.mxu0 0.0
  %5228 = vmatprep.subr.mxu0 0.0
  %5229 = vmatpush1.msra.mxu0 0.0
  %5230 = vmatprep.subr.mxu0 0.0
  %5231 = vmatpush1.msra.mxu0 0.0
  %5232 = vmatprep.subr.mxu0 0.0
  %5233 = vmatpush1.msra.mxu0 0.0
  %5234 = vmatprep.subr.mxu0 0.0
  %5235 = vmatpush1.msra.mxu0 0.0
  %5236 = vmatprep.subr.mxu0 0.0
  %5237 = vmatpush1.msra.mxu0 0.0
  %5238 = vmatprep.subr.mxu0 0.0
  %5239 = vmatpush1.msra.mxu0 0.0
  %5240 = vmatprep.subr.mxu0 0.0
  %5241 = vmatpush1.msra.mxu0 0.0
  %5242 = vmatprep.subr.mxu0 0.0
  %5243 = vmatpush1.msra.mxu0 0.0
  %5244 = vmatprep.subr.mxu0 0.0
  %5245 = vmatpush1.msra.mxu0 0.0
  %5246 = vmatprep.subr.mxu0 0.0
  %5247 = vmatpush1.msra.mxu0 0.0
  %5248 = vmatprep.subr.mxu0 0.0
  %5249 = vmatpush1.msra.mxu0 0.0
  %5250 = vmatprep.subr.mxu0 0.0
  %5251 = vmatpush1.msra.mxu0 0.0
  %5252 = vmatprep.subr.mxu0 0.0
  %5253 = vmatpush1.msra.mxu0 0.0
  %5254 = vmatprep.subr.mxu0 0.0
  %5255 = vmatpush1.msra.mxu0 0.0
  %5256 = vmatprep.subr.mxu0 0.0
  %5257 = vmatpush1.msra.mxu0 0.0
  %5258 = vmatprep.subr.mxu0 0.0
  %5259 = vmatpush1.msra.mxu0 0.0
  %5260 = vmatprep.subr.mxu0 0.0
  %5261 = vmatpush1.msra.mxu0 0.0
  %5262 = vmatprep.subr.mxu0 0.0
  %5263 = vmatpush1.msra.mxu0 0.0
  %5264 = vmatprep.subr.mxu0 0.0
  %5265 = vmatpush1.msra.mxu0 0.0
  %5266 = vmatprep.subr.mxu0 0.0
  %5267 = vmatpush1.msra.mxu0 0.0
  %5268 = vmatprep.subr.mxu0 0.0
  %5269 = vmatpush1.msra.mxu0 0.0
  %5270 = vmatprep.subr.mxu0 0.0
  %5271 = vmatpush1.msra.mxu0 0.0
  %5272 = vmatprep.subr.mxu0 0.0
  %5273 = vmatpush1.msra.mxu0 0.0
  %5274 = vmatprep.subr.mxu0 0.0
  %5275 = vmatpush1.msra.mxu0 0.0
  %5276 = vmatprep.subr.mxu0 0.0
  %5277 = vmatpush1.msra.mxu0 0.0
  %5278 = vmatprep.subr.mxu0 0.0
  %5279 = vmatpush1.msra.mxu0 0.0
  %5280 = vmatprep.mubr.f32.mxu0 0.0
  %5281 = vmatmul.mubr.f32.gmra.mrb[0].mxu0 %v5211
  %v5282 = vpop.f32.mrb[0].mxu0
  %v5283 = vadd.f32 0.0, %v5282
  %v5284 = vpop.f32.mrb[0].mxu0
  %v5285 = vadd.f32 0.0, %v5284
  %5286 = vmatprep.mubr.f32.mxu0 0.0
  %5287 = vmatmul.mubr.f32.gmra.mrb[0].mxu0 %v5214
  %v5288 = vpop.f32.mrb[0].mxu0
  %v5289 = vadd.f32 0.0, %v5288
  %v5290 = vpop.f32.mrb[0].mxu0
  %v5291 = vadd.f32 0.0, %v5290
  %5292 = vdwg.mxu0
  %5293 = vmatprep.subr.mxu0 %v5181
  %5294 = vmatpush1.msra.mxu0 %v5180
  %5295 = vmatprep.subr.mxu0 0.0
  %5296 = vmatpush1.msra.mxu0 0.0
  %5297 = vmatprep.subr.mxu0 0.0
  %5298 = vmatpush1.msra.mxu0 0.0
  %5299 = vmatprep.subr.mxu0 0.0
  %5300 = vmatpush1.msra.mxu0 0.0
  %5301 = vmatprep.subr.mxu0 0.0
  %5302 = vmatpush1.msra.mxu0 0.0
  %5303 = vmatprep.subr.mxu0 0.0
  %5304 = vmatpush1.msra.mxu0 0.0
  %5305 = vmatprep.subr.mxu0 0.0
  %5306 = vmatpush1.msra.mxu0 0.0
  %5307 = vmatprep.subr.mxu0 0.0
  %5308 = vmatpush1.msra.mxu0 0.0
  %5309 = vmatprep.subr.mxu0 0.0
  %5310 = vmatpush1.msra.mxu0 0.0
  %5311 = vmatprep.subr.mxu0 0.0
  %5312 = vmatpush1.msra.mxu0 0.0
  %5313 = vmatprep.subr.mxu0 0.0
  %5314 = vmatpush1.msra.mxu0 0.0
  %5315 = vmatprep.subr.mxu0 0.0
  %5316 = vmatpush1.msra.mxu0 0.0
  %5317 = vmatprep.subr.mxu0 0.0
  %5318 = vmatpush1.msra.mxu0 0.0
  %5319 = vmatprep.subr.mxu0 0.0
  %5320 = vmatpush1.msra.mxu0 0.0
  %5321 = vmatprep.subr.mxu0 0.0
  %5322 = vmatpush1.msra.mxu0 0.0
  %5323 = vmatprep.subr.mxu0 0.0
  %5324 = vmatpush1.msra.mxu0 0.0
  %5325 = vmatprep.subr.mxu0 0.0
  %5326 = vmatpush1.msra.mxu0 0.0
  %5327 = vmatprep.subr.mxu0 0.0
  %5328 = vmatpush1.msra.mxu0 0.0
  %5329 = vmatprep.subr.mxu0 0.0
  %5330 = vmatpush1.msra.mxu0 0.0
  %5331 = vmatprep.subr.mxu0 0.0
  %5332 = vmatpush1.msra.mxu0 0.0
  %5333 = vmatprep.subr.mxu0 0.0
  %5334 = vmatpush1.msra.mxu0 0.0
  %5335 = vmatprep.subr.mxu0 0.0
  %5336 = vmatpush1.msra.mxu0 0.0
  %5337 = vmatprep.subr.mxu0 0.0
  %5338 = vmatpush1.msra.mxu0 0.0
  %5339 = vmatprep.subr.mxu0 0.0
  %5340 = vmatpush1.msra.mxu0 0.0
  %5341 = vmatprep.subr.mxu0 0.0
  %5342 = vmatpush1.msra.mxu0 0.0
  %5343 = vmatprep.subr.mxu0 0.0
  %5344 = vmatpush1.msra.mxu0 0.0
  %5345 = vmatprep.subr.mxu0 0.0
  %5346 = vmatpush1.msra.mxu0 0.0
  %5347 = vmatprep.subr.mxu0 0.0
  %5348 = vmatpush1.msra.mxu0 0.0
  %5349 = vmatprep.subr.mxu0 0.0
  %5350 = vmatpush1.msra.mxu0 0.0
  %5351 = vmatprep.subr.mxu0 0.0
  %5352 = vmatpush1.msra.mxu0 0.0
  %5353 = vmatprep.subr.mxu0 0.0
  %5354 = vmatpush1.msra.mxu0 0.0
  %5355 = vmatprep.subr.mxu0 0.0
  %5356 = vmatpush1.msra.mxu0 0.0
  %5357 = vmatprep.mubr.f32.mxu0 0.0
  %5358 = vmatmul.mubr.f32.gmra.mrb[0].mxu0 %v5211
  %v5359 = vpop.f32.mrb[0].mxu0
  %v5360 = vadd.f32 0.0, %v5359
  %v5361 = vpop.f32.mrb[0].mxu0
  %v5362 = vadd.f32 0.0, %v5361
  %5363 = vmatprep.mubr.f32.mxu0 0.0
  %5364 = vmatmul.mubr.f32.gmra.mrb[0].mxu0 %v5214
  %v5365 = vpop.f32.mrb[0].mxu0
  %v5366 = vadd.f32 0.0, %v5365
  %v5367 = vpop.f32.mrb[0].mxu0
  %v5368 = vadd.f32 0.0, %v5367
  %5369 = vdwg.mxu0
  %5370 = vmatprep.subr.mxu0 %v5183
  %5371 = vmatpush1.msra.mxu0 %v5182
  %5372 = vmatprep.subr.mxu0 0.0
  %5373 = vmatpush1.msra.mxu0 0.0
  %5374 = vmatprep.subr.mxu0 0.0
  %5375 = vmatpush1.msra.mxu0 0.0
  %5376 = vmatprep.subr.mxu0 0.0
  %5377 = vmatpush1.msra.mxu0 0.0
  %5378 = vmatprep.subr.mxu0 0.0
  %5379 = vmatpush1.msra.mxu0 0.0
  %5380 = vmatprep.subr.mxu0 0.0
  %5381 = vmatpush1.msra.mxu0 0.0
  %5382 = vmatprep.subr.mxu0 0.0
  %5383 = vmatpush1.msra.mxu0 0.0
  %5384 = vmatprep.subr.mxu0 0.0
  %5385 = vmatpush1.msra.mxu0 0.0
  %5386 = vmatprep.subr.mxu0 0.0
  %5387 = vmatpush1.msra.mxu0 0.0
  %5388 = vmatprep.subr.mxu0 0.0
  %5389 = vmatpush1.msra.mxu0 0.0
  %5390 = vmatprep.subr.mxu0 0.0
  %5391 = vmatpush1.msra.mxu0 0.0
  %5392 = vmatprep.subr.mxu0 0.0
  %5393 = vmatpush1.msra.mxu0 0.0
  %5394 = vmatprep.subr.mxu0 0.0
  %5395 = vmatpush1.msra.mxu0 0.0
  %5396 = vmatprep.subr.mxu0 0.0
  %5397 = vmatpush1.msra.mxu0 0.0
  %5398 = vmatprep.subr.mxu0 0.0
  %5399 = vmatpush1.msra.mxu0 0.0
  %5400 = vmatprep.subr.mxu0 0.0
  %5401 = vmatpush1.msra.mxu0 0.0
  %5402 = vmatprep.subr.mxu0 0.0
  %5403 = vmatpush1.msra.mxu0 0.0
  %5404 = vmatprep.subr.mxu0 0.0
  %5405 = vmatpush1.msra.mxu0 0.0
  %5406 = vmatprep.subr.mxu0 0.0
  %5407 = vmatpush1.msra.mxu0 0.0
  %5408 = vmatprep.subr.mxu0 0.0
  %5409 = vmatpush1.msra.mxu0 0.0
  %5410 = vmatprep.subr.mxu0 0.0
  %5411 = vmatpush1.msra.mxu0 0.0
  %5412 = vmatprep.subr.mxu0 0.0
  %5413 = vmatpush1.msra.mxu0 0.0
  %5414 = vmatprep.subr.mxu0 0.0
  %5415 = vmatpush1.msra.mxu0 0.0
  %5416 = vmatprep.subr.mxu0 0.0
  %5417 = vmatpush1.msra.mxu0 0.0
  %5418 = vmatprep.subr.mxu0 0.0
  %5419 = vmatpush1.msra.mxu0 0.0
  %5420 = vmatprep.subr.mxu0 0.0
  %5421 = vmatpush1.msra.mxu0 0.0
  %5422 = vmatprep.subr.mxu0 0.0
  %5423 = vmatpush1.msra.mxu0 0.0
  %5424 = vmatprep.subr.mxu0 0.0
  %5425 = vmatpush1.msra.mxu0 0.0
  %5426 = vmatprep.subr.mxu0 0.0
  %5427 = vmatpush1.msra.mxu0 0.0
  %5428 = vmatprep.subr.mxu0 0.0
  %5429 = vmatpush1.msra.mxu0 0.0
  %5430 = vmatprep.subr.mxu0 0.0
  %5431 = vmatpush1.msra.mxu0 0.0
  %5432 = vmatprep.subr.mxu0 0.0
  %5433 = vmatpush1.msra.mxu0 0.0
  %5434 = vmatprep.mubr.f32.mxu0 0.0
  %5435 = vmatmul.mubr.f32.gmra.mrb[0].mxu0 %v5211
  %v5436 = vpop.f32.mrb[0].mxu0
  %v5437 = vadd.f32 0.0, %v5436
  %v5438 = vpop.f32.mrb[0].mxu0
  %v5439 = vadd.f32 0.0, %v5438
  %5440 = vmatprep.mubr.f32.mxu0 0.0
  %5441 = vmatmul.mubr.f32.gmra.mrb[0].mxu0 %v5214
  %v5442 = vpop.f32.mrb[0].mxu0
  %v5443 = vadd.f32 0.0, %v5442
  %v5444 = vpop.f32.mrb[0].mxu0
  %v5445 = vadd.f32 0.0, %v5444
  %5446 = vdwg.mxu0
  %5447 = vmatprep.subr.mxu0 %v5185
  %5448 = vmatpush1.msra.mxu0 %v5184
  %5449 = vmatprep.subr.mxu0 0.0
  %5450 = vmatpush1.msra.mxu0 0.0
  %5451 = vmatprep.subr.mxu0 0.0
  %5452 = vmatpush1.msra.mxu0 0.0
  %5453 = vmatprep.subr.mxu0 0.0
  %5454 = vmatpush1.msra.mxu0 0.0
  %5455 = vmatprep.subr.mxu0 0.0
  %5456 = vmatpush1.msra.mxu0 0.0
  %5457 = vmatprep.subr.mxu0 0.0
  %5458 = vmatpush1.msra.mxu0 0.0
  %5459 = vmatprep.subr.mxu0 0.0
  %5460 = vmatpush1.msra.mxu0 0.0
  %5461 = vmatprep.subr.mxu0 0.0
  %5462 = vmatpush1.msra.mxu0 0.0
  %5463 = vmatprep.subr.mxu0 0.0
  %5464 = vmatpush1.msra.mxu0 0.0
  %5465 = vmatprep.subr.mxu0 0.0
  %5466 = vmatpush1.msra.mxu0 0.0
  %5467 = vmatprep.subr.mxu0 0.0
  %5468 = vmatpush1.msra.mxu0 0.0
  %5469 = vmatprep.subr.mxu0 0.0
  %5470 = vmatpush1.msra.mxu0 0.0
  %5471 = vmatprep.subr.mxu0 0.0
  %5472 = vmatpush1.msra.mxu0 0.0
  %5473 = vmatprep.subr.mxu0 0.0
  %5474 = vmatpush1.msra.mxu0 0.0
  %5475 = vmatprep.subr.mxu0 0.0
  %5476 = vmatpush1.msra.mxu0 0.0
  %5477 = vmatprep.subr.mxu0 0.0
  %5478 = vmatpush1.msra.mxu0 0.0
  %5479 = vmatprep.subr.mxu0 0.0
  %5480 = vmatpush1.msra.mxu0 0.0
  %5481 = vmatprep.subr.mxu0 0.0
  %5482 = vmatpush1.msra.mxu0 0.0
  %5483 = vmatprep.subr.mxu0 0.0
  %5484 = vmatpush1.msra.mxu0 0.0
  %5485 = vmatprep.subr.mxu0 0.0
  %5486 = vmatpush1.msra.mxu0 0.0
  %5487 = vmatprep.subr.mxu0 0.0
  %5488 = vmatpush1.msra.mxu0 0.0
  %5489 = vmatprep.subr.mxu0 0.0
  %5490 = vmatpush1.msra.mxu0 0.0
  %5491 = vmatprep.subr.mxu0 0.0
  %5492 = vmatpush1.msra.mxu0 0.0
  %5493 = vmatprep.subr.mxu0 0.0
  %5494 = vmatpush1.msra.mxu0 0.0
  %5495 = vmatprep.subr.mxu0 0.0
  %5496 = vmatpush1.msra.mxu0 0.0
  %5497 = vmatprep.subr.mxu0 0.0
  %5498 = vmatpush1.msra.mxu0 0.0
  %5499 = vmatprep.subr.mxu0 0.0
  %5500 = vmatpush1.msra.mxu0 0.0
  %5501 = vmatprep.subr.mxu0 0.0
  %5502 = vmatpush1.msra.mxu0 0.0
  %5503 = vmatprep.subr.mxu0 0.0
  %5504 = vmatpush1.msra.mxu0 0.0
  %5505 = vmatprep.subr.mxu0 0.0
  %5506 = vmatpush1.msra.mxu0 0.0
  %5507 = vmatprep.subr.mxu0 0.0
  %5508 = vmatpush1.msra.mxu0 0.0
  %5509 = vmatprep.subr.mxu0 0.0
  %5510 = vmatpush1.msra.mxu0 0.0
  %5511 = vmatprep.mubr.f32.mxu0 0.0
  %5512 = vmatmul.mubr.f32.gmra.mrb[0].mxu0 %v5211
  %v5513 = vpop.f32.mrb[0].mxu0
  %v5514 = vadd.f32 0.0, %v5513
  %v5515 = vpop.f32.mrb[0].mxu0
  %v5516 = vadd.f32 0.0, %v5515
  %5517 = vmatprep.mubr.f32.mxu0 0.0
  %5518 = vmatmul.mubr.f32.gmra.mrb[0].mxu0 %v5214
  %v5519 = vpop.f32.mrb[0].mxu0
  %v5520 = vadd.f32 0.0, %v5519
  %v5521 = vpop.f32.mrb[0].mxu0
  %v5522 = vadd.f32 0.0, %v5521
  %5523 = vdwg.mxu0
  %5524 = vmatprep.subr.mxu0 %v5187
  %5525 = vmatpush1.msra.mxu0 %v5186
  %5526 = vmatprep.subr.mxu0 0.0
  %5527 = vmatpush1.msra.mxu0 0.0
  %5528 = vmatprep.subr.mxu0 0.0
  %5529 = vmatpush1.msra.mxu0 0.0
  %5530 = vmatprep.subr.mxu0 0.0
  %5531 = vmatpush1.msra.mxu0 0.0
  %5532 = vmatprep.subr.mxu0 0.0
  %5533 = vmatpush1.msra.mxu0 0.0
  %5534 = vmatprep.subr.mxu0 0.0
  %5535 = vmatpush1.msra.mxu0 0.0
  %5536 = vmatprep.subr.mxu0 0.0
  %5537 = vmatpush1.msra.mxu0 0.0
  %5538 = vmatprep.subr.mxu0 0.0
  %5539 = vmatpush1.msra.mxu0 0.0
  %5540 = vmatprep.subr.mxu0 0.0
  %5541 = vmatpush1.msra.mxu0 0.0
  %5542 = vmatprep.subr.mxu0 0.0
  %5543 = vmatpush1.msra.mxu0 0.0
  %5544 = vmatprep.subr.mxu0 0.0
  %5545 = vmatpush1.msra.mxu0 0.0
  %5546 = vmatprep.subr.mxu0 0.0
  %5547 = vmatpush1.msra.mxu0 0.0
  %5548 = vmatprep.subr.mxu0 0.0
  %5549 = vmatpush1.msra.mxu0 0.0
  %5550 = vmatprep.subr.mxu0 0.0
  %5551 = vmatpush1.msra.mxu0 0.0
  %5552 = vmatprep.subr.mxu0 0.0
  %5553 = vmatpush1.msra.mxu0 0.0
  %5554 = vmatprep.subr.mxu0 0.0
  %5555 = vmatpush1.msra.mxu0 0.0
  %5556 = vmatprep.subr.mxu0 0.0
  %5557 = vmatpush1.msra.mxu0 0.0
  %5558 = vmatprep.subr.mxu0 0.0
  %5559 = vmatpush1.msra.mxu0 0.0
  %5560 = vmatprep.subr.mxu0 0.0
  %5561 = vmatpush1.msra.mxu0 0.0
  %5562 = vmatprep.subr.mxu0 0.0
  %5563 = vmatpush1.msra.mxu0 0.0
  %5564 = vmatprep.subr.mxu0 0.0
  %5565 = vmatpush1.msra.mxu0 0.0
  %5566 = vmatprep.subr.mxu0 0.0
  %5567 = vmatpush1.msra.mxu0 0.0
  %5568 = vmatprep.subr.mxu0 0.0
  %5569 = vmatpush1.msra.mxu0 0.0
  %5570 = vmatprep.subr.mxu0 0.0
  %5571 = vmatpush1.msra.mxu0 0.0
  %5572 = vmatprep.subr.mxu0 0.0
  %5573 = vmatpush1.msra.mxu0 0.0
  %5574 = vmatprep.subr.mxu0 0.0
  %5575 = vmatpush1.msra.mxu0 0.0
  %5576 = vmatprep.subr.mxu0 0.0
  %5577 = vmatpush1.msra.mxu0 0.0
  %5578 = vmatprep.subr.mxu0 0.0
  %5579 = vmatpush1.msra.mxu0 0.0
  %5580 = vmatprep.subr.mxu0 0.0
  %5581 = vmatpush1.msra.mxu0 0.0
  %5582 = vmatprep.subr.mxu0 0.0
  %5583 = vmatpush1.msra.mxu0 0.0
  %5584 = vmatprep.subr.mxu0 0.0
  %5585 = vmatpush1.msra.mxu0 0.0
  %5586 = vmatprep.subr.mxu0 0.0
  %5587 = vmatpush1.msra.mxu0 0.0
  %5588 = vmatprep.mubr.f32.mxu0 0.0
  %5589 = vmatmul.mubr.f32.gmra.mrb[0].mxu0 %v5211
  %v5590 = vpop.f32.mrb[0].mxu0
  %v5591 = vadd.f32 0.0, %v5590
  %v5592 = vpop.f32.mrb[0].mxu0
  %v5593 = vadd.f32 0.0, %v5592
  %5594 = vmatprep.mubr.f32.mxu0 0.0
  %5595 = vmatmul.mubr.f32.gmra.mrb[0].mxu0 %v5214
  %v5596 = vpop.f32.mrb[0].mxu0
  %v5597 = vadd.f32 0.0, %v5596
  %v5598 = vpop.f32.mrb[0].mxu0
  %v5599 = vadd.f32 0.0, %v5598
  %5600 = vdwg.mxu0
  %5601 = vmatprep.subr.mxu0 %v5189
  %5602 = vmatpush1.msra.mxu0 %v5188
  %5603 = vmatprep.subr.mxu0 0.0
  %5604 = vmatpush1.msra.mxu0 0.0
  %5605 = vmatprep.subr.mxu0 0.0
  %5606 = vmatpush1.msra.mxu0 0.0
  %5607 = vmatprep.subr.mxu0 0.0
  %5608 = vmatpush1.msra.mxu0 0.0
  %5609 = vmatprep.subr.mxu0 0.0
  %5610 = vmatpush1.msra.mxu0 0.0
  %5611 = vmatprep.subr.mxu0 0.0
  %5612 = vmatpush1.msra.mxu0 0.0
  %5613 = vmatprep.subr.mxu0 0.0
  %5614 = vmatpush1.msra.mxu0 0.0
  %5615 = vmatprep.subr.mxu0 0.0
  %5616 = vmatpush1.msra.mxu0 0.0
  %5617 = vmatprep.subr.mxu0 0.0
  %5618 = vmatpush1.msra.mxu0 0.0
  %5619 = vmatprep.subr.mxu0 0.0
  %5620 = vmatpush1.msra.mxu0 0.0
  %5621 = vmatprep.subr.mxu0 0.0
  %5622 = vmatpush1.msra.mxu0 0.0
  %5623 = vmatprep.subr.mxu0 0.0
  %5624 = vmatpush1.msra.mxu0 0.0
  %5625 = vmatprep.subr.mxu0 0.0
  %5626 = vmatpush1.msra.mxu0 0.0
  %5627 = vmatprep.subr.mxu0 0.0
  %5628 = vmatpush1.msra.mxu0 0.0
  %5629 = vmatprep.subr.mxu0 0.0
  %5630 = vmatpush1.msra.mxu0 0.0
  %5631 = vmatprep.subr.mxu0 0.0
  %5632 = vmatpush1.msra.mxu0 0.0
  %5633 = vmatprep.subr.mxu0 0.0
  %5634 = vmatpush1.msra.mxu0 0.0
  %5635 = vmatprep.subr.mxu0 0.0
  %5636 = vmatpush1.msra.mxu0 0.0
  %5637 = vmatprep.subr.mxu0 0.0
  %5638 = vmatpush1.msra.mxu0 0.0
  %5639 = vmatprep.subr.mxu0 0.0
  %5640 = vmatpush1.msra.mxu0 0.0
  %5641 = vmatprep.subr.mxu0 0.0
  %5642 = vmatpush1.msra.mxu0 0.0
  %5643 = vmatprep.subr.mxu0 0.0
  %5644 = vmatpush1.msra.mxu0 0.0
  %5645 = vmatprep.subr.mxu0 0.0
  %5646 = vmatpush1.msra.mxu0 0.0
  %5647 = vmatprep.subr.mxu0 0.0
  %5648 = vmatpush1.msra.mxu0 0.0
  %5649 = vmatprep.subr.mxu0 0.0
  %5650 = vmatpush1.msra.mxu0 0.0
  %5651 = vmatprep.subr.mxu0 0.0
  %5652 = vmatpush1.msra.mxu0 0.0
  %5653 = vmatprep.subr.mxu0 0.0
  %5654 = vmatpush1.msra.mxu0 0.0
  %5655 = vmatprep.subr.mxu0 0.0
  %5656 = vmatpush1.msra.mxu0 0.0
  %5657 = vmatprep.subr.mxu0 0.0
  %5658 = vmatpush1.msra.mxu0 0.0
  %5659 = vmatprep.subr.mxu0 0.0
  %5660 = vmatpush1.msra.mxu0 0.0
  %5661 = vmatprep.subr.mxu0 0.0
  %5662 = vmatpush1.msra.mxu0 0.0
  %5663 = vmatprep.subr.mxu0 0.0
  %5664 = vmatpush1.msra.mxu0 0.0
  %5665 = vmatprep.mubr.f32.mxu0 0.0
  %5666 = vmatmul.mubr.f32.gmra.mrb[0].mxu0 %v5211
  %v5667 = vpop.f32.mrb[0].mxu0
  %v5668 = vadd.f32 0.0, %v5667
  %v5669 = vpop.f32.mrb[0].mxu0
  %v5670 = vadd.f32 0.0, %v5669
  %5671 = vmatprep.mubr.f32.mxu0 0.0
  %5672 = vmatmul.mubr.f32.gmra.mrb[0].mxu0 %v5214
  %v5673 = vpop.f32.mrb[0].mxu0
  %v5674 = vadd.f32 0.0, %v5673
  %v5675 = vpop.f32.mrb[0].mxu0
  %v5676 = vadd.f32 0.0, %v5675
  %5677 = vdwg.mxu0
  %5678 = vmatprep.subr.mxu0 %v5191
  %5679 = vmatpush1.msra.mxu0 %v5190
  %5680 = vmatprep.subr.mxu0 0.0
  %5681 = vmatpush1.msra.mxu0 0.0
  %5682 = vmatprep.subr.mxu0 0.0
  %5683 = vmatpush1.msra.mxu0 0.0
  %5684 = vmatprep.subr.mxu0 0.0
  %5685 = vmatpush1.msra.mxu0 0.0
  %5686 = vmatprep.subr.mxu0 0.0
  %5687 = vmatpush1.msra.mxu0 0.0
  %5688 = vmatprep.subr.mxu0 0.0
  %5689 = vmatpush1.msra.mxu0 0.0
  %5690 = vmatprep.subr.mxu0 0.0
  %5691 = vmatpush1.msra.mxu0 0.0
  %5692 = vmatprep.subr.mxu0 0.0
  %5693 = vmatpush1.msra.mxu0 0.0
  %5694 = vmatprep.subr.mxu0 0.0
  %5695 = vmatpush1.msra.mxu0 0.0
  %5696 = vmatprep.subr.mxu0 0.0
  %5697 = vmatpush1.msra.mxu0 0.0
  %5698 = vmatprep.subr.mxu0 0.0
  %5699 = vmatpush1.msra.mxu0 0.0
  %5700 = vmatprep.subr.mxu0 0.0
  %5701 = vmatpush1.msra.mxu0 0.0
  %5702 = vmatprep.subr.mxu0 0.0
  %5703 = vmatpush1.msra.mxu0 0.0
  %5704 = vmatprep.subr.mxu0 0.0
  %5705 = vmatpush1.msra.mxu0 0.0
  %5706 = vmatprep.subr.mxu0 0.0
  %5707 = vmatpush1.msra.mxu0 0.0
  %5708 = vmatprep.subr.mxu0 0.0
  %5709 = vmatpush1.msra.mxu0 0.0
  %5710 = vmatprep.subr.mxu0 0.0
  %5711 = vmatpush1.msra.mxu0 0.0
  %5712 = vmatprep.subr.mxu0 0.0
  %5713 = vmatpush1.msra.mxu0 0.0
  %5714 = vmatprep.subr.mxu0 0.0
  %5715 = vmatpush1.msra.mxu0 0.0
  %5716 = vmatprep.subr.mxu0 0.0
  %5717 = vmatpush1.msra.mxu0 0.0
  %5718 = vmatprep.subr.mxu0 0.0
  %5719 = vmatpush1.msra.mxu0 0.0
  %5720 = vmatprep.subr.mxu0 0.0
  %5721 = vmatpush1.msra.mxu0 0.0
  %5722 = vmatprep.subr.mxu0 0.0
  %5723 = vmatpush1.msra.mxu0 0.0
  %5724 = vmatprep.subr.mxu0 0.0
  %5725 = vmatpush1.msra.mxu0 0.0
  %5726 = vmatprep.subr.mxu0 0.0
  %5727 = vmatpush1.msra.mxu0 0.0
  %5728 = vmatprep.subr.mxu0 0.0
  %5729 = vmatpush1.msra.mxu0 0.0
  %5730 = vmatprep.subr.mxu0 0.0
  %5731 = vmatpush1.msra.mxu0 0.0
  %5732 = vmatprep.subr.mxu0 0.0
  %5733 = vmatpush1.msra.mxu0 0.0
  %5734 = vmatprep.subr.mxu0 0.0
  %5735 = vmatpush1.msra.mxu0 0.0
  %5736 = vmatprep.subr.mxu0 0.0
  %5737 = vmatpush1.msra.mxu0 0.0
  %5738 = vmatprep.subr.mxu0 0.0
  %5739 = vmatpush1.msra.mxu0 0.0
  %5740 = vmatprep.subr.mxu0 0.0
  %5741 = vmatpush1.msra.mxu0 0.0
  %5742 = vmatprep.mubr.f32.mxu0 0.0
  %5743 = vmatmul.mubr.f32.gmra.mrb[0].mxu0 %v5211
  %v5744 = vpop.f32.mrb[0].mxu0
  %v5745 = vadd.f32 0.0, %v5744
  %v5746 = vpop.f32.mrb[0].mxu0
  %v5747 = vadd.f32 0.0, %v5746
  %5748 = vmatprep.mubr.f32.mxu0 0.0
  %5749 = vmatmul.mubr.f32.gmra.mrb[0].mxu0 %v5214
  %v5750 = vpop.f32.mrb[0].mxu0
  %v5751 = vadd.f32 0.0, %v5750
  %v5752 = vpop.f32.mrb[0].mxu0
  %v5753 = vadd.f32 0.0, %v5752
  %5754 = vdwg.mxu0
  %5755 = vmatprep.subr.mxu0 %v5193
  %5756 = vmatpush1.msra.mxu0 %v5192
  %5757 = vmatprep.subr.mxu0 0.0
  %5758 = vmatpush1.msra.mxu0 0.0
  %5759 = vmatprep.subr.mxu0 0.0
  %5760 = vmatpush1.msra.mxu0 0.0
  %5761 = vmatprep.subr.mxu0 0.0
  %5762 = vmatpush1.msra.mxu0 0.0
  %5763 = vmatprep.subr.mxu0 0.0
  %5764 = vmatpush1.msra.mxu0 0.0
  %5765 = vmatprep.subr.mxu0 0.0
  %5766 = vmatpush1.msra.mxu0 0.0
  %5767 = vmatprep.subr.mxu0 0.0
  %5768 = vmatpush1.msra.mxu0 0.0
  %5769 = vmatprep.subr.mxu0 0.0
  %5770 = vmatpush1.msra.mxu0 0.0
  %5771 = vmatprep.subr.mxu0 0.0
  %5772 = vmatpush1.msra.mxu0 0.0
  %5773 = vmatprep.subr.mxu0 0.0
  %5774 = vmatpush1.msra.mxu0 0.0
  %5775 = vmatprep.subr.mxu0 0.0
  %5776 = vmatpush1.msra.mxu0 0.0
  %5777 = vmatprep.subr.mxu0 0.0
  %5778 = vmatpush1.msra.mxu0 0.0
  %5779 = vmatprep.subr.mxu0 0.0
  %5780 = vmatpush1.msra.mxu0 0.0
  %5781 = vmatprep.subr.mxu0 0.0
  %5782 = vmatpush1.msra.mxu0 0.0
  %5783 = vmatprep.subr.mxu0 0.0
  %5784 = vmatpush1.msra.mxu0 0.0
  %5785 = vmatprep.subr.mxu0 0.0
  %5786 = vmatpush1.msra.mxu0 0.0
  %5787 = vmatprep.subr.mxu0 0.0
  %5788 = vmatpush1.msra.mxu0 0.0
  %5789 = vmatprep.subr.mxu0 0.0
  %5790 = vmatpush1.msra.mxu0 0.0
  %5791 = vmatprep.subr.mxu0 0.0
  %5792 = vmatpush1.msra.mxu0 0.0
  %5793 = vmatprep.subr.mxu0 0.0
  %5794 = vmatpush1.msra.mxu0 0.0
  %5795 = vmatprep.subr.mxu0 0.0
  %5796 = vmatpush1.msra.mxu0 0.0
  %5797 = vmatprep.subr.mxu0 0.0
  %5798 = vmatpush1.msra.mxu0 0.0
  %5799 = vmatprep.subr.mxu0 0.0
  %5800 = vmatpush1.msra.mxu0 0.0
  %5801 = vmatprep.subr.mxu0 0.0
  %5802 = vmatpush1.msra.mxu0 0.0
  %5803 = vmatprep.subr.mxu0 0.0
  %5804 = vmatpush1.msra.mxu0 0.0
  %5805 = vmatprep.subr.mxu0 0.0
  %5806 = vmatpush1.msra.mxu0 0.0
  %5807 = vmatprep.subr.mxu0 0.0
  %5808 = vmatpush1.msra.mxu0 0.0
  %5809 = vmatprep.subr.mxu0 0.0
  %5810 = vmatpush1.msra.mxu0 0.0
  %5811 = vmatprep.subr.mxu0 0.0
  %5812 = vmatpush1.msra.mxu0 0.0
  %5813 = vmatprep.subr.mxu0 0.0
  %5814 = vmatpush1.msra.mxu0 0.0
  %5815 = vmatprep.subr.mxu0 0.0
  %5816 = vmatpush1.msra.mxu0 0.0
  %5817 = vmatprep.subr.mxu0 0.0
  %5818 = vmatpush1.msra.mxu0 0.0
  %5819 = vmatprep.mubr.f32.mxu0 0.0
  %5820 = vmatmul.mubr.f32.gmra.mrb[0].mxu0 %v5211
  %v5821 = vpop.f32.mrb[0].mxu0
  %v5822 = vadd.f32 0.0, %v5821
  %v5823 = vpop.f32.mrb[0].mxu0
  %v5824 = vadd.f32 0.0, %v5823
  %5825 = vmatprep.mubr.f32.mxu0 0.0
  %5826 = vmatmul.mubr.f32.gmra.mrb[0].mxu0 %v5214
  %v5827 = vpop.f32.mrb[0].mxu0
  %v5828 = vadd.f32 0.0, %v5827
  %v5829 = vpop.f32.mrb[0].mxu0
  %v5830 = vadd.f32 0.0, %v5829
  %5831 = vdwg.mxu0
  %v5832 = vadd.f32 %v5109, %v5283
  %v5833 = vadd.f32 %v5110, %v5285
  %v5834 = vadd.f32 %v5111, %v5360
  %v5835 = vadd.f32 %v5112, %v5362
  %v5836 = vadd.f32 %v5113, %v5437
  %v5837 = vadd.f32 %v5114, %v5439
  %v5838 = vadd.f32 %v5115, %v5514
  %v5839 = vadd.f32 %v5116, %v5516
  %v5840 = vadd.f32 %v5117, %v5591
  %v5841 = vadd.f32 %v5118, %v5593
  %v5842 = vadd.f32 %v5119, %v5668
  %v5843 = vadd.f32 %v5120, %v5670
  %v5844 = vadd.f32 %v5121, %v5745
  %v5845 = vadd.f32 %v5122, %v5747
  %v5846 = vadd.f32 %v5123, %v5822
  %v5847 = vadd.f32 %v5124, %v5824
  %v5848 = vadd.f32 %v5125, %v5289
  %v5849 = vadd.f32 %v5126, %v5291
  %v5850 = vadd.f32 %v5127, %v5366
  %v5851 = vadd.f32 %v5128, %v5368
  %v5852 = vadd.f32 %v5129, %v5443
  %v5853 = vadd.f32 %v5130, %v5445
  %v5854 = vadd.f32 %v5131, %v5520
  %v5855 = vadd.f32 %v5132, %v5522
  %v5856 = vadd.f32 %v5133, %v5597
  %v5857 = vadd.f32 %v5134, %v5599
  %v5858 = vadd.f32 %v5135, %v5674
  %v5859 = vadd.f32 %v5136, %v5676
  %v5860 = vadd.f32 %v5137, %v5751
  %v5861 = vadd.f32 %v5138, %v5753
  %v5862 = vadd.f32 %v5139, %v5828
  %v5863 = vadd.f32 %v5140, %v5830
  %s5864 = scalar_lea.vmem %s3, 96
  %v5865 = vld [vmem:[%s5864] sm:$0xff]
  %v5866 = vld [vmem:[%s5864 + $0x8] sm:$0xff]
  %v5868 = vsel %vm1758, %v5865, 0
  %v5871 = vsel %vm1758, %v5866, 0
  %5873 = vmatprep.subr.mxu0 %v4389
  %5874 = vmatpush1.msra.mxu0 %v4388
  %5875 = vmatprep.subr.mxu0 0.0
  %5876 = vmatpush1.msra.mxu0 0.0
  %5877 = vmatprep.subr.mxu0 0.0
  %5878 = vmatpush1.msra.mxu0 0.0
  %5879 = vmatprep.subr.mxu0 0.0
  %5880 = vmatpush1.msra.mxu0 0.0
  %5881 = vmatprep.subr.mxu0 0.0
  %5882 = vmatpush1.msra.mxu0 0.0
  %5883 = vmatprep.subr.mxu0 0.0
  %5884 = vmatpush1.msra.mxu0 0.0
  %5885 = vmatprep.subr.mxu0 0.0
  %5886 = vmatpush1.msra.mxu0 0.0
  %5887 = vmatprep.subr.mxu0 0.0
  %5888 = vmatpush1.msra.mxu0 0.0
  %5889 = vmatprep.subr.mxu0 0.0
  %5890 = vmatpush1.msra.mxu0 0.0
  %5891 = vmatprep.subr.mxu0 0.0
  %5892 = vmatpush1.msra.mxu0 0.0
  %5893 = vmatprep.subr.mxu0 0.0
  %5894 = vmatpush1.msra.mxu0 0.0
  %5895 = vmatprep.subr.mxu0 0.0
  %5896 = vmatpush1.msra.mxu0 0.0
  %5897 = vmatprep.subr.mxu0 0.0
  %5898 = vmatpush1.msra.mxu0 0.0
  %5899 = vmatprep.subr.mxu0 0.0
  %5900 = vmatpush1.msra.mxu0 0.0
  %5901 = vmatprep.subr.mxu0 0.0
  %5902 = vmatpush1.msra.mxu0 0.0
  %5903 = vmatprep.subr.mxu0 0.0
  %5904 = vmatpush1.msra.mxu0 0.0
  %5905 = vmatprep.subr.mxu0 0.0
  %5906 = vmatpush1.msra.mxu0 0.0
  %5907 = vmatprep.subr.mxu0 0.0
  %5908 = vmatpush1.msra.mxu0 0.0
  %5909 = vmatprep.subr.mxu0 0.0
  %5910 = vmatpush1.msra.mxu0 0.0
  %5911 = vmatprep.subr.mxu0 0.0
  %5912 = vmatpush1.msra.mxu0 0.0
  %5913 = vmatprep.subr.mxu0 0.0
  %5914 = vmatpush1.msra.mxu0 0.0
  %5915 = vmatprep.subr.mxu0 0.0
  %5916 = vmatpush1.msra.mxu0 0.0
  %5917 = vmatprep.subr.mxu0 0.0
  %5918 = vmatpush1.msra.mxu0 0.0
  %5919 = vmatprep.subr.mxu0 0.0
  %5920 = vmatpush1.msra.mxu0 0.0
  %5921 = vmatprep.subr.mxu0 0.0
  %5922 = vmatpush1.msra.mxu0 0.0
  %5923 = vmatprep.subr.mxu0 0.0
  %5924 = vmatpush1.msra.mxu0 0.0
  %5925 = vmatprep.subr.mxu0 0.0
  %5926 = vmatpush1.msra.mxu0 0.0
  %5927 = vmatprep.subr.mxu0 0.0
  %5928 = vmatpush1.msra.mxu0 0.0
  %5929 = vmatprep.subr.mxu0 0.0
  %5930 = vmatpush1.msra.mxu0 0.0
  %5931 = vmatprep.subr.mxu0 0.0
  %5932 = vmatpush1.msra.mxu0 0.0
  %5933 = vmatprep.subr.mxu0 0.0
  %5934 = vmatpush1.msra.mxu0 0.0
  %5935 = vmatprep.subr.mxu0 0.0
  %5936 = vmatpush1.msra.mxu0 0.0
  %5937 = vmatprep.mubr.f32.mxu0 0.0
  %5938 = vmatmul.mubr.f32.gmra.mrb[0].mxu0 %v5868
  %v5939 = vpop.f32.mrb[0].mxu0
  %v5940 = vadd.f32 0.0, %v5939
  %v5941 = vpop.f32.mrb[0].mxu0
  %v5942 = vadd.f32 0.0, %v5941
  %5943 = vmatprep.mubr.f32.mxu0 0.0
  %5944 = vmatmul.mubr.f32.gmra.mrb[0].mxu0 %v5871
  %v5945 = vpop.f32.mrb[0].mxu0
  %v5946 = vadd.f32 0.0, %v5945
  %v5947 = vpop.f32.mrb[0].mxu0
  %v5948 = vadd.f32 0.0, %v5947
  %5949 = vdwg.mxu0
  %5950 = vmatprep.subr.mxu0 %v4391
  %5951 = vmatpush1.msra.mxu0 %v4390
  %5952 = vmatprep.subr.mxu0 0.0
  %5953 = vmatpush1.msra.mxu0 0.0
  %5954 = vmatprep.subr.mxu0 0.0
  %5955 = vmatpush1.msra.mxu0 0.0
  %5956 = vmatprep.subr.mxu0 0.0
  %5957 = vmatpush1.msra.mxu0 0.0
  %5958 = vmatprep.subr.mxu0 0.0
  %5959 = vmatpush1.msra.mxu0 0.0
  %5960 = vmatprep.subr.mxu0 0.0
  %5961 = vmatpush1.msra.mxu0 0.0
  %5962 = vmatprep.subr.mxu0 0.0
  %5963 = vmatpush1.msra.mxu0 0.0
  %5964 = vmatprep.subr.mxu0 0.0
  %5965 = vmatpush1.msra.mxu0 0.0
  %5966 = vmatprep.subr.mxu0 0.0
  %5967 = vmatpush1.msra.mxu0 0.0
  %5968 = vmatprep.subr.mxu0 0.0
  %5969 = vmatpush1.msra.mxu0 0.0
  %5970 = vmatprep.subr.mxu0 0.0
  %5971 = vmatpush1.msra.mxu0 0.0
  %5972 = vmatprep.subr.mxu0 0.0
  %5973 = vmatpush1.msra.mxu0 0.0
  %5974 = vmatprep.subr.mxu0 0.0
  %5975 = vmatpush1.msra.mxu0 0.0
  %5976 = vmatprep.subr.mxu0 0.0
  %5977 = vmatpush1.msra.mxu0 0.0
  %5978 = vmatprep.subr.mxu0 0.0
  %5979 = vmatpush1.msra.mxu0 0.0
  %5980 = vmatprep.subr.mxu0 0.0
  %5981 = vmatpush1.msra.mxu0 0.0
  %5982 = vmatprep.subr.mxu0 0.0
  %5983 = vmatpush1.msra.mxu0 0.0
  %5984 = vmatprep.subr.mxu0 0.0
  %5985 = vmatpush1.msra.mxu0 0.0
  %5986 = vmatprep.subr.mxu0 0.0
  %5987 = vmatpush1.msra.mxu0 0.0
  %5988 = vmatprep.subr.mxu0 0.0
  %5989 = vmatpush1.msra.mxu0 0.0
  %5990 = vmatprep.subr.mxu0 0.0
  %5991 = vmatpush1.msra.mxu0 0.0
  %5992 = vmatprep.subr.mxu0 0.0
  %5993 = vmatpush1.msra.mxu0 0.0
  %5994 = vmatprep.subr.mxu0 0.0
  %5995 = vmatpush1.msra.mxu0 0.0
  %5996 = vmatprep.subr.mxu0 0.0
  %5997 = vmatpush1.msra.mxu0 0.0
  %5998 = vmatprep.subr.mxu0 0.0
  %5999 = vmatpush1.msra.mxu0 0.0
  %6000 = vmatprep.subr.mxu0 0.0
  %6001 = vmatpush1.msra.mxu0 0.0
  %6002 = vmatprep.subr.mxu0 0.0
  %6003 = vmatpush1.msra.mxu0 0.0
  %6004 = vmatprep.subr.mxu0 0.0
  %6005 = vmatpush1.msra.mxu0 0.0
  %6006 = vmatprep.subr.mxu0 0.0
  %6007 = vmatpush1.msra.mxu0 0.0
  %6008 = vmatprep.subr.mxu0 0.0
  %6009 = vmatpush1.msra.mxu0 0.0
  %6010 = vmatprep.subr.mxu0 0.0
  %6011 = vmatpush1.msra.mxu0 0.0
  %6012 = vmatprep.subr.mxu0 0.0
  %6013 = vmatpush1.msra.mxu0 0.0
  %6014 = vmatprep.mubr.f32.mxu0 0.0
  %6015 = vmatmul.mubr.f32.gmra.mrb[0].mxu0 %v5868
  %v6016 = vpop.f32.mrb[0].mxu0
  %v6017 = vadd.f32 0.0, %v6016
  %v6018 = vpop.f32.mrb[0].mxu0
  %v6019 = vadd.f32 0.0, %v6018
  %6020 = vmatprep.mubr.f32.mxu0 0.0
  %6021 = vmatmul.mubr.f32.gmra.mrb[0].mxu0 %v5871
  %v6022 = vpop.f32.mrb[0].mxu0
  %v6023 = vadd.f32 0.0, %v6022
  %v6024 = vpop.f32.mrb[0].mxu0
  %v6025 = vadd.f32 0.0, %v6024
  %6026 = vdwg.mxu0
  %6027 = vmatprep.subr.mxu0 %v4393
  %6028 = vmatpush1.msra.mxu0 %v4392
  %6029 = vmatprep.subr.mxu0 0.0
  %6030 = vmatpush1.msra.mxu0 0.0
  %6031 = vmatprep.subr.mxu0 0.0
  %6032 = vmatpush1.msra.mxu0 0.0
  %6033 = vmatprep.subr.mxu0 0.0
  %6034 = vmatpush1.msra.mxu0 0.0
  %6035 = vmatprep.subr.mxu0 0.0
  %6036 = vmatpush1.msra.mxu0 0.0
  %6037 = vmatprep.subr.mxu0 0.0
  %6038 = vmatpush1.msra.mxu0 0.0
  %6039 = vmatprep.subr.mxu0 0.0
  %6040 = vmatpush1.msra.mxu0 0.0
  %6041 = vmatprep.subr.mxu0 0.0
  %6042 = vmatpush1.msra.mxu0 0.0
  %6043 = vmatprep.subr.mxu0 0.0
  %6044 = vmatpush1.msra.mxu0 0.0
  %6045 = vmatprep.subr.mxu0 0.0
  %6046 = vmatpush1.msra.mxu0 0.0
  %6047 = vmatprep.subr.mxu0 0.0
  %6048 = vmatpush1.msra.mxu0 0.0
  %6049 = vmatprep.subr.mxu0 0.0
  %6050 = vmatpush1.msra.mxu0 0.0
  %6051 = vmatprep.subr.mxu0 0.0
  %6052 = vmatpush1.msra.mxu0 0.0
  %6053 = vmatprep.subr.mxu0 0.0
  %6054 = vmatpush1.msra.mxu0 0.0
  %6055 = vmatprep.subr.mxu0 0.0
  %6056 = vmatpush1.msra.mxu0 0.0
  %6057 = vmatprep.subr.mxu0 0.0
  %6058 = vmatpush1.msra.mxu0 0.0
  %6059 = vmatprep.subr.mxu0 0.0
  %6060 = vmatpush1.msra.mxu0 0.0
  %6061 = vmatprep.subr.mxu0 0.0
  %6062 = vmatpush1.msra.mxu0 0.0
  %6063 = vmatprep.subr.mxu0 0.0
  %6064 = vmatpush1.msra.mxu0 0.0
  %6065 = vmatprep.subr.mxu0 0.0
  %6066 = vmatpush1.msra.mxu0 0.0
  %6067 = vmatprep.subr.mxu0 0.0
  %6068 = vmatpush1.msra.mxu0 0.0
  %6069 = vmatprep.subr.mxu0 0.0
  %6070 = vmatpush1.msra.mxu0 0.0
  %6071 = vmatprep.subr.mxu0 0.0
  %6072 = vmatpush1.msra.mxu0 0.0
  %6073 = vmatprep.subr.mxu0 0.0
  %6074 = vmatpush1.msra.mxu0 0.0
  %6075 = vmatprep.subr.mxu0 0.0
  %6076 = vmatpush1.msra.mxu0 0.0
  %6077 = vmatprep.subr.mxu0 0.0
  %6078 = vmatpush1.msra.mxu0 0.0
  %6079 = vmatprep.subr.mxu0 0.0
  %6080 = vmatpush1.msra.mxu0 0.0
  %6081 = vmatprep.subr.mxu0 0.0
  %6082 = vmatpush1.msra.mxu0 0.0
  %6083 = vmatprep.subr.mxu0 0.0
  %6084 = vmatpush1.msra.mxu0 0.0
  %6085 = vmatprep.subr.mxu0 0.0
  %6086 = vmatpush1.msra.mxu0 0.0
  %6087 = vmatprep.subr.mxu0 0.0
  %6088 = vmatpush1.msra.mxu0 0.0
  %6089 = vmatprep.subr.mxu0 0.0
  %6090 = vmatpush1.msra.mxu0 0.0
  %6091 = vmatprep.mubr.f32.mxu0 0.0
  %6092 = vmatmul.mubr.f32.gmra.mrb[0].mxu0 %v5868
  %v6093 = vpop.f32.mrb[0].mxu0
  %v6094 = vadd.f32 0.0, %v6093
  %v6095 = vpop.f32.mrb[0].mxu0
  %v6096 = vadd.f32 0.0, %v6095
  %6097 = vmatprep.mubr.f32.mxu0 0.0
  %6098 = vmatmul.mubr.f32.gmra.mrb[0].mxu0 %v5871
  %v6099 = vpop.f32.mrb[0].mxu0
  %v6100 = vadd.f32 0.0, %v6099
  %v6101 = vpop.f32.mrb[0].mxu0
  %v6102 = vadd.f32 0.0, %v6101
  %6103 = vdwg.mxu0
  %6104 = vmatprep.subr.mxu0 %v4395
  %6105 = vmatpush1.msra.mxu0 %v4394
  %6106 = vmatprep.subr.mxu0 0.0
  %6107 = vmatpush1.msra.mxu0 0.0
  %6108 = vmatprep.subr.mxu0 0.0
  %6109 = vmatpush1.msra.mxu0 0.0
  %6110 = vmatprep.subr.mxu0 0.0
  %6111 = vmatpush1.msra.mxu0 0.0
  %6112 = vmatprep.subr.mxu0 0.0
  %6113 = vmatpush1.msra.mxu0 0.0
  %6114 = vmatprep.subr.mxu0 0.0
  %6115 = vmatpush1.msra.mxu0 0.0
  %6116 = vmatprep.subr.mxu0 0.0
  %6117 = vmatpush1.msra.mxu0 0.0
  %6118 = vmatprep.subr.mxu0 0.0
  %6119 = vmatpush1.msra.mxu0 0.0
  %6120 = vmatprep.subr.mxu0 0.0
  %6121 = vmatpush1.msra.mxu0 0.0
  %6122 = vmatprep.subr.mxu0 0.0
  %6123 = vmatpush1.msra.mxu0 0.0
  %6124 = vmatprep.subr.mxu0 0.0
  %6125 = vmatpush1.msra.mxu0 0.0
  %6126 = vmatprep.subr.mxu0 0.0
  %6127 = vmatpush1.msra.mxu0 0.0
  %6128 = vmatprep.subr.mxu0 0.0
  %6129 = vmatpush1.msra.mxu0 0.0
  %6130 = vmatprep.subr.mxu0 0.0
  %6131 = vmatpush1.msra.mxu0 0.0
  %6132 = vmatprep.subr.mxu0 0.0
  %6133 = vmatpush1.msra.mxu0 0.0
  %6134 = vmatprep.subr.mxu0 0.0
  %6135 = vmatpush1.msra.mxu0 0.0
  %6136 = vmatprep.subr.mxu0 0.0
  %6137 = vmatpush1.msra.mxu0 0.0
  %6138 = vmatprep.subr.mxu0 0.0
  %6139 = vmatpush1.msra.mxu0 0.0
  %6140 = vmatprep.subr.mxu0 0.0
  %6141 = vmatpush1.msra.mxu0 0.0
  %6142 = vmatprep.subr.mxu0 0.0
  %6143 = vmatpush1.msra.mxu0 0.0
  %6144 = vmatprep.subr.mxu0 0.0
  %6145 = vmatpush1.msra.mxu0 0.0
  %6146 = vmatprep.subr.mxu0 0.0
  %6147 = vmatpush1.msra.mxu0 0.0
  %6148 = vmatprep.subr.mxu0 0.0
  %6149 = vmatpush1.msra.mxu0 0.0
  %6150 = vmatprep.subr.mxu0 0.0
  %6151 = vmatpush1.msra.mxu0 0.0
  %6152 = vmatprep.subr.mxu0 0.0
  %6153 = vmatpush1.msra.mxu0 0.0
  %6154 = vmatprep.subr.mxu0 0.0
  %6155 = vmatpush1.msra.mxu0 0.0
  %6156 = vmatprep.subr.mxu0 0.0
  %6157 = vmatpush1.msra.mxu0 0.0
  %6158 = vmatprep.subr.mxu0 0.0
  %6159 = vmatpush1.msra.mxu0 0.0
  %6160 = vmatprep.subr.mxu0 0.0
  %6161 = vmatpush1.msra.mxu0 0.0
  %6162 = vmatprep.subr.mxu0 0.0
  %6163 = vmatpush1.msra.mxu0 0.0
  %6164 = vmatprep.subr.mxu0 0.0
  %6165 = vmatpush1.msra.mxu0 0.0
  %6166 = vmatprep.subr.mxu0 0.0
  %6167 = vmatpush1.msra.mxu0 0.0
  %6168 = vmatprep.mubr.f32.mxu0 0.0
  %6169 = vmatmul.mubr.f32.gmra.mrb[0].mxu0 %v5868
  %v6170 = vpop.f32.mrb[0].mxu0
  %v6171 = vadd.f32 0.0, %v6170
  %v6172 = vpop.f32.mrb[0].mxu0
  %v6173 = vadd.f32 0.0, %v6172
  %6174 = vmatprep.mubr.f32.mxu0 0.0
  %6175 = vmatmul.mubr.f32.gmra.mrb[0].mxu0 %v5871
  %v6176 = vpop.f32.mrb[0].mxu0
  %v6177 = vadd.f32 0.0, %v6176
  %v6178 = vpop.f32.mrb[0].mxu0
  %v6179 = vadd.f32 0.0, %v6178
  %6180 = vdwg.mxu0
  %6181 = vmatprep.subr.mxu0 %v4397
  %6182 = vmatpush1.msra.mxu0 %v4396
  %6183 = vmatprep.subr.mxu0 0.0
  %6184 = vmatpush1.msra.mxu0 0.0
  %6185 = vmatprep.subr.mxu0 0.0
  %6186 = vmatpush1.msra.mxu0 0.0
  %6187 = vmatprep.subr.mxu0 0.0
  %6188 = vmatpush1.msra.mxu0 0.0
  %6189 = vmatprep.subr.mxu0 0.0
  %6190 = vmatpush1.msra.mxu0 0.0
  %6191 = vmatprep.subr.mxu0 0.0
  %6192 = vmatpush1.msra.mxu0 0.0
  %6193 = vmatprep.subr.mxu0 0.0
  %6194 = vmatpush1.msra.mxu0 0.0
  %6195 = vmatprep.subr.mxu0 0.0
  %6196 = vmatpush1.msra.mxu0 0.0
  %6197 = vmatprep.subr.mxu0 0.0
  %6198 = vmatpush1.msra.mxu0 0.0
  %6199 = vmatprep.subr.mxu0 0.0
  %6200 = vmatpush1.msra.mxu0 0.0
  %6201 = vmatprep.subr.mxu0 0.0
  %6202 = vmatpush1.msra.mxu0 0.0
  %6203 = vmatprep.subr.mxu0 0.0
  %6204 = vmatpush1.msra.mxu0 0.0
  %6205 = vmatprep.subr.mxu0 0.0
  %6206 = vmatpush1.msra.mxu0 0.0
  %6207 = vmatprep.subr.mxu0 0.0
  %6208 = vmatpush1.msra.mxu0 0.0
  %6209 = vmatprep.subr.mxu0 0.0
  %6210 = vmatpush1.msra.mxu0 0.0
  %6211 = vmatprep.subr.mxu0 0.0
  %6212 = vmatpush1.msra.mxu0 0.0
  %6213 = vmatprep.subr.mxu0 0.0
  %6214 = vmatpush1.msra.mxu0 0.0
  %6215 = vmatprep.subr.mxu0 0.0
  %6216 = vmatpush1.msra.mxu0 0.0
  %6217 = vmatprep.subr.mxu0 0.0
  %6218 = vmatpush1.msra.mxu0 0.0
  %6219 = vmatprep.subr.mxu0 0.0
  %6220 = vmatpush1.msra.mxu0 0.0
  %6221 = vmatprep.subr.mxu0 0.0
  %6222 = vmatpush1.msra.mxu0 0.0
  %6223 = vmatprep.subr.mxu0 0.0
  %6224 = vmatpush1.msra.mxu0 0.0
  %6225 = vmatprep.subr.mxu0 0.0
  %6226 = vmatpush1.msra.mxu0 0.0
  %6227 = vmatprep.subr.mxu0 0.0
  %6228 = vmatpush1.msra.mxu0 0.0
  %6229 = vmatprep.subr.mxu0 0.0
  %6230 = vmatpush1.msra.mxu0 0.0
  %6231 = vmatprep.subr.mxu0 0.0
  %6232 = vmatpush1.msra.mxu0 0.0
  %6233 = vmatprep.subr.mxu0 0.0
  %6234 = vmatpush1.msra.mxu0 0.0
  %6235 = vmatprep.subr.mxu0 0.0
  %6236 = vmatpush1.msra.mxu0 0.0
  %6237 = vmatprep.subr.mxu0 0.0
  %6238 = vmatpush1.msra.mxu0 0.0
  %6239 = vmatprep.subr.mxu0 0.0
  %6240 = vmatpush1.msra.mxu0 0.0
  %6241 = vmatprep.subr.mxu0 0.0
  %6242 = vmatpush1.msra.mxu0 0.0
  %6243 = vmatprep.subr.mxu0 0.0
  %6244 = vmatpush1.msra.mxu0 0.0
  %6245 = vmatprep.mubr.f32.mxu0 0.0
  %6246 = vmatmul.mubr.f32.gmra.mrb[0].mxu0 %v5868
  %v6247 = vpop.f32.mrb[0].mxu0
  %v6248 = vadd.f32 0.0, %v6247
  %v6249 = vpop.f32.mrb[0].mxu0
  %v6250 = vadd.f32 0.0, %v6249
  %6251 = vmatprep.mubr.f32.mxu0 0.0
  %6252 = vmatmul.mubr.f32.gmra.mrb[0].mxu0 %v5871
  %v6253 = vpop.f32.mrb[0].mxu0
  %v6254 = vadd.f32 0.0, %v6253
  %v6255 = vpop.f32.mrb[0].mxu0
  %v6256 = vadd.f32 0.0, %v6255
  %6257 = vdwg.mxu0
  %6258 = vmatprep.subr.mxu0 %v4399
  %6259 = vmatpush1.msra.mxu0 %v4398
  %6260 = vmatprep.subr.mxu0 0.0
  %6261 = vmatpush1.msra.mxu0 0.0
  %6262 = vmatprep.subr.mxu0 0.0
  %6263 = vmatpush1.msra.mxu0 0.0
  %6264 = vmatprep.subr.mxu0 0.0
  %6265 = vmatpush1.msra.mxu0 0.0
  %6266 = vmatprep.subr.mxu0 0.0
  %6267 = vmatpush1.msra.mxu0 0.0
  %6268 = vmatprep.subr.mxu0 0.0
  %6269 = vmatpush1.msra.mxu0 0.0
  %6270 = vmatprep.subr.mxu0 0.0
  %6271 = vmatpush1.msra.mxu0 0.0
  %6272 = vmatprep.subr.mxu0 0.0
  %6273 = vmatpush1.msra.mxu0 0.0
  %6274 = vmatprep.subr.mxu0 0.0
  %6275 = vmatpush1.msra.mxu0 0.0
  %6276 = vmatprep.subr.mxu0 0.0
  %6277 = vmatpush1.msra.mxu0 0.0
  %6278 = vmatprep.subr.mxu0 0.0
  %6279 = vmatpush1.msra.mxu0 0.0
  %6280 = vmatprep.subr.mxu0 0.0
  %6281 = vmatpush1.msra.mxu0 0.0
  %6282 = vmatprep.subr.mxu0 0.0
  %6283 = vmatpush1.msra.mxu0 0.0
  %6284 = vmatprep.subr.mxu0 0.0
  %6285 = vmatpush1.msra.mxu0 0.0
  %6286 = vmatprep.subr.mxu0 0.0
  %6287 = vmatpush1.msra.mxu0 0.0
  %6288 = vmatprep.subr.mxu0 0.0
  %6289 = vmatpush1.msra.mxu0 0.0
  %6290 = vmatprep.subr.mxu0 0.0
  %6291 = vmatpush1.msra.mxu0 0.0
  %6292 = vmatprep.subr.mxu0 0.0
  %6293 = vmatpush1.msra.mxu0 0.0
  %6294 = vmatprep.subr.mxu0 0.0
  %6295 = vmatpush1.msra.mxu0 0.0
  %6296 = vmatprep.subr.mxu0 0.0
  %6297 = vmatpush1.msra.mxu0 0.0
  %6298 = vmatprep.subr.mxu0 0.0
  %6299 = vmatpush1.msra.mxu0 0.0
  %6300 = vmatprep.subr.mxu0 0.0
  %6301 = vmatpush1.msra.mxu0 0.0
  %6302 = vmatprep.subr.mxu0 0.0
  %6303 = vmatpush1.msra.mxu0 0.0
  %6304 = vmatprep.subr.mxu0 0.0
  %6305 = vmatpush1.msra.mxu0 0.0
  %6306 = vmatprep.subr.mxu0 0.0
  %6307 = vmatpush1.msra.mxu0 0.0
  %6308 = vmatprep.subr.mxu0 0.0
  %6309 = vmatpush1.msra.mxu0 0.0
  %6310 = vmatprep.subr.mxu0 0.0
  %6311 = vmatpush1.msra.mxu0 0.0
  %6312 = vmatprep.subr.mxu0 0.0
  %6313 = vmatpush1.msra.mxu0 0.0
  %6314 = vmatprep.subr.mxu0 0.0
  %6315 = vmatpush1.msra.mxu0 0.0
  %6316 = vmatprep.subr.mxu0 0.0
  %6317 = vmatpush1.msra.mxu0 0.0
  %6318 = vmatprep.subr.mxu0 0.0
  %6319 = vmatpush1.msra.mxu0 0.0
  %6320 = vmatprep.subr.mxu0 0.0
  %6321 = vmatpush1.msra.mxu0 0.0
  %6322 = vmatprep.mubr.f32.mxu0 0.0
  %6323 = vmatmul.mubr.f32.gmra.mrb[0].mxu0 %v5868
  %v6324 = vpop.f32.mrb[0].mxu0
  %v6325 = vadd.f32 0.0, %v6324
  %v6326 = vpop.f32.mrb[0].mxu0
  %v6327 = vadd.f32 0.0, %v6326
  %6328 = vmatprep.mubr.f32.mxu0 0.0
  %6329 = vmatmul.mubr.f32.gmra.mrb[0].mxu0 %v5871
  %v6330 = vpop.f32.mrb[0].mxu0
  %v6331 = vadd.f32 0.0, %v6330
  %v6332 = vpop.f32.mrb[0].mxu0
  %v6333 = vadd.f32 0.0, %v6332
  %6334 = vdwg.mxu0
  %6335 = vmatprep.subr.mxu0 %v4401
  %6336 = vmatpush1.msra.mxu0 %v4400
  %6337 = vmatprep.subr.mxu0 0.0
  %6338 = vmatpush1.msra.mxu0 0.0
  %6339 = vmatprep.subr.mxu0 0.0
  %6340 = vmatpush1.msra.mxu0 0.0
  %6341 = vmatprep.subr.mxu0 0.0
  %6342 = vmatpush1.msra.mxu0 0.0
  %6343 = vmatprep.subr.mxu0 0.0
  %6344 = vmatpush1.msra.mxu0 0.0
  %6345 = vmatprep.subr.mxu0 0.0
  %6346 = vmatpush1.msra.mxu0 0.0
  %6347 = vmatprep.subr.mxu0 0.0
  %6348 = vmatpush1.msra.mxu0 0.0
  %6349 = vmatprep.subr.mxu0 0.0
  %6350 = vmatpush1.msra.mxu0 0.0
  %6351 = vmatprep.subr.mxu0 0.0
  %6352 = vmatpush1.msra.mxu0 0.0
  %6353 = vmatprep.subr.mxu0 0.0
  %6354 = vmatpush1.msra.mxu0 0.0
  %6355 = vmatprep.subr.mxu0 0.0
  %6356 = vmatpush1.msra.mxu0 0.0
  %6357 = vmatprep.subr.mxu0 0.0
  %6358 = vmatpush1.msra.mxu0 0.0
  %6359 = vmatprep.subr.mxu0 0.0
  %6360 = vmatpush1.msra.mxu0 0.0
  %6361 = vmatprep.subr.mxu0 0.0
  %6362 = vmatpush1.msra.mxu0 0.0
  %6363 = vmatprep.subr.mxu0 0.0
  %6364 = vmatpush1.msra.mxu0 0.0
  %6365 = vmatprep.subr.mxu0 0.0
  %6366 = vmatpush1.msra.mxu0 0.0
  %6367 = vmatprep.subr.mxu0 0.0
  %6368 = vmatpush1.msra.mxu0 0.0
  %6369 = vmatprep.subr.mxu0 0.0
  %6370 = vmatpush1.msra.mxu0 0.0
  %6371 = vmatprep.subr.mxu0 0.0
  %6372 = vmatpush1.msra.mxu0 0.0
  %6373 = vmatprep.subr.mxu0 0.0
  %6374 = vmatpush1.msra.mxu0 0.0
  %6375 = vmatprep.subr.mxu0 0.0
  %6376 = vmatpush1.msra.mxu0 0.0
  %6377 = vmatprep.subr.mxu0 0.0
  %6378 = vmatpush1.msra.mxu0 0.0
  %6379 = vmatprep.subr.mxu0 0.0
  %6380 = vmatpush1.msra.mxu0 0.0
  %6381 = vmatprep.subr.mxu0 0.0
  %6382 = vmatpush1.msra.mxu0 0.0
  %6383 = vmatprep.subr.mxu0 0.0
  %6384 = vmatpush1.msra.mxu0 0.0
  %6385 = vmatprep.subr.mxu0 0.0
  %6386 = vmatpush1.msra.mxu0 0.0
  %6387 = vmatprep.subr.mxu0 0.0
  %6388 = vmatpush1.msra.mxu0 0.0
  %6389 = vmatprep.subr.mxu0 0.0
  %6390 = vmatpush1.msra.mxu0 0.0
  %6391 = vmatprep.subr.mxu0 0.0
  %6392 = vmatpush1.msra.mxu0 0.0
  %6393 = vmatprep.subr.mxu0 0.0
  %6394 = vmatpush1.msra.mxu0 0.0
  %6395 = vmatprep.subr.mxu0 0.0
  %6396 = vmatpush1.msra.mxu0 0.0
  %6397 = vmatprep.subr.mxu0 0.0
  %6398 = vmatpush1.msra.mxu0 0.0
  %6399 = vmatprep.mubr.f32.mxu0 0.0
  %6400 = vmatmul.mubr.f32.gmra.mrb[0].mxu0 %v5868
  %v6401 = vpop.f32.mrb[0].mxu0
  %v6402 = vadd.f32 0.0, %v6401
  %v6403 = vpop.f32.mrb[0].mxu0
  %v6404 = vadd.f32 0.0, %v6403
  %6405 = vmatprep.mubr.f32.mxu0 0.0
  %6406 = vmatmul.mubr.f32.gmra.mrb[0].mxu0 %v5871
  %v6407 = vpop.f32.mrb[0].mxu0
  %v6408 = vadd.f32 0.0, %v6407
  %v6409 = vpop.f32.mrb[0].mxu0
  %v6410 = vadd.f32 0.0, %v6409
  %6411 = vdwg.mxu0
  %6412 = vmatprep.subr.mxu0 %v4403
  %6413 = vmatpush1.msra.mxu0 %v4402
  %6414 = vmatprep.subr.mxu0 0.0
  %6415 = vmatpush1.msra.mxu0 0.0
  %6416 = vmatprep.subr.mxu0 0.0
  %6417 = vmatpush1.msra.mxu0 0.0
  %6418 = vmatprep.subr.mxu0 0.0
  %6419 = vmatpush1.msra.mxu0 0.0
  %6420 = vmatprep.subr.mxu0 0.0
  %6421 = vmatpush1.msra.mxu0 0.0
  %6422 = vmatprep.subr.mxu0 0.0
  %6423 = vmatpush1.msra.mxu0 0.0
  %6424 = vmatprep.subr.mxu0 0.0
  %6425 = vmatpush1.msra.mxu0 0.0
  %6426 = vmatprep.subr.mxu0 0.0
  %6427 = vmatpush1.msra.mxu0 0.0
  %6428 = vmatprep.subr.mxu0 0.0
  %6429 = vmatpush1.msra.mxu0 0.0
  %6430 = vmatprep.subr.mxu0 0.0
  %6431 = vmatpush1.msra.mxu0 0.0
  %6432 = vmatprep.subr.mxu0 0.0
  %6433 = vmatpush1.msra.mxu0 0.0
  %6434 = vmatprep.subr.mxu0 0.0
  %6435 = vmatpush1.msra.mxu0 0.0
  %6436 = vmatprep.subr.mxu0 0.0
  %6437 = vmatpush1.msra.mxu0 0.0
  %6438 = vmatprep.subr.mxu0 0.0
  %6439 = vmatpush1.msra.mxu0 0.0
  %6440 = vmatprep.subr.mxu0 0.0
  %6441 = vmatpush1.msra.mxu0 0.0
  %6442 = vmatprep.subr.mxu0 0.0
  %6443 = vmatpush1.msra.mxu0 0.0
  %6444 = vmatprep.subr.mxu0 0.0
  %6445 = vmatpush1.msra.mxu0 0.0
  %6446 = vmatprep.subr.mxu0 0.0
  %6447 = vmatpush1.msra.mxu0 0.0
  %6448 = vmatprep.subr.mxu0 0.0
  %6449 = vmatpush1.msra.mxu0 0.0
  %6450 = vmatprep.subr.mxu0 0.0
  %6451 = vmatpush1.msra.mxu0 0.0
  %6452 = vmatprep.subr.mxu0 0.0
  %6453 = vmatpush1.msra.mxu0 0.0
  %6454 = vmatprep.subr.mxu0 0.0
  %6455 = vmatpush1.msra.mxu0 0.0
  %6456 = vmatprep.subr.mxu0 0.0
  %6457 = vmatpush1.msra.mxu0 0.0
  %6458 = vmatprep.subr.mxu0 0.0
  %6459 = vmatpush1.msra.mxu0 0.0
  %6460 = vmatprep.subr.mxu0 0.0
  %6461 = vmatpush1.msra.mxu0 0.0
  %6462 = vmatprep.subr.mxu0 0.0
  %6463 = vmatpush1.msra.mxu0 0.0
  %6464 = vmatprep.subr.mxu0 0.0
  %6465 = vmatpush1.msra.mxu0 0.0
  %6466 = vmatprep.subr.mxu0 0.0
  %6467 = vmatpush1.msra.mxu0 0.0
  %6468 = vmatprep.subr.mxu0 0.0
  %6469 = vmatpush1.msra.mxu0 0.0
  %6470 = vmatprep.subr.mxu0 0.0
  %6471 = vmatpush1.msra.mxu0 0.0
  %6472 = vmatprep.subr.mxu0 0.0
  %6473 = vmatpush1.msra.mxu0 0.0
  %6474 = vmatprep.subr.mxu0 0.0
  %6475 = vmatpush1.msra.mxu0 0.0
  %6476 = vmatprep.mubr.f32.mxu0 0.0
  %6477 = vmatmul.mubr.f32.gmra.mrb[0].mxu0 %v5868
  %v6478 = vpop.f32.mrb[0].mxu0
  %v6479 = vadd.f32 0.0, %v6478
  %v6480 = vpop.f32.mrb[0].mxu0
  %v6481 = vadd.f32 0.0, %v6480
  %6482 = vmatprep.mubr.f32.mxu0 0.0
  %6483 = vmatmul.mubr.f32.gmra.mrb[0].mxu0 %v5871
  %v6484 = vpop.f32.mrb[0].mxu0
  %v6485 = vadd.f32 0.0, %v6484
  %v6486 = vpop.f32.mrb[0].mxu0
  %v6487 = vadd.f32 0.0, %v6486
  %6488 = vdwg.mxu0
  %v6489 = vadd.f32 %v5832, %v5940
  %v6490 = vadd.f32 %v5833, %v5942
  %v6491 = vadd.f32 %v5834, %v6017
  %v6492 = vadd.f32 %v5835, %v6019
  %v6493 = vadd.f32 %v5836, %v6094
  %v6494 = vadd.f32 %v5837, %v6096
  %v6495 = vadd.f32 %v5838, %v6171
  %v6496 = vadd.f32 %v5839, %v6173
  %v6497 = vadd.f32 %v5840, %v6248
  %v6498 = vadd.f32 %v5841, %v6250
  %v6499 = vadd.f32 %v5842, %v6325
  %v6500 = vadd.f32 %v5843, %v6327
  %v6501 = vadd.f32 %v5844, %v6402
  %v6502 = vadd.f32 %v5845, %v6404
  %v6503 = vadd.f32 %v5846, %v6479
  %v6504 = vadd.f32 %v5847, %v6481
  %v6505 = vadd.f32 %v5848, %v5946
  %v6506 = vadd.f32 %v5849, %v5948
  %v6507 = vadd.f32 %v5850, %v6023
  %v6508 = vadd.f32 %v5851, %v6025
  %v6509 = vadd.f32 %v5852, %v6100
  %v6510 = vadd.f32 %v5853, %v6102
  %v6511 = vadd.f32 %v5854, %v6177
  %v6512 = vadd.f32 %v5855, %v6179
  %v6513 = vadd.f32 %v5856, %v6254
  %v6514 = vadd.f32 %v5857, %v6256
  %v6515 = vadd.f32 %v5858, %v6331
  %v6516 = vadd.f32 %v5859, %v6333
  %v6517 = vadd.f32 %v5860, %v6408
  %v6518 = vadd.f32 %v5861, %v6410
  %v6519 = vadd.f32 %v5862, %v6485
  %v6520 = vadd.f32 %v5863, %v6487
  %s6521 = scalar_lea.vmem %s3, 112
  %v6522 = vld [vmem:[%s6521] sm:$0xff]
  %v6523 = vld [vmem:[%s6521 + $0x8] sm:$0xff]
  %v6524 = vld [vmem:[#allocation3 + $0x10] sm:$0xff]
  %v6525 = vld [vmem:[#allocation3 + $0x18] sm:$0xff]
  %v6526 = vld [vmem:[#allocation3 + $0x20] sm:$0xff]
  %v6527 = vld [vmem:[#allocation3 + $0x28] sm:$0xff]
  %v6528 = vld [vmem:[#allocation3 + $0x30] sm:$0xff]
  %v6529 = vld [vmem:[#allocation3 + $0x38] sm:$0xff]
  %v6530 = vld [vmem:[#allocation3 + $0x40] sm:$0xff]
  %v6531 = vld [vmem:[#allocation3 + $0x48] sm:$0xff]
  %v6532 = vld [vmem:[#allocation3 + $0x50] sm:$0xff]
  %v6533 = vld [vmem:[#allocation3 + $0x58] sm:$0xff]
  %v6534 = vld [vmem:[#allocation3 + $0x60] sm:$0xff]
  %v6535 = vld [vmem:[#allocation3 + $0x68] sm:$0xff]
  %v6536 = vld [vmem:[#allocation3 + $0x70] sm:$0xff]
  %v6537 = vld [vmem:[#allocation3 + $0x78] sm:$0xff]
  %v6538 = vld [vmem:[#allocation3 + $0x80] sm:$0xff]
  %v6539 = vld [vmem:[#allocation3 + $0x88] sm:$0xff]
  %v6540 = vld [vmem:[#allocation3 + $0x90] sm:$0xff]
  %6558 = vrot.lane.b32.xlu0 %v6524, 124
  %v6559 = vpop.permute.xlu0 %6558
  %6560 = vrot.lane.b32.xlu0 %v6525, 124
  %v6561 = vpop.permute.xlu0 %6560
  %6562 = vrot.lane.b32.xlu0 %v6526, 124
  %v6563 = vpop.permute.xlu0 %6562
  %6564 = vrot.lane.b32.xlu0 %v6527, 124
  %v6565 = vpop.permute.xlu0 %6564
  %6566 = vrot.lane.b32.xlu0 %v6528, 124
  %v6567 = vpop.permute.xlu0 %6566
  %6568 = vrot.lane.b32.xlu0 %v6529, 124
  %v6569 = vpop.permute.xlu0 %6568
  %6570 = vrot.lane.b32.xlu0 %v6530, 124
  %v6571 = vpop.permute.xlu0 %6570
  %6572 = vrot.lane.b32.xlu0 %v6531, 124
  %v6573 = vpop.permute.xlu0 %6572
  %6574 = vrot.lane.b32.xlu0 %v6532, 124
  %v6575 = vpop.permute.xlu0 %6574
  %6576 = vrot.lane.b32.xlu0 %v6533, 124
  %v6577 = vpop.permute.xlu0 %6576
  %6578 = vrot.lane.b32.xlu0 %v6534, 124
  %v6579 = vpop.permute.xlu0 %6578
  %6580 = vrot.lane.b32.xlu0 %v6535, 124
  %v6581 = vpop.permute.xlu0 %6580
  %6582 = vrot.lane.b32.xlu0 %v6536, 124
  %v6583 = vpop.permute.xlu0 %6582
  %6584 = vrot.lane.b32.xlu0 %v6537, 124
  %v6585 = vpop.permute.xlu0 %6584
  %6586 = vrot.lane.b32.xlu0 %v6538, 124
  %v6587 = vpop.permute.xlu0 %6586
  %6588 = vrot.lane.b32.xlu0 %v6539, 124
  %v6589 = vpop.permute.xlu0 %6588
  %6590 = vrot.lane.b32.xlu0 %v6540, 124
  %v6591 = vpop.permute.xlu0 %6590
  %v6592 = vsel %vm462, %v6559, %v6561
  %v6593 = vsel %vm462, %v6561, %v6563
  %v6594 = vsel %vm462, %v6563, %v6565
  %v6595 = vsel %vm462, %v6565, %v6567
  %v6596 = vsel %vm462, %v6567, %v6569
  %v6597 = vsel %vm462, %v6569, %v6571
  %v6598 = vsel %vm462, %v6571, %v6573
  %v6599 = vsel %vm462, %v6573, %v6575
  %v6600 = vsel %vm462, %v6575, %v6577
  %v6601 = vsel %vm462, %v6577, %v6579
  %v6602 = vsel %vm462, %v6579, %v6581
  %v6603 = vsel %vm462, %v6581, %v6583
  %v6604 = vsel %vm462, %v6583, %v6585
  %v6605 = vsel %vm462, %v6585, %v6587
  %v6606 = vsel %vm462, %v6587, %v6589
  %v6607 = vsel %vm462, %v6589, %v6591
  %v6625 = vsel %vm1758, %v6522, 0
  %v6628 = vsel %vm1758, %v6523, 0
  %6630 = vmatprep.subr.mxu0 %v6593
  %6631 = vmatpush1.msra.mxu0 %v6592
  %6632 = vmatprep.subr.mxu0 0.0
  %6633 = vmatpush1.msra.mxu0 0.0
  %6634 = vmatprep.subr.mxu0 0.0
  %6635 = vmatpush1.msra.mxu0 0.0
  %6636 = vmatprep.subr.mxu0 0.0
  %6637 = vmatpush1.msra.mxu0 0.0
  %6638 = vmatprep.subr.mxu0 0.0
  %6639 = vmatpush1.msra.mxu0 0.0
  %6640 = vmatprep.subr.mxu0 0.0
  %6641 = vmatpush1.msra.mxu0 0.0
  %6642 = vmatprep.subr.mxu0 0.0
  %6643 = vmatpush1.msra.mxu0 0.0
  %6644 = vmatprep.subr.mxu0 0.0
  %6645 = vmatpush1.msra.mxu0 0.0
  %6646 = vmatprep.subr.mxu0 0.0
  %6647 = vmatpush1.msra.mxu0 0.0
  %6648 = vmatprep.subr.mxu0 0.0
  %6649 = vmatpush1.msra.mxu0 0.0
  %6650 = vmatprep.subr.mxu0 0.0
  %6651 = vmatpush1.msra.mxu0 0.0
  %6652 = vmatprep.subr.mxu0 0.0
  %6653 = vmatpush1.msra.mxu0 0.0
  %6654 = vmatprep.subr.mxu0 0.0
  %6655 = vmatpush1.msra.mxu0 0.0
  %6656 = vmatprep.subr.mxu0 0.0
  %6657 = vmatpush1.msra.mxu0 0.0
  %6658 = vmatprep.subr.mxu0 0.0
  %6659 = vmatpush1.msra.mxu0 0.0
  %6660 = vmatprep.subr.mxu0 0.0
  %6661 = vmatpush1.msra.mxu0 0.0
  %6662 = vmatprep.subr.mxu0 0.0
  %6663 = vmatpush1.msra.mxu0 0.0
  %6664 = vmatprep.subr.mxu0 0.0
  %6665 = vmatpush1.msra.mxu0 0.0
  %6666 = vmatprep.subr.mxu0 0.0
  %6667 = vmatpush1.msra.mxu0 0.0
  %6668 = vmatprep.subr.mxu0 0.0
  %6669 = vmatpush1.msra.mxu0 0.0
  %6670 = vmatprep.subr.mxu0 0.0
  %6671 = vmatpush1.msra.mxu0 0.0
  %6672 = vmatprep.subr.mxu0 0.0
  %6673 = vmatpush1.msra.mxu0 0.0
  %6674 = vmatprep.subr.mxu0 0.0
  %6675 = vmatpush1.msra.mxu0 0.0
  %6676 = vmatprep.subr.mxu0 0.0
  %6677 = vmatpush1.msra.mxu0 0.0
  %6678 = vmatprep.subr.mxu0 0.0
  %6679 = vmatpush1.msra.mxu0 0.0
  %6680 = vmatprep.subr.mxu0 0.0
  %6681 = vmatpush1.msra.mxu0 0.0
  %6682 = vmatprep.subr.mxu0 0.0
  %6683 = vmatpush1.msra.mxu0 0.0
  %6684 = vmatprep.subr.mxu0 0.0
  %6685 = vmatpush1.msra.mxu0 0.0
  %6686 = vmatprep.subr.mxu0 0.0
  %6687 = vmatpush1.msra.mxu0 0.0
  %6688 = vmatprep.subr.mxu0 0.0
  %6689 = vmatpush1.msra.mxu0 0.0
  %6690 = vmatprep.subr.mxu0 0.0
  %6691 = vmatpush1.msra.mxu0 0.0
  %6692 = vmatprep.subr.mxu0 0.0
  %6693 = vmatpush1.msra.mxu0 0.0
  %6694 = vmatprep.mubr.f32.mxu0 0.0
  %6695 = vmatmul.mubr.f32.gmra.mrb[0].mxu0 %v6625
  %v6696 = vpop.f32.mrb[0].mxu0
  %v6697 = vadd.f32 0.0, %v6696
  %v6698 = vpop.f32.mrb[0].mxu0
  %v6699 = vadd.f32 0.0, %v6698
  %6700 = vmatprep.mubr.f32.mxu0 0.0
  %6701 = vmatmul.mubr.f32.gmra.mrb[0].mxu0 %v6628
  %v6702 = vpop.f32.mrb[0].mxu0
  %v6703 = vadd.f32 0.0, %v6702
  %v6704 = vpop.f32.mrb[0].mxu0
  %v6705 = vadd.f32 0.0, %v6704
  %6706 = vdwg.mxu0
  %6707 = vmatprep.subr.mxu0 %v6595
  %6708 = vmatpush1.msra.mxu0 %v6594
  %6709 = vmatprep.subr.mxu0 0.0
  %6710 = vmatpush1.msra.mxu0 0.0
  %6711 = vmatprep.subr.mxu0 0.0
  %6712 = vmatpush1.msra.mxu0 0.0
  %6713 = vmatprep.subr.mxu0 0.0
  %6714 = vmatpush1.msra.mxu0 0.0
  %6715 = vmatprep.subr.mxu0 0.0
  %6716 = vmatpush1.msra.mxu0 0.0
  %6717 = vmatprep.subr.mxu0 0.0
  %6718 = vmatpush1.msra.mxu0 0.0
  %6719 = vmatprep.subr.mxu0 0.0
  %6720 = vmatpush1.msra.mxu0 0.0
  %6721 = vmatprep.subr.mxu0 0.0
  %6722 = vmatpush1.msra.mxu0 0.0
  %6723 = vmatprep.subr.mxu0 0.0
  %6724 = vmatpush1.msra.mxu0 0.0
  %6725 = vmatprep.subr.mxu0 0.0
  %6726 = vmatpush1.msra.mxu0 0.0
  %6727 = vmatprep.subr.mxu0 0.0
  %6728 = vmatpush1.msra.mxu0 0.0
  %6729 = vmatprep.subr.mxu0 0.0
  %6730 = vmatpush1.msra.mxu0 0.0
  %6731 = vmatprep.subr.mxu0 0.0
  %6732 = vmatpush1.msra.mxu0 0.0
  %6733 = vmatprep.subr.mxu0 0.0
  %6734 = vmatpush1.msra.mxu0 0.0
  %6735 = vmatprep.subr.mxu0 0.0
  %6736 = vmatpush1.msra.mxu0 0.0
  %6737 = vmatprep.subr.mxu0 0.0
  %6738 = vmatpush1.msra.mxu0 0.0
  %6739 = vmatprep.subr.mxu0 0.0
  %6740 = vmatpush1.msra.mxu0 0.0
  %6741 = vmatprep.subr.mxu0 0.0
  %6742 = vmatpush1.msra.mxu0 0.0
  %6743 = vmatprep.subr.mxu0 0.0
  %6744 = vmatpush1.msra.mxu0 0.0
  %6745 = vmatprep.subr.mxu0 0.0
  %6746 = vmatpush1.msra.mxu0 0.0
  %6747 = vmatprep.subr.mxu0 0.0
  %6748 = vmatpush1.msra.mxu0 0.0
  %6749 = vmatprep.subr.mxu0 0.0
  %6750 = vmatpush1.msra.mxu0 0.0
  %6751 = vmatprep.subr.mxu0 0.0
  %6752 = vmatpush1.msra.mxu0 0.0
  %6753 = vmatprep.subr.mxu0 0.0
  %6754 = vmatpush1.msra.mxu0 0.0
  %6755 = vmatprep.subr.mxu0 0.0
  %6756 = vmatpush1.msra.mxu0 0.0
  %6757 = vmatprep.subr.mxu0 0.0
  %6758 = vmatpush1.msra.mxu0 0.0
  %6759 = vmatprep.subr.mxu0 0.0
  %6760 = vmatpush1.msra.mxu0 0.0
  %6761 = vmatprep.subr.mxu0 0.0
  %6762 = vmatpush1.msra.mxu0 0.0
  %6763 = vmatprep.subr.mxu0 0.0
  %6764 = vmatpush1.msra.mxu0 0.0
  %6765 = vmatprep.subr.mxu0 0.0
  %6766 = vmatpush1.msra.mxu0 0.0
  %6767 = vmatprep.subr.mxu0 0.0
  %6768 = vmatpush1.msra.mxu0 0.0
  %6769 = vmatprep.subr.mxu0 0.0
  %6770 = vmatpush1.msra.mxu0 0.0
  %6771 = vmatprep.mubr.f32.mxu0 0.0
  %6772 = vmatmul.mubr.f32.gmra.mrb[0].mxu0 %v6625
  %v6773 = vpop.f32.mrb[0].mxu0
  %v6774 = vadd.f32 0.0, %v6773
  %v6775 = vpop.f32.mrb[0].mxu0
  %v6776 = vadd.f32 0.0, %v6775
  %6777 = vmatprep.mubr.f32.mxu0 0.0
  %6778 = vmatmul.mubr.f32.gmra.mrb[0].mxu0 %v6628
  %v6779 = vpop.f32.mrb[0].mxu0
  %v6780 = vadd.f32 0.0, %v6779
  %v6781 = vpop.f32.mrb[0].mxu0
  %v6782 = vadd.f32 0.0, %v6781
  %6783 = vdwg.mxu0
  %6784 = vmatprep.subr.mxu0 %v6597
  %6785 = vmatpush1.msra.mxu0 %v6596
  %6786 = vmatprep.subr.mxu0 0.0
  %6787 = vmatpush1.msra.mxu0 0.0
  %6788 = vmatprep.subr.mxu0 0.0
  %6789 = vmatpush1.msra.mxu0 0.0
  %6790 = vmatprep.subr.mxu0 0.0
  %6791 = vmatpush1.msra.mxu0 0.0
  %6792 = vmatprep.subr.mxu0 0.0
  %6793 = vmatpush1.msra.mxu0 0.0
  %6794 = vmatprep.subr.mxu0 0.0
  %6795 = vmatpush1.msra.mxu0 0.0
  %6796 = vmatprep.subr.mxu0 0.0
  %6797 = vmatpush1.msra.mxu0 0.0
  %6798 = vmatprep.subr.mxu0 0.0
  %6799 = vmatpush1.msra.mxu0 0.0
  %6800 = vmatprep.subr.mxu0 0.0
  %6801 = vmatpush1.msra.mxu0 0.0
  %6802 = vmatprep.subr.mxu0 0.0
  %6803 = vmatpush1.msra.mxu0 0.0
  %6804 = vmatprep.subr.mxu0 0.0
  %6805 = vmatpush1.msra.mxu0 0.0
  %6806 = vmatprep.subr.mxu0 0.0
  %6807 = vmatpush1.msra.mxu0 0.0
  %6808 = vmatprep.subr.mxu0 0.0
  %6809 = vmatpush1.msra.mxu0 0.0
  %6810 = vmatprep.subr.mxu0 0.0
  %6811 = vmatpush1.msra.mxu0 0.0
  %6812 = vmatprep.subr.mxu0 0.0
  %6813 = vmatpush1.msra.mxu0 0.0
  %6814 = vmatprep.subr.mxu0 0.0
  %6815 = vmatpush1.msra.mxu0 0.0
  %6816 = vmatprep.subr.mxu0 0.0
  %6817 = vmatpush1.msra.mxu0 0.0
  %6818 = vmatprep.subr.mxu0 0.0
  %6819 = vmatpush1.msra.mxu0 0.0
  %6820 = vmatprep.subr.mxu0 0.0
  %6821 = vmatpush1.msra.mxu0 0.0
  %6822 = vmatprep.subr.mxu0 0.0
  %6823 = vmatpush1.msra.mxu0 0.0
  %6824 = vmatprep.subr.mxu0 0.0
  %6825 = vmatpush1.msra.mxu0 0.0
  %6826 = vmatprep.subr.mxu0 0.0
  %6827 = vmatpush1.msra.mxu0 0.0
  %6828 = vmatprep.subr.mxu0 0.0
  %6829 = vmatpush1.msra.mxu0 0.0
  %6830 = vmatprep.subr.mxu0 0.0
  %6831 = vmatpush1.msra.mxu0 0.0
  %6832 = vmatprep.subr.mxu0 0.0
  %6833 = vmatpush1.msra.mxu0 0.0
  %6834 = vmatprep.subr.mxu0 0.0
  %6835 = vmatpush1.msra.mxu0 0.0
  %6836 = vmatprep.subr.mxu0 0.0
  %6837 = vmatpush1.msra.mxu0 0.0
  %6838 = vmatprep.subr.mxu0 0.0
  %6839 = vmatpush1.msra.mxu0 0.0
  %6840 = vmatprep.subr.mxu0 0.0
  %6841 = vmatpush1.msra.mxu0 0.0
  %6842 = vmatprep.subr.mxu0 0.0
  %6843 = vmatpush1.msra.mxu0 0.0
  %6844 = vmatprep.subr.mxu0 0.0
  %6845 = vmatpush1.msra.mxu0 0.0
  %6846 = vmatprep.subr.mxu0 0.0
  %6847 = vmatpush1.msra.mxu0 0.0
  %6848 = vmatprep.mubr.f32.mxu0 0.0
  %6849 = vmatmul.mubr.f32.gmra.mrb[0].mxu0 %v6625
  %v6850 = vpop.f32.mrb[0].mxu0
  %v6851 = vadd.f32 0.0, %v6850
  %v6852 = vpop.f32.mrb[0].mxu0
  %v6853 = vadd.f32 0.0, %v6852
  %6854 = vmatprep.mubr.f32.mxu0 0.0
  %6855 = vmatmul.mubr.f32.gmra.mrb[0].mxu0 %v6628
  %v6856 = vpop.f32.mrb[0].mxu0
  %v6857 = vadd.f32 0.0, %v6856
  %v6858 = vpop.f32.mrb[0].mxu0
  %v6859 = vadd.f32 0.0, %v6858
  %6860 = vdwg.mxu0
  %6861 = vmatprep.subr.mxu0 %v6599
  %6862 = vmatpush1.msra.mxu0 %v6598
  %6863 = vmatprep.subr.mxu0 0.0
  %6864 = vmatpush1.msra.mxu0 0.0
  %6865 = vmatprep.subr.mxu0 0.0
  %6866 = vmatpush1.msra.mxu0 0.0
  %6867 = vmatprep.subr.mxu0 0.0
  %6868 = vmatpush1.msra.mxu0 0.0
  %6869 = vmatprep.subr.mxu0 0.0
  %6870 = vmatpush1.msra.mxu0 0.0
  %6871 = vmatprep.subr.mxu0 0.0
  %6872 = vmatpush1.msra.mxu0 0.0
  %6873 = vmatprep.subr.mxu0 0.0
  %6874 = vmatpush1.msra.mxu0 0.0
  %6875 = vmatprep.subr.mxu0 0.0
  %6876 = vmatpush1.msra.mxu0 0.0
  %6877 = vmatprep.subr.mxu0 0.0
  %6878 = vmatpush1.msra.mxu0 0.0
  %6879 = vmatprep.subr.mxu0 0.0
  %6880 = vmatpush1.msra.mxu0 0.0
  %6881 = vmatprep.subr.mxu0 0.0
  %6882 = vmatpush1.msra.mxu0 0.0
  %6883 = vmatprep.subr.mxu0 0.0
  %6884 = vmatpush1.msra.mxu0 0.0
  %6885 = vmatprep.subr.mxu0 0.0
  %6886 = vmatpush1.msra.mxu0 0.0
  %6887 = vmatprep.subr.mxu0 0.0
  %6888 = vmatpush1.msra.mxu0 0.0
  %6889 = vmatprep.subr.mxu0 0.0
  %6890 = vmatpush1.msra.mxu0 0.0
  %6891 = vmatprep.subr.mxu0 0.0
  %6892 = vmatpush1.msra.mxu0 0.0
  %6893 = vmatprep.subr.mxu0 0.0
  %6894 = vmatpush1.msra.mxu0 0.0
  %6895 = vmatprep.subr.mxu0 0.0
  %6896 = vmatpush1.msra.mxu0 0.0
  %6897 = vmatprep.subr.mxu0 0.0
  %6898 = vmatpush1.msra.mxu0 0.0
  %6899 = vmatprep.subr.mxu0 0.0
  %6900 = vmatpush1.msra.mxu0 0.0
  %6901 = vmatprep.subr.mxu0 0.0
  %6902 = vmatpush1.msra.mxu0 0.0
  %6903 = vmatprep.subr.mxu0 0.0
  %6904 = vmatpush1.msra.mxu0 0.0
  %6905 = vmatprep.subr.mxu0 0.0
  %6906 = vmatpush1.msra.mxu0 0.0
  %6907 = vmatprep.subr.mxu0 0.0
  %6908 = vmatpush1.msra.mxu0 0.0
  %6909 = vmatprep.subr.mxu0 0.0
  %6910 = vmatpush1.msra.mxu0 0.0
  %6911 = vmatprep.subr.mxu0 0.0
  %6912 = vmatpush1.msra.mxu0 0.0
  %6913 = vmatprep.subr.mxu0 0.0
  %6914 = vmatpush1.msra.mxu0 0.0
  %6915 = vmatprep.subr.mxu0 0.0
  %6916 = vmatpush1.msra.mxu0 0.0
  %6917 = vmatprep.subr.mxu0 0.0
  %6918 = vmatpush1.msra.mxu0 0.0
  %6919 = vmatprep.subr.mxu0 0.0
  %6920 = vmatpush1.msra.mxu0 0.0
  %6921 = vmatprep.subr.mxu0 0.0
  %6922 = vmatpush1.msra.mxu0 0.0
  %6923 = vmatprep.subr.mxu0 0.0
  %6924 = vmatpush1.msra.mxu0 0.0
  %6925 = vmatprep.mubr.f32.mxu0 0.0
  %6926 = vmatmul.mubr.f32.gmra.mrb[0].mxu0 %v6625
  %v6927 = vpop.f32.mrb[0].mxu0
  %v6928 = vadd.f32 0.0, %v6927
  %v6929 = vpop.f32.mrb[0].mxu0
  %v6930 = vadd.f32 0.0, %v6929
  %6931 = vmatprep.mubr.f32.mxu0 0.0
  %6932 = vmatmul.mubr.f32.gmra.mrb[0].mxu0 %v6628
  %v6933 = vpop.f32.mrb[0].mxu0
  %v6934 = vadd.f32 0.0, %v6933
  %v6935 = vpop.f32.mrb[0].mxu0
  %v6936 = vadd.f32 0.0, %v6935
  %6937 = vdwg.mxu0
  %6938 = vmatprep.subr.mxu0 %v6601
  %6939 = vmatpush1.msra.mxu0 %v6600
  %6940 = vmatprep.subr.mxu0 0.0
  %6941 = vmatpush1.msra.mxu0 0.0
  %6942 = vmatprep.subr.mxu0 0.0
  %6943 = vmatpush1.msra.mxu0 0.0
  %6944 = vmatprep.subr.mxu0 0.0
  %6945 = vmatpush1.msra.mxu0 0.0
  %6946 = vmatprep.subr.mxu0 0.0
  %6947 = vmatpush1.msra.mxu0 0.0
  %6948 = vmatprep.subr.mxu0 0.0
  %6949 = vmatpush1.msra.mxu0 0.0
  %6950 = vmatprep.subr.mxu0 0.0
  %6951 = vmatpush1.msra.mxu0 0.0
  %6952 = vmatprep.subr.mxu0 0.0
  %6953 = vmatpush1.msra.mxu0 0.0
  %6954 = vmatprep.subr.mxu0 0.0
  %6955 = vmatpush1.msra.mxu0 0.0
  %6956 = vmatprep.subr.mxu0 0.0
  %6957 = vmatpush1.msra.mxu0 0.0
  %6958 = vmatprep.subr.mxu0 0.0
  %6959 = vmatpush1.msra.mxu0 0.0
  %6960 = vmatprep.subr.mxu0 0.0
  %6961 = vmatpush1.msra.mxu0 0.0
  %6962 = vmatprep.subr.mxu0 0.0
  %6963 = vmatpush1.msra.mxu0 0.0
  %6964 = vmatprep.subr.mxu0 0.0
  %6965 = vmatpush1.msra.mxu0 0.0
  %6966 = vmatprep.subr.mxu0 0.0
  %6967 = vmatpush1.msra.mxu0 0.0
  %6968 = vmatprep.subr.mxu0 0.0
  %6969 = vmatpush1.msra.mxu0 0.0
  %6970 = vmatprep.subr.mxu0 0.0
  %6971 = vmatpush1.msra.mxu0 0.0
  %6972 = vmatprep.subr.mxu0 0.0
  %6973 = vmatpush1.msra.mxu0 0.0
  %6974 = vmatprep.subr.mxu0 0.0
  %6975 = vmatpush1.msra.mxu0 0.0
  %6976 = vmatprep.subr.mxu0 0.0
  %6977 = vmatpush1.msra.mxu0 0.0
  %6978 = vmatprep.subr.mxu0 0.0
  %6979 = vmatpush1.msra.mxu0 0.0
  %6980 = vmatprep.subr.mxu0 0.0
  %6981 = vmatpush1.msra.mxu0 0.0
  %6982 = vmatprep.subr.mxu0 0.0
  %6983 = vmatpush1.msra.mxu0 0.0
  %6984 = vmatprep.subr.mxu0 0.0
  %6985 = vmatpush1.msra.mxu0 0.0
  %6986 = vmatprep.subr.mxu0 0.0
  %6987 = vmatpush1.msra.mxu0 0.0
  %6988 = vmatprep.subr.mxu0 0.0
  %6989 = vmatpush1.msra.mxu0 0.0
  %6990 = vmatprep.subr.mxu0 0.0
  %6991 = vmatpush1.msra.mxu0 0.0
  %6992 = vmatprep.subr.mxu0 0.0
  %6993 = vmatpush1.msra.mxu0 0.0
  %6994 = vmatprep.subr.mxu0 0.0
  %6995 = vmatpush1.msra.mxu0 0.0
  %6996 = vmatprep.subr.mxu0 0.0
  %6997 = vmatpush1.msra.mxu0 0.0
  %6998 = vmatprep.subr.mxu0 0.0
  %6999 = vmatpush1.msra.mxu0 0.0
  %7000 = vmatprep.subr.mxu0 0.0
  %7001 = vmatpush1.msra.mxu0 0.0
  %7002 = vmatprep.mubr.f32.mxu0 0.0
  %7003 = vmatmul.mubr.f32.gmra.mrb[0].mxu0 %v6625
  %v7004 = vpop.f32.mrb[0].mxu0
  %v7005 = vadd.f32 0.0, %v7004
  %v7006 = vpop.f32.mrb[0].mxu0
  %v7007 = vadd.f32 0.0, %v7006
  %7008 = vmatprep.mubr.f32.mxu0 0.0
  %7009 = vmatmul.mubr.f32.gmra.mrb[0].mxu0 %v6628
  %v7010 = vpop.f32.mrb[0].mxu0
  %v7011 = vadd.f32 0.0, %v7010
  %v7012 = vpop.f32.mrb[0].mxu0
  %v7013 = vadd.f32 0.0, %v7012
  %7014 = vdwg.mxu0
  %7015 = vmatprep.subr.mxu0 %v6603
  %7016 = vmatpush1.msra.mxu0 %v6602
  %7017 = vmatprep.subr.mxu0 0.0
  %7018 = vmatpush1.msra.mxu0 0.0
  %7019 = vmatprep.subr.mxu0 0.0
  %7020 = vmatpush1.msra.mxu0 0.0
  %7021 = vmatprep.subr.mxu0 0.0
  %7022 = vmatpush1.msra.mxu0 0.0
  %7023 = vmatprep.subr.mxu0 0.0
  %7024 = vmatpush1.msra.mxu0 0.0
  %7025 = vmatprep.subr.mxu0 0.0
  %7026 = vmatpush1.msra.mxu0 0.0
  %7027 = vmatprep.subr.mxu0 0.0
  %7028 = vmatpush1.msra.mxu0 0.0
  %7029 = vmatprep.subr.mxu0 0.0
  %7030 = vmatpush1.msra.mxu0 0.0
  %7031 = vmatprep.subr.mxu0 0.0
  %7032 = vmatpush1.msra.mxu0 0.0
  %7033 = vmatprep.subr.mxu0 0.0
  %7034 = vmatpush1.msra.mxu0 0.0
  %7035 = vmatprep.subr.mxu0 0.0
  %7036 = vmatpush1.msra.mxu0 0.0
  %7037 = vmatprep.subr.mxu0 0.0
  %7038 = vmatpush1.msra.mxu0 0.0
  %7039 = vmatprep.subr.mxu0 0.0
  %7040 = vmatpush1.msra.mxu0 0.0
  %7041 = vmatprep.subr.mxu0 0.0
  %7042 = vmatpush1.msra.mxu0 0.0
  %7043 = vmatprep.subr.mxu0 0.0
  %7044 = vmatpush1.msra.mxu0 0.0
  %7045 = vmatprep.subr.mxu0 0.0
  %7046 = vmatpush1.msra.mxu0 0.0
  %7047 = vmatprep.subr.mxu0 0.0
  %7048 = vmatpush1.msra.mxu0 0.0
  %7049 = vmatprep.subr.mxu0 0.0
  %7050 = vmatpush1.msra.mxu0 0.0
  %7051 = vmatprep.subr.mxu0 0.0
  %7052 = vmatpush1.msra.mxu0 0.0
  %7053 = vmatprep.subr.mxu0 0.0
  %7054 = vmatpush1.msra.mxu0 0.0
  %7055 = vmatprep.subr.mxu0 0.0
  %7056 = vmatpush1.msra.mxu0 0.0
  %7057 = vmatprep.subr.mxu0 0.0
  %7058 = vmatpush1.msra.mxu0 0.0
  %7059 = vmatprep.subr.mxu0 0.0
  %7060 = vmatpush1.msra.mxu0 0.0
  %7061 = vmatprep.subr.mxu0 0.0
  %7062 = vmatpush1.msra.mxu0 0.0
  %7063 = vmatprep.subr.mxu0 0.0
  %7064 = vmatpush1.msra.mxu0 0.0
  %7065 = vmatprep.subr.mxu0 0.0
  %7066 = vmatpush1.msra.mxu0 0.0
  %7067 = vmatprep.subr.mxu0 0.0
  %7068 = vmatpush1.msra.mxu0 0.0
  %7069 = vmatprep.subr.mxu0 0.0
  %7070 = vmatpush1.msra.mxu0 0.0
  %7071 = vmatprep.subr.mxu0 0.0
  %7072 = vmatpush1.msra.mxu0 0.0
  %7073 = vmatprep.subr.mxu0 0.0
  %7074 = vmatpush1.msra.mxu0 0.0
  %7075 = vmatprep.subr.mxu0 0.0
  %7076 = vmatpush1.msra.mxu0 0.0
  %7077 = vmatprep.subr.mxu0 0.0
  %7078 = vmatpush1.msra.mxu0 0.0
  %7079 = vmatprep.mubr.f32.mxu0 0.0
  %7080 = vmatmul.mubr.f32.gmra.mrb[0].mxu0 %v6625
  %v7081 = vpop.f32.mrb[0].mxu0
  %v7082 = vadd.f32 0.0, %v7081
  %v7083 = vpop.f32.mrb[0].mxu0
  %v7084 = vadd.f32 0.0, %v7083
  %7085 = vmatprep.mubr.f32.mxu0 0.0
  %7086 = vmatmul.mubr.f32.gmra.mrb[0].mxu0 %v6628
  %v7087 = vpop.f32.mrb[0].mxu0
  %v7088 = vadd.f32 0.0, %v7087
  %v7089 = vpop.f32.mrb[0].mxu0
  %v7090 = vadd.f32 0.0, %v7089
  %7091 = vdwg.mxu0
  %7092 = vmatprep.subr.mxu0 %v6605
  %7093 = vmatpush1.msra.mxu0 %v6604
  %7094 = vmatprep.subr.mxu0 0.0
  %7095 = vmatpush1.msra.mxu0 0.0
  %7096 = vmatprep.subr.mxu0 0.0
  %7097 = vmatpush1.msra.mxu0 0.0
  %7098 = vmatprep.subr.mxu0 0.0
  %7099 = vmatpush1.msra.mxu0 0.0
  %7100 = vmatprep.subr.mxu0 0.0
  %7101 = vmatpush1.msra.mxu0 0.0
  %7102 = vmatprep.subr.mxu0 0.0
  %7103 = vmatpush1.msra.mxu0 0.0
  %7104 = vmatprep.subr.mxu0 0.0
  %7105 = vmatpush1.msra.mxu0 0.0
  %7106 = vmatprep.subr.mxu0 0.0
  %7107 = vmatpush1.msra.mxu0 0.0
  %7108 = vmatprep.subr.mxu0 0.0
  %7109 = vmatpush1.msra.mxu0 0.0
  %7110 = vmatprep.subr.mxu0 0.0
  %7111 = vmatpush1.msra.mxu0 0.0
  %7112 = vmatprep.subr.mxu0 0.0
  %7113 = vmatpush1.msra.mxu0 0.0
  %7114 = vmatprep.subr.mxu0 0.0
  %7115 = vmatpush1.msra.mxu0 0.0
  %7116 = vmatprep.subr.mxu0 0.0
  %7117 = vmatpush1.msra.mxu0 0.0
  %7118 = vmatprep.subr.mxu0 0.0
  %7119 = vmatpush1.msra.mxu0 0.0
  %7120 = vmatprep.subr.mxu0 0.0
  %7121 = vmatpush1.msra.mxu0 0.0
  %7122 = vmatprep.subr.mxu0 0.0
  %7123 = vmatpush1.msra.mxu0 0.0
  %7124 = vmatprep.subr.mxu0 0.0
  %7125 = vmatpush1.msra.mxu0 0.0
  %7126 = vmatprep.subr.mxu0 0.0
  %7127 = vmatpush1.msra.mxu0 0.0
  %7128 = vmatprep.subr.mxu0 0.0
  %7129 = vmatpush1.msra.mxu0 0.0
  %7130 = vmatprep.subr.mxu0 0.0
  %7131 = vmatpush1.msra.mxu0 0.0
  %7132 = vmatprep.subr.mxu0 0.0
  %7133 = vmatpush1.msra.mxu0 0.0
  %7134 = vmatprep.subr.mxu0 0.0
  %7135 = vmatpush1.msra.mxu0 0.0
  %7136 = vmatprep.subr.mxu0 0.0
  %7137 = vmatpush1.msra.mxu0 0.0
  %7138 = vmatprep.subr.mxu0 0.0
  %7139 = vmatpush1.msra.mxu0 0.0
  %7140 = vmatprep.subr.mxu0 0.0
  %7141 = vmatpush1.msra.mxu0 0.0
  %7142 = vmatprep.subr.mxu0 0.0
  %7143 = vmatpush1.msra.mxu0 0.0
  %7144 = vmatprep.subr.mxu0 0.0
  %7145 = vmatpush1.msra.mxu0 0.0
  %7146 = vmatprep.subr.mxu0 0.0
  %7147 = vmatpush1.msra.mxu0 0.0
  %7148 = vmatprep.subr.mxu0 0.0
  %7149 = vmatpush1.msra.mxu0 0.0
  %7150 = vmatprep.subr.mxu0 0.0
  %7151 = vmatpush1.msra.mxu0 0.0
  %7152 = vmatprep.subr.mxu0 0.0
  %7153 = vmatpush1.msra.mxu0 0.0
  %7154 = vmatprep.subr.mxu0 0.0
  %7155 = vmatpush1.msra.mxu0 0.0
  %7156 = vmatprep.mubr.f32.mxu0 0.0
  %7157 = vmatmul.mubr.f32.gmra.mrb[0].mxu0 %v6625
  %v7158 = vpop.f32.mrb[0].mxu0
  %v7159 = vadd.f32 0.0, %v7158
  %v7160 = vpop.f32.mrb[0].mxu0
  %v7161 = vadd.f32 0.0, %v7160
  %7162 = vmatprep.mubr.f32.mxu0 0.0
  %7163 = vmatmul.mubr.f32.gmra.mrb[0].mxu0 %v6628
  %v7164 = vpop.f32.mrb[0].mxu0
  %v7165 = vadd.f32 0.0, %v7164
  %v7166 = vpop.f32.mrb[0].mxu0
  %v7167 = vadd.f32 0.0, %v7166
  %7168 = vdwg.mxu0
  %7169 = vmatprep.subr.mxu0 %v6607
  %7170 = vmatpush1.msra.mxu0 %v6606
  %7171 = vmatprep.subr.mxu0 0.0
  %7172 = vmatpush1.msra.mxu0 0.0
  %7173 = vmatprep.subr.mxu0 0.0
  %7174 = vmatpush1.msra.mxu0 0.0
  %7175 = vmatprep.subr.mxu0 0.0
  %7176 = vmatpush1.msra.mxu0 0.0
  %7177 = vmatprep.subr.mxu0 0.0
  %7178 = vmatpush1.msra.mxu0 0.0
  %7179 = vmatprep.subr.mxu0 0.0
  %7180 = vmatpush1.msra.mxu0 0.0
  %7181 = vmatprep.subr.mxu0 0.0
  %7182 = vmatpush1.msra.mxu0 0.0
  %7183 = vmatprep.subr.mxu0 0.0
  %7184 = vmatpush1.msra.mxu0 0.0
  %7185 = vmatprep.subr.mxu0 0.0
  %7186 = vmatpush1.msra.mxu0 0.0
  %7187 = vmatprep.subr.mxu0 0.0
  %7188 = vmatpush1.msra.mxu0 0.0
  %7189 = vmatprep.subr.mxu0 0.0
  %7190 = vmatpush1.msra.mxu0 0.0
  %7191 = vmatprep.subr.mxu0 0.0
  %7192 = vmatpush1.msra.mxu0 0.0
  %7193 = vmatprep.subr.mxu0 0.0
  %7194 = vmatpush1.msra.mxu0 0.0
  %7195 = vmatprep.subr.mxu0 0.0
  %7196 = vmatpush1.msra.mxu0 0.0
  %7197 = vmatprep.subr.mxu0 0.0
  %7198 = vmatpush1.msra.mxu0 0.0
  %7199 = vmatprep.subr.mxu0 0.0
  %7200 = vmatpush1.msra.mxu0 0.0
  %7201 = vmatprep.subr.mxu0 0.0
  %7202 = vmatpush1.msra.mxu0 0.0
  %7203 = vmatprep.subr.mxu0 0.0
  %7204 = vmatpush1.msra.mxu0 0.0
  %7205 = vmatprep.subr.mxu0 0.0
  %7206 = vmatpush1.msra.mxu0 0.0
  %7207 = vmatprep.subr.mxu0 0.0
  %7208 = vmatpush1.msra.mxu0 0.0
  %7209 = vmatprep.subr.mxu0 0.0
  %7210 = vmatpush1.msra.mxu0 0.0
  %7211 = vmatprep.subr.mxu0 0.0
  %7212 = vmatpush1.msra.mxu0 0.0
  %7213 = vmatprep.subr.mxu0 0.0
  %7214 = vmatpush1.msra.mxu0 0.0
  %7215 = vmatprep.subr.mxu0 0.0
  %7216 = vmatpush1.msra.mxu0 0.0
  %7217 = vmatprep.subr.mxu0 0.0
  %7218 = vmatpush1.msra.mxu0 0.0
  %7219 = vmatprep.subr.mxu0 0.0
  %7220 = vmatpush1.msra.mxu0 0.0
  %7221 = vmatprep.subr.mxu0 0.0
  %7222 = vmatpush1.msra.mxu0 0.0
  %7223 = vmatprep.subr.mxu0 0.0
  %7224 = vmatpush1.msra.mxu0 0.0
  %7225 = vmatprep.subr.mxu0 0.0
  %7226 = vmatpush1.msra.mxu0 0.0
  %7227 = vmatprep.subr.mxu0 0.0
  %7228 = vmatpush1.msra.mxu0 0.0
  %7229 = vmatprep.subr.mxu0 0.0
  %7230 = vmatpush1.msra.mxu0 0.0
  %7231 = vmatprep.subr.mxu0 0.0
  %7232 = vmatpush1.msra.mxu0 0.0
  %7233 = vmatprep.mubr.f32.mxu0 0.0
  %7234 = vmatmul.mubr.f32.gmra.mrb[0].mxu0 %v6625
  %v7235 = vpop.f32.mrb[0].mxu0
  %v7236 = vadd.f32 0.0, %v7235
  %v7237 = vpop.f32.mrb[0].mxu0
  %v7238 = vadd.f32 0.0, %v7237
  %7239 = vmatprep.mubr.f32.mxu0 0.0
  %7240 = vmatmul.mubr.f32.gmra.mrb[0].mxu0 %v6628
  %v7241 = vpop.f32.mrb[0].mxu0
  %v7242 = vadd.f32 0.0, %v7241
  %v7243 = vpop.f32.mrb[0].mxu0
  %v7244 = vadd.f32 0.0, %v7243
  %7245 = vdwg.mxu0
  %v7246 = vadd.f32 %v6489, %v6697
  %v7247 = vadd.f32 %v6490, %v6699
  %v7248 = vadd.f32 %v6491, %v6774
  %v7249 = vadd.f32 %v6492, %v6776
  %v7250 = vadd.f32 %v6493, %v6851
  %v7251 = vadd.f32 %v6494, %v6853
  %v7252 = vadd.f32 %v6495, %v6928
  %v7253 = vadd.f32 %v6496, %v6930
  %v7254 = vadd.f32 %v6497, %v7005
  %v7255 = vadd.f32 %v6498, %v7007
  %v7256 = vadd.f32 %v6499, %v7082
  %v7257 = vadd.f32 %v6500, %v7084
  %v7258 = vadd.f32 %v6501, %v7159
  %v7259 = vadd.f32 %v6502, %v7161
  %v7260 = vadd.f32 %v6503, %v7236
  %v7261 = vadd.f32 %v6504, %v7238
  %v7262 = vadd.f32 %v6505, %v6703
  %v7263 = vadd.f32 %v6506, %v6705
  %v7264 = vadd.f32 %v6507, %v6780
  %v7265 = vadd.f32 %v6508, %v6782
  %v7266 = vadd.f32 %v6509, %v6857
  %v7267 = vadd.f32 %v6510, %v6859
  %v7268 = vadd.f32 %v6511, %v6934
  %v7269 = vadd.f32 %v6512, %v6936
  %v7270 = vadd.f32 %v6513, %v7011
  %v7271 = vadd.f32 %v6514, %v7013
  %v7272 = vadd.f32 %v6515, %v7088
  %v7273 = vadd.f32 %v6516, %v7090
  %v7274 = vadd.f32 %v6517, %v7165
  %v7275 = vadd.f32 %v6518, %v7167
  %v7276 = vadd.f32 %v6519, %v7242
  %v7277 = vadd.f32 %v6520, %v7244
  %s7278 = scalar_lea.vmem %s3, 128
  %v7279 = vld [vmem:[%s7278] sm:$0xff]
  %v7280 = vld [vmem:[%s7278 + $0x8] sm:$0xff]
  %7281 = vrot.lane.b32.xlu0 %v6524, 120
  %v7282 = vpop.permute.xlu0 %7281
  %7283 = vrot.lane.b32.xlu0 %v6525, 120
  %v7284 = vpop.permute.xlu0 %7283
  %7285 = vrot.lane.b32.xlu0 %v6526, 120
  %v7286 = vpop.permute.xlu0 %7285
  %7287 = vrot.lane.b32.xlu0 %v6527, 120
  %v7288 = vpop.permute.xlu0 %7287
  %7289 = vrot.lane.b32.xlu0 %v6528, 120
  %v7290 = vpop.permute.xlu0 %7289
  %7291 = vrot.lane.b32.xlu0 %v6529, 120
  %v7292 = vpop.permute.xlu0 %7291
  %7293 = vrot.lane.b32.xlu0 %v6530, 120
  %v7294 = vpop.permute.xlu0 %7293
  %7295 = vrot.lane.b32.xlu0 %v6531, 120
  %v7296 = vpop.permute.xlu0 %7295
  %7297 = vrot.lane.b32.xlu0 %v6532, 120
  %v7298 = vpop.permute.xlu0 %7297
  %7299 = vrot.lane.b32.xlu0 %v6533, 120
  %v7300 = vpop.permute.xlu0 %7299
  %7301 = vrot.lane.b32.xlu0 %v6534, 120
  %v7302 = vpop.permute.xlu0 %7301
  %7303 = vrot.lane.b32.xlu0 %v6535, 120
  %v7304 = vpop.permute.xlu0 %7303
  %7305 = vrot.lane.b32.xlu0 %v6536, 120
  %v7306 = vpop.permute.xlu0 %7305
  %7307 = vrot.lane.b32.xlu0 %v6537, 120
  %v7308 = vpop.permute.xlu0 %7307
  %7309 = vrot.lane.b32.xlu0 %v6538, 120
  %v7310 = vpop.permute.xlu0 %7309
  %7311 = vrot.lane.b32.xlu0 %v6539, 120
  %v7312 = vpop.permute.xlu0 %7311
  %7313 = vrot.lane.b32.xlu0 %v6540, 120
  %v7314 = vpop.permute.xlu0 %7313
  %v7315 = vsel %vm3040, %v7282, %v7284
  %v7316 = vsel %vm3040, %v7284, %v7286
  %v7317 = vsel %vm3040, %v7286, %v7288
  %v7318 = vsel %vm3040, %v7288, %v7290
  %v7319 = vsel %vm3040, %v7290, %v7292
  %v7320 = vsel %vm3040, %v7292, %v7294
  %v7321 = vsel %vm3040, %v7294, %v7296
  %v7322 = vsel %vm3040, %v7296, %v7298
  %v7323 = vsel %vm3040, %v7298, %v7300
  %v7324 = vsel %vm3040, %v7300, %v7302
  %v7325 = vsel %vm3040, %v7302, %v7304
  %v7326 = vsel %vm3040, %v7304, %v7306
  %v7327 = vsel %vm3040, %v7306, %v7308
  %v7328 = vsel %vm3040, %v7308, %v7310
  %v7329 = vsel %vm3040, %v7310, %v7312
  %v7330 = vsel %vm3040, %v7312, %v7314
  %v7348 = vsel %vm1758, %v7279, 0
  %v7351 = vsel %vm1758, %v7280, 0
  %7353 = vmatprep.subr.mxu0 %v7316
  %7354 = vmatpush1.msra.mxu0 %v7315
  %7355 = vmatprep.subr.mxu0 0.0
  %7356 = vmatpush1.msra.mxu0 0.0
  %7357 = vmatprep.subr.mxu0 0.0
  %7358 = vmatpush1.msra.mxu0 0.0
  %7359 = vmatprep.subr.mxu0 0.0
  %7360 = vmatpush1.msra.mxu0 0.0
  %7361 = vmatprep.subr.mxu0 0.0
  %7362 = vmatpush1.msra.mxu0 0.0
  %7363 = vmatprep.subr.mxu0 0.0
  %7364 = vmatpush1.msra.mxu0 0.0
  %7365 = vmatprep.subr.mxu0 0.0
  %7366 = vmatpush1.msra.mxu0 0.0
  %7367 = vmatprep.subr.mxu0 0.0
  %7368 = vmatpush1.msra.mxu0 0.0
  %7369 = vmatprep.subr.mxu0 0.0
  %7370 = vmatpush1.msra.mxu0 0.0
  %7371 = vmatprep.subr.mxu0 0.0
  %7372 = vmatpush1.msra.mxu0 0.0
  %7373 = vmatprep.subr.mxu0 0.0
  %7374 = vmatpush1.msra.mxu0 0.0
  %7375 = vmatprep.subr.mxu0 0.0
  %7376 = vmatpush1.msra.mxu0 0.0
  %7377 = vmatprep.subr.mxu0 0.0
  %7378 = vmatpush1.msra.mxu0 0.0
  %7379 = vmatprep.subr.mxu0 0.0
  %7380 = vmatpush1.msra.mxu0 0.0
  %7381 = vmatprep.subr.mxu0 0.0
  %7382 = vmatpush1.msra.mxu0 0.0
  %7383 = vmatprep.subr.mxu0 0.0
  %7384 = vmatpush1.msra.mxu0 0.0
  %7385 = vmatprep.subr.mxu0 0.0
  %7386 = vmatpush1.msra.mxu0 0.0
  %7387 = vmatprep.subr.mxu0 0.0
  %7388 = vmatpush1.msra.mxu0 0.0
  %7389 = vmatprep.subr.mxu0 0.0
  %7390 = vmatpush1.msra.mxu0 0.0
  %7391 = vmatprep.subr.mxu0 0.0
  %7392 = vmatpush1.msra.mxu0 0.0
  %7393 = vmatprep.subr.mxu0 0.0
  %7394 = vmatpush1.msra.mxu0 0.0
  %7395 = vmatprep.subr.mxu0 0.0
  %7396 = vmatpush1.msra.mxu0 0.0
  %7397 = vmatprep.subr.mxu0 0.0
  %7398 = vmatpush1.msra.mxu0 0.0
  %7399 = vmatprep.subr.mxu0 0.0
  %7400 = vmatpush1.msra.mxu0 0.0
  %7401 = vmatprep.subr.mxu0 0.0
  %7402 = vmatpush1.msra.mxu0 0.0
  %7403 = vmatprep.subr.mxu0 0.0
  %7404 = vmatpush1.msra.mxu0 0.0
  %7405 = vmatprep.subr.mxu0 0.0
  %7406 = vmatpush1.msra.mxu0 0.0
  %7407 = vmatprep.subr.mxu0 0.0
  %7408 = vmatpush1.msra.mxu0 0.0
  %7409 = vmatprep.subr.mxu0 0.0
  %7410 = vmatpush1.msra.mxu0 0.0
  %7411 = vmatprep.subr.mxu0 0.0
  %7412 = vmatpush1.msra.mxu0 0.0
  %7413 = vmatprep.subr.mxu0 0.0
  %7414 = vmatpush1.msra.mxu0 0.0
  %7415 = vmatprep.subr.mxu0 0.0
  %7416 = vmatpush1.msra.mxu0 0.0
  %7417 = vmatprep.mubr.f32.mxu0 0.0
  %7418 = vmatmul.mubr.f32.gmra.mrb[0].mxu0 %v7348
  %v7419 = vpop.f32.mrb[0].mxu0
  %v7420 = vadd.f32 0.0, %v7419
  %v7421 = vpop.f32.mrb[0].mxu0
  %v7422 = vadd.f32 0.0, %v7421
  %7423 = vmatprep.mubr.f32.mxu0 0.0
  %7424 = vmatmul.mubr.f32.gmra.mrb[0].mxu0 %v7351
  %v7425 = vpop.f32.mrb[0].mxu0
  %v7426 = vadd.f32 0.0, %v7425
  %v7427 = vpop.f32.mrb[0].mxu0
  %v7428 = vadd.f32 0.0, %v7427
  %7429 = vdwg.mxu0
  %7430 = vmatprep.subr.mxu0 %v7318
  %7431 = vmatpush1.msra.mxu0 %v7317
  %7432 = vmatprep.subr.mxu0 0.0
  %7433 = vmatpush1.msra.mxu0 0.0
  %7434 = vmatprep.subr.mxu0 0.0
  %7435 = vmatpush1.msra.mxu0 0.0
  %7436 = vmatprep.subr.mxu0 0.0
  %7437 = vmatpush1.msra.mxu0 0.0
  %7438 = vmatprep.subr.mxu0 0.0
  %7439 = vmatpush1.msra.mxu0 0.0
  %7440 = vmatprep.subr.mxu0 0.0
  %7441 = vmatpush1.msra.mxu0 0.0
  %7442 = vmatprep.subr.mxu0 0.0
  %7443 = vmatpush1.msra.mxu0 0.0
  %7444 = vmatprep.subr.mxu0 0.0
  %7445 = vmatpush1.msra.mxu0 0.0
  %7446 = vmatprep.subr.mxu0 0.0
  %7447 = vmatpush1.msra.mxu0 0.0
  %7448 = vmatprep.subr.mxu0 0.0
  %7449 = vmatpush1.msra.mxu0 0.0
  %7450 = vmatprep.subr.mxu0 0.0
  %7451 = vmatpush1.msra.mxu0 0.0
  %7452 = vmatprep.subr.mxu0 0.0
  %7453 = vmatpush1.msra.mxu0 0.0
  %7454 = vmatprep.subr.mxu0 0.0
  %7455 = vmatpush1.msra.mxu0 0.0
  %7456 = vmatprep.subr.mxu0 0.0
  %7457 = vmatpush1.msra.mxu0 0.0
  %7458 = vmatprep.subr.mxu0 0.0
  %7459 = vmatpush1.msra.mxu0 0.0
  %7460 = vmatprep.subr.mxu0 0.0
  %7461 = vmatpush1.msra.mxu0 0.0
  %7462 = vmatprep.subr.mxu0 0.0
  %7463 = vmatpush1.msra.mxu0 0.0
  %7464 = vmatprep.subr.mxu0 0.0
  %7465 = vmatpush1.msra.mxu0 0.0
  %7466 = vmatprep.subr.mxu0 0.0
  %7467 = vmatpush1.msra.mxu0 0.0
  %7468 = vmatprep.subr.mxu0 0.0
  %7469 = vmatpush1.msra.mxu0 0.0
  %7470 = vmatprep.subr.mxu0 0.0
  %7471 = vmatpush1.msra.mxu0 0.0
  %7472 = vmatprep.subr.mxu0 0.0
  %7473 = vmatpush1.msra.mxu0 0.0
  %7474 = vmatprep.subr.mxu0 0.0
  %7475 = vmatpush1.msra.mxu0 0.0
  %7476 = vmatprep.subr.mxu0 0.0
  %7477 = vmatpush1.msra.mxu0 0.0
  %7478 = vmatprep.subr.mxu0 0.0
  %7479 = vmatpush1.msra.mxu0 0.0
  %7480 = vmatprep.subr.mxu0 0.0
  %7481 = vmatpush1.msra.mxu0 0.0
  %7482 = vmatprep.subr.mxu0 0.0
  %7483 = vmatpush1.msra.mxu0 0.0
  %7484 = vmatprep.subr.mxu0 0.0
  %7485 = vmatpush1.msra.mxu0 0.0
  %7486 = vmatprep.subr.mxu0 0.0
  %7487 = vmatpush1.msra.mxu0 0.0
  %7488 = vmatprep.subr.mxu0 0.0
  %7489 = vmatpush1.msra.mxu0 0.0
  %7490 = vmatprep.subr.mxu0 0.0
  %7491 = vmatpush1.msra.mxu0 0.0
  %7492 = vmatprep.subr.mxu0 0.0
  %7493 = vmatpush1.msra.mxu0 0.0
  %7494 = vmatprep.mubr.f32.mxu0 0.0
  %7495 = vmatmul.mubr.f32.gmra.mrb[0].mxu0 %v7348
  %v7496 = vpop.f32.mrb[0].mxu0
  %v7497 = vadd.f32 0.0, %v7496
  %v7498 = vpop.f32.mrb[0].mxu0
  %v7499 = vadd.f32 0.0, %v7498
  %7500 = vmatprep.mubr.f32.mxu0 0.0
  %7501 = vmatmul.mubr.f32.gmra.mrb[0].mxu0 %v7351
  %v7502 = vpop.f32.mrb[0].mxu0
  %v7503 = vadd.f32 0.0, %v7502
  %v7504 = vpop.f32.mrb[0].mxu0
  %v7505 = vadd.f32 0.0, %v7504
  %7506 = vdwg.mxu0
  %7507 = vmatprep.subr.mxu0 %v7320
  %7508 = vmatpush1.msra.mxu0 %v7319
  %7509 = vmatprep.subr.mxu0 0.0
  %7510 = vmatpush1.msra.mxu0 0.0
  %7511 = vmatprep.subr.mxu0 0.0
  %7512 = vmatpush1.msra.mxu0 0.0
  %7513 = vmatprep.subr.mxu0 0.0
  %7514 = vmatpush1.msra.mxu0 0.0
  %7515 = vmatprep.subr.mxu0 0.0
  %7516 = vmatpush1.msra.mxu0 0.0
  %7517 = vmatprep.subr.mxu0 0.0
  %7518 = vmatpush1.msra.mxu0 0.0
  %7519 = vmatprep.subr.mxu0 0.0
  %7520 = vmatpush1.msra.mxu0 0.0
  %7521 = vmatprep.subr.mxu0 0.0
  %7522 = vmatpush1.msra.mxu0 0.0
  %7523 = vmatprep.subr.mxu0 0.0
  %7524 = vmatpush1.msra.mxu0 0.0
  %7525 = vmatprep.subr.mxu0 0.0
  %7526 = vmatpush1.msra.mxu0 0.0
  %7527 = vmatprep.subr.mxu0 0.0
  %7528 = vmatpush1.msra.mxu0 0.0
  %7529 = vmatprep.subr.mxu0 0.0
  %7530 = vmatpush1.msra.mxu0 0.0
  %7531 = vmatprep.subr.mxu0 0.0
  %7532 = vmatpush1.msra.mxu0 0.0
  %7533 = vmatprep.subr.mxu0 0.0
  %7534 = vmatpush1.msra.mxu0 0.0
  %7535 = vmatprep.subr.mxu0 0.0
  %7536 = vmatpush1.msra.mxu0 0.0
  %7537 = vmatprep.subr.mxu0 0.0
  %7538 = vmatpush1.msra.mxu0 0.0
  %7539 = vmatprep.subr.mxu0 0.0
  %7540 = vmatpush1.msra.mxu0 0.0
  %7541 = vmatprep.subr.mxu0 0.0
  %7542 = vmatpush1.msra.mxu0 0.0
  %7543 = vmatprep.subr.mxu0 0.0
  %7544 = vmatpush1.msra.mxu0 0.0
  %7545 = vmatprep.subr.mxu0 0.0
  %7546 = vmatpush1.msra.mxu0 0.0
  %7547 = vmatprep.subr.mxu0 0.0
  %7548 = vmatpush1.msra.mxu0 0.0
  %7549 = vmatprep.subr.mxu0 0.0
  %7550 = vmatpush1.msra.mxu0 0.0
  %7551 = vmatprep.subr.mxu0 0.0
  %7552 = vmatpush1.msra.mxu0 0.0
  %7553 = vmatprep.subr.mxu0 0.0
  %7554 = vmatpush1.msra.mxu0 0.0
  %7555 = vmatprep.subr.mxu0 0.0
  %7556 = vmatpush1.msra.mxu0 0.0
  %7557 = vmatprep.subr.mxu0 0.0
  %7558 = vmatpush1.msra.mxu0 0.0
  %7559 = vmatprep.subr.mxu0 0.0
  %7560 = vmatpush1.msra.mxu0 0.0
  %7561 = vmatprep.subr.mxu0 0.0
  %7562 = vmatpush1.msra.mxu0 0.0
  %7563 = vmatprep.subr.mxu0 0.0
  %7564 = vmatpush1.msra.mxu0 0.0
  %7565 = vmatprep.subr.mxu0 0.0
  %7566 = vmatpush1.msra.mxu0 0.0
  %7567 = vmatprep.subr.mxu0 0.0
  %7568 = vmatpush1.msra.mxu0 0.0
  %7569 = vmatprep.subr.mxu0 0.0
  %7570 = vmatpush1.msra.mxu0 0.0
  %7571 = vmatprep.mubr.f32.mxu0 0.0
  %7572 = vmatmul.mubr.f32.gmra.mrb[0].mxu0 %v7348
  %v7573 = vpop.f32.mrb[0].mxu0
  %v7574 = vadd.f32 0.0, %v7573
  %v7575 = vpop.f32.mrb[0].mxu0
  %v7576 = vadd.f32 0.0, %v7575
  %7577 = vmatprep.mubr.f32.mxu0 0.0
  %7578 = vmatmul.mubr.f32.gmra.mrb[0].mxu0 %v7351
  %v7579 = vpop.f32.mrb[0].mxu0
  %v7580 = vadd.f32 0.0, %v7579
  %v7581 = vpop.f32.mrb[0].mxu0
  %v7582 = vadd.f32 0.0, %v7581
  %7583 = vdwg.mxu0
  %7584 = vmatprep.subr.mxu0 %v7322
  %7585 = vmatpush1.msra.mxu0 %v7321
  %7586 = vmatprep.subr.mxu0 0.0
  %7587 = vmatpush1.msra.mxu0 0.0
  %7588 = vmatprep.subr.mxu0 0.0
  %7589 = vmatpush1.msra.mxu0 0.0
  %7590 = vmatprep.subr.mxu0 0.0
  %7591 = vmatpush1.msra.mxu0 0.0
  %7592 = vmatprep.subr.mxu0 0.0
  %7593 = vmatpush1.msra.mxu0 0.0
  %7594 = vmatprep.subr.mxu0 0.0
  %7595 = vmatpush1.msra.mxu0 0.0
  %7596 = vmatprep.subr.mxu0 0.0
  %7597 = vmatpush1.msra.mxu0 0.0
  %7598 = vmatprep.subr.mxu0 0.0
  %7599 = vmatpush1.msra.mxu0 0.0
  %7600 = vmatprep.subr.mxu0 0.0
  %7601 = vmatpush1.msra.mxu0 0.0
  %7602 = vmatprep.subr.mxu0 0.0
  %7603 = vmatpush1.msra.mxu0 0.0
  %7604 = vmatprep.subr.mxu0 0.0
  %7605 = vmatpush1.msra.mxu0 0.0
  %7606 = vmatprep.subr.mxu0 0.0
  %7607 = vmatpush1.msra.mxu0 0.0
  %7608 = vmatprep.subr.mxu0 0.0
  %7609 = vmatpush1.msra.mxu0 0.0
  %7610 = vmatprep.subr.mxu0 0.0
  %7611 = vmatpush1.msra.mxu0 0.0
  %7612 = vmatprep.subr.mxu0 0.0
  %7613 = vmatpush1.msra.mxu0 0.0
  %7614 = vmatprep.subr.mxu0 0.0
  %7615 = vmatpush1.msra.mxu0 0.0
  %7616 = vmatprep.subr.mxu0 0.0
  %7617 = vmatpush1.msra.mxu0 0.0
  %7618 = vmatprep.subr.mxu0 0.0
  %7619 = vmatpush1.msra.mxu0 0.0
  %7620 = vmatprep.subr.mxu0 0.0
  %7621 = vmatpush1.msra.mxu0 0.0
  %7622 = vmatprep.subr.mxu0 0.0
  %7623 = vmatpush1.msra.mxu0 0.0
  %7624 = vmatprep.subr.mxu0 0.0
  %7625 = vmatpush1.msra.mxu0 0.0
  %7626 = vmatprep.subr.mxu0 0.0
  %7627 = vmatpush1.msra.mxu0 0.0
  %7628 = vmatprep.subr.mxu0 0.0
  %7629 = vmatpush1.msra.mxu0 0.0
  %7630 = vmatprep.subr.mxu0 0.0
  %7631 = vmatpush1.msra.mxu0 0.0
  %7632 = vmatprep.subr.mxu0 0.0
  %7633 = vmatpush1.msra.mxu0 0.0
  %7634 = vmatprep.subr.mxu0 0.0
  %7635 = vmatpush1.msra.mxu0 0.0
  %7636 = vmatprep.subr.mxu0 0.0
  %7637 = vmatpush1.msra.mxu0 0.0
  %7638 = vmatprep.subr.mxu0 0.0
  %7639 = vmatpush1.msra.mxu0 0.0
  %7640 = vmatprep.subr.mxu0 0.0
  %7641 = vmatpush1.msra.mxu0 0.0
  %7642 = vmatprep.subr.mxu0 0.0
  %7643 = vmatpush1.msra.mxu0 0.0
  %7644 = vmatprep.subr.mxu0 0.0
  %7645 = vmatpush1.msra.mxu0 0.0
  %7646 = vmatprep.subr.mxu0 0.0
  %7647 = vmatpush1.msra.mxu0 0.0
  %7648 = vmatprep.mubr.f32.mxu0 0.0
  %7649 = vmatmul.mubr.f32.gmra.mrb[0].mxu0 %v7348
  %v7650 = vpop.f32.mrb[0].mxu0
  %v7651 = vadd.f32 0.0, %v7650
  %v7652 = vpop.f32.mrb[0].mxu0
  %v7653 = vadd.f32 0.0, %v7652
  %7654 = vmatprep.mubr.f32.mxu0 0.0
  %7655 = vmatmul.mubr.f32.gmra.mrb[0].mxu0 %v7351
  %v7656 = vpop.f32.mrb[0].mxu0
  %v7657 = vadd.f32 0.0, %v7656
  %v7658 = vpop.f32.mrb[0].mxu0
  %v7659 = vadd.f32 0.0, %v7658
  %7660 = vdwg.mxu0
  %7661 = vmatprep.subr.mxu0 %v7324
  %7662 = vmatpush1.msra.mxu0 %v7323
  %7663 = vmatprep.subr.mxu0 0.0
  %7664 = vmatpush1.msra.mxu0 0.0
  %7665 = vmatprep.subr.mxu0 0.0
  %7666 = vmatpush1.msra.mxu0 0.0
  %7667 = vmatprep.subr.mxu0 0.0
  %7668 = vmatpush1.msra.mxu0 0.0
  %7669 = vmatprep.subr.mxu0 0.0
  %7670 = vmatpush1.msra.mxu0 0.0
  %7671 = vmatprep.subr.mxu0 0.0
  %7672 = vmatpush1.msra.mxu0 0.0
  %7673 = vmatprep.subr.mxu0 0.0
  %7674 = vmatpush1.msra.mxu0 0.0
  %7675 = vmatprep.subr.mxu0 0.0
  %7676 = vmatpush1.msra.mxu0 0.0
  %7677 = vmatprep.subr.mxu0 0.0
  %7678 = vmatpush1.msra.mxu0 0.0
  %7679 = vmatprep.subr.mxu0 0.0
  %7680 = vmatpush1.msra.mxu0 0.0
  %7681 = vmatprep.subr.mxu0 0.0
  %7682 = vmatpush1.msra.mxu0 0.0
  %7683 = vmatprep.subr.mxu0 0.0
  %7684 = vmatpush1.msra.mxu0 0.0
  %7685 = vmatprep.subr.mxu0 0.0
  %7686 = vmatpush1.msra.mxu0 0.0
  %7687 = vmatprep.subr.mxu0 0.0
  %7688 = vmatpush1.msra.mxu0 0.0
  %7689 = vmatprep.subr.mxu0 0.0
  %7690 = vmatpush1.msra.mxu0 0.0
  %7691 = vmatprep.subr.mxu0 0.0
  %7692 = vmatpush1.msra.mxu0 0.0
  %7693 = vmatprep.subr.mxu0 0.0
  %7694 = vmatpush1.msra.mxu0 0.0
  %7695 = vmatprep.subr.mxu0 0.0
  %7696 = vmatpush1.msra.mxu0 0.0
  %7697 = vmatprep.subr.mxu0 0.0
  %7698 = vmatpush1.msra.mxu0 0.0
  %7699 = vmatprep.subr.mxu0 0.0
  %7700 = vmatpush1.msra.mxu0 0.0
  %7701 = vmatprep.subr.mxu0 0.0
  %7702 = vmatpush1.msra.mxu0 0.0
  %7703 = vmatprep.subr.mxu0 0.0
  %7704 = vmatpush1.msra.mxu0 0.0
  %7705 = vmatprep.subr.mxu0 0.0
  %7706 = vmatpush1.msra.mxu0 0.0
  %7707 = vmatprep.subr.mxu0 0.0
  %7708 = vmatpush1.msra.mxu0 0.0
  %7709 = vmatprep.subr.mxu0 0.0
  %7710 = vmatpush1.msra.mxu0 0.0
  %7711 = vmatprep.subr.mxu0 0.0
  %7712 = vmatpush1.msra.mxu0 0.0
  %7713 = vmatprep.subr.mxu0 0.0
  %7714 = vmatpush1.msra.mxu0 0.0
  %7715 = vmatprep.subr.mxu0 0.0
  %7716 = vmatpush1.msra.mxu0 0.0
  %7717 = vmatprep.subr.mxu0 0.0
  %7718 = vmatpush1.msra.mxu0 0.0
  %7719 = vmatprep.subr.mxu0 0.0
  %7720 = vmatpush1.msra.mxu0 0.0
  %7721 = vmatprep.subr.mxu0 0.0
  %7722 = vmatpush1.msra.mxu0 0.0
  %7723 = vmatprep.subr.mxu0 0.0
  %7724 = vmatpush1.msra.mxu0 0.0
  %7725 = vmatprep.mubr.f32.mxu0 0.0
  %7726 = vmatmul.mubr.f32.gmra.mrb[0].mxu0 %v7348
  %v7727 = vpop.f32.mrb[0].mxu0
  %v7728 = vadd.f32 0.0, %v7727
  %v7729 = vpop.f32.mrb[0].mxu0
  %v7730 = vadd.f32 0.0, %v7729
  %7731 = vmatprep.mubr.f32.mxu0 0.0
  %7732 = vmatmul.mubr.f32.gmra.mrb[0].mxu0 %v7351
  %v7733 = vpop.f32.mrb[0].mxu0
  %v7734 = vadd.f32 0.0, %v7733
  %v7735 = vpop.f32.mrb[0].mxu0
  %v7736 = vadd.f32 0.0, %v7735
  %7737 = vdwg.mxu0
  %7738 = vmatprep.subr.mxu0 %v7326
  %7739 = vmatpush1.msra.mxu0 %v7325
  %7740 = vmatprep.subr.mxu0 0.0
  %7741 = vmatpush1.msra.mxu0 0.0
  %7742 = vmatprep.subr.mxu0 0.0
  %7743 = vmatpush1.msra.mxu0 0.0
  %7744 = vmatprep.subr.mxu0 0.0
  %7745 = vmatpush1.msra.mxu0 0.0
  %7746 = vmatprep.subr.mxu0 0.0
  %7747 = vmatpush1.msra.mxu0 0.0
  %7748 = vmatprep.subr.mxu0 0.0
  %7749 = vmatpush1.msra.mxu0 0.0
  %7750 = vmatprep.subr.mxu0 0.0
  %7751 = vmatpush1.msra.mxu0 0.0
  %7752 = vmatprep.subr.mxu0 0.0
  %7753 = vmatpush1.msra.mxu0 0.0
  %7754 = vmatprep.subr.mxu0 0.0
  %7755 = vmatpush1.msra.mxu0 0.0
  %7756 = vmatprep.subr.mxu0 0.0
  %7757 = vmatpush1.msra.mxu0 0.0
  %7758 = vmatprep.subr.mxu0 0.0
  %7759 = vmatpush1.msra.mxu0 0.0
  %7760 = vmatprep.subr.mxu0 0.0
  %7761 = vmatpush1.msra.mxu0 0.0
  %7762 = vmatprep.subr.mxu0 0.0
  %7763 = vmatpush1.msra.mxu0 0.0
  %7764 = vmatprep.subr.mxu0 0.0
  %7765 = vmatpush1.msra.mxu0 0.0
  %7766 = vmatprep.subr.mxu0 0.0
  %7767 = vmatpush1.msra.mxu0 0.0
  %7768 = vmatprep.subr.mxu0 0.0
  %7769 = vmatpush1.msra.mxu0 0.0
  %7770 = vmatprep.subr.mxu0 0.0
  %7771 = vmatpush1.msra.mxu0 0.0
  %7772 = vmatprep.subr.mxu0 0.0
  %7773 = vmatpush1.msra.mxu0 0.0
  %7774 = vmatprep.subr.mxu0 0.0
  %7775 = vmatpush1.msra.mxu0 0.0
  %7776 = vmatprep.subr.mxu0 0.0
  %7777 = vmatpush1.msra.mxu0 0.0
  %7778 = vmatprep.subr.mxu0 0.0
  %7779 = vmatpush1.msra.mxu0 0.0
  %7780 = vmatprep.subr.mxu0 0.0
  %7781 = vmatpush1.msra.mxu0 0.0
  %7782 = vmatprep.subr.mxu0 0.0
  %7783 = vmatpush1.msra.mxu0 0.0
  %7784 = vmatprep.subr.mxu0 0.0
  %7785 = vmatpush1.msra.mxu0 0.0
  %7786 = vmatprep.subr.mxu0 0.0
  %7787 = vmatpush1.msra.mxu0 0.0
  %7788 = vmatprep.subr.mxu0 0.0
  %7789 = vmatpush1.msra.mxu0 0.0
  %7790 = vmatprep.subr.mxu0 0.0
  %7791 = vmatpush1.msra.mxu0 0.0
  %7792 = vmatprep.subr.mxu0 0.0
  %7793 = vmatpush1.msra.mxu0 0.0
  %7794 = vmatprep.subr.mxu0 0.0
  %7795 = vmatpush1.msra.mxu0 0.0
  %7796 = vmatprep.subr.mxu0 0.0
  %7797 = vmatpush1.msra.mxu0 0.0
  %7798 = vmatprep.subr.mxu0 0.0
  %7799 = vmatpush1.msra.mxu0 0.0
  %7800 = vmatprep.subr.mxu0 0.0
  %7801 = vmatpush1.msra.mxu0 0.0
  %7802 = vmatprep.mubr.f32.mxu0 0.0
  %7803 = vmatmul.mubr.f32.gmra.mrb[0].mxu0 %v7348
  %v7804 = vpop.f32.mrb[0].mxu0
  %v7805 = vadd.f32 0.0, %v7804
  %v7806 = vpop.f32.mrb[0].mxu0
  %v7807 = vadd.f32 0.0, %v7806
  %7808 = vmatprep.mubr.f32.mxu0 0.0
  %7809 = vmatmul.mubr.f32.gmra.mrb[0].mxu0 %v7351
  %v7810 = vpop.f32.mrb[0].mxu0
  %v7811 = vadd.f32 0.0, %v7810
  %v7812 = vpop.f32.mrb[0].mxu0
  %v7813 = vadd.f32 0.0, %v7812
  %7814 = vdwg.mxu0
  %7815 = vmatprep.subr.mxu0 %v7328
  %7816 = vmatpush1.msra.mxu0 %v7327
  %7817 = vmatprep.subr.mxu0 0.0
  %7818 = vmatpush1.msra.mxu0 0.0
  %7819 = vmatprep.subr.mxu0 0.0
  %7820 = vmatpush1.msra.mxu0 0.0
  %7821 = vmatprep.subr.mxu0 0.0
  %7822 = vmatpush1.msra.mxu0 0.0
  %7823 = vmatprep.subr.mxu0 0.0
  %7824 = vmatpush1.msra.mxu0 0.0
  %7825 = vmatprep.subr.mxu0 0.0
  %7826 = vmatpush1.msra.mxu0 0.0
  %7827 = vmatprep.subr.mxu0 0.0
  %7828 = vmatpush1.msra.mxu0 0.0
  %7829 = vmatprep.subr.mxu0 0.0
  %7830 = vmatpush1.msra.mxu0 0.0
  %7831 = vmatprep.subr.mxu0 0.0
  %7832 = vmatpush1.msra.mxu0 0.0
  %7833 = vmatprep.subr.mxu0 0.0
  %7834 = vmatpush1.msra.mxu0 0.0
  %7835 = vmatprep.subr.mxu0 0.0
  %7836 = vmatpush1.msra.mxu0 0.0
  %7837 = vmatprep.subr.mxu0 0.0
  %7838 = vmatpush1.msra.mxu0 0.0
  %7839 = vmatprep.subr.mxu0 0.0
  %7840 = vmatpush1.msra.mxu0 0.0
  %7841 = vmatprep.subr.mxu0 0.0
  %7842 = vmatpush1.msra.mxu0 0.0
  %7843 = vmatprep.subr.mxu0 0.0
  %7844 = vmatpush1.msra.mxu0 0.0
  %7845 = vmatprep.subr.mxu0 0.0
  %7846 = vmatpush1.msra.mxu0 0.0
  %7847 = vmatprep.subr.mxu0 0.0
  %7848 = vmatpush1.msra.mxu0 0.0
  %7849 = vmatprep.subr.mxu0 0.0
  %7850 = vmatpush1.msra.mxu0 0.0
  %7851 = vmatprep.subr.mxu0 0.0
  %7852 = vmatpush1.msra.mxu0 0.0
  %7853 = vmatprep.subr.mxu0 0.0
  %7854 = vmatpush1.msra.mxu0 0.0
  %7855 = vmatprep.subr.mxu0 0.0
  %7856 = vmatpush1.msra.mxu0 0.0
  %7857 = vmatprep.subr.mxu0 0.0
  %7858 = vmatpush1.msra.mxu0 0.0
  %7859 = vmatprep.subr.mxu0 0.0
  %7860 = vmatpush1.msra.mxu0 0.0
  %7861 = vmatprep.subr.mxu0 0.0
  %7862 = vmatpush1.msra.mxu0 0.0
  %7863 = vmatprep.subr.mxu0 0.0
  %7864 = vmatpush1.msra.mxu0 0.0
  %7865 = vmatprep.subr.mxu0 0.0
  %7866 = vmatpush1.msra.mxu0 0.0
  %7867 = vmatprep.subr.mxu0 0.0
  %7868 = vmatpush1.msra.mxu0 0.0
  %7869 = vmatprep.subr.mxu0 0.0
  %7870 = vmatpush1.msra.mxu0 0.0
  %7871 = vmatprep.subr.mxu0 0.0
  %7872 = vmatpush1.msra.mxu0 0.0
  %7873 = vmatprep.subr.mxu0 0.0
  %7874 = vmatpush1.msra.mxu0 0.0
  %7875 = vmatprep.subr.mxu0 0.0
  %7876 = vmatpush1.msra.mxu0 0.0
  %7877 = vmatprep.subr.mxu0 0.0
  %7878 = vmatpush1.msra.mxu0 0.0
  %7879 = vmatprep.mubr.f32.mxu0 0.0
  %7880 = vmatmul.mubr.f32.gmra.mrb[0].mxu0 %v7348
  %v7881 = vpop.f32.mrb[0].mxu0
  %v7882 = vadd.f32 0.0, %v7881
  %v7883 = vpop.f32.mrb[0].mxu0
  %v7884 = vadd.f32 0.0, %v7883
  %7885 = vmatprep.mubr.f32.mxu0 0.0
  %7886 = vmatmul.mubr.f32.gmra.mrb[0].mxu0 %v7351
  %v7887 = vpop.f32.mrb[0].mxu0
  %v7888 = vadd.f32 0.0, %v7887
  %v7889 = vpop.f32.mrb[0].mxu0
  %v7890 = vadd.f32 0.0, %v7889
  %7891 = vdwg.mxu0
  %7892 = vmatprep.subr.mxu0 %v7330
  %7893 = vmatpush1.msra.mxu0 %v7329
  %7894 = vmatprep.subr.mxu0 0.0
  %7895 = vmatpush1.msra.mxu0 0.0
  %7896 = vmatprep.subr.mxu0 0.0
  %7897 = vmatpush1.msra.mxu0 0.0
  %7898 = vmatprep.subr.mxu0 0.0
  %7899 = vmatpush1.msra.mxu0 0.0
  %7900 = vmatprep.subr.mxu0 0.0
  %7901 = vmatpush1.msra.mxu0 0.0
  %7902 = vmatprep.subr.mxu0 0.0
  %7903 = vmatpush1.msra.mxu0 0.0
  %7904 = vmatprep.subr.mxu0 0.0
  %7905 = vmatpush1.msra.mxu0 0.0
  %7906 = vmatprep.subr.mxu0 0.0
  %7907 = vmatpush1.msra.mxu0 0.0
  %7908 = vmatprep.subr.mxu0 0.0
  %7909 = vmatpush1.msra.mxu0 0.0
  %7910 = vmatprep.subr.mxu0 0.0
  %7911 = vmatpush1.msra.mxu0 0.0
  %7912 = vmatprep.subr.mxu0 0.0
  %7913 = vmatpush1.msra.mxu0 0.0
  %7914 = vmatprep.subr.mxu0 0.0
  %7915 = vmatpush1.msra.mxu0 0.0
  %7916 = vmatprep.subr.mxu0 0.0
  %7917 = vmatpush1.msra.mxu0 0.0
  %7918 = vmatprep.subr.mxu0 0.0
  %7919 = vmatpush1.msra.mxu0 0.0
  %7920 = vmatprep.subr.mxu0 0.0
  %7921 = vmatpush1.msra.mxu0 0.0
  %7922 = vmatprep.subr.mxu0 0.0
  %7923 = vmatpush1.msra.mxu0 0.0
  %7924 = vmatprep.subr.mxu0 0.0
  %7925 = vmatpush1.msra.mxu0 0.0
  %7926 = vmatprep.subr.mxu0 0.0
  %7927 = vmatpush1.msra.mxu0 0.0
  %7928 = vmatprep.subr.mxu0 0.0
  %7929 = vmatpush1.msra.mxu0 0.0
  %7930 = vmatprep.subr.mxu0 0.0
  %7931 = vmatpush1.msra.mxu0 0.0
  %7932 = vmatprep.subr.mxu0 0.0
  %7933 = vmatpush1.msra.mxu0 0.0
  %7934 = vmatprep.subr.mxu0 0.0
  %7935 = vmatpush1.msra.mxu0 0.0
  %7936 = vmatprep.subr.mxu0 0.0
  %7937 = vmatpush1.msra.mxu0 0.0
  %7938 = vmatprep.subr.mxu0 0.0
  %7939 = vmatpush1.msra.mxu0 0.0
  %7940 = vmatprep.subr.mxu0 0.0
  %7941 = vmatpush1.msra.mxu0 0.0
  %7942 = vmatprep.subr.mxu0 0.0
  %7943 = vmatpush1.msra.mxu0 0.0
  %7944 = vmatprep.subr.mxu0 0.0
  %7945 = vmatpush1.msra.mxu0 0.0
  %7946 = vmatprep.subr.mxu0 0.0
  %7947 = vmatpush1.msra.mxu0 0.0
  %7948 = vmatprep.subr.mxu0 0.0
  %7949 = vmatpush1.msra.mxu0 0.0
  %7950 = vmatprep.subr.mxu0 0.0
  %7951 = vmatpush1.msra.mxu0 0.0
  %7952 = vmatprep.subr.mxu0 0.0
  %7953 = vmatpush1.msra.mxu0 0.0
  %7954 = vmatprep.subr.mxu0 0.0
  %7955 = vmatpush1.msra.mxu0 0.0
  %7956 = vmatprep.mubr.f32.mxu0 0.0
  %7957 = vmatmul.mubr.f32.gmra.mrb[0].mxu0 %v7348
  %v7958 = vpop.f32.mrb[0].mxu0
  %v7959 = vadd.f32 0.0, %v7958
  %v7960 = vpop.f32.mrb[0].mxu0
  %v7961 = vadd.f32 0.0, %v7960
  %7962 = vmatprep.mubr.f32.mxu0 0.0
  %7963 = vmatmul.mubr.f32.gmra.mrb[0].mxu0 %v7351
  %v7964 = vpop.f32.mrb[0].mxu0
  %v7965 = vadd.f32 0.0, %v7964
  %v7966 = vpop.f32.mrb[0].mxu0
  %v7967 = vadd.f32 0.0, %v7966
  %7968 = vdwg.mxu0
  %v7969 = vadd.f32 %v7246, %v7420
  %v7970 = vadd.f32 %v7247, %v7422
  %v7971 = vadd.f32 %v7248, %v7497
  %v7972 = vadd.f32 %v7249, %v7499
  %v7973 = vadd.f32 %v7250, %v7574
  %v7974 = vadd.f32 %v7251, %v7576
  %v7975 = vadd.f32 %v7252, %v7651
  %v7976 = vadd.f32 %v7253, %v7653
  %v7977 = vadd.f32 %v7254, %v7728
  %v7978 = vadd.f32 %v7255, %v7730
  %v7979 = vadd.f32 %v7256, %v7805
  %v7980 = vadd.f32 %v7257, %v7807
  %v7981 = vadd.f32 %v7258, %v7882
  %v7982 = vadd.f32 %v7259, %v7884
  %v7983 = vadd.f32 %v7260, %v7959
  %v7984 = vadd.f32 %v7261, %v7961
  %v7985 = vadd.f32 %v7262, %v7426
  %v7986 = vadd.f32 %v7263, %v7428
  %v7987 = vadd.f32 %v7264, %v7503
  %v7988 = vadd.f32 %v7265, %v7505
  %v7989 = vadd.f32 %v7266, %v7580
  %v7990 = vadd.f32 %v7267, %v7582
  %v7991 = vadd.f32 %v7268, %v7657
  %v7992 = vadd.f32 %v7269, %v7659
  %v7993 = vadd.f32 %v7270, %v7734
  %v7994 = vadd.f32 %v7271, %v7736
  %v7995 = vadd.f32 %v7272, %v7811
  %v7996 = vadd.f32 %v7273, %v7813
  %v7997 = vadd.f32 %v7274, %v7888
  %v7998 = vadd.f32 %v7275, %v7890
  %v7999 = vadd.f32 %v7276, %v7965
  %v8000 = vadd.f32 %v7277, %v7967
  %v8001 = vld [vmem:[%s4] sm:$0xff]
  %v8002 = vld [vmem:[%s4 + $0x8] sm:$0xff]
  %8004 = vset.pattern.permute.xlu0 0
  %8005 = vperm.xlu0 %8004, %v8001
  %v8006 = vpop.permute.xlu0 %8005
  %8009 = vset.pattern.permute.xlu0 0
  %8010 = vperm.xlu0 %8009, %v8002
  %v8011 = vpop.permute.xlu0 %8010
  %v8013 = vadd.f32 %v7969, %v8006
  %v8014 = vadd.f32 %v7970, %v8006
  %v8015 = vadd.f32 %v7971, %v8006
  %v8016 = vadd.f32 %v7972, %v8006
  %v8017 = vadd.f32 %v7973, %v8006
  %v8018 = vadd.f32 %v7974, %v8006
  %v8019 = vadd.f32 %v7975, %v8006
  %v8020 = vadd.f32 %v7976, %v8006
  %v8021 = vadd.f32 %v7977, %v8006
  %v8022 = vadd.f32 %v7978, %v8006
  %v8023 = vadd.f32 %v7979, %v8006
  %v8024 = vadd.f32 %v7980, %v8006
  %v8025 = vadd.f32 %v7981, %v8006
  %v8026 = vadd.f32 %v7982, %v8006
  %v8027 = vadd.f32 %v7983, %v8006
  %v8028 = vadd.f32 %v7984, %v8006
  %v8029 = vadd.f32 %v7985, %v8011
  %v8030 = vadd.f32 %v7986, %v8011
  %v8031 = vadd.f32 %v7987, %v8011
  %v8032 = vadd.f32 %v7988, %v8011
  %v8033 = vadd.f32 %v7989, %v8011
  %v8034 = vadd.f32 %v7990, %v8011
  %v8035 = vadd.f32 %v7991, %v8011
  %v8036 = vadd.f32 %v7992, %v8011
  %v8037 = vadd.f32 %v7993, %v8011
  %v8038 = vadd.f32 %v7994, %v8011
  %v8039 = vadd.f32 %v7995, %v8011
  %v8040 = vadd.f32 %v7996, %v8011
  %v8041 = vadd.f32 %v7997, %v8011
  %v8042 = vadd.f32 %v7998, %v8011
  %v8043 = vadd.f32 %v7999, %v8011
  %v8044 = vadd.f32 %v8000, %v8011
  %v8045 = vmax.f32 %v8013, 0.0
  %v8046 = vmax.f32 %v8014, 0.0
  %v8047 = vmax.f32 %v8015, 0.0
  %v8048 = vmax.f32 %v8016, 0.0
  %v8049 = vmax.f32 %v8017, 0.0
  %v8050 = vmax.f32 %v8018, 0.0
  %v8051 = vmax.f32 %v8019, 0.0
  %v8052 = vmax.f32 %v8020, 0.0
  %v8053 = vmax.f32 %v8021, 0.0
  %v8054 = vmax.f32 %v8022, 0.0
  %v8055 = vmax.f32 %v8023, 0.0
  %v8056 = vmax.f32 %v8024, 0.0
  %v8057 = vmax.f32 %v8025, 0.0
  %v8058 = vmax.f32 %v8026, 0.0
  %v8059 = vmax.f32 %v8027, 0.0
  %v8060 = vmax.f32 %v8028, 0.0
  %v8061 = vmax.f32 %v8029, 0.0
  %v8062 = vmax.f32 %v8030, 0.0
  %v8063 = vmax.f32 %v8031, 0.0
  %v8064 = vmax.f32 %v8032, 0.0
  %v8065 = vmax.f32 %v8033, 0.0
  %v8066 = vmax.f32 %v8034, 0.0
  %v8067 = vmax.f32 %v8035, 0.0
  %v8068 = vmax.f32 %v8036, 0.0
  %v8069 = vmax.f32 %v8037, 0.0
  %v8070 = vmax.f32 %v8038, 0.0
  %v8071 = vmax.f32 %v8039, 0.0
  %v8072 = vmax.f32 %v8040, 0.0
  %v8073 = vmax.f32 %v8041, 0.0
  %v8074 = vmax.f32 %v8042, 0.0
  %v8075 = vmax.f32 %v8043, 0.0
  %v8076 = vmax.f32 %v8044, 0.0
  %8077 = vst [vmem:[#allocation4] sm:$0xff] %v8045
  %8078 = vst [vmem:[#allocation4 + $0x8] sm:$0xff] %v8046
  %8079 = vst [vmem:[#allocation4 + $0x10] sm:$0xff] %v8047
  %8080 = vst [vmem:[#allocation4 + $0x18] sm:$0xff] %v8048
  %8081 = vst [vmem:[#allocation4 + $0x20] sm:$0xff] %v8049
  %8082 = vst [vmem:[#allocation4 + $0x28] sm:$0xff] %v8050
  %8083 = vst [vmem:[#allocation4 + $0x30] sm:$0xff] %v8051
  %8084 = vst [vmem:[#allocation4 + $0x38] sm:$0xff] %v8052
  %8085 = vst [vmem:[#allocation4 + $0x40] sm:$0xff] %v8053
  %8086 = vst [vmem:[#allocation4 + $0x48] sm:$0xff] %v8054
  %8087 = vst [vmem:[#allocation4 + $0x50] sm:$0xff] %v8055
  %8088 = vst [vmem:[#allocation4 + $0x58] sm:$0xff] %v8056
  %8089 = vst [vmem:[#allocation4 + $0x60] sm:$0xff] %v8057
  %8090 = vst [vmem:[#allocation4 + $0x68] sm:$0xff] %v8058
  %8091 = vst [vmem:[#allocation4 + $0x70] sm:$0xff] %v8059
  %8092 = vst [vmem:[#allocation4 + $0x78] sm:$0xff] %v8060
  %8093 = vst [vmem:[#allocation4 + $0x98] sm:$0xff] %v8061
  %8094 = vst [vmem:[#allocation4 + $0xa0] sm:$0xff] %v8062
  %8095 = vst [vmem:[#allocation4 + $0xa8] sm:$0xff] %v8063
  %8096 = vst [vmem:[#allocation4 + $0xb0] sm:$0xff] %v8064
  %8097 = vst [vmem:[#allocation4 + $0xb8] sm:$0xff] %v8065
  %8098 = vst [vmem:[#allocation4 + $0xc0] sm:$0xff] %v8066
  %8099 = vst [vmem:[#allocation4 + $0xc8] sm:$0xff] %v8067
  %8100 = vst [vmem:[#allocation4 + $0xd0] sm:$0xff] %v8068
  %8101 = vst [vmem:[#allocation4 + $0xd8] sm:$0xff] %v8069
  %8102 = vst [vmem:[#allocation4 + $0xe0] sm:$0xff] %v8070
  %8103 = vst [vmem:[#allocation4 + $0xe8] sm:$0xff] %v8071
  %8104 = vst [vmem:[#allocation4 + $0xf0] sm:$0xff] %v8072
  %8105 = vst [vmem:[#allocation4 + $0xf8] sm:$0xff] %v8073
  %8106 = vst [vmem:[#allocation4 + $0x100] sm:$0xff] %v8074
  %8107 = vst [vmem:[#allocation4 + $0x108] sm:$0xff] %v8075
  %8108 = vst [vmem:[#allocation4 + $0x110] sm:$0xff] %v8076
  %v8109 = vld [vmem:[#allocation4] sm:$0xff]
  %v8110 = vld [vmem:[#allocation4 + $0x8] sm:$0xff]
  %v8111 = vld [vmem:[#allocation4 + $0x10] sm:$0xff]
  %v8112 = vld [vmem:[#allocation4 + $0x18] sm:$0xff]
  %v8113 = vld [vmem:[#allocation4 + $0x20] sm:$0xff]
  %v8114 = vld [vmem:[#allocation4 + $0x28] sm:$0xff]
  %v8115 = vld [vmem:[#allocation4 + $0x30] sm:$0xff]
  %v8116 = vld [vmem:[#allocation4 + $0x38] sm:$0xff]
  %v8117 = vld [vmem:[#allocation4 + $0x40] sm:$0xff]
  %v8118 = vld [vmem:[#allocation4 + $0x48] sm:$0xff]
  %v8119 = vld [vmem:[#allocation4 + $0x50] sm:$0xff]
  %v8120 = vld [vmem:[#allocation4 + $0x58] sm:$0xff]
  %v8121 = vld [vmem:[#allocation4 + $0x60] sm:$0xff]
  %v8122 = vld [vmem:[#allocation4 + $0x68] sm:$0xff]
  %v8123 = vld [vmem:[#allocation4 + $0x70] sm:$0xff]
  %v8124 = vld [vmem:[#allocation4 + $0x78] sm:$0xff]
  %v8125 = vld [vmem:[#allocation4 + $0x98] sm:$0xff]
  %v8126 = vld [vmem:[#allocation4 + $0xa0] sm:$0xff]
  %v8127 = vld [vmem:[#allocation4 + $0xa8] sm:$0xff]
  %v8128 = vld [vmem:[#allocation4 + $0xb0] sm:$0xff]
  %v8129 = vld [vmem:[#allocation4 + $0xb8] sm:$0xff]
  %v8130 = vld [vmem:[#allocation4 + $0xc0] sm:$0xff]
  %v8131 = vld [vmem:[#allocation4 + $0xc8] sm:$0xff]
  %v8132 = vld [vmem:[#allocation4 + $0xd0] sm:$0xff]
  %v8133 = vld [vmem:[#allocation4 + $0xd8] sm:$0xff]
  %v8134 = vld [vmem:[#allocation4 + $0xe0] sm:$0xff]
  %v8135 = vld [vmem:[#allocation4 + $0xe8] sm:$0xff]
  %v8136 = vld [vmem:[#allocation4 + $0xf0] sm:$0xff]
  %v8137 = vld [vmem:[#allocation4 + $0xf8] sm:$0xff]
  %v8138 = vld [vmem:[#allocation4 + $0x100] sm:$0xff]
  %v8139 = vld [vmem:[#allocation4 + $0x108] sm:$0xff]
  %v8140 = vld [vmem:[#allocation4 + $0x110] sm:$0xff]
  %v8141 = vld [vmem:[#allocation4 + $0x80] sm:$0xff]
  %v8142 = vld [vmem:[#allocation4 + $0x118] sm:$0xff]
  %8177 = vrot.lane.b32.xlu0 %v8109, 124
  %v8178 = vpop.permute.xlu0 %8177
  %8179 = vrot.lane.b32.xlu0 %v8110, 124
  %v8180 = vpop.permute.xlu0 %8179
  %8181 = vrot.lane.b32.xlu0 %v8111, 124
  %v8182 = vpop.permute.xlu0 %8181
  %8183 = vrot.lane.b32.xlu0 %v8112, 124
  %v8184 = vpop.permute.xlu0 %8183
  %8185 = vrot.lane.b32.xlu0 %v8113, 124
  %v8186 = vpop.permute.xlu0 %8185
  %8187 = vrot.lane.b32.xlu0 %v8114, 124
  %v8188 = vpop.permute.xlu0 %8187
  %8189 = vrot.lane.b32.xlu0 %v8115, 124
  %v8190 = vpop.permute.xlu0 %8189
  %8191 = vrot.lane.b32.xlu0 %v8116, 124
  %v8192 = vpop.permute.xlu0 %8191
  %8193 = vrot.lane.b32.xlu0 %v8117, 124
  %v8194 = vpop.permute.xlu0 %8193
  %8195 = vrot.lane.b32.xlu0 %v8118, 124
  %v8196 = vpop.permute.xlu0 %8195
  %8197 = vrot.lane.b32.xlu0 %v8119, 124
  %v8198 = vpop.permute.xlu0 %8197
  %8199 = vrot.lane.b32.xlu0 %v8120, 124
  %v8200 = vpop.permute.xlu0 %8199
  %8201 = vrot.lane.b32.xlu0 %v8121, 124
  %v8202 = vpop.permute.xlu0 %8201
  %8203 = vrot.lane.b32.xlu0 %v8122, 124
  %v8204 = vpop.permute.xlu0 %8203
  %8205 = vrot.lane.b32.xlu0 %v8123, 124
  %v8206 = vpop.permute.xlu0 %8205
  %8207 = vrot.lane.b32.xlu0 %v8124, 124
  %v8208 = vpop.permute.xlu0 %8207
  %8209 = vrot.lane.b32.xlu0 %v8141, 124
  %v8210 = vpop.permute.xlu0 %8209
  %8211 = vrot.lane.b32.xlu0 %v8125, 124
  %v8212 = vpop.permute.xlu0 %8211
  %8213 = vrot.lane.b32.xlu0 %v8126, 124
  %v8214 = vpop.permute.xlu0 %8213
  %8215 = vrot.lane.b32.xlu0 %v8127, 124
  %v8216 = vpop.permute.xlu0 %8215
  %8217 = vrot.lane.b32.xlu0 %v8128, 124
  %v8218 = vpop.permute.xlu0 %8217
  %8219 = vrot.lane.b32.xlu0 %v8129, 124
  %v8220 = vpop.permute.xlu0 %8219
  %8221 = vrot.lane.b32.xlu0 %v8130, 124
  %v8222 = vpop.permute.xlu0 %8221
  %8223 = vrot.lane.b32.xlu0 %v8131, 124
  %v8224 = vpop.permute.xlu0 %8223
  %8225 = vrot.lane.b32.xlu0 %v8132, 124
  %v8226 = vpop.permute.xlu0 %8225
  %8227 = vrot.lane.b32.xlu0 %v8133, 124
  %v8228 = vpop.permute.xlu0 %8227
  %8229 = vrot.lane.b32.xlu0 %v8134, 124
  %v8230 = vpop.permute.xlu0 %8229
  %8231 = vrot.lane.b32.xlu0 %v8135, 124
  %v8232 = vpop.permute.xlu0 %8231
  %8233 = vrot.lane.b32.xlu0 %v8136, 124
  %v8234 = vpop.permute.xlu0 %8233
  %8235 = vrot.lane.b32.xlu0 %v8137, 124
  %v8236 = vpop.permute.xlu0 %8235
  %8237 = vrot.lane.b32.xlu0 %v8138, 124
  %v8238 = vpop.permute.xlu0 %8237
  %8239 = vrot.lane.b32.xlu0 %v8139, 124
  %v8240 = vpop.permute.xlu0 %8239
  %8241 = vrot.lane.b32.xlu0 %v8140, 124
  %v8242 = vpop.permute.xlu0 %8241
  %8243 = vrot.lane.b32.xlu0 %v8142, 124
  %v8244 = vpop.permute.xlu0 %8243
  %v8245 = vsel %vm462, %v8178, %v8180
  %v8246 = vsel %vm462, %v8180, %v8182
  %v8247 = vsel %vm462, %v8182, %v8184
  %v8248 = vsel %vm462, %v8184, %v8186
  %v8249 = vsel %vm462, %v8186, %v8188
  %v8250 = vsel %vm462, %v8188, %v8190
  %v8251 = vsel %vm462, %v8190, %v8192
  %v8252 = vsel %vm462, %v8192, %v8194
  %v8253 = vsel %vm462, %v8194, %v8196
  %v8254 = vsel %vm462, %v8196, %v8198
  %v8255 = vsel %vm462, %v8198, %v8200
  %v8256 = vsel %vm462, %v8200, %v8202
  %v8257 = vsel %vm462, %v8202, %v8204
  %v8258 = vsel %vm462, %v8204, %v8206
  %v8259 = vsel %vm462, %v8206, %v8208
  %v8260 = vsel %vm462, %v8208, %v8210
  %v8261 = vsel %vm462, %v8212, %v8214
  %v8262 = vsel %vm462, %v8214, %v8216
  %v8263 = vsel %vm462, %v8216, %v8218
  %v8264 = vsel %vm462, %v8218, %v8220
  %v8265 = vsel %vm462, %v8220, %v8222
  %v8266 = vsel %vm462, %v8222, %v8224
  %v8267 = vsel %vm462, %v8224, %v8226
  %v8268 = vsel %vm462, %v8226, %v8228
  %v8269 = vsel %vm462, %v8228, %v8230
  %v8270 = vsel %vm462, %v8230, %v8232
  %v8271 = vsel %vm462, %v8232, %v8234
  %v8272 = vsel %vm462, %v8234, %v8236
  %v8273 = vsel %vm462, %v8236, %v8238
  %v8274 = vsel %vm462, %v8238, %v8240
  %v8275 = vsel %vm462, %v8240, %v8242
  %v8276 = vsel %vm462, %v8242, %v8244
  %v8309 = vmax.f32 %v8109, %v8245
  %v8310 = vmax.f32 %v8110, %v8246
  %v8311 = vmax.f32 %v8111, %v8247
  %v8312 = vmax.f32 %v8112, %v8248
  %v8313 = vmax.f32 %v8113, %v8249
  %v8314 = vmax.f32 %v8114, %v8250
  %v8315 = vmax.f32 %v8115, %v8251
  %v8316 = vmax.f32 %v8116, %v8252
  %v8317 = vmax.f32 %v8117, %v8253
  %v8318 = vmax.f32 %v8118, %v8254
  %v8319 = vmax.f32 %v8119, %v8255
  %v8320 = vmax.f32 %v8120, %v8256
  %v8321 = vmax.f32 %v8121, %v8257
  %v8322 = vmax.f32 %v8122, %v8258
  %v8323 = vmax.f32 %v8123, %v8259
  %v8324 = vmax.f32 %v8124, %v8260
  %v8325 = vmax.f32 %v8125, %v8261
  %v8326 = vmax.f32 %v8126, %v8262
  %v8327 = vmax.f32 %v8127, %v8263
  %v8328 = vmax.f32 %v8128, %v8264
  %v8329 = vmax.f32 %v8129, %v8265
  %v8330 = vmax.f32 %v8130, %v8266
  %v8331 = vmax.f32 %v8131, %v8267
  %v8332 = vmax.f32 %v8132, %v8268
  %v8333 = vmax.f32 %v8133, %v8269
  %v8334 = vmax.f32 %v8134, %v8270
  %v8335 = vmax.f32 %v8135, %v8271
  %v8336 = vmax.f32 %v8136, %v8272
  %v8337 = vmax.f32 %v8137, %v8273
  %v8338 = vmax.f32 %v8138, %v8274
  %v8339 = vmax.f32 %v8139, %v8275
  %v8340 = vmax.f32 %v8140, %v8276
  %v8341 = vmax.f32 %v8309, %v8110
  %v8342 = vmax.f32 %v8310, %v8111
  %v8343 = vmax.f32 %v8311, %v8112
  %v8344 = vmax.f32 %v8312, %v8113
  %v8345 = vmax.f32 %v8313, %v8114
  %v8346 = vmax.f32 %v8314, %v8115
  %v8347 = vmax.f32 %v8315, %v8116
  %v8348 = vmax.f32 %v8316, %v8117
  %v8349 = vmax.f32 %v8317, %v8118
  %v8350 = vmax.f32 %v8318, %v8119
  %v8351 = vmax.f32 %v8319, %v8120
  %v8352 = vmax.f32 %v8320, %v8121
  %v8353 = vmax.f32 %v8321, %v8122
  %v8354 = vmax.f32 %v8322, %v8123
  %v8355 = vmax.f32 %v8323, %v8124
  %v8356 = vmax.f32 %v8324, %v8141
  %v8357 = vmax.f32 %v8325, %v8126
  %v8358 = vmax.f32 %v8326, %v8127
  %v8359 = vmax.f32 %v8327, %v8128
  %v8360 = vmax.f32 %v8328, %v8129
  %v8361 = vmax.f32 %v8329, %v8130
  %v8362 = vmax.f32 %v8330, %v8131
  %v8363 = vmax.f32 %v8331, %v8132
  %v8364 = vmax.f32 %v8332, %v8133
  %v8365 = vmax.f32 %v8333, %v8134
  %v8366 = vmax.f32 %v8334, %v8135
  %v8367 = vmax.f32 %v8335, %v8136
  %v8368 = vmax.f32 %v8336, %v8137
  %v8369 = vmax.f32 %v8337, %v8138
  %v8370 = vmax.f32 %v8338, %v8139
  %v8371 = vmax.f32 %v8339, %v8140
  %v8372 = vmax.f32 %v8340, %v8142
  %v8373 = vld [vmem:[#allocation4 + $0x88] sm:$0xff]
  %v8374 = vld [vmem:[#allocation4 + $0x120] sm:$0xff]
  %8377 = vrot.lane.b32.xlu0 %v8373, 124
  %v8378 = vpop.permute.xlu0 %8377
  %8379 = vrot.lane.b32.xlu0 %v8374, 124
  %v8380 = vpop.permute.xlu0 %8379
  %v8381 = vsel %vm462, %v8210, %v8378
  %v8382 = vsel %vm462, %v8244, %v8380
  %v8385 = vmax.f32 %v8341, %v8246
  %v8386 = vmax.f32 %v8342, %v8247
  %v8387 = vmax.f32 %v8343, %v8248
  %v8388 = vmax.f32 %v8344, %v8249
  %v8389 = vmax.f32 %v8345, %v8250
  %v8390 = vmax.f32 %v8346, %v8251
  %v8391 = vmax.f32 %v8347, %v8252
  %v8392 = vmax.f32 %v8348, %v8253
  %v8393 = vmax.f32 %v8349, %v8254
  %v8394 = vmax.f32 %v8350, %v8255
  %v8395 = vmax.f32 %v8351, %v8256
  %v8396 = vmax.f32 %v8352, %v8257
  %v8397 = vmax.f32 %v8353, %v8258
  %v8398 = vmax.f32 %v8354, %v8259
  %v8399 = vmax.f32 %v8355, %v8260
  %v8400 = vmax.f32 %v8356, %v8381
  %v8401 = vmax.f32 %v8357, %v8262
  %v8402 = vmax.f32 %v8358, %v8263
  %v8403 = vmax.f32 %v8359, %v8264
  %v8404 = vmax.f32 %v8360, %v8265
  %v8405 = vmax.f32 %v8361, %v8266
  %v8406 = vmax.f32 %v8362, %v8267
  %v8407 = vmax.f32 %v8363, %v8268
  %v8408 = vmax.f32 %v8364, %v8269
  %v8409 = vmax.f32 %v8365, %v8270
  %v8410 = vmax.f32 %v8366, %v8271
  %v8411 = vmax.f32 %v8367, %v8272
  %v8412 = vmax.f32 %v8368, %v8273
  %v8413 = vmax.f32 %v8369, %v8274
  %v8414 = vmax.f32 %v8370, %v8275
  %v8415 = vmax.f32 %v8371, %v8276
  %v8416 = vmax.f32 %v8372, %v8382
  %8417 = vst [vmem:[#allocation5] sm:$0xff] %v8385
  %8418 = vst [vmem:[#allocation5 + $0x8] sm:$0xff] %v8386
  %8419 = vst [vmem:[#allocation5 + $0x10] sm:$0xff] %v8387
  %8420 = vst [vmem:[#allocation5 + $0x18] sm:$0xff] %v8388
  %8421 = vst [vmem:[#allocation5 + $0x20] sm:$0xff] %v8389
  %8422 = vst [vmem:[#allocation5 + $0x28] sm:$0xff] %v8390
  %8423 = vst [vmem:[#allocation5 + $0x30] sm:$0xff] %v8391
  %8424 = vst [vmem:[#allocation5 + $0x38] sm:$0xff] %v8392
  %8425 = vst [vmem:[#allocation5 + $0x40] sm:$0xff] %v8393
  %8426 = vst [vmem:[#allocation5 + $0x48] sm:$0xff] %v8394
  %8427 = vst [vmem:[#allocation5 + $0x50] sm:$0xff] %v8395
  %8428 = vst [vmem:[#allocation5 + $0x58] sm:$0xff] %v8396
  %8429 = vst [vmem:[#allocation5 + $0x60] sm:$0xff] %v8397
  %8430 = vst [vmem:[#allocation5 + $0x68] sm:$0xff] %v8398
  %8431 = vst [vmem:[#allocation5 + $0x70] sm:$0xff] %v8399
  %8432 = vst [vmem:[#allocation5 + $0x78] sm:$0xff] %v8400
  %8433 = vst [vmem:[#allocation5 + $0x80] sm:$0xff] %v8401
  %8434 = vst [vmem:[#allocation5 + $0x88] sm:$0xff] %v8402
  %8435 = vst [vmem:[#allocation5 + $0x90] sm:$0xff] %v8403
  %8436 = vst [vmem:[#allocation5 + $0x98] sm:$0xff] %v8404
  %8437 = vst [vmem:[#allocation5 + $0xa0] sm:$0xff] %v8405
  %8438 = vst [vmem:[#allocation5 + $0xa8] sm:$0xff] %v8406
  %8439 = vst [vmem:[#allocation5 + $0xb0] sm:$0xff] %v8407
  %8440 = vst [vmem:[#allocation5 + $0xb8] sm:$0xff] %v8408
  %8441 = vst [vmem:[#allocation5 + $0xc0] sm:$0xff] %v8409
  %8442 = vst [vmem:[#allocation5 + $0xc8] sm:$0xff] %v8410
  %8443 = vst [vmem:[#allocation5 + $0xd0] sm:$0xff] %v8411
  %8444 = vst [vmem:[#allocation5 + $0xd8] sm:$0xff] %v8412
  %8445 = vst [vmem:[#allocation5 + $0xe0] sm:$0xff] %v8413
  %8446 = vst [vmem:[#allocation5 + $0xe8] sm:$0xff] %v8414
  %8447 = vst [vmem:[#allocation5 + $0xf0] sm:$0xff] %v8415
  %8448 = vst [vmem:[#allocation5 + $0xf8] sm:$0xff] %v8416
  %v8449 = vld [vmem:[#allocation5] sm:$0xff]
  %v8450 = vld [vmem:[#allocation5 + $0x80] sm:$0xff]
  %vm8451 = vcmask 15360
  %8452 = vst.msk [vmem:[#allocation6] sm:$0xff] %vm8451, %v8449
  %8453 = vst.msk [vmem:[#allocation6 + $0x8] sm:$0xff] %vm8451, %v8450
  %v8454 = vld [vmem:[#allocation5] sm:$0xff]
  %v8455 = vld [vmem:[#allocation5 + $0x80] sm:$0xff]
  %8458 = vrot.lane.b32.xlu0 %v8454, 120
  %v8459 = vpop.permute.xlu0 %8458
  %8460 = vrot.lane.b32.xlu0 %v8455, 120
  %v8461 = vpop.permute.xlu0 %8460
  %8464 = vst.msk [vmem:[#allocation6 + $0x10] sm:$0xff] %vm8451, %v8459
  %8465 = vst.msk [vmem:[#allocation6 + $0x18] sm:$0xff] %vm8451, %v8461
  %v8466 = vld [vmem:[#allocation5] sm:$0xff]
  %v8467 = vld [vmem:[#allocation5 + $0x80] sm:$0xff]
  %8470 = vrot.lane.b32.xlu0 %v8466, 112
  %v8471 = vpop.permute.xlu0 %8470
  %8472 = vrot.lane.b32.xlu0 %v8467, 112
  %v8473 = vpop.permute.xlu0 %8472
  %8476 = vst.msk [vmem:[#allocation6 + $0x20] sm:$0xff] %vm8451, %v8471
  %8477 = vst.msk [vmem:[#allocation6 + $0x28] sm:$0xff] %vm8451, %v8473
  %v8478 = vld [vmem:[#allocation5] sm:$0xff]
  %v8479 = vld [vmem:[#allocation5 + $0x80] sm:$0xff]
  %8482 = vrot.lane.b32.xlu0 %v8478, 104
  %v8483 = vpop.permute.xlu0 %8482
  %8484 = vrot.lane.b32.xlu0 %v8479, 104
  %v8485 = vpop.permute.xlu0 %8484
  %8488 = vst.msk [vmem:[#allocation6 + $0x30] sm:$0xff] %vm8451, %v8483
  %8489 = vst.msk [vmem:[#allocation6 + $0x38] sm:$0xff] %vm8451, %v8485
  %v8490 = vld [vmem:[#allocation5] sm:$0xff]
  %v8491 = vld [vmem:[#allocation5 + $0x80] sm:$0xff]
  %8494 = vrot.lane.b32.xlu0 %v8490, 96
  %v8495 = vpop.permute.xlu0 %8494
  %8496 = vrot.lane.b32.xlu0 %v8491, 96
  %v8497 = vpop.permute.xlu0 %8496
  %8500 = vst.msk [vmem:[#allocation6 + $0x40] sm:$0xff] %vm8451, %v8495
  %8501 = vst.msk [vmem:[#allocation6 + $0x48] sm:$0xff] %vm8451, %v8497
  %v8502 = vld [vmem:[#allocation5] sm:$0xff]
  %v8503 = vld [vmem:[#allocation5 + $0x80] sm:$0xff]
  %8506 = vrot.lane.b32.xlu0 %v8502, 88
  %v8507 = vpop.permute.xlu0 %8506
  %8508 = vrot.lane.b32.xlu0 %v8503, 88
  %v8509 = vpop.permute.xlu0 %8508
  %8512 = vst.msk [vmem:[#allocation6 + $0x50] sm:$0xff] %vm8451, %v8507
  %8513 = vst.msk [vmem:[#allocation6 + $0x58] sm:$0xff] %vm8451, %v8509
  %v8514 = vld [vmem:[#allocation5 + $0x10] sm:$0xff]
  %v8515 = vld [vmem:[#allocation5 + $0x90] sm:$0xff]
  %8516 = vst.msk [vmem:[#allocation6 + $0x60] sm:$0xff] %vm8451, %v8514
  %8517 = vst.msk [vmem:[#allocation6 + $0x68] sm:$0xff] %vm8451, %v8515
  %v8518 = vld [vmem:[#allocation5 + $0x10] sm:$0xff]
  %v8519 = vld [vmem:[#allocation5 + $0x90] sm:$0xff]
  %8522 = vrot.lane.b32.xlu0 %v8518, 120
  %v8523 = vpop.permute.xlu0 %8522
  %8524 = vrot.lane.b32.xlu0 %v8519, 120
  %v8525 = vpop.permute.xlu0 %8524
  %8528 = vst.msk [vmem:[#allocation6 + $0x70] sm:$0xff] %vm8451, %v8523
  %8529 = vst.msk [vmem:[#allocation6 + $0x78] sm:$0xff] %vm8451, %v8525
  %v8530 = vld [vmem:[#allocation5 + $0x10] sm:$0xff]
  %v8531 = vld [vmem:[#allocation5 + $0x90] sm:$0xff]
  %8534 = vrot.lane.b32.xlu0 %v8530, 112
  %v8535 = vpop.permute.xlu0 %8534
  %8536 = vrot.lane.b32.xlu0 %v8531, 112
  %v8537 = vpop.permute.xlu0 %8536
  %8540 = vst.msk [vmem:[#allocation6 + $0x80] sm:$0xff] %vm8451, %v8535
  %8541 = vst.msk [vmem:[#allocation6 + $0x88] sm:$0xff] %vm8451, %v8537
  %v8542 = vld [vmem:[#allocation5 + $0x10] sm:$0xff]
  %v8543 = vld [vmem:[#allocation5 + $0x90] sm:$0xff]
  %8546 = vrot.lane.b32.xlu0 %v8542, 104
  %v8547 = vpop.permute.xlu0 %8546
  %8548 = vrot.lane.b32.xlu0 %v8543, 104
  %v8549 = vpop.permute.xlu0 %8548
  %8552 = vst.msk [vmem:[#allocation6 + $0x90] sm:$0xff] %vm8451, %v8547
  %8553 = vst.msk [vmem:[#allocation6 + $0x98] sm:$0xff] %vm8451, %v8549
  %v8554 = vld [vmem:[#allocation5 + $0x10] sm:$0xff]
  %v8555 = vld [vmem:[#allocation5 + $0x90] sm:$0xff]
  %8558 = vrot.lane.b32.xlu0 %v8554, 96
  %v8559 = vpop.permute.xlu0 %8558
  %8560 = vrot.lane.b32.xlu0 %v8555, 96
  %v8561 = vpop.permute.xlu0 %8560
  %8564 = vst.msk [vmem:[#allocation6 + $0xa0] sm:$0xff] %vm8451, %v8559
  %8565 = vst.msk [vmem:[#allocation6 + $0xa8] sm:$0xff] %vm8451, %v8561
  %v8566 = vld [vmem:[#allocation5 + $0x10] sm:$0xff]
  %v8567 = vld [vmem:[#allocation5 + $0x90] sm:$0xff]
  %8570 = vrot.lane.b32.xlu0 %v8566, 88
  %v8571 = vpop.permute.xlu0 %8570
  %8572 = vrot.lane.b32.xlu0 %v8567, 88
  %v8573 = vpop.permute.xlu0 %8572
  %8576 = vst.msk [vmem:[#allocation6 + $0xb0] sm:$0xff] %vm8451, %v8571
  %8577 = vst.msk [vmem:[#allocation6 + $0xb8] sm:$0xff] %vm8451, %v8573
  %v8578 = vld [vmem:[#allocation5 + $0x20] sm:$0xff]
  %v8579 = vld [vmem:[#allocation5 + $0xa0] sm:$0xff]
  %8580 = vst.msk [vmem:[#allocation6 + $0xc0] sm:$0xff] %vm8451, %v8578
  %8581 = vst.msk [vmem:[#allocation6 + $0xc8] sm:$0xff] %vm8451, %v8579
  %v8582 = vld [vmem:[#allocation5 + $0x20] sm:$0xff]
  %v8583 = vld [vmem:[#allocation5 + $0xa0] sm:$0xff]
  %8586 = vrot.lane.b32.xlu0 %v8582, 120
  %v8587 = vpop.permute.xlu0 %8586
  %8588 = vrot.lane.b32.xlu0 %v8583, 120
  %v8589 = vpop.permute.xlu0 %8588
  %8592 = vst.msk [vmem:[#allocation6 + $0xd0] sm:$0xff] %vm8451, %v8587
  %8593 = vst.msk [vmem:[#allocation6 + $0xd8] sm:$0xff] %vm8451, %v8589
  %v8594 = vld [vmem:[#allocation5 + $0x20] sm:$0xff]
  %v8595 = vld [vmem:[#allocation5 + $0xa0] sm:$0xff]
  %8598 = vrot.lane.b32.xlu0 %v8594, 112
  %v8599 = vpop.permute.xlu0 %8598
  %8600 = vrot.lane.b32.xlu0 %v8595, 112
  %v8601 = vpop.permute.xlu0 %8600
  %8604 = vst.msk [vmem:[#allocation6 + $0xe0] sm:$0xff] %vm8451, %v8599
  %8605 = vst.msk [vmem:[#allocation6 + $0xe8] sm:$0xff] %vm8451, %v8601
  %v8606 = vld [vmem:[#allocation5 + $0x20] sm:$0xff]
  %v8607 = vld [vmem:[#allocation5 + $0xa0] sm:$0xff]
  %8610 = vrot.lane.b32.xlu0 %v8606, 104
  %v8611 = vpop.permute.xlu0 %8610
  %8612 = vrot.lane.b32.xlu0 %v8607, 104
  %v8613 = vpop.permute.xlu0 %8612
  %8616 = vst.msk [vmem:[#allocation6 + $0xf0] sm:$0xff] %vm8451, %v8611
  %8617 = vst.msk [vmem:[#allocation6 + $0xf8] sm:$0xff] %vm8451, %v8613
  %v8618 = vld [vmem:[#allocation5 + $0x20] sm:$0xff]
  %v8619 = vld [vmem:[#allocation5 + $0xa0] sm:$0xff]
  %8622 = vrot.lane.b32.xlu0 %v8618, 96
  %v8623 = vpop.permute.xlu0 %8622
  %8624 = vrot.lane.b32.xlu0 %v8619, 96
  %v8625 = vpop.permute.xlu0 %8624
  %8628 = vst.msk [vmem:[#allocation6 + $0x100] sm:$0xff] %vm8451, %v8623
  %8629 = vst.msk [vmem:[#allocation6 + $0x108] sm:$0xff] %vm8451, %v8625
  %v8630 = vld [vmem:[#allocation5 + $0x20] sm:$0xff]
  %v8631 = vld [vmem:[#allocation5 + $0xa0] sm:$0xff]
  %8634 = vrot.lane.b32.xlu0 %v8630, 88
  %v8635 = vpop.permute.xlu0 %8634
  %8636 = vrot.lane.b32.xlu0 %v8631, 88
  %v8637 = vpop.permute.xlu0 %8636
  %8640 = vst.msk [vmem:[#allocation6 + $0x110] sm:$0xff] %vm8451, %v8635
  %8641 = vst.msk [vmem:[#allocation6 + $0x118] sm:$0xff] %vm8451, %v8637
  %v8642 = vld [vmem:[#allocation5 + $0x30] sm:$0xff]
  %v8643 = vld [vmem:[#allocation5 + $0xb0] sm:$0xff]
  %8644 = vst.msk [vmem:[#allocation6 + $0x120] sm:$0xff] %vm8451, %v8642
  %8645 = vst.msk [vmem:[#allocation6 + $0x128] sm:$0xff] %vm8451, %v8643
  %v8646 = vld [vmem:[#allocation5 + $0x30] sm:$0xff]
  %v8647 = vld [vmem:[#allocation5 + $0xb0] sm:$0xff]
  %8650 = vrot.lane.b32.xlu0 %v8646, 120
  %v8651 = vpop.permute.xlu0 %8650
  %8652 = vrot.lane.b32.xlu0 %v8647, 120
  %v8653 = vpop.permute.xlu0 %8652
  %8656 = vst.msk [vmem:[#allocation6 + $0x130] sm:$0xff] %vm8451, %v8651
  %8657 = vst.msk [vmem:[#allocation6 + $0x138] sm:$0xff] %vm8451, %v8653
  %v8658 = vld [vmem:[#allocation5 + $0x30] sm:$0xff]
  %v8659 = vld [vmem:[#allocation5 + $0xb0] sm:$0xff]
  %8662 = vrot.lane.b32.xlu0 %v8658, 112
  %v8663 = vpop.permute.xlu0 %8662
  %8664 = vrot.lane.b32.xlu0 %v8659, 112
  %v8665 = vpop.permute.xlu0 %8664
  %8668 = vst.msk [vmem:[#allocation6 + $0x140] sm:$0xff] %vm8451, %v8663
  %8669 = vst.msk [vmem:[#allocation6 + $0x148] sm:$0xff] %vm8451, %v8665
  %v8670 = vld [vmem:[#allocation5 + $0x30] sm:$0xff]
  %v8671 = vld [vmem:[#allocation5 + $0xb0] sm:$0xff]
  %8674 = vrot.lane.b32.xlu0 %v8670, 104
  %v8675 = vpop.permute.xlu0 %8674
  %8676 = vrot.lane.b32.xlu0 %v8671, 104
  %v8677 = vpop.permute.xlu0 %8676
  %8680 = vst.msk [vmem:[#allocation6 + $0x150] sm:$0xff] %vm8451, %v8675
  %8681 = vst.msk [vmem:[#allocation6 + $0x158] sm:$0xff] %vm8451, %v8677
  %v8682 = vld [vmem:[#allocation5 + $0x30] sm:$0xff]
  %v8683 = vld [vmem:[#allocation5 + $0xb0] sm:$0xff]
  %8686 = vrot.lane.b32.xlu0 %v8682, 96
  %v8687 = vpop.permute.xlu0 %8686
  %8688 = vrot.lane.b32.xlu0 %v8683, 96
  %v8689 = vpop.permute.xlu0 %8688
  %8692 = vst.msk [vmem:[#allocation6 + $0x160] sm:$0xff] %vm8451, %v8687
  %8693 = vst.msk [vmem:[#allocation6 + $0x168] sm:$0xff] %vm8451, %v8689
  %v8694 = vld [vmem:[#allocation5 + $0x30] sm:$0xff]
  %v8695 = vld [vmem:[#allocation5 + $0xb0] sm:$0xff]
  %8698 = vrot.lane.b32.xlu0 %v8694, 88
  %v8699 = vpop.permute.xlu0 %8698
  %8700 = vrot.lane.b32.xlu0 %v8695, 88
  %v8701 = vpop.permute.xlu0 %8700
  %8704 = vst.msk [vmem:[#allocation6 + $0x170] sm:$0xff] %vm8451, %v8699
  %8705 = vst.msk [vmem:[#allocation6 + $0x178] sm:$0xff] %vm8451, %v8701
  %v8706 = vld [vmem:[#allocation5 + $0x40] sm:$0xff]
  %v8707 = vld [vmem:[#allocation5 + $0xc0] sm:$0xff]
  %8708 = vst.msk [vmem:[#allocation6 + $0x180] sm:$0xff] %vm8451, %v8706
  %8709 = vst.msk [vmem:[#allocation6 + $0x188] sm:$0xff] %vm8451, %v8707
  %v8710 = vld [vmem:[#allocation5 + $0x40] sm:$0xff]
  %v8711 = vld [vmem:[#allocation5 + $0xc0] sm:$0xff]
  %8714 = vrot.lane.b32.xlu0 %v8710, 120
  %v8715 = vpop.permute.xlu0 %8714
  %8716 = vrot.lane.b32.xlu0 %v8711, 120
  %v8717 = vpop.permute.xlu0 %8716
  %8720 = vst.msk [vmem:[#allocation6 + $0x190] sm:$0xff] %vm8451, %v8715
  %8721 = vst.msk [vmem:[#allocation6 + $0x198] sm:$0xff] %vm8451, %v8717
  %v8722 = vld [vmem:[#allocation5 + $0x40] sm:$0xff]
  %v8723 = vld [vmem:[#allocation5 + $0xc0] sm:$0xff]
  %8726 = vrot.lane.b32.xlu0 %v8722, 112
  %v8727 = vpop.permute.xlu0 %8726
  %8728 = vrot.lane.b32.xlu0 %v8723, 112
  %v8729 = vpop.permute.xlu0 %8728
  %8732 = vst.msk [vmem:[#allocation6 + $0x1a0] sm:$0xff] %vm8451, %v8727
  %8733 = vst.msk [vmem:[#allocation6 + $0x1a8] sm:$0xff] %vm8451, %v8729
  %v8734 = vld [vmem:[#allocation5 + $0x40] sm:$0xff]
  %v8735 = vld [vmem:[#allocation5 + $0xc0] sm:$0xff]
  %8738 = vrot.lane.b32.xlu0 %v8734, 104
  %v8739 = vpop.permute.xlu0 %8738
  %8740 = vrot.lane.b32.xlu0 %v8735, 104
  %v8741 = vpop.permute.xlu0 %8740
  %8744 = vst.msk [vmem:[#allocation6 + $0x1b0] sm:$0xff] %vm8451, %v8739
  %8745 = vst.msk [vmem:[#allocation6 + $0x1b8] sm:$0xff] %vm8451, %v8741
  %v8746 = vld [vmem:[#allocation5 + $0x40] sm:$0xff]
  %v8747 = vld [vmem:[#allocation5 + $0xc0] sm:$0xff]
  %8750 = vrot.lane.b32.xlu0 %v8746, 96
  %v8751 = vpop.permute.xlu0 %8750
  %8752 = vrot.lane.b32.xlu0 %v8747, 96
  %v8753 = vpop.permute.xlu0 %8752
  %8756 = vst.msk [vmem:[#allocation6 + $0x1c0] sm:$0xff] %vm8451, %v8751
  %8757 = vst.msk [vmem:[#allocation6 + $0x1c8] sm:$0xff] %vm8451, %v8753
  %v8758 = vld [vmem:[#allocation5 + $0x40] sm:$0xff]
  %v8759 = vld [vmem:[#allocation5 + $0xc0] sm:$0xff]
  %8762 = vrot.lane.b32.xlu0 %v8758, 88
  %v8763 = vpop.permute.xlu0 %8762
  %8764 = vrot.lane.b32.xlu0 %v8759, 88
  %v8765 = vpop.permute.xlu0 %8764
  %8768 = vst.msk [vmem:[#allocation6 + $0x1d0] sm:$0xff] %vm8451, %v8763
  %8769 = vst.msk [vmem:[#allocation6 + $0x1d8] sm:$0xff] %vm8451, %v8765
  %v8770 = vld [vmem:[#allocation5 + $0x50] sm:$0xff]
  %v8771 = vld [vmem:[#allocation5 + $0xd0] sm:$0xff]
  %8772 = vst.msk [vmem:[#allocation6 + $0x1e0] sm:$0xff] %vm8451, %v8770
  %8773 = vst.msk [vmem:[#allocation6 + $0x1e8] sm:$0xff] %vm8451, %v8771
  %v8774 = vld [vmem:[#allocation5 + $0x50] sm:$0xff]
  %v8775 = vld [vmem:[#allocation5 + $0xd0] sm:$0xff]
  %8778 = vrot.lane.b32.xlu0 %v8774, 120
  %v8779 = vpop.permute.xlu0 %8778
  %8780 = vrot.lane.b32.xlu0 %v8775, 120
  %v8781 = vpop.permute.xlu0 %8780
  %8784 = vst.msk [vmem:[#allocation6 + $0x1f0] sm:$0xff] %vm8451, %v8779
  %8785 = vst.msk [vmem:[#allocation6 + $0x1f8] sm:$0xff] %vm8451, %v8781
  %v8786 = vld [vmem:[#allocation5 + $0x50] sm:$0xff]
  %v8787 = vld [vmem:[#allocation5 + $0xd0] sm:$0xff]
  %8790 = vrot.lane.b32.xlu0 %v8786, 112
  %v8791 = vpop.permute.xlu0 %8790
  %8792 = vrot.lane.b32.xlu0 %v8787, 112
  %v8793 = vpop.permute.xlu0 %8792
  %8796 = vst.msk [vmem:[#allocation6 + $0x200] sm:$0xff] %vm8451, %v8791
  %8797 = vst.msk [vmem:[#allocation6 + $0x208] sm:$0xff] %vm8451, %v8793
  %v8798 = vld [vmem:[#allocation5 + $0x50] sm:$0xff]
  %v8799 = vld [vmem:[#allocation5 + $0xd0] sm:$0xff]
  %8802 = vrot.lane.b32.xlu0 %v8798, 104
  %v8803 = vpop.permute.xlu0 %8802
  %8804 = vrot.lane.b32.xlu0 %v8799, 104
  %v8805 = vpop.permute.xlu0 %8804
  %8808 = vst.msk [vmem:[#allocation6 + $0x210] sm:$0xff] %vm8451, %v8803
  %8809 = vst.msk [vmem:[#allocation6 + $0x218] sm:$0xff] %vm8451, %v8805
  %v8810 = vld [vmem:[#allocation5 + $0x50] sm:$0xff]
  %v8811 = vld [vmem:[#allocation5 + $0xd0] sm:$0xff]
  %8814 = vrot.lane.b32.xlu0 %v8810, 96
  %v8815 = vpop.permute.xlu0 %8814
  %8816 = vrot.lane.b32.xlu0 %v8811, 96
  %v8817 = vpop.permute.xlu0 %8816
  %8820 = vst.msk [vmem:[#allocation6 + $0x220] sm:$0xff] %vm8451, %v8815
  %8821 = vst.msk [vmem:[#allocation6 + $0x228] sm:$0xff] %vm8451, %v8817
  %v8822 = vld [vmem:[#allocation5 + $0x50] sm:$0xff]
  %v8823 = vld [vmem:[#allocation5 + $0xd0] sm:$0xff]
  %8826 = vrot.lane.b32.xlu0 %v8822, 88
  %v8827 = vpop.permute.xlu0 %8826
  %8828 = vrot.lane.b32.xlu0 %v8823, 88
  %v8829 = vpop.permute.xlu0 %8828
  %8832 = vst.msk [vmem:[#allocation6 + $0x230] sm:$0xff] %vm8451, %v8827
  %8833 = vst.msk [vmem:[#allocation6 + $0x238] sm:$0xff] %vm8451, %v8829
  %v8834 = vld [vmem:[#allocation6] sm:$0xff]
  %v8835 = vld [vmem:[#allocation6 + $0x8] sm:$0xff]
  %v8836 = vld [vmem:[#allocation6 + $0x10] sm:$0xff]
  %v8837 = vld [vmem:[#allocation6 + $0x18] sm:$0xff]
  %v8838 = vld [vmem:[#allocation6 + $0x20] sm:$0xff]
  %v8839 = vld [vmem:[#allocation6 + $0x28] sm:$0xff]
  %v8840 = vld [vmem:[#allocation6 + $0x30] sm:$0xff]
  %v8841 = vld [vmem:[#allocation6 + $0x38] sm:$0xff]
  %v8842 = vld [vmem:[#allocation6 + $0x40] sm:$0xff]
  %v8843 = vld [vmem:[#allocation6 + $0x48] sm:$0xff]
  %v8844 = vld [vmem:[#allocation6 + $0x50] sm:$0xff]
  %v8845 = vld [vmem:[#allocation6 + $0x58] sm:$0xff]
  %v8846 = vld [vmem:[#allocation6 + $0x60] sm:$0xff]
  %v8847 = vld [vmem:[#allocation6 + $0x68] sm:$0xff]
  %v8848 = vld [vmem:[#allocation6 + $0x70] sm:$0xff]
  %v8849 = vld [vmem:[#allocation6 + $0x78] sm:$0xff]
  %v8850 = vld [vmem:[#allocation6 + $0x80] sm:$0xff]
  %v8851 = vld [vmem:[#allocation6 + $0x88] sm:$0xff]
  %v8852 = vld [vmem:[#allocation6 + $0x90] sm:$0xff]
  %v8853 = vld [vmem:[#allocation6 + $0x98] sm:$0xff]
  %v8854 = vld [vmem:[#allocation6 + $0xa0] sm:$0xff]
  %v8855 = vld [vmem:[#allocation6 + $0xa8] sm:$0xff]
  %v8856 = vld [vmem:[#allocation6 + $0xb0] sm:$0xff]
  %v8857 = vld [vmem:[#allocation6 + $0xb8] sm:$0xff]
  %v8858 = vld [vmem:[#allocation6 + $0xc0] sm:$0xff]
  %v8859 = vld [vmem:[#allocation6 + $0xc8] sm:$0xff]
  %v8860 = vld [vmem:[#allocation6 + $0xd0] sm:$0xff]
  %v8861 = vld [vmem:[#allocation6 + $0xd8] sm:$0xff]
  %v8862 = vld [vmem:[#allocation6 + $0xe0] sm:$0xff]
  %v8863 = vld [vmem:[#allocation6 + $0xe8] sm:$0xff]
  %v8864 = vld [vmem:[#allocation6 + $0xf0] sm:$0xff]
  %v8865 = vld [vmem:[#allocation6 + $0xf8] sm:$0xff]
  %v8866 = vld [vmem:[#allocation6 + $0x100] sm:$0xff]
  %v8867 = vld [vmem:[#allocation6 + $0x108] sm:$0xff]
  %v8868 = vld [vmem:[#allocation6 + $0x110] sm:$0xff]
  %v8869 = vld [vmem:[#allocation6 + $0x118] sm:$0xff]
  %v8870 = vld [vmem:[#allocation6 + $0x120] sm:$0xff]
  %v8871 = vld [vmem:[#allocation6 + $0x128] sm:$0xff]
  %v8872 = vld [vmem:[#allocation6 + $0x130] sm:$0xff]
  %v8873 = vld [vmem:[#allocation6 + $0x138] sm:$0xff]
  %v8874 = vld [vmem:[#allocation6 + $0x140] sm:$0xff]
  %v8875 = vld [vmem:[#allocation6 + $0x148] sm:$0xff]
  %v8876 = vld [vmem:[#allocation6 + $0x150] sm:$0xff]
  %v8877 = vld [vmem:[#allocation6 + $0x158] sm:$0xff]
  %v8878 = vld [vmem:[#allocation6 + $0x160] sm:$0xff]
  %v8879 = vld [vmem:[#allocation6 + $0x168] sm:$0xff]
  %v8880 = vld [vmem:[#allocation6 + $0x170] sm:$0xff]
  %v8881 = vld [vmem:[#allocation6 + $0x178] sm:$0xff]
  %v8882 = vld [vmem:[#allocation6 + $0x180] sm:$0xff]
  %v8883 = vld [vmem:[#allocation6 + $0x188] sm:$0xff]
  %v8884 = vld [vmem:[#allocation6 + $0x190] sm:$0xff]
  %v8885 = vld [vmem:[#allocation6 + $0x198] sm:$0xff]
  %v8886 = vld [vmem:[#allocation6 + $0x1a0] sm:$0xff]
  %v8887 = vld [vmem:[#allocation6 + $0x1a8] sm:$0xff]
  %v8888 = vld [vmem:[#allocation6 + $0x1b0] sm:$0xff]
  %v8889 = vld [vmem:[#allocation6 + $0x1b8] sm:$0xff]
  %v8890 = vld [vmem:[#allocation6 + $0x1c0] sm:$0xff]
  %v8891 = vld [vmem:[#allocation6 + $0x1c8] sm:$0xff]
  %v8892 = vld [vmem:[#allocation6 + $0x1d0] sm:$0xff]
  %v8893 = vld [vmem:[#allocation6 + $0x1d8] sm:$0xff]
  %v8894 = vld [vmem:[#allocation6 + $0x1e0] sm:$0xff]
  %v8895 = vld [vmem:[#allocation6 + $0x1e8] sm:$0xff]
  %v8896 = vld [vmem:[#allocation6 + $0x1f0] sm:$0xff]
  %v8897 = vld [vmem:[#allocation6 + $0x1f8] sm:$0xff]
  %v8898 = vld [vmem:[#allocation6 + $0x200] sm:$0xff]
  %v8899 = vld [vmem:[#allocation6 + $0x208] sm:$0xff]
  %v8900 = vld [vmem:[#allocation6 + $0x210] sm:$0xff]
  %v8901 = vld [vmem:[#allocation6 + $0x218] sm:$0xff]
  %v8902 = vld [vmem:[#allocation6 + $0x220] sm:$0xff]
  %v8903 = vld [vmem:[#allocation6 + $0x228] sm:$0xff]
  %v8904 = vld [vmem:[#allocation6 + $0x230] sm:$0xff]
  %v8905 = vld [vmem:[#allocation6 + $0x238] sm:$0xff]
  %v8906 = vld [vmem:[%s5] sm:$0xff]
  %v8907 = vld [vmem:[%s5 + $0x8] sm:$0xff]
  %v8908 = vld [vmem:[%s5 + $0x10] sm:$0xff]
  %v8909 = vld [vmem:[%s5 + $0x18] sm:$0xff]
  %v8910 = vld [vmem:[%s5 + $0x20] sm:$0xff]
  %v8911 = vld [vmem:[%s5 + $0x28] sm:$0xff]
  %v8912 = vld [vmem:[%s5 + $0x30] sm:$0xff]
  %v8913 = vld [vmem:[%s5 + $0x38] sm:$0xff]
  %v8914 = vld [vmem:[%s5 + $0x40] sm:$0xff]
  %v8915 = vld [vmem:[%s5 + $0x48] sm:$0xff]
  %v8916 = vld [vmem:[%s5 + $0x50] sm:$0xff]
  %v8917 = vld [vmem:[%s5 + $0x58] sm:$0xff]
  %v8918 = vld [vmem:[%s5 + $0x60] sm:$0xff]
  %v8919 = vld [vmem:[%s5 + $0x68] sm:$0xff]
  %v8920 = vld [vmem:[%s5 + $0x70] sm:$0xff]
  %v8921 = vld [vmem:[%s5 + $0x78] sm:$0xff]
  %v8922 = vld [vmem:[%s5 + $0x80] sm:$0xff]
  %v8923 = vld [vmem:[%s5 + $0x88] sm:$0xff]
  %v8924 = vld [vmem:[%s5 + $0x90] sm:$0xff]
  %v8925 = vld [vmem:[%s5 + $0x98] sm:$0xff]
  %v8926 = vld [vmem:[%s5 + $0xa0] sm:$0xff]
  %v8927 = vld [vmem:[%s5 + $0xa8] sm:$0xff]
  %v8928 = vld [vmem:[%s5 + $0xb0] sm:$0xff]
  %v8929 = vld [vmem:[%s5 + $0xb8] sm:$0xff]
  %v8930 = vld [vmem:[%s5 + $0xc0] sm:$0xff]
  %v8931 = vld [vmem:[%s5 + $0xc8] sm:$0xff]
  %v8932 = vld [vmem:[%s5 + $0xd0] sm:$0xff]
  %v8933 = vld [vmem:[%s5 + $0xd8] sm:$0xff]
  %v8934 = vld [vmem:[%s5 + $0xe0] sm:$0xff]
  %v8935 = vld [vmem:[%s5 + $0xe8] sm:$0xff]
  %v8936 = vld [vmem:[%s5 + $0xf0] sm:$0xff]
  %v8937 = vld [vmem:[%s5 + $0xf8] sm:$0xff]
  %v8938 = vld [vmem:[%s5 + $0x100] sm:$0xff]
  %v8939 = vld [vmem:[%s5 + $0x108] sm:$0xff]
  %v8940 = vld [vmem:[%s5 + $0x110] sm:$0xff]
  %v8941 = vld [vmem:[%s5 + $0x118] sm:$0xff]
  %v8942 = vld [vmem:[%s5 + $0x120] sm:$0xff]
  %v8943 = vld [vmem:[%s5 + $0x128] sm:$0xff]
  %v8944 = vld [vmem:[%s5 + $0x130] sm:$0xff]
  %v8945 = vld [vmem:[%s5 + $0x138] sm:$0xff]
  %v8946 = vld [vmem:[%s5 + $0x140] sm:$0xff]
  %v8947 = vld [vmem:[%s5 + $0x148] sm:$0xff]
  %v8948 = vld [vmem:[%s5 + $0x150] sm:$0xff]
  %v8949 = vld [vmem:[%s5 + $0x158] sm:$0xff]
  %v8950 = vld [vmem:[%s5 + $0x160] sm:$0xff]
  %v8951 = vld [vmem:[%s5 + $0x168] sm:$0xff]
  %v8952 = vld [vmem:[%s5 + $0x170] sm:$0xff]
  %v8953 = vld [vmem:[%s5 + $0x178] sm:$0xff]
  %v8954 = vld [vmem:[%s5 + $0x180] sm:$0xff]
  %v8955 = vld [vmem:[%s5 + $0x188] sm:$0xff]
  %v8956 = vld [vmem:[%s5 + $0x190] sm:$0xff]
  %v8957 = vld [vmem:[%s5 + $0x198] sm:$0xff]
  %v8958 = vld [vmem:[%s5 + $0x1a0] sm:$0xff]
  %v8959 = vld [vmem:[%s5 + $0x1a8] sm:$0xff]
  %v8960 = vld [vmem:[%s5 + $0x1b0] sm:$0xff]
  %v8961 = vld [vmem:[%s5 + $0x1b8] sm:$0xff]
  %v8962 = vld [vmem:[%s5 + $0x1c0] sm:$0xff]
  %v8963 = vld [vmem:[%s5 + $0x1c8] sm:$0xff]
  %v8964 = vld [vmem:[%s5 + $0x1d0] sm:$0xff]
  %v8965 = vld [vmem:[%s5 + $0x1d8] sm:$0xff]
  %v8966 = vld [vmem:[%s5 + $0x1e0] sm:$0xff]
  %v8967 = vld [vmem:[%s5 + $0x1e8] sm:$0xff]
  %v8968 = vld [vmem:[%s5 + $0x1f0] sm:$0xff]
  %v8969 = vld [vmem:[%s5 + $0x1f8] sm:$0xff]
  %v8970 = vld [vmem:[%s5 + $0x200] sm:$0xff]
  %v8971 = vld [vmem:[%s5 + $0x208] sm:$0xff]
  %v8972 = vld [vmem:[%s5 + $0x210] sm:$0xff]
  %v8973 = vld [vmem:[%s5 + $0x218] sm:$0xff]
  %v8974 = vld [vmem:[%s5 + $0x220] sm:$0xff]
  %v8975 = vld [vmem:[%s5 + $0x228] sm:$0xff]
  %v8976 = vld [vmem:[%s5 + $0x230] sm:$0xff]
  %v8977 = vld [vmem:[%s5 + $0x238] sm:$0xff]
  %v8978 = vld [vmem:[%s5 + $0x240] sm:$0xff]
  %v8979 = vld [vmem:[%s5 + $0x248] sm:$0xff]
  %v8980 = vld [vmem:[%s5 + $0x250] sm:$0xff]
  %v8981 = vld [vmem:[%s6] sm:$0xff]
  %v8982 = vld [vmem:[%s6 + $0x8] sm:$0xff]
  %v8983 = vld [vmem:[%s6 + $0x10] sm:$0xff]
  %v8984 = vld [vmem:[%s6 + $0x18] sm:$0xff]
  %v8985 = vld [vmem:[%s6 + $0x20] sm:$0xff]
  %v8986 = vld [vmem:[%s6 + $0x28] sm:$0xff]
  %v8987 = vld [vmem:[%s6 + $0x30] sm:$0xff]
  %v8988 = vld [vmem:[%s6 + $0x38] sm:$0xff]
  %v8989 = vld [vmem:[%s6 + $0x40] sm:$0xff]
  %v8990 = vld [vmem:[%s6 + $0x48] sm:$0xff]
  %v8991 = vld [vmem:[%s6 + $0x50] sm:$0xff]
  %v8992 = vld [vmem:[%s6 + $0x58] sm:$0xff]
  %v8993 = vld [vmem:[%s6 + $0x60] sm:$0xff]
  %v8994 = vld [vmem:[%s6 + $0x68] sm:$0xff]
  %v8995 = vld [vmem:[%s6 + $0x70] sm:$0xff]
  %8997 = vset.pattern.permute.xlu0 0
  %8998 = vperm.xlu0 %8997, %v8981
  %v8999 = vpop.permute.xlu0 %8998
  %9002 = vset.pattern.permute.xlu0 0
  %9003 = vperm.xlu0 %9002, %v8982
  %v9004 = vpop.permute.xlu0 %9003
  %9007 = vset.pattern.permute.xlu0 0
  %9008 = vperm.xlu0 %9007, %v8983
  %v9009 = vpop.permute.xlu0 %9008
  %9012 = vset.pattern.permute.xlu0 0
  %9013 = vperm.xlu0 %9012, %v8984
  %v9014 = vpop.permute.xlu0 %9013
  %9017 = vset.pattern.permute.xlu0 0
  %9018 = vperm.xlu0 %9017, %v8985
  %v9019 = vpop.permute.xlu0 %9018
  %9022 = vset.pattern.permute.xlu0 0
  %9023 = vperm.xlu0 %9022, %v8986
  %v9024 = vpop.permute.xlu0 %9023
  %9027 = vset.pattern.permute.xlu0 0
  %9028 = vperm.xlu0 %9027, %v8987
  %v9029 = vpop.permute.xlu0 %9028
  %9032 = vset.pattern.permute.xlu0 0
  %9033 = vperm.xlu0 %9032, %v8988
  %v9034 = vpop.permute.xlu0 %9033
  %9037 = vset.pattern.permute.xlu0 0
  %9038 = vperm.xlu0 %9037, %v8989
  %v9039 = vpop.permute.xlu0 %9038
  %9042 = vset.pattern.permute.xlu0 0
  %9043 = vperm.xlu0 %9042, %v8990
  %v9044 = vpop.permute.xlu0 %9043
  %9047 = vset.pattern.permute.xlu0 0
  %9048 = vperm.xlu0 %9047, %v8991
  %v9049 = vpop.permute.xlu0 %9048
  %9052 = vset.pattern.permute.xlu0 0
  %9053 = vperm.xlu0 %9052, %v8992
  %v9054 = vpop.permute.xlu0 %9053
  %9057 = vset.pattern.permute.xlu0 0
  %9058 = vperm.xlu0 %9057, %v8993
  %v9059 = vpop.permute.xlu0 %9058
  %9062 = vset.pattern.permute.xlu0 0
  %9063 = vperm.xlu0 %9062, %v8994
  %v9064 = vpop.permute.xlu0 %9063
  %9067 = vset.pattern.permute.xlu0 0
  %9068 = vperm.xlu0 %9067, %v8995
  %v9069 = vpop.permute.xlu0 %9068
  %v9072 = vsel %vm583, %v8910, 0
  %v9075 = vsel %vm583, %v8915, 0
  %v9078 = vsel %vm583, %v8920, 0
  %v9081 = vsel %vm583, %v8925, 0
  %v9084 = vsel %vm583, %v8930, 0
  %v9087 = vsel %vm583, %v8935, 0
  %v9090 = vsel %vm583, %v8940, 0
  %v9093 = vsel %vm583, %v8945, 0
  %v9096 = vsel %vm583, %v8950, 0
  %v9099 = vsel %vm583, %v8955, 0
  %v9102 = vsel %vm583, %v8960, 0
  %v9105 = vsel %vm583, %v8965, 0
  %v9108 = vsel %vm583, %v8970, 0
  %v9111 = vsel %vm583, %v8975, 0
  %v9114 = vsel %vm583, %v8980, 0
  %9116 = vmatprep.subr.mxu0 0.0
  %9117 = vmatpush1.msra.mxu0 %v8834
  %9118 = vmatprep.subr.mxu0 0.0
  %9119 = vmatpush1.msra.mxu0 %v8835
  %9120 = vmatprep.subr.mxu0 0.0
  %9121 = vmatpush1.msra.mxu0 %v8836
  %9122 = vmatprep.subr.mxu0 0.0
  %9123 = vmatpush1.msra.mxu0 %v8837
  %9124 = vmatprep.subr.mxu0 0.0
  %9125 = vmatpush1.msra.mxu0 %v8838
  %9126 = vmatprep.subr.mxu0 0.0
  %9127 = vmatpush1.msra.mxu0 %v8839
  %9128 = vmatprep.subr.mxu0 0.0
  %9129 = vmatpush1.msra.mxu0 %v8840
  %9130 = vmatprep.subr.mxu0 0.0
  %9131 = vmatpush1.msra.mxu0 %v8841
  %9132 = vmatprep.subr.mxu0 0.0
  %9133 = vmatpush1.msra.mxu0 %v8842
  %9134 = vmatprep.subr.mxu0 0.0
  %9135 = vmatpush1.msra.mxu0 %v8843
  %9136 = vmatprep.subr.mxu0 0.0
  %9137 = vmatpush1.msra.mxu0 %v8844
  %9138 = vmatprep.subr.mxu0 0.0
  %9139 = vmatpush1.msra.mxu0 %v8845
  %9140 = vmatprep.subr.mxu0 0.0
  %9141 = vmatpush1.msra.mxu0 %v8846
  %9142 = vmatprep.subr.mxu0 0.0
  %9143 = vmatpush1.msra.mxu0 %v8847
  %9144 = vmatprep.subr.mxu0 0.0
  %9145 = vmatpush1.msra.mxu0 %v8848
  %9146 = vmatprep.subr.mxu0 0.0
  %9147 = vmatpush1.msra.mxu0 %v8849
  %9148 = vmatprep.subr.mxu0 0.0
  %9149 = vmatpush1.msra.mxu0 %v8850
  %9150 = vmatprep.subr.mxu0 0.0
  %9151 = vmatpush1.msra.mxu0 %v8851
  %9152 = vmatprep.subr.mxu0 0.0
  %9153 = vmatpush1.msra.mxu0 %v8852
  %9154 = vmatprep.subr.mxu0 0.0
  %9155 = vmatpush1.msra.mxu0 %v8853
  %9156 = vmatprep.subr.mxu0 0.0
  %9157 = vmatpush1.msra.mxu0 %v8854
  %9158 = vmatprep.subr.mxu0 0.0
  %9159 = vmatpush1.msra.mxu0 %v8855
  %9160 = vmatprep.subr.mxu0 0.0
  %9161 = vmatpush1.msra.mxu0 %v8856
  %9162 = vmatprep.subr.mxu0 0.0
  %9163 = vmatpush1.msra.mxu0 %v8857
  %9164 = vmatprep.subr.mxu0 0.0
  %9165 = vmatpush1.msra.mxu0 %v8858
  %9166 = vmatprep.subr.mxu0 0.0
  %9167 = vmatpush1.msra.mxu0 %v8859
  %9168 = vmatprep.subr.mxu0 0.0
  %9169 = vmatpush1.msra.mxu0 %v8860
  %9170 = vmatprep.subr.mxu0 0.0
  %9171 = vmatpush1.msra.mxu0 %v8861
  %9172 = vmatprep.subr.mxu0 0.0
  %9173 = vmatpush1.msra.mxu0 %v8862
  %9174 = vmatprep.subr.mxu0 0.0
  %9175 = vmatpush1.msra.mxu0 %v8863
  %9176 = vmatprep.subr.mxu0 0.0
  %9177 = vmatpush1.msra.mxu0 %v8864
  %9178 = vmatprep.subr.mxu0 0.0
  %9179 = vmatpush1.msra.mxu0 %v8865
  %9180 = vmatprep.mubr.f32.mxu0 %v8907
  %9181 = vmatmul.mubr.f32.gmra.mrb[0].mxu0 %v8906
  %v9182 = vpop.f32.mrb[0].mxu0
  %v9183 = vadd.f32 %v8999, %v9182
  %v9184 = vpop.f32.mrb[0].mxu0
  %9185 = vmatprep.mubr.f32.mxu0 %v8912
  %9186 = vmatmul.mubr.f32.gmra.mrb[0].mxu0 %v8911
  %v9187 = vpop.f32.mrb[0].mxu0
  %v9188 = vadd.f32 %v9004, %v9187
  %v9189 = vpop.f32.mrb[0].mxu0
  %9190 = vmatprep.mubr.f32.mxu0 %v8917
  %9191 = vmatmul.mubr.f32.gmra.mrb[0].mxu0 %v8916
  %v9192 = vpop.f32.mrb[0].mxu0
  %v9193 = vadd.f32 %v9009, %v9192
  %v9194 = vpop.f32.mrb[0].mxu0
  %9195 = vmatprep.mubr.f32.mxu0 %v8922
  %9196 = vmatmul.mubr.f32.gmra.mrb[0].mxu0 %v8921
  %v9197 = vpop.f32.mrb[0].mxu0
  %v9198 = vadd.f32 %v9014, %v9197
  %v9199 = vpop.f32.mrb[0].mxu0
  %9200 = vmatprep.mubr.f32.mxu0 %v8927
  %9201 = vmatmul.mubr.f32.gmra.mrb[0].mxu0 %v8926
  %v9202 = vpop.f32.mrb[0].mxu0
  %v9203 = vadd.f32 %v9019, %v9202
  %v9204 = vpop.f32.mrb[0].mxu0
  %9205 = vmatprep.mubr.f32.mxu0 %v8932
  %9206 = vmatmul.mubr.f32.gmra.mrb[0].mxu0 %v8931
  %v9207 = vpop.f32.mrb[0].mxu0
  %v9208 = vadd.f32 %v9024, %v9207
  %v9209 = vpop.f32.mrb[0].mxu0
  %9210 = vmatprep.mubr.f32.mxu0 %v8937
  %9211 = vmatmul.mubr.f32.gmra.mrb[0].mxu0 %v8936
  %v9212 = vpop.f32.mrb[0].mxu0
  %v9213 = vadd.f32 %v9029, %v9212
  %v9214 = vpop.f32.mrb[0].mxu0
  %9215 = vmatprep.mubr.f32.mxu0 %v8942
  %9216 = vmatmul.mubr.f32.gmra.mrb[0].mxu0 %v8941
  %v9217 = vpop.f32.mrb[0].mxu0
  %v9218 = vadd.f32 %v9034, %v9217
  %v9219 = vpop.f32.mrb[0].mxu0
  %9220 = vmatprep.mubr.f32.mxu0 %v8947
  %9221 = vmatmul.mubr.f32.gmra.mrb[0].mxu0 %v8946
  %v9222 = vpop.f32.mrb[0].mxu0
  %v9223 = vadd.f32 %v9039, %v9222
  %v9224 = vpop.f32.mrb[0].mxu0
  %9225 = vmatprep.mubr.f32.mxu0 %v8952
  %9226 = vmatmul.mubr.f32.gmra.mrb[0].mxu0 %v8951
  %v9227 = vpop.f32.mrb[0].mxu0
  %v9228 = vadd.f32 %v9044, %v9227
  %v9229 = vpop.f32.mrb[0].mxu0
  %9230 = vmatprep.mubr.f32.mxu0 %v8957
  %9231 = vmatmul.mubr.f32.gmra.mrb[0].mxu0 %v8956
  %v9232 = vpop.f32.mrb[0].mxu0
  %v9233 = vadd.f32 %v9049, %v9232
  %v9234 = vpop.f32.mrb[0].mxu0
  %9235 = vmatprep.mubr.f32.mxu0 %v8962
  %9236 = vmatmul.mubr.f32.gmra.mrb[0].mxu0 %v8961
  %v9237 = vpop.f32.mrb[0].mxu0
  %v9238 = vadd.f32 %v9054, %v9237
  %v9239 = vpop.f32.mrb[0].mxu0
  %9240 = vmatprep.mubr.f32.mxu0 %v8967
  %9241 = vmatmul.mubr.f32.gmra.mrb[0].mxu0 %v8966
  %v9242 = vpop.f32.mrb[0].mxu0
  %v9243 = vadd.f32 %v9059, %v9242
  %v9244 = vpop.f32.mrb[0].mxu0
  %9245 = vmatprep.mubr.f32.mxu0 %v8972
  %9246 = vmatmul.mubr.f32.gmra.mrb[0].mxu0 %v8971
  %v9247 = vpop.f32.mrb[0].mxu0
  %v9248 = vadd.f32 %v9064, %v9247
  %v9249 = vpop.f32.mrb[0].mxu0
  %9250 = vmatprep.mubr.f32.mxu0 %v8977
  %9251 = vmatmul.mubr.f32.gmra.mrb[0].mxu0 %v8976
  %v9252 = vpop.f32.mrb[0].mxu0
  %v9253 = vadd.f32 %v9069, %v9252
  %v9254 = vpop.f32.mrb[0].mxu0
  %9255 = vdwg.mxu0
  %9256 = vmatprep.subr.mxu0 0.0
  %9257 = vmatpush1.msra.mxu0 %v8866
  %9258 = vmatprep.subr.mxu0 0.0
  %9259 = vmatpush1.msra.mxu0 %v8867
  %9260 = vmatprep.subr.mxu0 0.0
  %9261 = vmatpush1.msra.mxu0 %v8868
  %9262 = vmatprep.subr.mxu0 0.0
  %9263 = vmatpush1.msra.mxu0 %v8869
  %9264 = vmatprep.subr.mxu0 0.0
  %9265 = vmatpush1.msra.mxu0 %v8870
  %9266 = vmatprep.subr.mxu0 0.0
  %9267 = vmatpush1.msra.mxu0 %v8871
  %9268 = vmatprep.subr.mxu0 0.0
  %9269 = vmatpush1.msra.mxu0 %v8872
  %9270 = vmatprep.subr.mxu0 0.0
  %9271 = vmatpush1.msra.mxu0 %v8873
  %9272 = vmatprep.subr.mxu0 0.0
  %9273 = vmatpush1.msra.mxu0 %v8874
  %9274 = vmatprep.subr.mxu0 0.0
  %9275 = vmatpush1.msra.mxu0 %v8875
  %9276 = vmatprep.subr.mxu0 0.0
  %9277 = vmatpush1.msra.mxu0 %v8876
  %9278 = vmatprep.subr.mxu0 0.0
  %9279 = vmatpush1.msra.mxu0 %v8877
  %9280 = vmatprep.subr.mxu0 0.0
  %9281 = vmatpush1.msra.mxu0 %v8878
  %9282 = vmatprep.subr.mxu0 0.0
  %9283 = vmatpush1.msra.mxu0 %v8879
  %9284 = vmatprep.subr.mxu0 0.0
  %9285 = vmatpush1.msra.mxu0 %v8880
  %9286 = vmatprep.subr.mxu0 0.0
  %9287 = vmatpush1.msra.mxu0 %v8881
  %9288 = vmatprep.subr.mxu0 0.0
  %9289 = vmatpush1.msra.mxu0 %v8882
  %9290 = vmatprep.subr.mxu0 0.0
  %9291 = vmatpush1.msra.mxu0 %v8883
  %9292 = vmatprep.subr.mxu0 0.0
  %9293 = vmatpush1.msra.mxu0 %v8884
  %9294 = vmatprep.subr.mxu0 0.0
  %9295 = vmatpush1.msra.mxu0 %v8885
  %9296 = vmatprep.subr.mxu0 0.0
  %9297 = vmatpush1.msra.mxu0 %v8886
  %9298 = vmatprep.subr.mxu0 0.0
  %9299 = vmatpush1.msra.mxu0 %v8887
  %9300 = vmatprep.subr.mxu0 0.0
  %9301 = vmatpush1.msra.mxu0 %v8888
  %9302 = vmatprep.subr.mxu0 0.0
  %9303 = vmatpush1.msra.mxu0 %v8889
  %9304 = vmatprep.subr.mxu0 0.0
  %9305 = vmatpush1.msra.mxu0 %v8890
  %9306 = vmatprep.subr.mxu0 0.0
  %9307 = vmatpush1.msra.mxu0 %v8891
  %9308 = vmatprep.subr.mxu0 0.0
  %9309 = vmatpush1.msra.mxu0 %v8892
  %9310 = vmatprep.subr.mxu0 0.0
  %9311 = vmatpush1.msra.mxu0 %v8893
  %9312 = vmatprep.subr.mxu0 0.0
  %9313 = vmatpush1.msra.mxu0 %v8894
  %9314 = vmatprep.subr.mxu0 0.0
  %9315 = vmatpush1.msra.mxu0 %v8895
  %9316 = vmatprep.subr.mxu0 0.0
  %9317 = vmatpush1.msra.mxu0 %v8896
  %9318 = vmatprep.subr.mxu0 0.0
  %9319 = vmatpush1.msra.mxu0 %v8897
  %9320 = vmatprep.mubr.f32.mxu0 %v8909
  %9321 = vmatmul.mubr.f32.gmra.mrb[0].mxu0 %v8908
  %v9322 = vpop.f32.mrb[0].mxu0
  %v9323 = vadd.f32 %v9183, %v9322
  %v9324 = vpop.f32.mrb[0].mxu0
  %9325 = vmatprep.mubr.f32.mxu0 %v8914
  %9326 = vmatmul.mubr.f32.gmra.mrb[0].mxu0 %v8913
  %v9327 = vpop.f32.mrb[0].mxu0
  %v9328 = vadd.f32 %v9188, %v9327
  %v9329 = vpop.f32.mrb[0].mxu0
  %9330 = vmatprep.mubr.f32.mxu0 %v8919
  %9331 = vmatmul.mubr.f32.gmra.mrb[0].mxu0 %v8918
  %v9332 = vpop.f32.mrb[0].mxu0
  %v9333 = vadd.f32 %v9193, %v9332
  %v9334 = vpop.f32.mrb[0].mxu0
  %9335 = vmatprep.mubr.f32.mxu0 %v8924
  %9336 = vmatmul.mubr.f32.gmra.mrb[0].mxu0 %v8923
  %v9337 = vpop.f32.mrb[0].mxu0
  %v9338 = vadd.f32 %v9198, %v9337
  %v9339 = vpop.f32.mrb[0].mxu0
  %9340 = vmatprep.mubr.f32.mxu0 %v8929
  %9341 = vmatmul.mubr.f32.gmra.mrb[0].mxu0 %v8928
  %v9342 = vpop.f32.mrb[0].mxu0
  %v9343 = vadd.f32 %v9203, %v9342
  %v9344 = vpop.f32.mrb[0].mxu0
  %9345 = vmatprep.mubr.f32.mxu0 %v8934
  %9346 = vmatmul.mubr.f32.gmra.mrb[0].mxu0 %v8933
  %v9347 = vpop.f32.mrb[0].mxu0
  %v9348 = vadd.f32 %v9208, %v9347
  %v9349 = vpop.f32.mrb[0].mxu0
  %9350 = vmatprep.mubr.f32.mxu0 %v8939
  %9351 = vmatmul.mubr.f32.gmra.mrb[0].mxu0 %v8938
  %v9352 = vpop.f32.mrb[0].mxu0
  %v9353 = vadd.f32 %v9213, %v9352
  %v9354 = vpop.f32.mrb[0].mxu0
  %9355 = vmatprep.mubr.f32.mxu0 %v8944
  %9356 = vmatmul.mubr.f32.gmra.mrb[0].mxu0 %v8943
  %v9357 = vpop.f32.mrb[0].mxu0
  %v9358 = vadd.f32 %v9218, %v9357
  %v9359 = vpop.f32.mrb[0].mxu0
  %9360 = vmatprep.mubr.f32.mxu0 %v8949
  %9361 = vmatmul.mubr.f32.gmra.mrb[0].mxu0 %v8948
  %v9362 = vpop.f32.mrb[0].mxu0
  %v9363 = vadd.f32 %v9223, %v9362
  %v9364 = vpop.f32.mrb[0].mxu0
  %9365 = vmatprep.mubr.f32.mxu0 %v8954
  %9366 = vmatmul.mubr.f32.gmra.mrb[0].mxu0 %v8953
  %v9367 = vpop.f32.mrb[0].mxu0
  %v9368 = vadd.f32 %v9228, %v9367
  %v9369 = vpop.f32.mrb[0].mxu0
  %9370 = vmatprep.mubr.f32.mxu0 %v8959
  %9371 = vmatmul.mubr.f32.gmra.mrb[0].mxu0 %v8958
  %v9372 = vpop.f32.mrb[0].mxu0
  %v9373 = vadd.f32 %v9233, %v9372
  %v9374 = vpop.f32.mrb[0].mxu0
  %9375 = vmatprep.mubr.f32.mxu0 %v8964
  %9376 = vmatmul.mubr.f32.gmra.mrb[0].mxu0 %v8963
  %v9377 = vpop.f32.mrb[0].mxu0
  %v9378 = vadd.f32 %v9238, %v9377
  %v9379 = vpop.f32.mrb[0].mxu0
  %9380 = vmatprep.mubr.f32.mxu0 %v8969
  %9381 = vmatmul.mubr.f32.gmra.mrb[0].mxu0 %v8968
  %v9382 = vpop.f32.mrb[0].mxu0
  %v9383 = vadd.f32 %v9243, %v9382
  %v9384 = vpop.f32.mrb[0].mxu0
  %9385 = vmatprep.mubr.f32.mxu0 %v8974
  %9386 = vmatmul.mubr.f32.gmra.mrb[0].mxu0 %v8973
  %v9387 = vpop.f32.mrb[0].mxu0
  %v9388 = vadd.f32 %v9248, %v9387
  %v9389 = vpop.f32.mrb[0].mxu0
  %9390 = vmatprep.mubr.f32.mxu0 %v8979
  %9391 = vmatmul.mubr.f32.gmra.mrb[0].mxu0 %v8978
  %v9392 = vpop.f32.mrb[0].mxu0
  %v9393 = vadd.f32 %v9253, %v9392
  %v9394 = vpop.f32.mrb[0].mxu0
  %9395 = vdwg.mxu0
  %9396 = vmatprep.subr.mxu0 0.0
  %9397 = vmatpush1.msra.mxu0 %v8898
  %9398 = vmatprep.subr.mxu0 0.0
  %9399 = vmatpush1.msra.mxu0 %v8899
  %9400 = vmatprep.subr.mxu0 0.0
  %9401 = vmatpush1.msra.mxu0 %v8900
  %9402 = vmatprep.subr.mxu0 0.0
  %9403 = vmatpush1.msra.mxu0 %v8901
  %9404 = vmatprep.subr.mxu0 0.0
  %9405 = vmatpush1.msra.mxu0 %v8902
  %9406 = vmatprep.subr.mxu0 0.0
  %9407 = vmatpush1.msra.mxu0 %v8903
  %9408 = vmatprep.subr.mxu0 0.0
  %9409 = vmatpush1.msra.mxu0 %v8904
  %9410 = vmatprep.subr.mxu0 0.0
  %9411 = vmatpush1.msra.mxu0 %v8905
  %9412 = vmatprep.subr.mxu0 0.0
  %9413 = vmatpush1.msra.mxu0 0.0
  %9414 = vmatprep.subr.mxu0 0.0
  %9415 = vmatpush1.msra.mxu0 0.0
  %9416 = vmatprep.subr.mxu0 0.0
  %9417 = vmatpush1.msra.mxu0 0.0
  %9418 = vmatprep.subr.mxu0 0.0
  %9419 = vmatpush1.msra.mxu0 0.0
  %9420 = vmatprep.subr.mxu0 0.0
  %9421 = vmatpush1.msra.mxu0 0.0
  %9422 = vmatprep.subr.mxu0 0.0
  %9423 = vmatpush1.msra.mxu0 0.0
  %9424 = vmatprep.subr.mxu0 0.0
  %9425 = vmatpush1.msra.mxu0 0.0
  %9426 = vmatprep.subr.mxu0 0.0
  %9427 = vmatpush1.msra.mxu0 0.0
  %9428 = vmatprep.subr.mxu0 0.0
  %9429 = vmatpush1.msra.mxu0 0.0
  %9430 = vmatprep.subr.mxu0 0.0
  %9431 = vmatpush1.msra.mxu0 0.0
  %9432 = vmatprep.subr.mxu0 0.0
  %9433 = vmatpush1.msra.mxu0 0.0
  %9434 = vmatprep.subr.mxu0 0.0
  %9435 = vmatpush1.msra.mxu0 0.0
  %9436 = vmatprep.subr.mxu0 0.0
  %9437 = vmatpush1.msra.mxu0 0.0
  %9438 = vmatprep.subr.mxu0 0.0
  %9439 = vmatpush1.msra.mxu0 0.0
  %9440 = vmatprep.subr.mxu0 0.0
  %9441 = vmatpush1.msra.mxu0 0.0
  %9442 = vmatprep.subr.mxu0 0.0
  %9443 = vmatpush1.msra.mxu0 0.0
  %9444 = vmatprep.subr.mxu0 0.0
  %9445 = vmatpush1.msra.mxu0 0.0
  %9446 = vmatprep.subr.mxu0 0.0
  %9447 = vmatpush1.msra.mxu0 0.0
  %9448 = vmatprep.subr.mxu0 0.0
  %9449 = vmatpush1.msra.mxu0 0.0
  %9450 = vmatprep.subr.mxu0 0.0
  %9451 = vmatpush1.msra.mxu0 0.0
  %9452 = vmatprep.subr.mxu0 0.0
  %9453 = vmatpush1.msra.mxu0 0.0
  %9454 = vmatprep.subr.mxu0 0.0
  %9455 = vmatpush1.msra.mxu0 0.0
  %9456 = vmatprep.subr.mxu0 0.0
  %9457 = vmatpush1.msra.mxu0 0.0
  %9458 = vmatprep.subr.mxu0 0.0
  %9459 = vmatpush1.msra.mxu0 0.0
  %9460 = vmatprep.mubr.f32.mxu0 0.0
  %9461 = vmatmul.mubr.f32.gmra.mrb[0].mxu0 %v9072
  %v9462 = vpop.f32.mrb[0].mxu0
  %v9463 = vadd.f32 %v9323, %v9462
  %v9464 = vpop.f32.mrb[0].mxu0
  %9465 = vmatprep.mubr.f32.mxu0 0.0
  %9466 = vmatmul.mubr.f32.gmra.mrb[0].mxu0 %v9075
  %v9467 = vpop.f32.mrb[0].mxu0
  %v9468 = vadd.f32 %v9328, %v9467
  %v9469 = vpop.f32.mrb[0].mxu0
  %9470 = vmatprep.mubr.f32.mxu0 0.0
  %9471 = vmatmul.mubr.f32.gmra.mrb[0].mxu0 %v9078
  %v9472 = vpop.f32.mrb[0].mxu0
  %v9473 = vadd.f32 %v9333, %v9472
  %v9474 = vpop.f32.mrb[0].mxu0
  %9475 = vmatprep.mubr.f32.mxu0 0.0
  %9476 = vmatmul.mubr.f32.gmra.mrb[0].mxu0 %v9081
  %v9477 = vpop.f32.mrb[0].mxu0
  %v9478 = vadd.f32 %v9338, %v9477
  %v9479 = vpop.f32.mrb[0].mxu0
  %9480 = vmatprep.mubr.f32.mxu0 0.0
  %9481 = vmatmul.mubr.f32.gmra.mrb[0].mxu0 %v9084
  %v9482 = vpop.f32.mrb[0].mxu0
  %v9483 = vadd.f32 %v9343, %v9482
  %v9484 = vpop.f32.mrb[0].mxu0
  %9485 = vmatprep.mubr.f32.mxu0 0.0
  %9486 = vmatmul.mubr.f32.gmra.mrb[0].mxu0 %v9087
  %v9487 = vpop.f32.mrb[0].mxu0
  %v9488 = vadd.f32 %v9348, %v9487
  %v9489 = vpop.f32.mrb[0].mxu0
  %9490 = vmatprep.mubr.f32.mxu0 0.0
  %9491 = vmatmul.mubr.f32.gmra.mrb[0].mxu0 %v9090
  %v9492 = vpop.f32.mrb[0].mxu0
  %v9493 = vadd.f32 %v9353, %v9492
  %v9494 = vpop.f32.mrb[0].mxu0
  %9495 = vmatprep.mubr.f32.mxu0 0.0
  %9496 = vmatmul.mubr.f32.gmra.mrb[0].mxu0 %v9093
  %v9497 = vpop.f32.mrb[0].mxu0
  %v9498 = vadd.f32 %v9358, %v9497
  %v9499 = vpop.f32.mrb[0].mxu0
  %9500 = vmatprep.mubr.f32.mxu0 0.0
  %9501 = vmatmul.mubr.f32.gmra.mrb[0].mxu0 %v9096
  %v9502 = vpop.f32.mrb[0].mxu0
  %v9503 = vadd.f32 %v9363, %v9502
  %v9504 = vpop.f32.mrb[0].mxu0
  %9505 = vmatprep.mubr.f32.mxu0 0.0
  %9506 = vmatmul.mubr.f32.gmra.mrb[0].mxu0 %v9099
  %v9507 = vpop.f32.mrb[0].mxu0
  %v9508 = vadd.f32 %v9368, %v9507
  %v9509 = vpop.f32.mrb[0].mxu0
  %9510 = vmatprep.mubr.f32.mxu0 0.0
  %9511 = vmatmul.mubr.f32.gmra.mrb[0].mxu0 %v9102
  %v9512 = vpop.f32.mrb[0].mxu0
  %v9513 = vadd.f32 %v9373, %v9512
  %v9514 = vpop.f32.mrb[0].mxu0
  %9515 = vmatprep.mubr.f32.mxu0 0.0
  %9516 = vmatmul.mubr.f32.gmra.mrb[0].mxu0 %v9105
  %v9517 = vpop.f32.mrb[0].mxu0
  %v9518 = vadd.f32 %v9378, %v9517
  %v9519 = vpop.f32.mrb[0].mxu0
  %9520 = vmatprep.mubr.f32.mxu0 0.0
  %9521 = vmatmul.mubr.f32.gmra.mrb[0].mxu0 %v9108
  %v9522 = vpop.f32.mrb[0].mxu0
  %v9523 = vadd.f32 %v9383, %v9522
  %v9524 = vpop.f32.mrb[0].mxu0
  %9525 = vmatprep.mubr.f32.mxu0 0.0
  %9526 = vmatmul.mubr.f32.gmra.mrb[0].mxu0 %v9111
  %v9527 = vpop.f32.mrb[0].mxu0
  %v9528 = vadd.f32 %v9388, %v9527
  %v9529 = vpop.f32.mrb[0].mxu0
  %9530 = vmatprep.mubr.f32.mxu0 0.0
  %9531 = vmatmul.mubr.f32.gmra.mrb[0].mxu0 %v9114
  %v9532 = vpop.f32.mrb[0].mxu0
  %v9533 = vadd.f32 %v9393, %v9532
  %v9534 = vpop.f32.mrb[0].mxu0
  %9535 = vdwg.mxu0
  %v9536 = vmax.f32 %v9463, 0.0
  %v9537 = vmax.f32 %v9468, 0.0
  %v9538 = vmax.f32 %v9473, 0.0
  %v9539 = vmax.f32 %v9478, 0.0
  %v9540 = vmax.f32 %v9483, 0.0
  %v9541 = vmax.f32 %v9488, 0.0
  %v9542 = vmax.f32 %v9493, 0.0
  %v9543 = vmax.f32 %v9498, 0.0
  %v9544 = vmax.f32 %v9503, 0.0
  %v9545 = vmax.f32 %v9508, 0.0
  %v9546 = vmax.f32 %v9513, 0.0
  %v9547 = vmax.f32 %v9518, 0.0
  %v9548 = vmax.f32 %v9523, 0.0
  %v9549 = vmax.f32 %v9528, 0.0
  %v9550 = vmax.f32 %v9533, 0.0
  %v9551 = vld [vmem:[%s7] sm:$0xff]
  %v9552 = vld [vmem:[%s7 + $0x8] sm:$0xff]
  %v9553 = vld [vmem:[%s7 + $0x10] sm:$0xff]
  %v9554 = vld [vmem:[%s7 + $0x18] sm:$0xff]
  %v9555 = vld [vmem:[%s7 + $0x20] sm:$0xff]
  %v9556 = vld [vmem:[%s7 + $0x28] sm:$0xff]
  %v9557 = vld [vmem:[%s7 + $0x30] sm:$0xff]
  %v9558 = vld [vmem:[%s7 + $0x38] sm:$0xff]
  %v9559 = vld [vmem:[%s7 + $0x40] sm:$0xff]
  %v9560 = vld [vmem:[%s7 + $0x48] sm:$0xff]
  %v9561 = vld [vmem:[%s7 + $0x50] sm:$0xf]
  %v9562 = vld [vmem:[%s8] sm:$0xff]
  %v9563 = vld [vmem:[%s8 + $0x8] sm:$0xff]
  %v9564 = vld [vmem:[%s8 + $0x10] sm:$0xff]
  %v9565 = vld [vmem:[%s8 + $0x18] sm:$0xff]
  %v9566 = vld [vmem:[%s8 + $0x20] sm:$0xff]
  %v9567 = vld [vmem:[%s8 + $0x28] sm:$0xff]
  %v9568 = vld [vmem:[%s8 + $0x30] sm:$0xff]
  %v9569 = vld [vmem:[%s8 + $0x38] sm:$0xff]
  %v9570 = vld [vmem:[%s8 + $0x40] sm:$0xff]
  %v9571 = vld [vmem:[%s8 + $0x48] sm:$0xff]
  %v9572 = vld [vmem:[%s8 + $0x50] sm:$0xf]
  %9574 = vset.pattern.permute.xlu0 0
  %9575 = vperm.xlu0 %9574, %v9562
  %v9576 = vpop.permute.xlu0 %9575
  %9579 = vset.pattern.permute.xlu0 0
  %9580 = vperm.xlu0 %9579, %v9563
  %v9581 = vpop.permute.xlu0 %9580
  %9584 = vset.pattern.permute.xlu0 0
  %9585 = vperm.xlu0 %9584, %v9564
  %v9586 = vpop.permute.xlu0 %9585
  %9589 = vset.pattern.permute.xlu0 0
  %9590 = vperm.xlu0 %9589, %v9565
  %v9591 = vpop.permute.xlu0 %9590
  %9594 = vset.pattern.permute.xlu0 0
  %9595 = vperm.xlu0 %9594, %v9566
  %v9596 = vpop.permute.xlu0 %9595
  %9599 = vset.pattern.permute.xlu0 0
  %9600 = vperm.xlu0 %9599, %v9567
  %v9601 = vpop.permute.xlu0 %9600
  %9604 = vset.pattern.permute.xlu0 0
  %9605 = vperm.xlu0 %9604, %v9568
  %v9606 = vpop.permute.xlu0 %9605
  %9609 = vset.pattern.permute.xlu0 0
  %9610 = vperm.xlu0 %9609, %v9569
  %v9611 = vpop.permute.xlu0 %9610
  %9614 = vset.pattern.permute.xlu0 0
  %9615 = vperm.xlu0 %9614, %v9570
  %v9616 = vpop.permute.xlu0 %9615
  %9619 = vset.pattern.permute.xlu0 0
  %9620 = vperm.xlu0 %9619, %v9571
  %v9621 = vpop.permute.xlu0 %9620
  %9624 = vset.pattern.permute.xlu0 0
  %9625 = vperm.xlu0 %9624, %v9572
  %v9626 = vpop.permute.xlu0 %9625
  %v9629 = vsel %vm3040, %v9551, 0
  %v9632 = vsel %vm3040, %v9552, 0
  %v9635 = vsel %vm3040, %v9553, 0
  %v9638 = vsel %vm3040, %v9554, 0
  %v9641 = vsel %vm3040, %v9555, 0
  %v9644 = vsel %vm3040, %v9556, 0
  %v9647 = vsel %vm3040, %v9557, 0
  %v9650 = vsel %vm3040, %v9558, 0
  %v9653 = vsel %vm3040, %v9559, 0
  %v9656 = vsel %vm3040, %v9560, 0
  %v9659 = vsel %vm3040, %v9561, 0
  %9661 = vmatprep.subr.mxu0 0.0
  %9662 = vmatpush1.msra.mxu0 %v9536
  %9663 = vmatprep.subr.mxu0 0.0
  %9664 = vmatpush1.msra.mxu0 %v9537
  %9665 = vmatprep.subr.mxu0 0.0
  %9666 = vmatpush1.msra.mxu0 %v9538
  %9667 = vmatprep.subr.mxu0 0.0
  %9668 = vmatpush1.msra.mxu0 %v9539
  %9669 = vmatprep.subr.mxu0 0.0
  %9670 = vmatpush1.msra.mxu0 %v9540
  %9671 = vmatprep.subr.mxu0 0.0
  %9672 = vmatpush1.msra.mxu0 %v9541
  %9673 = vmatprep.subr.mxu0 0.0
  %9674 = vmatpush1.msra.mxu0 %v9542
  %9675 = vmatprep.subr.mxu0 0.0
  %9676 = vmatpush1.msra.mxu0 %v9543
  %9677 = vmatprep.subr.mxu0 0.0
  %9678 = vmatpush1.msra.mxu0 %v9544
  %9679 = vmatprep.subr.mxu0 0.0
  %9680 = vmatpush1.msra.mxu0 %v9545
  %9681 = vmatprep.subr.mxu0 0.0
  %9682 = vmatpush1.msra.mxu0 %v9546
  %9683 = vmatprep.subr.mxu0 0.0
  %9684 = vmatpush1.msra.mxu0 %v9547
  %9685 = vmatprep.subr.mxu0 0.0
  %9686 = vmatpush1.msra.mxu0 %v9548
  %9687 = vmatprep.subr.mxu0 0.0
  %9688 = vmatpush1.msra.mxu0 %v9549
  %9689 = vmatprep.subr.mxu0 0.0
  %9690 = vmatpush1.msra.mxu0 %v9550
  %9691 = vmatprep.subr.mxu0 0.0
  %9692 = vmatpush1.msra.mxu0 0.0
  %9693 = vmatprep.subr.mxu0 0.0
  %9694 = vmatpush1.msra.mxu0 0.0
  %9695 = vmatprep.subr.mxu0 0.0
  %9696 = vmatpush1.msra.mxu0 0.0
  %9697 = vmatprep.subr.mxu0 0.0
  %9698 = vmatpush1.msra.mxu0 0.0
  %9699 = vmatprep.subr.mxu0 0.0
  %9700 = vmatpush1.msra.mxu0 0.0
  %9701 = vmatprep.subr.mxu0 0.0
  %9702 = vmatpush1.msra.mxu0 0.0
  %9703 = vmatprep.subr.mxu0 0.0
  %9704 = vmatpush1.msra.mxu0 0.0
  %9705 = vmatprep.subr.mxu0 0.0
  %9706 = vmatpush1.msra.mxu0 0.0
  %9707 = vmatprep.subr.mxu0 0.0
  %9708 = vmatpush1.msra.mxu0 0.0
  %9709 = vmatprep.subr.mxu0 0.0
  %9710 = vmatpush1.msra.mxu0 0.0
  %9711 = vmatprep.subr.mxu0 0.0
  %9712 = vmatpush1.msra.mxu0 0.0
  %9713 = vmatprep.subr.mxu0 0.0
  %9714 = vmatpush1.msra.mxu0 0.0
  %9715 = vmatprep.subr.mxu0 0.0
  %9716 = vmatpush1.msra.mxu0 0.0
  %9717 = vmatprep.subr.mxu0 0.0
  %9718 = vmatpush1.msra.mxu0 0.0
  %9719 = vmatprep.subr.mxu0 0.0
  %9720 = vmatpush1.msra.mxu0 0.0
  %9721 = vmatprep.subr.mxu0 0.0
  %9722 = vmatpush1.msra.mxu0 0.0
  %9723 = vmatprep.subr.mxu0 0.0
  %9724 = vmatpush1.msra.mxu0 0.0
  %9725 = vmatprep.mubr.f32.mxu0 0.0
  %9726 = vmatmul.mubr.f32.gmra.mrb[0].mxu0 %v9629
  %v9727 = vpop.f32.mrb[0].mxu0
  %v9728 = vadd.f32 %v9576, %v9727
  %v9729 = vpop.f32.mrb[0].mxu0
  %9730 = vmatprep.mubr.f32.mxu0 0.0
  %9731 = vmatmul.mubr.f32.gmra.mrb[0].mxu0 %v9632
  %v9732 = vpop.f32.mrb[0].mxu0
  %v9733 = vadd.f32 %v9581, %v9732
  %v9734 = vpop.f32.mrb[0].mxu0
  %9735 = vmatprep.mubr.f32.mxu0 0.0
  %9736 = vmatmul.mubr.f32.gmra.mrb[0].mxu0 %v9635
  %v9737 = vpop.f32.mrb[0].mxu0
  %v9738 = vadd.f32 %v9586, %v9737
  %v9739 = vpop.f32.mrb[0].mxu0
  %9740 = vmatprep.mubr.f32.mxu0 0.0
  %9741 = vmatmul.mubr.f32.gmra.mrb[0].mxu0 %v9638
  %v9742 = vpop.f32.mrb[0].mxu0
  %v9743 = vadd.f32 %v9591, %v9742
  %v9744 = vpop.f32.mrb[0].mxu0
  %9745 = vmatprep.mubr.f32.mxu0 0.0
  %9746 = vmatmul.mubr.f32.gmra.mrb[0].mxu0 %v9641
  %v9747 = vpop.f32.mrb[0].mxu0
  %v9748 = vadd.f32 %v9596, %v9747
  %v9749 = vpop.f32.mrb[0].mxu0
  %9750 = vmatprep.mubr.f32.mxu0 0.0
  %9751 = vmatmul.mubr.f32.gmra.mrb[0].mxu0 %v9644
  %v9752 = vpop.f32.mrb[0].mxu0
  %v9753 = vadd.f32 %v9601, %v9752
  %v9754 = vpop.f32.mrb[0].mxu0
  %9755 = vmatprep.mubr.f32.mxu0 0.0
  %9756 = vmatmul.mubr.f32.gmra.mrb[0].mxu0 %v9647
  %v9757 = vpop.f32.mrb[0].mxu0
  %v9758 = vadd.f32 %v9606, %v9757
  %v9759 = vpop.f32.mrb[0].mxu0
  %9760 = vmatprep.mubr.f32.mxu0 0.0
  %9761 = vmatmul.mubr.f32.gmra.mrb[0].mxu0 %v9650
  %v9762 = vpop.f32.mrb[0].mxu0
  %v9763 = vadd.f32 %v9611, %v9762
  %v9764 = vpop.f32.mrb[0].mxu0
  %9765 = vmatprep.mubr.f32.mxu0 0.0
  %9766 = vmatmul.mubr.f32.gmra.mrb[0].mxu0 %v9653
  %v9767 = vpop.f32.mrb[0].mxu0
  %v9768 = vadd.f32 %v9616, %v9767
  %v9769 = vpop.f32.mrb[0].mxu0
  %9770 = vmatprep.mubr.f32.mxu0 0.0
  %9771 = vmatmul.mubr.f32.gmra.mrb[0].mxu0 %v9656
  %v9772 = vpop.f32.mrb[0].mxu0
  %v9773 = vadd.f32 %v9621, %v9772
  %v9774 = vpop.f32.mrb[0].mxu0
  %9775 = vmatprep.mubr.f32.mxu0 0.0
  %9776 = vmatmul.mubr.f32.gmra.mrb[0].mxu0 %v9659
  %v9777 = vpop.f32.mrb[0].mxu0
  %v9778 = vadd.f32 %v9626, %v9777
  %v9779 = vpop.f32.mrb[0].mxu0
  %9780 = vdwg.mxu0
  %v9781 = vmax.f32 %v9728, 0.0
  %v9782 = vmax.f32 %v9733, 0.0
  %v9783 = vmax.f32 %v9738, 0.0
  %v9784 = vmax.f32 %v9743, 0.0
  %v9785 = vmax.f32 %v9748, 0.0
  %v9786 = vmax.f32 %v9753, 0.0
  %v9787 = vmax.f32 %v9758, 0.0
  %v9788 = vmax.f32 %v9763, 0.0
  %v9789 = vmax.f32 %v9768, 0.0
  %v9790 = vmax.f32 %v9773, 0.0
  %v9791 = vmax.f32 %v9778, 0.0
  %v9792 = vld [vmem:[%s9] sm:$0xff]
  %v9793 = vld [vmem:[%s9 + $0x8] sm:$0x3]
  %v9794 = vld [vmem:[%s10] sm:$0xff]
  %v9795 = vld [vmem:[%s10 + $0x8] sm:$0x3]
  %9797 = vset.pattern.permute.xlu0 0
  %9798 = vperm.xlu0 %9797, %v9794
  %v9799 = vpop.permute.xlu0 %9798
  %9802 = vset.pattern.permute.xlu0 0
  %9803 = vperm.xlu0 %9802, %v9795
  %v9804 = vpop.permute.xlu0 %9803
  %vm9806 = vcmask 687104
  %v9808 = vsel %vm9806, %v9792, 0
  %v9811 = vsel %vm9806, %v9793, 0
  %vm9813 = vcmask 1043456
  %v9815 = vsel %vm9813, %v9791, 0
  %9817 = vmatprep.subr.mxu0 0.0
  %9818 = vmatpush1.msra.mxu0 %v9781
  %9819 = vmatprep.subr.mxu0 0.0
  %9820 = vmatpush1.msra.mxu0 %v9782
  %9821 = vmatprep.subr.mxu0 0.0
  %9822 = vmatpush1.msra.mxu0 %v9783
  %9823 = vmatprep.subr.mxu0 0.0
  %9824 = vmatpush1.msra.mxu0 %v9784
  %9825 = vmatprep.subr.mxu0 0.0
  %9826 = vmatpush1.msra.mxu0 %v9785
  %9827 = vmatprep.subr.mxu0 0.0
  %9828 = vmatpush1.msra.mxu0 %v9786
  %9829 = vmatprep.subr.mxu0 0.0
  %9830 = vmatpush1.msra.mxu0 %v9787
  %9831 = vmatprep.subr.mxu0 0.0
  %9832 = vmatpush1.msra.mxu0 %v9788
  %9833 = vmatprep.subr.mxu0 0.0
  %9834 = vmatpush1.msra.mxu0 %v9789
  %9835 = vmatprep.subr.mxu0 0.0
  %9836 = vmatpush1.msra.mxu0 %v9790
  %9837 = vmatprep.subr.mxu0 0.0
  %9838 = vmatpush1.msra.mxu0 %v9815
  %9839 = vmatprep.subr.mxu0 0.0
  %9840 = vmatpush1.msra.mxu0 0.0
  %9841 = vmatprep.subr.mxu0 0.0
  %9842 = vmatpush1.msra.mxu0 0.0
  %9843 = vmatprep.subr.mxu0 0.0
  %9844 = vmatpush1.msra.mxu0 0.0
  %9845 = vmatprep.subr.mxu0 0.0
  %9846 = vmatpush1.msra.mxu0 0.0
  %9847 = vmatprep.subr.mxu0 0.0
  %9848 = vmatpush1.msra.mxu0 0.0
  %9849 = vmatprep.subr.mxu0 0.0
  %9850 = vmatpush1.msra.mxu0 0.0
  %9851 = vmatprep.subr.mxu0 0.0
  %9852 = vmatpush1.msra.mxu0 0.0
  %9853 = vmatprep.subr.mxu0 0.0
  %9854 = vmatpush1.msra.mxu0 0.0
  %9855 = vmatprep.subr.mxu0 0.0
  %9856 = vmatpush1.msra.mxu0 0.0
  %9857 = vmatprep.subr.mxu0 0.0
  %9858 = vmatpush1.msra.mxu0 0.0
  %9859 = vmatprep.subr.mxu0 0.0
  %9860 = vmatpush1.msra.mxu0 0.0
  %9861 = vmatprep.subr.mxu0 0.0
  %9862 = vmatpush1.msra.mxu0 0.0
  %9863 = vmatprep.subr.mxu0 0.0
  %9864 = vmatpush1.msra.mxu0 0.0
  %9865 = vmatprep.subr.mxu0 0.0
  %9866 = vmatpush1.msra.mxu0 0.0
  %9867 = vmatprep.subr.mxu0 0.0
  %9868 = vmatpush1.msra.mxu0 0.0
  %9869 = vmatprep.subr.mxu0 0.0
  %9870 = vmatpush1.msra.mxu0 0.0
  %9871 = vmatprep.subr.mxu0 0.0
  %9872 = vmatpush1.msra.mxu0 0.0
  %9873 = vmatprep.subr.mxu0 0.0
  %9874 = vmatpush1.msra.mxu0 0.0
  %9875 = vmatprep.subr.mxu0 0.0
  %9876 = vmatpush1.msra.mxu0 0.0
  %9877 = vmatprep.subr.mxu0 0.0
  %9878 = vmatpush1.msra.mxu0 0.0
  %9879 = vmatprep.subr.mxu0 0.0
  %9880 = vmatpush1.msra.mxu0 0.0
  %9881 = vmatprep.mubr.f32.mxu0 0.0
  %9882 = vmatmul.mubr.f32.gmra.mrb[0].mxu0 %v9808
  %v9883 = vpop.f32.mrb[0].mxu0
  %v9884 = vadd.f32 %v9799, %v9883
  %v9885 = vpop.f32.mrb[0].mxu0
  %9886 = vmatprep.mubr.f32.mxu0 0.0
  %9887 = vmatmul.mubr.f32.gmra.mrb[0].mxu0 %v9811
  %v9888 = vpop.f32.mrb[0].mxu0
  %v9889 = vadd.f32 %v9804, %v9888
  %v9890 = vpop.f32.mrb[0].mxu0
  %9891 = vdwg.mxu0
  %9892 = vst.msk [vmem:[%s11] sm:$0xff] %vm8451, %v9884
  %vm9893 = vcmask 9216
  %9894 = vst.msk [vmem:[%s11 + $0x8] sm:$0x3] %vm9893, %v9889
  // Predicated region
  $region46: #{net_forward.1} parent=0 // pred_check
    _
  $region47: #{net_forward.1} parent=0 // pred_check_branch
    %9896 = sbr.rel (0) target = $region49
  $region48: #{net_forward.1} parent=0 // pred_region
    _
  $region49: #{net_forward.1} parent=0 // pred_fallthru
    _
  // Predicated region
  $region50: #{net_forward.1} parent=0 // pred_check
    _
  $region51: #{net_forward.1} parent=0 // pred_check_branch
    %9898 = sbr.rel (0) target = $region53
  $region52: #{net_forward.1} parent=0 // pred_region
    _
  $region53: #{net_forward.1} parent=0 // pred_fallthru
    _

</llo_original>
